<compile_context>
chip_gen: v7x
topology: tpu7x:2x2x1
jax: 0.10.0
libtpu: 0.0.40
codegen_flags: <defaults>
</compile_context>

<pallas_src>
import functools

import jax
import jax.numpy as jnp
from jax.experimental import pallas as pl
from jax.experimental.pallas import tpu as pltpu

LN_EPS = 1e-5
MATMUL_DTYPE = jnp.bfloat16   # MXU input dtype for the bottleneck matmuls

# Row indices inside the packed (8, C) per-channel constants operand.
_GATE, _LN1_G, _LN1_B, _FB2, _LN2_G, _LN2_B = 0, 1, 2, 3, 4, 5


def _silu(x):
    return x * jax.nn.sigmoid(x)


def _layernorm_1pass(x, gamma, beta):
    """One-pass LayerNorm: var = E[x^2] - mu^2 (clamped at 0)."""
    mu = jnp.mean(x, axis=-1, keepdims=True)
    ex2 = jnp.mean(x * x, axis=-1, keepdims=True)
    var = jnp.maximum(ex2 - mu * mu, 0.0)
    return (x - mu) * jax.lax.rsqrt(var + LN_EPS) * gamma + beta


def _layernorm_2pass(x, gamma, beta):
    """Reference (two-pass) LayerNorm, used only by the pure-JAX reference."""
    mu = jnp.mean(x, axis=-1, keepdims=True)
    var = jnp.mean((x - mu) ** 2, axis=-1, keepdims=True)
    return (x - mu) * jax.lax.rsqrt(var + LN_EPS) * gamma + beta


def encoder_kernel(x_ref,        # (tr, C)  input rows, f32
                   consts_ref,   # (8,  C)  packed broadcast constants, f32
                   fw1_ref,      # (C, Hp)  bottleneck linear1 weight, bf16 (zero-padded cols)
                   fb1_ref,      # (1, Hp)  bottleneck linear1 bias, f32 (zero-padded)
                   fw2_ref,      # (Hp, C)  bottleneck linear2 weight, bf16 (zero-padded rows)
                   o_ref):       # (tr, C)  output rows
    x = x_ref[...].astype(jnp.float32)

    # ---- AttentionLayer + residual, fused: x*gate + x == x * (gate + 1) ----
    x = x * consts_ref[_GATE:_GATE + 1, :]

    # ---- LayerNorm1 (f32, one-pass stats) ----
    x = _layernorm_1pass(x, consts_ref[_LN1_G:_LN1_G + 1, :],
                         consts_ref[_LN1_B:_LN1_B + 1, :])

    # ---- CSP bottleneck (bf16 MXU inputs, f32 accumulate) + outer residual: 2*x + bn(x) ----
    hh = jnp.dot(x.astype(fw1_ref.dtype), fw1_ref[...],
                 preferred_element_type=jnp.float32) + fb1_ref[...]
    hh = _silu(hh)
    bn = jnp.dot(hh.astype(fw2_ref.dtype), fw2_ref[...],
                 preferred_element_type=jnp.float32) + consts_ref[_FB2:_FB2 + 1, :]
    x = 2.0 * x + bn

    # ---- LayerNorm2 (f32, one-pass stats) ----
    x = _layernorm_1pass(x, consts_ref[_LN2_G:_LN2_G + 1, :],
                         consts_ref[_LN2_B:_LN2_B + 1, :])

    o_ref[...] = x.astype(o_ref.dtype)


def _round_up(v, m):
    return ((v + m - 1) // m) * m


@functools.partial(jax.jit, static_argnames=("block_rows",))
def mlp_encoder_layer(x, params, block_rows=1024):
    """x: (batch, seq, channel) float32.  Returns the same shape/dtype."""
    B, S, C = x.shape
    H = params["fw1"].shape[1]
    N = B * S

    # ---- Hoisted weight-only attention gate: computed once per call, not per tile ----
    s = params["s"].astype(jnp.float32)                           # (1, C)
    h = _silu(jnp.dot(s, params["ew1"].astype(jnp.float32)))      # (1, H)
    gate = jax.nn.sigmoid(jnp.dot(h, params["ew2"].astype(jnp.float32)))
    gate_plus_one = gate + 1.0                                    # (1, C)

    # ---- Pack the six (1, C) broadcast constants into one (8, C) operand ----
    consts = jnp.zeros((8, C), jnp.float32)
    consts = consts.at[_GATE].set(gate_plus_one[0])
    consts = consts.at[_LN1_G].set(params["ln1_g"].reshape(C))
    consts = consts.at[_LN1_B].set(params["ln1_b"].reshape(C))
    consts = consts.at[_FB2].set(params["fb2"].reshape(C))
    consts = consts.at[_LN2_G].set(params["ln2_g"].reshape(C))
    consts = consts.at[_LN2_B].set(params["ln2_b"].reshape(C))

    # ---- Zero-pad the bottleneck hidden dim to a lane-dense multiple of 128 (exact) ----
    Hp = max(128, _round_up(H, 128))
    fw1 = params["fw1"].astype(jnp.float32)
    fb1 = params["fb1"].astype(jnp.float32)
    fw2 = params["fw2"].astype(jnp.float32)
    if Hp != H:
        fw1 = jnp.pad(fw1, ((0, 0), (0, Hp - H)))   # extra cols -> zero activations
        fb1 = jnp.pad(fb1, ((0, 0), (0, Hp - H)))   # silu(0) = 0
        fw2 = jnp.pad(fw2, ((0, Hp - H), (0, 0)))   # zero rows -> no contribution
    fw1 = fw1.astype(MATMUL_DTYPE)
    fw2 = fw2.astype(MATMUL_DTYPE)

    # ---- Row-tile size: multiple of 8, no wrapper-side padding of x ----
    tr = min(block_rows, _round_up(N, 8))
    tr = max(8, _round_up(tr, 8))
    # Keep >= 2 grid steps when there are enough rows (v7x has two TensorCores).
    if N >= 1024 and pl.cdiv(N, tr) < 2:
        tr = max(8, _round_up(pl.cdiv(N, 2), 8))
    n_blocks = pl.cdiv(N, tr)

    x2 = x.reshape(N, C)

    # VMEM limit sized from the actual tile budget (16 MiB floor, 48 MiB cap).
    tile_bytes = tr * max(C, Hp) * 4
    vmem_limit = int(min(48 * 2**20, max(16 * 2**20, 16 * tile_bytes)))

    full = lambda shape: pl.BlockSpec(shape, lambda i: (0, 0))

    out = pl.pallas_call(
        encoder_kernel,
        out_shape=jax.ShapeDtypeStruct((N, C), x.dtype),
        grid_spec=pltpu.PrefetchScalarGridSpec(
            num_scalar_prefetch=0,
            grid=(n_blocks,),
            in_specs=[
                pl.BlockSpec((tr, C), lambda i: (i, 0)),  # x rows (tiled)
                full((8, C)),                             # packed broadcast constants
                full((C, Hp)),                            # bottleneck W1 (bf16)
                full((1, Hp)),                            # bottleneck b1
                full((Hp, C)),                            # bottleneck W2 (bf16)
            ],
            out_specs=pl.BlockSpec((tr, C), lambda i: (i, 0)),
        ),
        compiler_params=pltpu.CompilerParams(
            dimension_semantics=("parallel",),   # row tiles are independent -> megacore
            vmem_limit_bytes=vmem_limit,
        ),
    )(x2, consts, fw1, fb1, fw2)

    return out.reshape(B, S, C)


def ref_forward(x, p):
    """Pure-JAX f32 reference mirroring the PyTorch module."""
    h = _silu(p["s"] @ p["ew1"])
    gate = jax.nn.sigmoid(h @ p["ew2"])            # (1, C)
    x = x * gate + x                               # attention + residual
    x = _layernorm_2pass(x, p["ln1_g"], p["ln1_b"])
    hh = _silu(x @ p["fw1"] + p["fb1"])
    x = 2.0 * x + (hh @ p["fw2"] + p["fb2"])       # CSP (x + bottleneck) + outer residual
    x = _layernorm_2pass(x, p["ln2_g"], p["ln2_b"])
    return x


def init_params(key, channel, shunkrate=4):
    H = channel // shunkrate
    ks = jax.random.split(key, 7)
    scale = 0.1
    return {
        "s":    jax.random.normal(ks[0], (1, channel), jnp.float32) * scale,
        "ew1":  jax.random.normal(ks[1], (channel, H), jnp.float32) * scale,
        "ew2":  jax.random.normal(ks[2], (H, channel), jnp.float32) * scale,
        "ln1_g": jnp.ones((1, channel), jnp.float32),
        "ln1_b": jnp.zeros((1, channel), jnp.float32),
        "fw1":  jax.random.normal(ks[3], (channel, H), jnp.float32) * scale,
        "fb1":  jax.random.normal(ks[4], (1, H), jnp.float32) * scale,
        "fw2":  jax.random.normal(ks[5], (H, channel), jnp.float32) * scale,
        "fb2":  jax.random.normal(ks[6], (1, channel), jnp.float32) * scale,
        "ln2_g": jnp.ones((1, channel), jnp.float32),
        "ln2_b": jnp.zeros((1, channel), jnp.float32),
    }


if __name__ == "__main__":
    key = jax.random.PRNGKey(0)
    kx, kp, kx2, kx3 = jax.random.split(key, 4)

    batch, seq, channel, shunkrate = 4, 512, 128, 4
    params = init_params(kp, channel, shunkrate)

    # Main case: N = 2048 rows -> 2 grid steps of 1024 rows (dual-TC friendly on v7x).
    x = jax.random.normal(kx, (batch, seq, channel), jnp.float32)
    out = jax.block_until_ready(mlp_encoder_layer(x, params))
    ref = ref_forward(x, params)
    assert out.shape == x.shape
    # bf16 MXU inputs + one-pass LN vs pure-f32 reference -> ~1e-3-level deviation allowed.
    assert jnp.allclose(out, ref, atol=2e-2, rtol=2e-2), "mismatch vs reference (main)"

    # Small case: N = 16 rows -> one exact (16, C) tile, no padding anywhere.
    xs = jax.random.normal(kx2, (2, 8, channel), jnp.float32)
    outs = jax.block_until_ready(mlp_encoder_layer(xs, params))
    refs = ref_forward(xs, params)
    assert outs.shape == xs.shape
    assert jnp.allclose(outs, refs, atol=2e-2, rtol=2e-2), "mismatch vs reference (small)"
    assert bool(jnp.all(jnp.isfinite(outs))), "non-finite values in small-case output"

    # Ragged case: N = 1100 rows with tr = 1024 -> partial last block (writes of OOB rows dropped).
    xr = jax.random.normal(kx3, (1, 1100, channel), jnp.float32)
    outr = jax.block_until_ready(mlp_encoder_layer(xr, params))
    refr = ref_forward(xr, params)
    assert outr.shape == xr.shape
    assert jnp.allclose(outr, refr, atol=2e-2, rtol=2e-2), "mismatch vs reference (ragged)"
    assert bool(jnp.all(jnp.isfinite(outr))), "non-finite values in ragged-case output"

    print("KERNEL_OK")
</pallas_src>

<mosaic_0001>
module attributes {stable_mosaic.version = 11 : i64} {
  func.func @encoder_kernel(%arg0: i32, %arg1: memref<1024x128xf32, #tpu.memory_space<vmem>>, %arg2: memref<8x128xf32, #tpu.memory_space<vmem>>, %arg3: memref<128x128xbf16, #tpu.memory_space<vmem>>, %arg4: memref<1x128xf32, #tpu.memory_space<vmem>>, %arg5: memref<128x128xbf16, #tpu.memory_space<vmem>>, %arg6: memref<1024x128xf32, #tpu.memory_space<vmem>>) attributes {dimension_semantics = [#tpu.dimension_semantics<parallel>], iteration_bounds = array<i64: 2>, scalar_prefetch = 0 : i64, scratch_operands = 0 : i64, tpu.core_type = #tpu.core_type<tc>, window_params = [{transform_indices = @transform_0, window_bounds = array<i64: 1024, 128>}, {pipeline_mode = #tpu.pipeline_mode<synchronous>, transform_indices = @transform_1, window_bounds = array<i64: 8, 128>}, {pipeline_mode = #tpu.pipeline_mode<synchronous>, transform_indices = @transform_2, window_bounds = array<i64: 128, 128>}, {pipeline_mode = #tpu.pipeline_mode<synchronous>, transform_indices = @transform_3, window_bounds = array<i64: 1, 128>}, {pipeline_mode = #tpu.pipeline_mode<synchronous>, transform_indices = @transform_4, window_bounds = array<i64: 128, 128>}, {transform_indices = @transform_5, window_bounds = array<i64: 1024, 128>}]} {
    %c0 = arith.constant 0 : index
    %c0_0 = arith.constant 0 : index
    %0 = vector.load %arg1[%c0, %c0_0] : memref<1024x128xf32, #tpu.memory_space<vmem>>, vector<1024x128xf32>
    %c0_1 = arith.constant 0 : index
    %c0_2 = arith.constant 0 : index
    %1 = vector.load %arg2[%c0_1, %c0_2] : memref<8x128xf32, #tpu.memory_space<vmem>>, vector<1x128xf32>
    %2 = vector.broadcast %1 : vector<1x128xf32> to vector<1024x128xf32>
    %3 = arith.mulf %0, %2 : vector<1024x128xf32>
    %c1 = arith.constant 1 : index
    %c0_3 = arith.constant 0 : index
    %4 = vector.load %arg2[%c1, %c0_3] : memref<8x128xf32, #tpu.memory_space<vmem>>, vector<1x128xf32>
    %c2 = arith.constant 2 : index
    %c0_4 = arith.constant 0 : index
    %5 = vector.load %arg2[%c2, %c0_4] : memref<8x128xf32, #tpu.memory_space<vmem>>, vector<1x128xf32>
    %cst = arith.constant dense<0.000000e+00> : vector<1024xf32>
    %6 = vector.multi_reduction <add>, %3, %cst [1] : vector<1024x128xf32> to vector<1024xf32>
    %7 = vector.shape_cast %6 : vector<1024xf32> to vector<1024x1xf32>
    %cst_5 = arith.constant 1.280000e+02 : f32
    %8 = vector.broadcast %cst_5 : f32 to vector<1024x1xf32>
    %9 = arith.divf %7, %8 : vector<1024x1xf32>
    %10 = arith.mulf %3, %3 : vector<1024x128xf32>
    %cst_6 = arith.constant dense<0.000000e+00> : vector<1024xf32>
    %11 = vector.multi_reduction <add>, %10, %cst_6 [1] : vector<1024x128xf32> to vector<1024xf32>
    %12 = vector.shape_cast %11 : vector<1024xf32> to vector<1024x1xf32>
    %cst_7 = arith.constant 1.280000e+02 : f32
    %13 = vector.broadcast %cst_7 : f32 to vector<1024x1xf32>
    %14 = arith.divf %12, %13 : vector<1024x1xf32>
    %15 = arith.mulf %9, %9 : vector<1024x1xf32>
    %16 = arith.subf %14, %15 : vector<1024x1xf32>
    %cst_8 = arith.constant 0.000000e+00 : f32
    %17 = vector.broadcast %cst_8 : f32 to vector<1024x1xf32>
    %18 = arith.maximumf %16, %17 : vector<1024x1xf32>
    %19 = vector.broadcast %9 : vector<1024x1xf32> to vector<1024x128xf32>
    %20 = arith.subf %3, %19 : vector<1024x128xf32>
    %cst_9 = arith.constant 9.99999974E-6 : f32
    %21 = vector.broadcast %cst_9 : f32 to vector<1024x1xf32>
    %22 = arith.addf %18, %21 : vector<1024x1xf32>
    %23 = math.rsqrt %22 : vector<1024x1xf32>
    %24 = vector.broadcast %23 : vector<1024x1xf32> to vector<1024x128xf32>
    %25 = arith.mulf %20, %24 : vector<1024x128xf32>
    %26 = vector.broadcast %4 : vector<1x128xf32> to vector<1024x128xf32>
    %27 = arith.mulf %25, %26 : vector<1024x128xf32>
    %28 = vector.broadcast %5 : vector<1x128xf32> to vector<1024x128xf32>
    %29 = arith.addf %27, %28 : vector<1024x128xf32>
    %30 = arith.truncf %29 : vector<1024x128xf32> to vector<1024x128xbf16>
    %c0_10 = arith.constant 0 : index
    %c0_11 = arith.constant 0 : index
    %31 = vector.load %arg3[%c0_10, %c0_11] : memref<128x128xbf16, #tpu.memory_space<vmem>>, vector<128x128xbf16>
    %cst_12 = arith.constant dense<0.000000e+00> : vector<1024x128xf32>
    %32 = tpu.matmul %30, %31, %cst_12 {dimension_numbers = #tpu.dot_dimension_numbers<[1], [0], [0], [1], [0, 0, 1, 1], [], []>} : vector<1024x128xbf16>, vector<128x128xbf16>, vector<1024x128xf32> -> vector<1024x128xf32>
    %c0_13 = arith.constant 0 : index
    %c0_14 = arith.constant 0 : index
    %33 = vector.load %arg4[%c0_13, %c0_14] : memref<1x128xf32, #tpu.memory_space<vmem>>, vector<1x128xf32>
    %34 = vector.broadcast %33 : vector<1x128xf32> to vector<1024x128xf32>
    %35 = arith.addf %32, %34 : vector<1024x128xf32>
    %36 = arith.negf %35 : vector<1024x128xf32>
    %37 = math.exp %36 : vector<1024x128xf32>
    %cst_15 = arith.constant 1.000000e+00 : f32
    %38 = vector.broadcast %cst_15 : f32 to vector<1024x128xf32>
    %39 = arith.addf %38, %37 : vector<1024x128xf32>
    %40 = arith.divf %38, %39 : vector<1024x128xf32>
    %41 = arith.mulf %35, %40 : vector<1024x128xf32>
    %42 = arith.truncf %41 : vector<1024x128xf32> to vector<1024x128xbf16>
    %c0_16 = arith.constant 0 : index
    %c0_17 = arith.constant 0 : index
    %43 = vector.load %arg5[%c0_16, %c0_17] : memref<128x128xbf16, #tpu.memory_space<vmem>>, vector<128x128xbf16>
    %cst_18 = arith.constant dense<0.000000e+00> : vector<1024x128xf32>
    %44 = tpu.matmul %42, %43, %cst_18 {dimension_numbers = #tpu.dot_dimension_numbers<[1], [0], [0], [1], [0, 0, 1, 1], [], []>} : vector<1024x128xbf16>, vector<128x128xbf16>, vector<1024x128xf32> -> vector<1024x128xf32>
    %c3 = arith.constant 3 : index
    %c0_19 = arith.constant 0 : index
    %45 = vector.load %arg2[%c3, %c0_19] : memref<8x128xf32, #tpu.memory_space<vmem>>, vector<1x128xf32>
    %46 = vector.broadcast %45 : vector<1x128xf32> to vector<1024x128xf32>
    %47 = arith.addf %44, %46 : vector<1024x128xf32>
    %cst_20 = arith.constant 2.000000e+00 : f32
    %48 = vector.broadcast %cst_20 : f32 to vector<1024x128xf32>
    %49 = arith.mulf %48, %29 : vector<1024x128xf32>
    %50 = arith.addf %49, %47 : vector<1024x128xf32>
    %c4 = arith.constant 4 : index
    %c0_21 = arith.constant 0 : index
    %51 = vector.load %arg2[%c4, %c0_21] : memref<8x128xf32, #tpu.memory_space<vmem>>, vector<1x128xf32>
    %c5 = arith.constant 5 : index
    %c0_22 = arith.constant 0 : index
    %52 = vector.load %arg2[%c5, %c0_22] : memref<8x128xf32, #tpu.memory_space<vmem>>, vector<1x128xf32>
    %cst_23 = arith.constant dense<0.000000e+00> : vector<1024xf32>
    %53 = vector.multi_reduction <add>, %50, %cst_23 [1] : vector<1024x128xf32> to vector<1024xf32>
    %54 = vector.shape_cast %53 : vector<1024xf32> to vector<1024x1xf32>
    %cst_24 = arith.constant 1.280000e+02 : f32
    %55 = vector.broadcast %cst_24 : f32 to vector<1024x1xf32>
    %56 = arith.divf %54, %55 : vector<1024x1xf32>
    %57 = arith.mulf %50, %50 : vector<1024x128xf32>
    %cst_25 = arith.constant dense<0.000000e+00> : vector<1024xf32>
    %58 = vector.multi_reduction <add>, %57, %cst_25 [1] : vector<1024x128xf32> to vector<1024xf32>
    %59 = vector.shape_cast %58 : vector<1024xf32> to vector<1024x1xf32>
    %cst_26 = arith.constant 1.280000e+02 : f32
    %60 = vector.broadcast %cst_26 : f32 to vector<1024x1xf32>
    %61 = arith.divf %59, %60 : vector<1024x1xf32>
    %62 = arith.mulf %56, %56 : vector<1024x1xf32>
    %63 = arith.subf %61, %62 : vector<1024x1xf32>
    %cst_27 = arith.constant 0.000000e+00 : f32
    %64 = vector.broadcast %cst_27 : f32 to vector<1024x1xf32>
    %65 = arith.maximumf %63, %64 : vector<1024x1xf32>
    %66 = vector.broadcast %56 : vector<1024x1xf32> to vector<1024x128xf32>
    %67 = arith.subf %50, %66 : vector<1024x128xf32>
    %cst_28 = arith.constant 9.99999974E-6 : f32
    %68 = vector.broadcast %cst_28 : f32 to vector<1024x1xf32>
    %69 = arith.addf %65, %68 : vector<1024x1xf32>
    %70 = math.rsqrt %69 : vector<1024x1xf32>
    %71 = vector.broadcast %70 : vector<1024x1xf32> to vector<1024x128xf32>
    %72 = arith.mulf %67, %71 : vector<1024x128xf32>
    %73 = vector.broadcast %51 : vector<1x128xf32> to vector<1024x128xf32>
    %74 = arith.mulf %72, %73 : vector<1024x128xf32>
    %75 = vector.broadcast %52 : vector<1x128xf32> to vector<1024x128xf32>
    %76 = arith.addf %74, %75 : vector<1024x128xf32>
    %c0_29 = arith.constant 0 : index
    %c0_30 = arith.constant 0 : index
    %77 = vector.load %arg6[%c0_29, %c0_30] : memref<1024x128xf32, #tpu.memory_space<vmem>>, vector<1024x128xf32>
    tpu.vector_store %arg6[%c0_29, %c0_30], %76 {strides = array<i32>} : memref<1024x128xf32, #tpu.memory_space<vmem>>, vector<1024x128xf32>,
    return
  }
  func.func @transform_0(%arg0: i32) -> (i32, i32) {
    %c0_i32 = arith.constant 0 : i32
    %c0_i32_0 = arith.constant 0 : i32
    return %arg0, %c0_i32 : i32, i32
  }
  func.func @transform_1(%arg0: i32) -> (i32, i32) {
    %c0_i32 = arith.constant 0 : i32
    %c0_i32_0 = arith.constant 0 : i32
    %c0_i32_1 = arith.constant 0 : i32
    return %c0_i32, %c0_i32_0 : i32, i32
  }
  func.func @transform_2(%arg0: i32) -> (i32, i32) {
    %c0_i32 = arith.constant 0 : i32
    %c0_i32_0 = arith.constant 0 : i32
    %c0_i32_1 = arith.constant 0 : i32
    return %c0_i32, %c0_i32_0 : i32, i32
  }
  func.func @transform_3(%arg0: i32) -> (i32, i32) {
    %c0_i32 = arith.constant 0 : i32
    %c0_i32_0 = arith.constant 0 : i32
    %c0_i32_1 = arith.constant 0 : i32
    return %c0_i32, %c0_i32_0 : i32, i32
  }
  func.func @transform_4(%arg0: i32) -> (i32, i32) {
    %c0_i32 = arith.constant 0 : i32
    %c0_i32_0 = arith.constant 0 : i32
    %c0_i32_1 = arith.constant 0 : i32
    return %c0_i32, %c0_i32_0 : i32, i32
  }
  func.func @transform_5(%arg0: i32) -> (i32, i32) {
    %c0_i32 = arith.constant 0 : i32
    %c0_i32_0 = arith.constant 0 : i32
    return %arg0, %c0_i32 : i32, i32
  }
}

</mosaic_0001>

<llo_original>
// kernel: mlp_encoder_layer.1
$region0: #{mlp_encoder_layer.1}
  #allocation0 [shape = 'u32[]', space=smem, size = 0x4, offset = 0x4, fixed_abs, tag = 'smem constant byte address 0x4 - core index']
  #allocation1 [shape = 'u32[144,128]{1,0:T(1,128)}', space=vmem, size = 0x12000, scoped, tag = 'internal scratch']
  %s0 = inlined_call_operand.hbm [shape: f32[2048,128], index: 0, kind: input, shape index: {}]
  %s1 = inlined_call_operand.vmem [shape: f32[8,128], index: 1, kind: input, shape index: {}]
  %s2 = inlined_call_operand.vmem [shape: bf16[128,128], index: 2, kind: input, shape index: {}]
  %s3 = inlined_call_operand.vmem [shape: f32[1,128], index: 3, kind: input, shape index: {}]
  %s4 = inlined_call_operand.vmem [shape: bf16[128,128], index: 4, kind: input, shape index: {}]
  %s5 = inlined_call_operand.hbm [shape: f32[2048,128], index: 5, kind: output, shape index: {}]
  %s6 = sld [smem:[#allocation0]]
  $region57: #{mlp_encoder_layer.1} parent=0
    _
  %s8 = ssub.s32 1, %s6
  %s9 = scalar_select 0, %s8, %s6
  $region1: #{mlp_encoder_layer.1} parent=0
    #allocation2 [shape = 'u8[1048576]{0}', space=vmem, size = 0x100000, scoped, tag = 'input window, operand 0']
    #allocation3 [shape = 's32[2]{0}', space=sflag, size = 0x8, scoped, tag = 'scoped memory for mlp_encoder_layer.1']
    #allocation4 [shape = 's32[2]{0}', space=sflag, size = 0x8, scoped, tag = 'scoped memory for mlp_encoder_layer.1']
    #allocation5 [shape = 'u8[1048576]{0}', space=vmem, size = 0x100000, scoped, tag = 'output window, operand 0']
    %10 = vsyncpa [#allocation3], 0
    %s11 = scalar_lea.sflag [#allocation3], 1
    %12 = vsyncpa %s11, 0
    %13 = vsyncpa [#allocation4], 0
    %s14 = scalar_lea.sflag [#allocation4], 1
    %15 = vsyncpa %s14, 0
    loop: start=0, step=1, limit=4
    $region2: #{mlp_encoder_layer.1} parent=1 // loop_pre_header
      _
    $region3: #{mlp_encoder_layer.1} parent=1 // loop_header
      %s17 = sphi 0, %s21
      %p18 = scmp.ge.s32.totalorder %s17, 4
      %s27 = sphi 0, %s29
      %s30 = sphi 0, %s27
      %s31 = sphi 0, %s30
      %s47 = sphi 0, %s31
      %s51 = sphi 0, %s51
      %s53 = sphi 0, %s51
      %s54 = sphi 0, %s53
      %s68 = sphi 0, %s54
      %s72 = sphi 0, %s72
      %s74 = sphi 0, %s72
      %s75 = sphi 0, %s74
      %s89 = sphi 0, %s75
      %s93 = sphi 0, %s93
      %s95 = sphi 0, %s93
      %s96 = sphi 0, %s95
      %s110 = sphi 0, %s96
      %s114 = sphi 0, %s114
      %s116 = sphi 0, %s114
      %s117 = sphi 0, %s116
      %s131 = sphi 0, %s117
      %s137 = sphi 0, %s139
      %s140 = sphi 0, %s137
      %s141 = sphi 0, %s140
      %s157 = sphi 0, %s141
    $region4: #{mlp_encoder_layer.1} parent=1 // loop_header_branch
      %20 = sbr.rel (%p18) target = $region8
    $region5: #{mlp_encoder_layer.1} parent=1 // loop_body
      %s22 = ssub.s32 %s17, 1
      %s23 = ssub.s32 %s17, 2
      %s24 = sadd.s32 %s17, 1
      %s25 = ssub.s32 %s17, %s24
      %p26 = scmp.eq.s32.totalorder %s25, 0
      %s28 = sadd.s32 %s27, 1
      %s29 = scalar_select %p26, %s27, %s28
      %p32 = pneg %p26
      %p33 = scmp.eq.s32.totalorder %s17, 1
      %p34 = por %p32, %p33
      %p35 = scmp.ne.s32.totalorder %s27, %s30
      %p36 = scmp.eq.s32.totalorder %s17, 0
      %p37 = por %p35, %p36
      %p38 = scmp.ne.s32.totalorder %s27, %s30
      %p39 = scmp.eq.s32.totalorder %s22, 1
      %p40 = por %p38, %p39
      %p41 = scmp.ne.s32.totalorder %s30, %s31
      %p42 = scmp.eq.s32.totalorder %s22, 0
      %p43 = por %p41, %p42
      %p44 = scmp.ne.s32.totalorder %s30, %s31
      %p45 = scmp.eq.s32.totalorder %s23, 1
      %p46 = por %p44, %p45
      %p48 = scmp.ne.s32.totalorder %s31, %s47
      %p49 = scmp.eq.s32.totalorder %s23, 0
      %p50 = por %p48, %p49
      %s52 = sadd.s32 %s51, 1
      %p55 = scmp.eq.s32.totalorder %s17, 1
      %p56 = scmp.ne.s32.totalorder %s51, %s53
      %p57 = scmp.eq.s32.totalorder %s17, 0
      %p58 = por %p56, %p57
      %p59 = scmp.ne.s32.totalorder %s51, %s53
      %p60 = scmp.eq.s32.totalorder %s22, 1
      %p61 = por %p59, %p60
      %p62 = scmp.ne.s32.totalorder %s53, %s54
      %p63 = scmp.eq.s32.totalorder %s22, 0
      %p64 = por %p62, %p63
      %p65 = scmp.ne.s32.totalorder %s53, %s54
      %p66 = scmp.eq.s32.totalorder %s23, 1
      %p67 = por %p65, %p66
      %p69 = scmp.ne.s32.totalorder %s54, %s68
      %p70 = scmp.eq.s32.totalorder %s23, 0
      %p71 = por %p69, %p70
      %s73 = sadd.s32 %s72, 1
      %p76 = scmp.eq.s32.totalorder %s17, 1
      %p77 = scmp.ne.s32.totalorder %s72, %s74
      %p78 = scmp.eq.s32.totalorder %s17, 0
      %p79 = por %p77, %p78
      %p80 = scmp.ne.s32.totalorder %s72, %s74
      %p81 = scmp.eq.s32.totalorder %s22, 1
      %p82 = por %p80, %p81
      %p83 = scmp.ne.s32.totalorder %s74, %s75
      %p84 = scmp.eq.s32.totalorder %s22, 0
      %p85 = por %p83, %p84
      %p86 = scmp.ne.s32.totalorder %s74, %s75
      %p87 = scmp.eq.s32.totalorder %s23, 1
      %p88 = por %p86, %p87
      %p90 = scmp.ne.s32.totalorder %s75, %s89
      %p91 = scmp.eq.s32.totalorder %s23, 0
      %p92 = por %p90, %p91
      %s94 = sadd.s32 %s93, 1
      %p97 = scmp.eq.s32.totalorder %s17, 1
      %p98 = scmp.ne.s32.totalorder %s93, %s95
      %p99 = scmp.eq.s32.totalorder %s17, 0
      %p100 = por %p98, %p99
      %p101 = scmp.ne.s32.totalorder %s93, %s95
      %p102 = scmp.eq.s32.totalorder %s22, 1
      %p103 = por %p101, %p102
      %p104 = scmp.ne.s32.totalorder %s95, %s96
      %p105 = scmp.eq.s32.totalorder %s22, 0
      %p106 = por %p104, %p105
      %p107 = scmp.ne.s32.totalorder %s95, %s96
      %p108 = scmp.eq.s32.totalorder %s23, 1
      %p109 = por %p107, %p108
      %p111 = scmp.ne.s32.totalorder %s96, %s110
      %p112 = scmp.eq.s32.totalorder %s23, 0
      %p113 = por %p111, %p112
      %s115 = sadd.s32 %s114, 1
      %p118 = scmp.eq.s32.totalorder %s17, 1
      %p119 = scmp.ne.s32.totalorder %s114, %s116
      %p120 = scmp.eq.s32.totalorder %s17, 0
      %p121 = por %p119, %p120
      %p122 = scmp.ne.s32.totalorder %s114, %s116
      %p123 = scmp.eq.s32.totalorder %s22, 1
      %p124 = por %p122, %p123
      %p125 = scmp.ne.s32.totalorder %s116, %s117
      %p126 = scmp.eq.s32.totalorder %s22, 0
      %p127 = por %p125, %p126
      %p128 = scmp.ne.s32.totalorder %s116, %s117
      %p129 = scmp.eq.s32.totalorder %s23, 1
      %p130 = por %p128, %p129
      %p132 = scmp.ne.s32.totalorder %s117, %s131
      %p133 = scmp.eq.s32.totalorder %s23, 0
      %p134 = por %p132, %p133
      %s135 = ssub.s32 %s17, %s24
      %p136 = scmp.eq.s32.totalorder %s135, 0
      %s138 = sadd.s32 %s137, 1
      %s139 = scalar_select %p136, %s137, %s138
      %p142 = pneg %p136
      %p143 = scmp.eq.s32.totalorder %s17, 1
      %p144 = por %p142, %p143
      %p145 = scmp.ne.s32.totalorder %s137, %s140
      %p146 = scmp.eq.s32.totalorder %s17, 0
      %p147 = por %p145, %p146
      %p148 = scmp.ne.s32.totalorder %s137, %s140
      %p149 = scmp.eq.s32.totalorder %s22, 1
      %p150 = por %p148, %p149
      %p151 = scmp.ne.s32.totalorder %s140, %s141
      %p152 = scmp.eq.s32.totalorder %s22, 0
      %p153 = por %p151, %p152
      %p154 = scmp.ne.s32.totalorder %s140, %s141
      %p155 = scmp.eq.s32.totalorder %s23, 1
      %p156 = por %p154, %p155
      %p158 = scmp.ne.s32.totalorder %s141, %s157
      %p159 = scmp.eq.s32.totalorder %s23, 0
      %p160 = por %p158, %p159
      %p161 = scmp.le.s32.totalorder 1, %s17
      %p162 = scmp.lt.s32.totalorder %s17, 3
      %p163 = pnand %p161, %p162
      %p164 = pneg %p163
      // Predicated region
      $region9: #{mlp_encoder_layer.1} parent=5 // pred_check
        _
      $region10: #{mlp_encoder_layer.1} parent=5 // pred_check_branch
        %166 = sbr.rel (%p163) target = $region12
      $region11: #{mlp_encoder_layer.1} parent=5 // pred_region
        %s167 = ssub.s32 %s17, 1
        // Predicated region
        $region13: #{mlp_encoder_layer.1} parent=11 // pred_check
          %p168 = pneg %p64
        $region14: #{mlp_encoder_layer.1} parent=11 // pred_check_branch
          %170 = sbr.rel (%p168) target = $region16
        $region15: #{mlp_encoder_layer.1} parent=11 // pred_region
          _
        $region16: #{mlp_encoder_layer.1} parent=11 // pred_fallthru
          _
        // Predicated region
        $region17: #{mlp_encoder_layer.1} parent=11 // pred_check
          %p171 = pneg %p85
        $region18: #{mlp_encoder_layer.1} parent=11 // pred_check_branch
          %173 = sbr.rel (%p171) target = $region20
        $region19: #{mlp_encoder_layer.1} parent=11 // pred_region
          _
        $region20: #{mlp_encoder_layer.1} parent=11 // pred_fallthru
          _
        // Predicated region
        $region21: #{mlp_encoder_layer.1} parent=11 // pred_check
          %p174 = pneg %p106
        $region22: #{mlp_encoder_layer.1} parent=11 // pred_check_branch
          %176 = sbr.rel (%p174) target = $region24
        $region23: #{mlp_encoder_layer.1} parent=11 // pred_region
          _
        $region24: #{mlp_encoder_layer.1} parent=11 // pred_fallthru
          _
        // Predicated region
        $region25: #{mlp_encoder_layer.1} parent=11 // pred_check
          %p177 = pneg %p127
        $region26: #{mlp_encoder_layer.1} parent=11 // pred_check_branch
          %179 = sbr.rel (%p177) target = $region28
        $region27: #{mlp_encoder_layer.1} parent=11 // pred_region
          _
        $region28: #{mlp_encoder_layer.1} parent=11 // pred_fallthru
          _
      $region12: #{mlp_encoder_layer.1} parent=5 // pred_fallthru
        _
      %p180 = scmp.lt.s32.totalorder %s17, 2
      // Predicated region
      $region29: #{mlp_encoder_layer.1} parent=5 // pred_check
        %p181 = pneg %p180
      $region30: #{mlp_encoder_layer.1} parent=5 // pred_check_branch
        %183 = sbr.rel (%p181) target = $region32
      $region31: #{mlp_encoder_layer.1} parent=5 // pred_region
        // Predicated region
        $region33: #{mlp_encoder_layer.1} parent=31 // pred_check
          %p184 = pneg %p37
        $region34: #{mlp_encoder_layer.1} parent=31 // pred_check_branch
          %186 = sbr.rel (%p184) target = $region36
        $region35: #{mlp_encoder_layer.1} parent=31 // pred_region
          %s187 = sand.u32 %s27, 1
          %s188 = scalar_lea.sflag [#allocation3], %s187
          %s189 = sand.u32 %s27, 1
          %s190 = smul.addr %s189, 1024
          %s191 = scalar_lea.vmem [#allocation2], %s190
          %s192 = smul.u32 128, %s17
          %s194 = ssub.s32 16384, 16384
          %195 = vsyncadd %s188, %s194
          %s196 = smul.addr %s192, 128
          %s197 = scalar_lea.hbm %s0, %s196
          %s198 = sshll.u32 %s191, 4
          %s199 = int_to_ptr.vmem [resolvable:$true] %s198
          %204 = dma.hbm_to_vmem [thread:$0]  %s197, 16384, %s199, %s188, 128, 128, 8
        $region36: #{mlp_encoder_layer.1} parent=31 // pred_fallthru
          _
      $region32: #{mlp_encoder_layer.1} parent=5 // pred_fallthru
        _
      %p205 = scmp.le.s32.totalorder 1, %s17
      %p206 = scmp.lt.s32.totalorder %s17, 3
      %p207 = pnand %p205, %p206
      %p208 = pneg %p207
      // Predicated region
      $region37: #{mlp_encoder_layer.1} parent=5 // pred_check
        _
      $region38: #{mlp_encoder_layer.1} parent=5 // pred_check_branch
        %210 = sbr.rel (%p207) target = $region40
      $region39: #{mlp_encoder_layer.1} parent=5 // pred_region
        %s211 = ssub.s32 %s17, 1
        %s212 = sand.u32 %s30, 1
        %s213 = scalar_lea.sflag [#allocation3], %s212
        %s214 = sand.u32 %s30, 1
        %s215 = smul.addr %s214, 1024
        %s216 = scalar_lea.vmem [#allocation2], %s215
        // Predicated region
        $region41: #{mlp_encoder_layer.1} parent=39 // pred_check
          %p217 = pneg %p43
        $region42: #{mlp_encoder_layer.1} parent=39 // pred_check_branch
          %219 = sbr.rel (%p217) target = $region44
        $region43: #{mlp_encoder_layer.1} parent=39 // pred_region
          %220 = dma.done %s213, 16384
        $region44: #{mlp_encoder_layer.1} parent=39 // pred_fallthru
          _
        %s221 = sand.u32 %s30, 1
        %s222 = scalar_lea.sflag [#allocation3], %s221
        %s223 = sand.u32 %s30, 1
        %s224 = smul.addr %s223, 1024
        %s225 = scalar_lea.vmem [#allocation2], %s224
        %p226 = pneg %p43
        %p227 = pneg %p40
        %p228 = pneg %p64
        %p229 = pneg %p61
        %p230 = pneg %p85
        %p231 = pneg %p82
        %p232 = pneg %p106
        %p233 = pneg %p103
        %p234 = pneg %p127
        %p235 = pneg %p124
        %p236 = pneg %p153
        %p237 = pneg %p150
        %s238 = sand.u32 %s140, 1
        %s239 = scalar_lea.sflag [#allocation4], %s238
        %s240 = sand.u32 %s140, 1
        %s241 = smul.addr %s240, 1024
        %s242 = scalar_lea.vmem [#allocation5], %s241
        %s243 = smul.u32 128, %s22
        %s244 = smul.u32 128, %s22
        %v246 = vld [vmem:[%s216] sm:$0xff]
        %v247 = vld [vmem:[%s216 + $0x8] sm:$0xff]
        %v248 = vld [vmem:[%s216 + $0x10] sm:$0xff]
        %v249 = vld [vmem:[%s216 + $0x18] sm:$0xff]
        %v250 = vld [vmem:[%s216 + $0x20] sm:$0xff]
        %v251 = vld [vmem:[%s216 + $0x28] sm:$0xff]
        %v252 = vld [vmem:[%s216 + $0x30] sm:$0xff]
        %v253 = vld [vmem:[%s216 + $0x38] sm:$0xff]
        %v254 = vld [vmem:[%s216 + $0x40] sm:$0xff]
        %v255 = vld [vmem:[%s216 + $0x48] sm:$0xff]
        %v256 = vld [vmem:[%s216 + $0x50] sm:$0xff]
        %v257 = vld [vmem:[%s216 + $0x58] sm:$0xff]
        %v258 = vld [vmem:[%s216 + $0x60] sm:$0xff]
        %v259 = vld [vmem:[%s216 + $0x68] sm:$0xff]
        %v260 = vld [vmem:[%s216 + $0x70] sm:$0xff]
        %v261 = vld [vmem:[%s216 + $0x78] sm:$0xff]
        %v262 = vld [vmem:[%s216 + $0x80] sm:$0xff]
        %v263 = vld [vmem:[%s216 + $0x88] sm:$0xff]
        %v264 = vld [vmem:[%s216 + $0x90] sm:$0xff]
        %v265 = vld [vmem:[%s216 + $0x98] sm:$0xff]
        %v266 = vld [vmem:[%s216 + $0xa0] sm:$0xff]
        %v267 = vld [vmem:[%s216 + $0xa8] sm:$0xff]
        %v268 = vld [vmem:[%s216 + $0xb0] sm:$0xff]
        %v269 = vld [vmem:[%s216 + $0xb8] sm:$0xff]
        %v270 = vld [vmem:[%s216 + $0xc0] sm:$0xff]
        %v271 = vld [vmem:[%s216 + $0xc8] sm:$0xff]
        %v272 = vld [vmem:[%s216 + $0xd0] sm:$0xff]
        %v273 = vld [vmem:[%s216 + $0xd8] sm:$0xff]
        %v274 = vld [vmem:[%s216 + $0xe0] sm:$0xff]
        %v275 = vld [vmem:[%s216 + $0xe8] sm:$0xff]
        %v276 = vld [vmem:[%s216 + $0xf0] sm:$0xff]
        %v277 = vld [vmem:[%s216 + $0xf8] sm:$0xff]
        %v278 = vld [vmem:[%s216 + $0x100] sm:$0xff]
        %v279 = vld [vmem:[%s216 + $0x108] sm:$0xff]
        %v280 = vld [vmem:[%s216 + $0x110] sm:$0xff]
        %v281 = vld [vmem:[%s216 + $0x118] sm:$0xff]
        %v282 = vld [vmem:[%s216 + $0x120] sm:$0xff]
        %v283 = vld [vmem:[%s216 + $0x128] sm:$0xff]
        %v284 = vld [vmem:[%s216 + $0x130] sm:$0xff]
        %v285 = vld [vmem:[%s216 + $0x138] sm:$0xff]
        %v286 = vld [vmem:[%s216 + $0x140] sm:$0xff]
        %v287 = vld [vmem:[%s216 + $0x148] sm:$0xff]
        %v288 = vld [vmem:[%s216 + $0x150] sm:$0xff]
        %v289 = vld [vmem:[%s216 + $0x158] sm:$0xff]
        %v290 = vld [vmem:[%s216 + $0x160] sm:$0xff]
        %v291 = vld [vmem:[%s216 + $0x168] sm:$0xff]
        %v292 = vld [vmem:[%s216 + $0x170] sm:$0xff]
        %v293 = vld [vmem:[%s216 + $0x178] sm:$0xff]
        %v294 = vld [vmem:[%s216 + $0x180] sm:$0xff]
        %v295 = vld [vmem:[%s216 + $0x188] sm:$0xff]
        %v296 = vld [vmem:[%s216 + $0x190] sm:$0xff]
        %v297 = vld [vmem:[%s216 + $0x198] sm:$0xff]
        %v298 = vld [vmem:[%s216 + $0x1a0] sm:$0xff]
        %v299 = vld [vmem:[%s216 + $0x1a8] sm:$0xff]
        %v300 = vld [vmem:[%s216 + $0x1b0] sm:$0xff]
        %v301 = vld [vmem:[%s216 + $0x1b8] sm:$0xff]
        %v302 = vld [vmem:[%s216 + $0x1c0] sm:$0xff]
        %v303 = vld [vmem:[%s216 + $0x1c8] sm:$0xff]
        %v304 = vld [vmem:[%s216 + $0x1d0] sm:$0xff]
        %v305 = vld [vmem:[%s216 + $0x1d8] sm:$0xff]
        %v306 = vld [vmem:[%s216 + $0x1e0] sm:$0xff]
        %v307 = vld [vmem:[%s216 + $0x1e8] sm:$0xff]
        %v308 = vld [vmem:[%s216 + $0x1f0] sm:$0xff]
        %v309 = vld [vmem:[%s216 + $0x1f8] sm:$0xff]
        %v310 = vld [vmem:[%s216 + $0x200] sm:$0xff]
        %v311 = vld [vmem:[%s216 + $0x208] sm:$0xff]
        %v312 = vld [vmem:[%s216 + $0x210] sm:$0xff]
        %v313 = vld [vmem:[%s216 + $0x218] sm:$0xff]
        %v314 = vld [vmem:[%s216 + $0x220] sm:$0xff]
        %v315 = vld [vmem:[%s216 + $0x228] sm:$0xff]
        %v316 = vld [vmem:[%s216 + $0x230] sm:$0xff]
        %v317 = vld [vmem:[%s216 + $0x238] sm:$0xff]
        %v318 = vld [vmem:[%s216 + $0x240] sm:$0xff]
        %v319 = vld [vmem:[%s216 + $0x248] sm:$0xff]
        %v320 = vld [vmem:[%s216 + $0x250] sm:$0xff]
        %v321 = vld [vmem:[%s216 + $0x258] sm:$0xff]
        %v322 = vld [vmem:[%s216 + $0x260] sm:$0xff]
        %v323 = vld [vmem:[%s216 + $0x268] sm:$0xff]
        %v324 = vld [vmem:[%s216 + $0x270] sm:$0xff]
        %v325 = vld [vmem:[%s216 + $0x278] sm:$0xff]
        %v326 = vld [vmem:[%s216 + $0x280] sm:$0xff]
        %v327 = vld [vmem:[%s216 + $0x288] sm:$0xff]
        %v328 = vld [vmem:[%s216 + $0x290] sm:$0xff]
        %v329 = vld [vmem:[%s216 + $0x298] sm:$0xff]
        %v330 = vld [vmem:[%s216 + $0x2a0] sm:$0xff]
        %v331 = vld [vmem:[%s216 + $0x2a8] sm:$0xff]
        %v332 = vld [vmem:[%s216 + $0x2b0] sm:$0xff]
        %v333 = vld [vmem:[%s216 + $0x2b8] sm:$0xff]
        %v334 = vld [vmem:[%s216 + $0x2c0] sm:$0xff]
        %v335 = vld [vmem:[%s216 + $0x2c8] sm:$0xff]
        %v336 = vld [vmem:[%s216 + $0x2d0] sm:$0xff]
        %v337 = vld [vmem:[%s216 + $0x2d8] sm:$0xff]
        %v338 = vld [vmem:[%s216 + $0x2e0] sm:$0xff]
        %v339 = vld [vmem:[%s216 + $0x2e8] sm:$0xff]
        %v340 = vld [vmem:[%s216 + $0x2f0] sm:$0xff]
        %v341 = vld [vmem:[%s216 + $0x2f8] sm:$0xff]
        %v342 = vld [vmem:[%s216 + $0x300] sm:$0xff]
        %v343 = vld [vmem:[%s216 + $0x308] sm:$0xff]
        %v344 = vld [vmem:[%s216 + $0x310] sm:$0xff]
        %v345 = vld [vmem:[%s216 + $0x318] sm:$0xff]
        %v346 = vld [vmem:[%s216 + $0x320] sm:$0xff]
        %v347 = vld [vmem:[%s216 + $0x328] sm:$0xff]
        %v348 = vld [vmem:[%s216 + $0x330] sm:$0xff]
        %v349 = vld [vmem:[%s216 + $0x338] sm:$0xff]
        %v350 = vld [vmem:[%s216 + $0x340] sm:$0xff]
        %v351 = vld [vmem:[%s216 + $0x348] sm:$0xff]
        %v352 = vld [vmem:[%s216 + $0x350] sm:$0xff]
        %v353 = vld [vmem:[%s216 + $0x358] sm:$0xff]
        %v354 = vld [vmem:[%s216 + $0x360] sm:$0xff]
        %v355 = vld [vmem:[%s216 + $0x368] sm:$0xff]
        %v356 = vld [vmem:[%s216 + $0x370] sm:$0xff]
        %v357 = vld [vmem:[%s216 + $0x378] sm:$0xff]
        %v358 = vld [vmem:[%s216 + $0x380] sm:$0xff]
        %v359 = vld [vmem:[%s216 + $0x388] sm:$0xff]
        %v360 = vld [vmem:[%s216 + $0x390] sm:$0xff]
        %v361 = vld [vmem:[%s216 + $0x398] sm:$0xff]
        %v362 = vld [vmem:[%s216 + $0x3a0] sm:$0xff]
        %v363 = vld [vmem:[%s216 + $0x3a8] sm:$0xff]
        %v364 = vld [vmem:[%s216 + $0x3b0] sm:$0xff]
        %v365 = vld [vmem:[%s216 + $0x3b8] sm:$0xff]
        %v366 = vld [vmem:[%s216 + $0x3c0] sm:$0xff]
        %v367 = vld [vmem:[%s216 + $0x3c8] sm:$0xff]
        %v368 = vld [vmem:[%s216 + $0x3d0] sm:$0xff]
        %v369 = vld [vmem:[%s216 + $0x3d8] sm:$0xff]
        %v370 = vld [vmem:[%s216 + $0x3e0] sm:$0xff]
        %v371 = vld [vmem:[%s216 + $0x3e8] sm:$0xff]
        %v372 = vld [vmem:[%s216 + $0x3f0] sm:$0xff]
        %v373 = vld [vmem:[%s216 + $0x3f8] sm:$0xff]
        %v374 = vld [vmem:[%s1] sm:$0x1]
        %v375 = vlaneseq
        %v376 = vshrl.u32 %v375, 7
        %v377 = vsub.s32 0, %v376
        %v378 = vrot.slane %v374, %v377
        %v379 = vmul.f32 %v246, %v378
        %v380 = vmul.f32 %v247, %v378
        %v381 = vmul.f32 %v248, %v378
        %v382 = vmul.f32 %v249, %v378
        %v383 = vmul.f32 %v250, %v378
        %v384 = vmul.f32 %v251, %v378
        %v385 = vmul.f32 %v252, %v378
        %v386 = vmul.f32 %v253, %v378
        %v387 = vmul.f32 %v254, %v378
        %v388 = vmul.f32 %v255, %v378
        %v389 = vmul.f32 %v256, %v378
        %v390 = vmul.f32 %v257, %v378
        %v391 = vmul.f32 %v258, %v378
        %v392 = vmul.f32 %v259, %v378
        %v393 = vmul.f32 %v260, %v378
        %v394 = vmul.f32 %v261, %v378
        %v395 = vmul.f32 %v262, %v378
        %v396 = vmul.f32 %v263, %v378
        %v397 = vmul.f32 %v264, %v378
        %v398 = vmul.f32 %v265, %v378
        %v399 = vmul.f32 %v266, %v378
        %v400 = vmul.f32 %v267, %v378
        %v401 = vmul.f32 %v268, %v378
        %v402 = vmul.f32 %v269, %v378
        %v403 = vmul.f32 %v270, %v378
        %v404 = vmul.f32 %v271, %v378
        %v405 = vmul.f32 %v272, %v378
        %v406 = vmul.f32 %v273, %v378
        %v407 = vmul.f32 %v274, %v378
        %v408 = vmul.f32 %v275, %v378
        %v409 = vmul.f32 %v276, %v378
        %v410 = vmul.f32 %v277, %v378
        %v411 = vmul.f32 %v278, %v378
        %v412 = vmul.f32 %v279, %v378
        %v413 = vmul.f32 %v280, %v378
        %v414 = vmul.f32 %v281, %v378
        %v415 = vmul.f32 %v282, %v378
        %v416 = vmul.f32 %v283, %v378
        %v417 = vmul.f32 %v284, %v378
        %v418 = vmul.f32 %v285, %v378
        %v419 = vmul.f32 %v286, %v378
        %v420 = vmul.f32 %v287, %v378
        %v421 = vmul.f32 %v288, %v378
        %v422 = vmul.f32 %v289, %v378
        %v423 = vmul.f32 %v290, %v378
        %v424 = vmul.f32 %v291, %v378
        %v425 = vmul.f32 %v292, %v378
        %v426 = vmul.f32 %v293, %v378
        %v427 = vmul.f32 %v294, %v378
        %v428 = vmul.f32 %v295, %v378
        %v429 = vmul.f32 %v296, %v378
        %v430 = vmul.f32 %v297, %v378
        %v431 = vmul.f32 %v298, %v378
        %v432 = vmul.f32 %v299, %v378
        %v433 = vmul.f32 %v300, %v378
        %v434 = vmul.f32 %v301, %v378
        %v435 = vmul.f32 %v302, %v378
        %v436 = vmul.f32 %v303, %v378
        %v437 = vmul.f32 %v304, %v378
        %v438 = vmul.f32 %v305, %v378
        %v439 = vmul.f32 %v306, %v378
        %v440 = vmul.f32 %v307, %v378
        %v441 = vmul.f32 %v308, %v378
        %v442 = vmul.f32 %v309, %v378
        %v443 = vmul.f32 %v310, %v378
        %v444 = vmul.f32 %v311, %v378
        %v445 = vmul.f32 %v312, %v378
        %v446 = vmul.f32 %v313, %v378
        %v447 = vmul.f32 %v314, %v378
        %v448 = vmul.f32 %v315, %v378
        %v449 = vmul.f32 %v316, %v378
        %v450 = vmul.f32 %v317, %v378
        %v451 = vmul.f32 %v318, %v378
        %v452 = vmul.f32 %v319, %v378
        %v453 = vmul.f32 %v320, %v378
        %v454 = vmul.f32 %v321, %v378
        %v455 = vmul.f32 %v322, %v378
        %v456 = vmul.f32 %v323, %v378
        %v457 = vmul.f32 %v324, %v378
        %v458 = vmul.f32 %v325, %v378
        %v459 = vmul.f32 %v326, %v378
        %v460 = vmul.f32 %v327, %v378
        %v461 = vmul.f32 %v328, %v378
        %v462 = vmul.f32 %v329, %v378
        %v463 = vmul.f32 %v330, %v378
        %v464 = vmul.f32 %v331, %v378
        %v465 = vmul.f32 %v332, %v378
        %v466 = vmul.f32 %v333, %v378
        %v467 = vmul.f32 %v334, %v378
        %v468 = vmul.f32 %v335, %v378
        %v469 = vmul.f32 %v336, %v378
        %v470 = vmul.f32 %v337, %v378
        %v471 = vmul.f32 %v338, %v378
        %v472 = vmul.f32 %v339, %v378
        %v473 = vmul.f32 %v340, %v378
        %v474 = vmul.f32 %v341, %v378
        %v475 = vmul.f32 %v342, %v378
        %v476 = vmul.f32 %v343, %v378
        %v477 = vmul.f32 %v344, %v378
        %v478 = vmul.f32 %v345, %v378
        %v479 = vmul.f32 %v346, %v378
        %v480 = vmul.f32 %v347, %v378
        %v481 = vmul.f32 %v348, %v378
        %v482 = vmul.f32 %v349, %v378
        %v483 = vmul.f32 %v350, %v378
        %v484 = vmul.f32 %v351, %v378
        %v485 = vmul.f32 %v352, %v378
        %v486 = vmul.f32 %v353, %v378
        %v487 = vmul.f32 %v354, %v378
        %v488 = vmul.f32 %v355, %v378
        %v489 = vmul.f32 %v356, %v378
        %v490 = vmul.f32 %v357, %v378
        %v491 = vmul.f32 %v358, %v378
        %v492 = vmul.f32 %v359, %v378
        %v493 = vmul.f32 %v360, %v378
        %v494 = vmul.f32 %v361, %v378
        %v495 = vmul.f32 %v362, %v378
        %v496 = vmul.f32 %v363, %v378
        %v497 = vmul.f32 %v364, %v378
        %v498 = vmul.f32 %v365, %v378
        %v499 = vmul.f32 %v366, %v378
        %v500 = vmul.f32 %v367, %v378
        %v501 = vmul.f32 %v368, %v378
        %v502 = vmul.f32 %v369, %v378
        %v503 = vmul.f32 %v370, %v378
        %v504 = vmul.f32 %v371, %v378
        %v505 = vmul.f32 %v372, %v378
        %v506 = vmul.f32 %v373, %v378
        %v507 = vld [vmem:[%s1 + $0x1] sm:$0x1]
        %v508 = vld [vmem:[%s1 + $0x2] sm:$0x1]
        %509 = vadd.xlane.f32.xlu0 %v379
        %v510 = vpop.xlane.xlu0 %509
        %511 = vadd.xlane.f32.xlu0 %v380
        %v512 = vpop.xlane.xlu0 %511
        %513 = vadd.xlane.f32.xlu0 %v381
        %v514 = vpop.xlane.xlu0 %513
        %515 = vadd.xlane.f32.xlu0 %v382
        %v516 = vpop.xlane.xlu0 %515
        %517 = vadd.xlane.f32.xlu0 %v383
        %v518 = vpop.xlane.xlu0 %517
        %519 = vadd.xlane.f32.xlu0 %v384
        %v520 = vpop.xlane.xlu0 %519
        %521 = vadd.xlane.f32.xlu0 %v385
        %v522 = vpop.xlane.xlu0 %521
        %523 = vadd.xlane.f32.xlu0 %v386
        %v524 = vpop.xlane.xlu0 %523
        %525 = vadd.xlane.f32.xlu0 %v387
        %v526 = vpop.xlane.xlu0 %525
        %527 = vadd.xlane.f32.xlu0 %v388
        %v528 = vpop.xlane.xlu0 %527
        %529 = vadd.xlane.f32.xlu0 %v389
        %v530 = vpop.xlane.xlu0 %529
        %531 = vadd.xlane.f32.xlu0 %v390
        %v532 = vpop.xlane.xlu0 %531
        %533 = vadd.xlane.f32.xlu0 %v391
        %v534 = vpop.xlane.xlu0 %533
        %535 = vadd.xlane.f32.xlu0 %v392
        %v536 = vpop.xlane.xlu0 %535
        %537 = vadd.xlane.f32.xlu0 %v393
        %v538 = vpop.xlane.xlu0 %537
        %539 = vadd.xlane.f32.xlu0 %v394
        %v540 = vpop.xlane.xlu0 %539
        %541 = vadd.xlane.f32.xlu0 %v395
        %v542 = vpop.xlane.xlu0 %541
        %543 = vadd.xlane.f32.xlu0 %v396
        %v544 = vpop.xlane.xlu0 %543
        %545 = vadd.xlane.f32.xlu0 %v397
        %v546 = vpop.xlane.xlu0 %545
        %547 = vadd.xlane.f32.xlu0 %v398
        %v548 = vpop.xlane.xlu0 %547
        %549 = vadd.xlane.f32.xlu0 %v399
        %v550 = vpop.xlane.xlu0 %549
        %551 = vadd.xlane.f32.xlu0 %v400
        %v552 = vpop.xlane.xlu0 %551
        %553 = vadd.xlane.f32.xlu0 %v401
        %v554 = vpop.xlane.xlu0 %553
        %555 = vadd.xlane.f32.xlu0 %v402
        %v556 = vpop.xlane.xlu0 %555
        %557 = vadd.xlane.f32.xlu0 %v403
        %v558 = vpop.xlane.xlu0 %557
        %559 = vadd.xlane.f32.xlu0 %v404
        %v560 = vpop.xlane.xlu0 %559
        %561 = vadd.xlane.f32.xlu0 %v405
        %v562 = vpop.xlane.xlu0 %561
        %563 = vadd.xlane.f32.xlu0 %v406
        %v564 = vpop.xlane.xlu0 %563
        %565 = vadd.xlane.f32.xlu0 %v407
        %v566 = vpop.xlane.xlu0 %565
        %567 = vadd.xlane.f32.xlu0 %v408
        %v568 = vpop.xlane.xlu0 %567
        %569 = vadd.xlane.f32.xlu0 %v409
        %v570 = vpop.xlane.xlu0 %569
        %571 = vadd.xlane.f32.xlu0 %v410
        %v572 = vpop.xlane.xlu0 %571
        %573 = vadd.xlane.f32.xlu0 %v411
        %v574 = vpop.xlane.xlu0 %573
        %575 = vadd.xlane.f32.xlu0 %v412
        %v576 = vpop.xlane.xlu0 %575
        %577 = vadd.xlane.f32.xlu0 %v413
        %v578 = vpop.xlane.xlu0 %577
        %579 = vadd.xlane.f32.xlu0 %v414
        %v580 = vpop.xlane.xlu0 %579
        %581 = vadd.xlane.f32.xlu0 %v415
        %v582 = vpop.xlane.xlu0 %581
        %583 = vadd.xlane.f32.xlu0 %v416
        %v584 = vpop.xlane.xlu0 %583
        %585 = vadd.xlane.f32.xlu0 %v417
        %v586 = vpop.xlane.xlu0 %585
        %587 = vadd.xlane.f32.xlu0 %v418
        %v588 = vpop.xlane.xlu0 %587
        %589 = vadd.xlane.f32.xlu0 %v419
        %v590 = vpop.xlane.xlu0 %589
        %591 = vadd.xlane.f32.xlu0 %v420
        %v592 = vpop.xlane.xlu0 %591
        %593 = vadd.xlane.f32.xlu0 %v421
        %v594 = vpop.xlane.xlu0 %593
        %595 = vadd.xlane.f32.xlu0 %v422
        %v596 = vpop.xlane.xlu0 %595
        %597 = vadd.xlane.f32.xlu0 %v423
        %v598 = vpop.xlane.xlu0 %597
        %599 = vadd.xlane.f32.xlu0 %v424
        %v600 = vpop.xlane.xlu0 %599
        %601 = vadd.xlane.f32.xlu0 %v425
        %v602 = vpop.xlane.xlu0 %601
        %603 = vadd.xlane.f32.xlu0 %v426
        %v604 = vpop.xlane.xlu0 %603
        %605 = vadd.xlane.f32.xlu0 %v427
        %v606 = vpop.xlane.xlu0 %605
        %607 = vadd.xlane.f32.xlu0 %v428
        %v608 = vpop.xlane.xlu0 %607
        %609 = vadd.xlane.f32.xlu0 %v429
        %v610 = vpop.xlane.xlu0 %609
        %611 = vadd.xlane.f32.xlu0 %v430
        %v612 = vpop.xlane.xlu0 %611
        %613 = vadd.xlane.f32.xlu0 %v431
        %v614 = vpop.xlane.xlu0 %613
        %615 = vadd.xlane.f32.xlu0 %v432
        %v616 = vpop.xlane.xlu0 %615
        %617 = vadd.xlane.f32.xlu0 %v433
        %v618 = vpop.xlane.xlu0 %617
        %619 = vadd.xlane.f32.xlu0 %v434
        %v620 = vpop.xlane.xlu0 %619
        %621 = vadd.xlane.f32.xlu0 %v435
        %v622 = vpop.xlane.xlu0 %621
        %623 = vadd.xlane.f32.xlu0 %v436
        %v624 = vpop.xlane.xlu0 %623
        %625 = vadd.xlane.f32.xlu0 %v437
        %v626 = vpop.xlane.xlu0 %625
        %627 = vadd.xlane.f32.xlu0 %v438
        %v628 = vpop.xlane.xlu0 %627
        %629 = vadd.xlane.f32.xlu0 %v439
        %v630 = vpop.xlane.xlu0 %629
        %631 = vadd.xlane.f32.xlu0 %v440
        %v632 = vpop.xlane.xlu0 %631
        %633 = vadd.xlane.f32.xlu0 %v441
        %v634 = vpop.xlane.xlu0 %633
        %635 = vadd.xlane.f32.xlu0 %v442
        %v636 = vpop.xlane.xlu0 %635
        %637 = vadd.xlane.f32.xlu0 %v443
        %v638 = vpop.xlane.xlu0 %637
        %639 = vadd.xlane.f32.xlu0 %v444
        %v640 = vpop.xlane.xlu0 %639
        %641 = vadd.xlane.f32.xlu0 %v445
        %v642 = vpop.xlane.xlu0 %641
        %643 = vadd.xlane.f32.xlu0 %v446
        %v644 = vpop.xlane.xlu0 %643
        %645 = vadd.xlane.f32.xlu0 %v447
        %v646 = vpop.xlane.xlu0 %645
        %647 = vadd.xlane.f32.xlu0 %v448
        %v648 = vpop.xlane.xlu0 %647
        %649 = vadd.xlane.f32.xlu0 %v449
        %v650 = vpop.xlane.xlu0 %649
        %651 = vadd.xlane.f32.xlu0 %v450
        %v652 = vpop.xlane.xlu0 %651
        %653 = vadd.xlane.f32.xlu0 %v451
        %v654 = vpop.xlane.xlu0 %653
        %655 = vadd.xlane.f32.xlu0 %v452
        %v656 = vpop.xlane.xlu0 %655
        %657 = vadd.xlane.f32.xlu0 %v453
        %v658 = vpop.xlane.xlu0 %657
        %659 = vadd.xlane.f32.xlu0 %v454
        %v660 = vpop.xlane.xlu0 %659
        %661 = vadd.xlane.f32.xlu0 %v455
        %v662 = vpop.xlane.xlu0 %661
        %663 = vadd.xlane.f32.xlu0 %v456
        %v664 = vpop.xlane.xlu0 %663
        %665 = vadd.xlane.f32.xlu0 %v457
        %v666 = vpop.xlane.xlu0 %665
        %667 = vadd.xlane.f32.xlu0 %v458
        %v668 = vpop.xlane.xlu0 %667
        %669 = vadd.xlane.f32.xlu0 %v459
        %v670 = vpop.xlane.xlu0 %669
        %671 = vadd.xlane.f32.xlu0 %v460
        %v672 = vpop.xlane.xlu0 %671
        %673 = vadd.xlane.f32.xlu0 %v461
        %v674 = vpop.xlane.xlu0 %673
        %675 = vadd.xlane.f32.xlu0 %v462
        %v676 = vpop.xlane.xlu0 %675
        %677 = vadd.xlane.f32.xlu0 %v463
        %v678 = vpop.xlane.xlu0 %677
        %679 = vadd.xlane.f32.xlu0 %v464
        %v680 = vpop.xlane.xlu0 %679
        %681 = vadd.xlane.f32.xlu0 %v465
        %v682 = vpop.xlane.xlu0 %681
        %683 = vadd.xlane.f32.xlu0 %v466
        %v684 = vpop.xlane.xlu0 %683
        %685 = vadd.xlane.f32.xlu0 %v467
        %v686 = vpop.xlane.xlu0 %685
        %687 = vadd.xlane.f32.xlu0 %v468
        %v688 = vpop.xlane.xlu0 %687
        %689 = vadd.xlane.f32.xlu0 %v469
        %v690 = vpop.xlane.xlu0 %689
        %691 = vadd.xlane.f32.xlu0 %v470
        %v692 = vpop.xlane.xlu0 %691
        %693 = vadd.xlane.f32.xlu0 %v471
        %v694 = vpop.xlane.xlu0 %693
        %695 = vadd.xlane.f32.xlu0 %v472
        %v696 = vpop.xlane.xlu0 %695
        %697 = vadd.xlane.f32.xlu0 %v473
        %v698 = vpop.xlane.xlu0 %697
        %699 = vadd.xlane.f32.xlu0 %v474
        %v700 = vpop.xlane.xlu0 %699
        %701 = vadd.xlane.f32.xlu0 %v475
        %v702 = vpop.xlane.xlu0 %701
        %703 = vadd.xlane.f32.xlu0 %v476
        %v704 = vpop.xlane.xlu0 %703
        %705 = vadd.xlane.f32.xlu0 %v477
        %v706 = vpop.xlane.xlu0 %705
        %707 = vadd.xlane.f32.xlu0 %v478
        %v708 = vpop.xlane.xlu0 %707
        %709 = vadd.xlane.f32.xlu0 %v479
        %v710 = vpop.xlane.xlu0 %709
        %711 = vadd.xlane.f32.xlu0 %v480
        %v712 = vpop.xlane.xlu0 %711
        %713 = vadd.xlane.f32.xlu0 %v481
        %v714 = vpop.xlane.xlu0 %713
        %715 = vadd.xlane.f32.xlu0 %v482
        %v716 = vpop.xlane.xlu0 %715
        %717 = vadd.xlane.f32.xlu0 %v483
        %v718 = vpop.xlane.xlu0 %717
        %719 = vadd.xlane.f32.xlu0 %v484
        %v720 = vpop.xlane.xlu0 %719
        %721 = vadd.xlane.f32.xlu0 %v485
        %v722 = vpop.xlane.xlu0 %721
        %723 = vadd.xlane.f32.xlu0 %v486
        %v724 = vpop.xlane.xlu0 %723
        %725 = vadd.xlane.f32.xlu0 %v487
        %v726 = vpop.xlane.xlu0 %725
        %727 = vadd.xlane.f32.xlu0 %v488
        %v728 = vpop.xlane.xlu0 %727
        %729 = vadd.xlane.f32.xlu0 %v489
        %v730 = vpop.xlane.xlu0 %729
        %731 = vadd.xlane.f32.xlu0 %v490
        %v732 = vpop.xlane.xlu0 %731
        %733 = vadd.xlane.f32.xlu0 %v491
        %v734 = vpop.xlane.xlu0 %733
        %735 = vadd.xlane.f32.xlu0 %v492
        %v736 = vpop.xlane.xlu0 %735
        %737 = vadd.xlane.f32.xlu0 %v493
        %v738 = vpop.xlane.xlu0 %737
        %739 = vadd.xlane.f32.xlu0 %v494
        %v740 = vpop.xlane.xlu0 %739
        %741 = vadd.xlane.f32.xlu0 %v495
        %v742 = vpop.xlane.xlu0 %741
        %743 = vadd.xlane.f32.xlu0 %v496
        %v744 = vpop.xlane.xlu0 %743
        %745 = vadd.xlane.f32.xlu0 %v497
        %v746 = vpop.xlane.xlu0 %745
        %747 = vadd.xlane.f32.xlu0 %v498
        %v748 = vpop.xlane.xlu0 %747
        %749 = vadd.xlane.f32.xlu0 %v499
        %v750 = vpop.xlane.xlu0 %749
        %751 = vadd.xlane.f32.xlu0 %v500
        %v752 = vpop.xlane.xlu0 %751
        %753 = vadd.xlane.f32.xlu0 %v501
        %v754 = vpop.xlane.xlu0 %753
        %755 = vadd.xlane.f32.xlu0 %v502
        %v756 = vpop.xlane.xlu0 %755
        %757 = vadd.xlane.f32.xlu0 %v503
        %v758 = vpop.xlane.xlu0 %757
        %759 = vadd.xlane.f32.xlu0 %v504
        %v760 = vpop.xlane.xlu0 %759
        %761 = vadd.xlane.f32.xlu0 %v505
        %v762 = vpop.xlane.xlu0 %761
        %763 = vadd.xlane.f32.xlu0 %v506
        %v764 = vpop.xlane.xlu0 %763
        %v765 = vrcp.pop 128.0
        %v766 = vmul.f32 %v510, %v765
        %v767 = vmul.f32 %v512, %v765
        %v768 = vmul.f32 %v514, %v765
        %v769 = vmul.f32 %v516, %v765
        %v770 = vmul.f32 %v518, %v765
        %v771 = vmul.f32 %v520, %v765
        %v772 = vmul.f32 %v522, %v765
        %v773 = vmul.f32 %v524, %v765
        %v774 = vmul.f32 %v526, %v765
        %v775 = vmul.f32 %v528, %v765
        %v776 = vmul.f32 %v530, %v765
        %v777 = vmul.f32 %v532, %v765
        %v778 = vmul.f32 %v534, %v765
        %v779 = vmul.f32 %v536, %v765
        %v780 = vmul.f32 %v538, %v765
        %v781 = vmul.f32 %v540, %v765
        %v782 = vmul.f32 %v542, %v765
        %v783 = vmul.f32 %v544, %v765
        %v784 = vmul.f32 %v546, %v765
        %v785 = vmul.f32 %v548, %v765
        %v786 = vmul.f32 %v550, %v765
        %v787 = vmul.f32 %v552, %v765
        %v788 = vmul.f32 %v554, %v765
        %v789 = vmul.f32 %v556, %v765
        %v790 = vmul.f32 %v558, %v765
        %v791 = vmul.f32 %v560, %v765
        %v792 = vmul.f32 %v562, %v765
        %v793 = vmul.f32 %v564, %v765
        %v794 = vmul.f32 %v566, %v765
        %v795 = vmul.f32 %v568, %v765
        %v796 = vmul.f32 %v570, %v765
        %v797 = vmul.f32 %v572, %v765
        %v798 = vmul.f32 %v574, %v765
        %v799 = vmul.f32 %v576, %v765
        %v800 = vmul.f32 %v578, %v765
        %v801 = vmul.f32 %v580, %v765
        %v802 = vmul.f32 %v582, %v765
        %v803 = vmul.f32 %v584, %v765
        %v804 = vmul.f32 %v586, %v765
        %v805 = vmul.f32 %v588, %v765
        %v806 = vmul.f32 %v590, %v765
        %v807 = vmul.f32 %v592, %v765
        %v808 = vmul.f32 %v594, %v765
        %v809 = vmul.f32 %v596, %v765
        %v810 = vmul.f32 %v598, %v765
        %v811 = vmul.f32 %v600, %v765
        %v812 = vmul.f32 %v602, %v765
        %v813 = vmul.f32 %v604, %v765
        %v814 = vmul.f32 %v606, %v765
        %v815 = vmul.f32 %v608, %v765
        %v816 = vmul.f32 %v610, %v765
        %v817 = vmul.f32 %v612, %v765
        %v818 = vmul.f32 %v614, %v765
        %v819 = vmul.f32 %v616, %v765
        %v820 = vmul.f32 %v618, %v765
        %v821 = vmul.f32 %v620, %v765
        %v822 = vmul.f32 %v622, %v765
        %v823 = vmul.f32 %v624, %v765
        %v824 = vmul.f32 %v626, %v765
        %v825 = vmul.f32 %v628, %v765
        %v826 = vmul.f32 %v630, %v765
        %v827 = vmul.f32 %v632, %v765
        %v828 = vmul.f32 %v634, %v765
        %v829 = vmul.f32 %v636, %v765
        %v830 = vmul.f32 %v638, %v765
        %v831 = vmul.f32 %v640, %v765
        %v832 = vmul.f32 %v642, %v765
        %v833 = vmul.f32 %v644, %v765
        %v834 = vmul.f32 %v646, %v765
        %v835 = vmul.f32 %v648, %v765
        %v836 = vmul.f32 %v650, %v765
        %v837 = vmul.f32 %v652, %v765
        %v838 = vmul.f32 %v654, %v765
        %v839 = vmul.f32 %v656, %v765
        %v840 = vmul.f32 %v658, %v765
        %v841 = vmul.f32 %v660, %v765
        %v842 = vmul.f32 %v662, %v765
        %v843 = vmul.f32 %v664, %v765
        %v844 = vmul.f32 %v666, %v765
        %v845 = vmul.f32 %v668, %v765
        %v846 = vmul.f32 %v670, %v765
        %v847 = vmul.f32 %v672, %v765
        %v848 = vmul.f32 %v674, %v765
        %v849 = vmul.f32 %v676, %v765
        %v850 = vmul.f32 %v678, %v765
        %v851 = vmul.f32 %v680, %v765
        %v852 = vmul.f32 %v682, %v765
        %v853 = vmul.f32 %v684, %v765
        %v854 = vmul.f32 %v686, %v765
        %v855 = vmul.f32 %v688, %v765
        %v856 = vmul.f32 %v690, %v765
        %v857 = vmul.f32 %v692, %v765
        %v858 = vmul.f32 %v694, %v765
        %v859 = vmul.f32 %v696, %v765
        %v860 = vmul.f32 %v698, %v765
        %v861 = vmul.f32 %v700, %v765
        %v862 = vmul.f32 %v702, %v765
        %v863 = vmul.f32 %v704, %v765
        %v864 = vmul.f32 %v706, %v765
        %v865 = vmul.f32 %v708, %v765
        %v866 = vmul.f32 %v710, %v765
        %v867 = vmul.f32 %v712, %v765
        %v868 = vmul.f32 %v714, %v765
        %v869 = vmul.f32 %v716, %v765
        %v870 = vmul.f32 %v718, %v765
        %v871 = vmul.f32 %v720, %v765
        %v872 = vmul.f32 %v722, %v765
        %v873 = vmul.f32 %v724, %v765
        %v874 = vmul.f32 %v726, %v765
        %v875 = vmul.f32 %v728, %v765
        %v876 = vmul.f32 %v730, %v765
        %v877 = vmul.f32 %v732, %v765
        %v878 = vmul.f32 %v734, %v765
        %v879 = vmul.f32 %v736, %v765
        %v880 = vmul.f32 %v738, %v765
        %v881 = vmul.f32 %v740, %v765
        %v882 = vmul.f32 %v742, %v765
        %v883 = vmul.f32 %v744, %v765
        %v884 = vmul.f32 %v746, %v765
        %v885 = vmul.f32 %v748, %v765
        %v886 = vmul.f32 %v750, %v765
        %v887 = vmul.f32 %v752, %v765
        %v888 = vmul.f32 %v754, %v765
        %v889 = vmul.f32 %v756, %v765
        %v890 = vmul.f32 %v758, %v765
        %v891 = vmul.f32 %v760, %v765
        %v892 = vmul.f32 %v762, %v765
        %v893 = vmul.f32 %v764, %v765
        %v894 = vmul.f32 %v379, %v379
        %v895 = vmul.f32 %v380, %v380
        %v896 = vmul.f32 %v381, %v381
        %v897 = vmul.f32 %v382, %v382
        %v898 = vmul.f32 %v383, %v383
        %v899 = vmul.f32 %v384, %v384
        %v900 = vmul.f32 %v385, %v385
        %v901 = vmul.f32 %v386, %v386
        %v902 = vmul.f32 %v387, %v387
        %v903 = vmul.f32 %v388, %v388
        %v904 = vmul.f32 %v389, %v389
        %v905 = vmul.f32 %v390, %v390
        %v906 = vmul.f32 %v391, %v391
        %v907 = vmul.f32 %v392, %v392
        %v908 = vmul.f32 %v393, %v393
        %v909 = vmul.f32 %v394, %v394
        %v910 = vmul.f32 %v395, %v395
        %v911 = vmul.f32 %v396, %v396
        %v912 = vmul.f32 %v397, %v397
        %v913 = vmul.f32 %v398, %v398
        %v914 = vmul.f32 %v399, %v399
        %v915 = vmul.f32 %v400, %v400
        %v916 = vmul.f32 %v401, %v401
        %v917 = vmul.f32 %v402, %v402
        %v918 = vmul.f32 %v403, %v403
        %v919 = vmul.f32 %v404, %v404
        %v920 = vmul.f32 %v405, %v405
        %v921 = vmul.f32 %v406, %v406
        %v922 = vmul.f32 %v407, %v407
        %v923 = vmul.f32 %v408, %v408
        %v924 = vmul.f32 %v409, %v409
        %v925 = vmul.f32 %v410, %v410
        %v926 = vmul.f32 %v411, %v411
        %v927 = vmul.f32 %v412, %v412
        %v928 = vmul.f32 %v413, %v413
        %v929 = vmul.f32 %v414, %v414
        %v930 = vmul.f32 %v415, %v415
        %v931 = vmul.f32 %v416, %v416
        %v932 = vmul.f32 %v417, %v417
        %v933 = vmul.f32 %v418, %v418
        %v934 = vmul.f32 %v419, %v419
        %v935 = vmul.f32 %v420, %v420
        %v936 = vmul.f32 %v421, %v421
        %v937 = vmul.f32 %v422, %v422
        %v938 = vmul.f32 %v423, %v423
        %v939 = vmul.f32 %v424, %v424
        %v940 = vmul.f32 %v425, %v425
        %v941 = vmul.f32 %v426, %v426
        %v942 = vmul.f32 %v427, %v427
        %v943 = vmul.f32 %v428, %v428
        %v944 = vmul.f32 %v429, %v429
        %v945 = vmul.f32 %v430, %v430
        %v946 = vmul.f32 %v431, %v431
        %v947 = vmul.f32 %v432, %v432
        %v948 = vmul.f32 %v433, %v433
        %v949 = vmul.f32 %v434, %v434
        %v950 = vmul.f32 %v435, %v435
        %v951 = vmul.f32 %v436, %v436
        %v952 = vmul.f32 %v437, %v437
        %v953 = vmul.f32 %v438, %v438
        %v954 = vmul.f32 %v439, %v439
        %v955 = vmul.f32 %v440, %v440
        %v956 = vmul.f32 %v441, %v441
        %v957 = vmul.f32 %v442, %v442
        %v958 = vmul.f32 %v443, %v443
        %v959 = vmul.f32 %v444, %v444
        %v960 = vmul.f32 %v445, %v445
        %v961 = vmul.f32 %v446, %v446
        %v962 = vmul.f32 %v447, %v447
        %v963 = vmul.f32 %v448, %v448
        %v964 = vmul.f32 %v449, %v449
        %v965 = vmul.f32 %v450, %v450
        %v966 = vmul.f32 %v451, %v451
        %v967 = vmul.f32 %v452, %v452
        %v968 = vmul.f32 %v453, %v453
        %v969 = vmul.f32 %v454, %v454
        %v970 = vmul.f32 %v455, %v455
        %v971 = vmul.f32 %v456, %v456
        %v972 = vmul.f32 %v457, %v457
        %v973 = vmul.f32 %v458, %v458
        %v974 = vmul.f32 %v459, %v459
        %v975 = vmul.f32 %v460, %v460
        %v976 = vmul.f32 %v461, %v461
        %v977 = vmul.f32 %v462, %v462
        %v978 = vmul.f32 %v463, %v463
        %v979 = vmul.f32 %v464, %v464
        %v980 = vmul.f32 %v465, %v465
        %v981 = vmul.f32 %v466, %v466
        %v982 = vmul.f32 %v467, %v467
        %v983 = vmul.f32 %v468, %v468
        %v984 = vmul.f32 %v469, %v469
        %v985 = vmul.f32 %v470, %v470
        %v986 = vmul.f32 %v471, %v471
        %v987 = vmul.f32 %v472, %v472
        %v988 = vmul.f32 %v473, %v473
        %v989 = vmul.f32 %v474, %v474
        %v990 = vmul.f32 %v475, %v475
        %v991 = vmul.f32 %v476, %v476
        %v992 = vmul.f32 %v477, %v477
        %v993 = vmul.f32 %v478, %v478
        %v994 = vmul.f32 %v479, %v479
        %v995 = vmul.f32 %v480, %v480
        %v996 = vmul.f32 %v481, %v481
        %v997 = vmul.f32 %v482, %v482
        %v998 = vmul.f32 %v483, %v483
        %v999 = vmul.f32 %v484, %v484
        %v1000 = vmul.f32 %v485, %v485
        %v1001 = vmul.f32 %v486, %v486
        %v1002 = vmul.f32 %v487, %v487
        %v1003 = vmul.f32 %v488, %v488
        %v1004 = vmul.f32 %v489, %v489
        %v1005 = vmul.f32 %v490, %v490
        %v1006 = vmul.f32 %v491, %v491
        %v1007 = vmul.f32 %v492, %v492
        %v1008 = vmul.f32 %v493, %v493
        %v1009 = vmul.f32 %v494, %v494
        %v1010 = vmul.f32 %v495, %v495
        %v1011 = vmul.f32 %v496, %v496
        %v1012 = vmul.f32 %v497, %v497
        %v1013 = vmul.f32 %v498, %v498
        %v1014 = vmul.f32 %v499, %v499
        %v1015 = vmul.f32 %v500, %v500
        %v1016 = vmul.f32 %v501, %v501
        %v1017 = vmul.f32 %v502, %v502
        %v1018 = vmul.f32 %v503, %v503
        %v1019 = vmul.f32 %v504, %v504
        %v1020 = vmul.f32 %v505, %v505
        %v1021 = vmul.f32 %v506, %v506
        %1022 = vadd.xlane.f32.xlu0 %v894
        %v1023 = vpop.xlane.xlu0 %1022
        %1024 = vadd.xlane.f32.xlu0 %v895
        %v1025 = vpop.xlane.xlu0 %1024
        %1026 = vadd.xlane.f32.xlu0 %v896
        %v1027 = vpop.xlane.xlu0 %1026
        %1028 = vadd.xlane.f32.xlu0 %v897
        %v1029 = vpop.xlane.xlu0 %1028
        %1030 = vadd.xlane.f32.xlu0 %v898
        %v1031 = vpop.xlane.xlu0 %1030
        %1032 = vadd.xlane.f32.xlu0 %v899
        %v1033 = vpop.xlane.xlu0 %1032
        %1034 = vadd.xlane.f32.xlu0 %v900
        %v1035 = vpop.xlane.xlu0 %1034
        %1036 = vadd.xlane.f32.xlu0 %v901
        %v1037 = vpop.xlane.xlu0 %1036
        %1038 = vadd.xlane.f32.xlu0 %v902
        %v1039 = vpop.xlane.xlu0 %1038
        %1040 = vadd.xlane.f32.xlu0 %v903
        %v1041 = vpop.xlane.xlu0 %1040
        %1042 = vadd.xlane.f32.xlu0 %v904
        %v1043 = vpop.xlane.xlu0 %1042
        %1044 = vadd.xlane.f32.xlu0 %v905
        %v1045 = vpop.xlane.xlu0 %1044
        %1046 = vadd.xlane.f32.xlu0 %v906
        %v1047 = vpop.xlane.xlu0 %1046
        %1048 = vadd.xlane.f32.xlu0 %v907
        %v1049 = vpop.xlane.xlu0 %1048
        %1050 = vadd.xlane.f32.xlu0 %v908
        %v1051 = vpop.xlane.xlu0 %1050
        %1052 = vadd.xlane.f32.xlu0 %v909
        %v1053 = vpop.xlane.xlu0 %1052
        %1054 = vadd.xlane.f32.xlu0 %v910
        %v1055 = vpop.xlane.xlu0 %1054
        %1056 = vadd.xlane.f32.xlu0 %v911
        %v1057 = vpop.xlane.xlu0 %1056
        %1058 = vadd.xlane.f32.xlu0 %v912
        %v1059 = vpop.xlane.xlu0 %1058
        %1060 = vadd.xlane.f32.xlu0 %v913
        %v1061 = vpop.xlane.xlu0 %1060
        %1062 = vadd.xlane.f32.xlu0 %v914
        %v1063 = vpop.xlane.xlu0 %1062
        %1064 = vadd.xlane.f32.xlu0 %v915
        %v1065 = vpop.xlane.xlu0 %1064
        %1066 = vadd.xlane.f32.xlu0 %v916
        %v1067 = vpop.xlane.xlu0 %1066
        %1068 = vadd.xlane.f32.xlu0 %v917
        %v1069 = vpop.xlane.xlu0 %1068
        %1070 = vadd.xlane.f32.xlu0 %v918
        %v1071 = vpop.xlane.xlu0 %1070
        %1072 = vadd.xlane.f32.xlu0 %v919
        %v1073 = vpop.xlane.xlu0 %1072
        %1074 = vadd.xlane.f32.xlu0 %v920
        %v1075 = vpop.xlane.xlu0 %1074
        %1076 = vadd.xlane.f32.xlu0 %v921
        %v1077 = vpop.xlane.xlu0 %1076
        %1078 = vadd.xlane.f32.xlu0 %v922
        %v1079 = vpop.xlane.xlu0 %1078
        %1080 = vadd.xlane.f32.xlu0 %v923
        %v1081 = vpop.xlane.xlu0 %1080
        %1082 = vadd.xlane.f32.xlu0 %v924
        %v1083 = vpop.xlane.xlu0 %1082
        %1084 = vadd.xlane.f32.xlu0 %v925
        %v1085 = vpop.xlane.xlu0 %1084
        %1086 = vadd.xlane.f32.xlu0 %v926
        %v1087 = vpop.xlane.xlu0 %1086
        %1088 = vadd.xlane.f32.xlu0 %v927
        %v1089 = vpop.xlane.xlu0 %1088
        %1090 = vadd.xlane.f32.xlu0 %v928
        %v1091 = vpop.xlane.xlu0 %1090
        %1092 = vadd.xlane.f32.xlu0 %v929
        %v1093 = vpop.xlane.xlu0 %1092
        %1094 = vadd.xlane.f32.xlu0 %v930
        %v1095 = vpop.xlane.xlu0 %1094
        %1096 = vadd.xlane.f32.xlu0 %v931
        %v1097 = vpop.xlane.xlu0 %1096
        %1098 = vadd.xlane.f32.xlu0 %v932
        %v1099 = vpop.xlane.xlu0 %1098
        %1100 = vadd.xlane.f32.xlu0 %v933
        %v1101 = vpop.xlane.xlu0 %1100
        %1102 = vadd.xlane.f32.xlu0 %v934
        %v1103 = vpop.xlane.xlu0 %1102
        %1104 = vadd.xlane.f32.xlu0 %v935
        %v1105 = vpop.xlane.xlu0 %1104
        %1106 = vadd.xlane.f32.xlu0 %v936
        %v1107 = vpop.xlane.xlu0 %1106
        %1108 = vadd.xlane.f32.xlu0 %v937
        %v1109 = vpop.xlane.xlu0 %1108
        %1110 = vadd.xlane.f32.xlu0 %v938
        %v1111 = vpop.xlane.xlu0 %1110
        %1112 = vadd.xlane.f32.xlu0 %v939
        %v1113 = vpop.xlane.xlu0 %1112
        %1114 = vadd.xlane.f32.xlu0 %v940
        %v1115 = vpop.xlane.xlu0 %1114
        %1116 = vadd.xlane.f32.xlu0 %v941
        %v1117 = vpop.xlane.xlu0 %1116
        %1118 = vadd.xlane.f32.xlu0 %v942
        %v1119 = vpop.xlane.xlu0 %1118
        %1120 = vadd.xlane.f32.xlu0 %v943
        %v1121 = vpop.xlane.xlu0 %1120
        %1122 = vadd.xlane.f32.xlu0 %v944
        %v1123 = vpop.xlane.xlu0 %1122
        %1124 = vadd.xlane.f32.xlu0 %v945
        %v1125 = vpop.xlane.xlu0 %1124
        %1126 = vadd.xlane.f32.xlu0 %v946
        %v1127 = vpop.xlane.xlu0 %1126
        %1128 = vadd.xlane.f32.xlu0 %v947
        %v1129 = vpop.xlane.xlu0 %1128
        %1130 = vadd.xlane.f32.xlu0 %v948
        %v1131 = vpop.xlane.xlu0 %1130
        %1132 = vadd.xlane.f32.xlu0 %v949
        %v1133 = vpop.xlane.xlu0 %1132
        %1134 = vadd.xlane.f32.xlu0 %v950
        %v1135 = vpop.xlane.xlu0 %1134
        %1136 = vadd.xlane.f32.xlu0 %v951
        %v1137 = vpop.xlane.xlu0 %1136
        %1138 = vadd.xlane.f32.xlu0 %v952
        %v1139 = vpop.xlane.xlu0 %1138
        %1140 = vadd.xlane.f32.xlu0 %v953
        %v1141 = vpop.xlane.xlu0 %1140
        %1142 = vadd.xlane.f32.xlu0 %v954
        %v1143 = vpop.xlane.xlu0 %1142
        %1144 = vadd.xlane.f32.xlu0 %v955
        %v1145 = vpop.xlane.xlu0 %1144
        %1146 = vadd.xlane.f32.xlu0 %v956
        %v1147 = vpop.xlane.xlu0 %1146
        %1148 = vadd.xlane.f32.xlu0 %v957
        %v1149 = vpop.xlane.xlu0 %1148
        %1150 = vadd.xlane.f32.xlu0 %v958
        %v1151 = vpop.xlane.xlu0 %1150
        %1152 = vadd.xlane.f32.xlu0 %v959
        %v1153 = vpop.xlane.xlu0 %1152
        %1154 = vadd.xlane.f32.xlu0 %v960
        %v1155 = vpop.xlane.xlu0 %1154
        %1156 = vadd.xlane.f32.xlu0 %v961
        %v1157 = vpop.xlane.xlu0 %1156
        %1158 = vadd.xlane.f32.xlu0 %v962
        %v1159 = vpop.xlane.xlu0 %1158
        %1160 = vadd.xlane.f32.xlu0 %v963
        %v1161 = vpop.xlane.xlu0 %1160
        %1162 = vadd.xlane.f32.xlu0 %v964
        %v1163 = vpop.xlane.xlu0 %1162
        %1164 = vadd.xlane.f32.xlu0 %v965
        %v1165 = vpop.xlane.xlu0 %1164
        %1166 = vadd.xlane.f32.xlu0 %v966
        %v1167 = vpop.xlane.xlu0 %1166
        %1168 = vadd.xlane.f32.xlu0 %v967
        %v1169 = vpop.xlane.xlu0 %1168
        %1170 = vadd.xlane.f32.xlu0 %v968
        %v1171 = vpop.xlane.xlu0 %1170
        %1172 = vadd.xlane.f32.xlu0 %v969
        %v1173 = vpop.xlane.xlu0 %1172
        %1174 = vadd.xlane.f32.xlu0 %v970
        %v1175 = vpop.xlane.xlu0 %1174
        %1176 = vadd.xlane.f32.xlu0 %v971
        %v1177 = vpop.xlane.xlu0 %1176
        %1178 = vadd.xlane.f32.xlu0 %v972
        %v1179 = vpop.xlane.xlu0 %1178
        %1180 = vadd.xlane.f32.xlu0 %v973
        %v1181 = vpop.xlane.xlu0 %1180
        %1182 = vadd.xlane.f32.xlu0 %v974
        %v1183 = vpop.xlane.xlu0 %1182
        %1184 = vadd.xlane.f32.xlu0 %v975
        %v1185 = vpop.xlane.xlu0 %1184
        %1186 = vadd.xlane.f32.xlu0 %v976
        %v1187 = vpop.xlane.xlu0 %1186
        %1188 = vadd.xlane.f32.xlu0 %v977
        %v1189 = vpop.xlane.xlu0 %1188
        %1190 = vadd.xlane.f32.xlu0 %v978
        %v1191 = vpop.xlane.xlu0 %1190
        %1192 = vadd.xlane.f32.xlu0 %v979
        %v1193 = vpop.xlane.xlu0 %1192
        %1194 = vadd.xlane.f32.xlu0 %v980
        %v1195 = vpop.xlane.xlu0 %1194
        %1196 = vadd.xlane.f32.xlu0 %v981
        %v1197 = vpop.xlane.xlu0 %1196
        %1198 = vadd.xlane.f32.xlu0 %v982
        %v1199 = vpop.xlane.xlu0 %1198
        %1200 = vadd.xlane.f32.xlu0 %v983
        %v1201 = vpop.xlane.xlu0 %1200
        %1202 = vadd.xlane.f32.xlu0 %v984
        %v1203 = vpop.xlane.xlu0 %1202
        %1204 = vadd.xlane.f32.xlu0 %v985
        %v1205 = vpop.xlane.xlu0 %1204
        %1206 = vadd.xlane.f32.xlu0 %v986
        %v1207 = vpop.xlane.xlu0 %1206
        %1208 = vadd.xlane.f32.xlu0 %v987
        %v1209 = vpop.xlane.xlu0 %1208
        %1210 = vadd.xlane.f32.xlu0 %v988
        %v1211 = vpop.xlane.xlu0 %1210
        %1212 = vadd.xlane.f32.xlu0 %v989
        %v1213 = vpop.xlane.xlu0 %1212
        %1214 = vadd.xlane.f32.xlu0 %v990
        %v1215 = vpop.xlane.xlu0 %1214
        %1216 = vadd.xlane.f32.xlu0 %v991
        %v1217 = vpop.xlane.xlu0 %1216
        %1218 = vadd.xlane.f32.xlu0 %v992
        %v1219 = vpop.xlane.xlu0 %1218
        %1220 = vadd.xlane.f32.xlu0 %v993
        %v1221 = vpop.xlane.xlu0 %1220
        %1222 = vadd.xlane.f32.xlu0 %v994
        %v1223 = vpop.xlane.xlu0 %1222
        %1224 = vadd.xlane.f32.xlu0 %v995
        %v1225 = vpop.xlane.xlu0 %1224
        %1226 = vadd.xlane.f32.xlu0 %v996
        %v1227 = vpop.xlane.xlu0 %1226
        %1228 = vadd.xlane.f32.xlu0 %v997
        %v1229 = vpop.xlane.xlu0 %1228
        %1230 = vadd.xlane.f32.xlu0 %v998
        %v1231 = vpop.xlane.xlu0 %1230
        %1232 = vadd.xlane.f32.xlu0 %v999
        %v1233 = vpop.xlane.xlu0 %1232
        %1234 = vadd.xlane.f32.xlu0 %v1000
        %v1235 = vpop.xlane.xlu0 %1234
        %1236 = vadd.xlane.f32.xlu0 %v1001
        %v1237 = vpop.xlane.xlu0 %1236
        %1238 = vadd.xlane.f32.xlu0 %v1002
        %v1239 = vpop.xlane.xlu0 %1238
        %1240 = vadd.xlane.f32.xlu0 %v1003
        %v1241 = vpop.xlane.xlu0 %1240
        %1242 = vadd.xlane.f32.xlu0 %v1004
        %v1243 = vpop.xlane.xlu0 %1242
        %1244 = vadd.xlane.f32.xlu0 %v1005
        %v1245 = vpop.xlane.xlu0 %1244
        %1246 = vadd.xlane.f32.xlu0 %v1006
        %v1247 = vpop.xlane.xlu0 %1246
        %1248 = vadd.xlane.f32.xlu0 %v1007
        %v1249 = vpop.xlane.xlu0 %1248
        %1250 = vadd.xlane.f32.xlu0 %v1008
        %v1251 = vpop.xlane.xlu0 %1250
        %1252 = vadd.xlane.f32.xlu0 %v1009
        %v1253 = vpop.xlane.xlu0 %1252
        %1254 = vadd.xlane.f32.xlu0 %v1010
        %v1255 = vpop.xlane.xlu0 %1254
        %1256 = vadd.xlane.f32.xlu0 %v1011
        %v1257 = vpop.xlane.xlu0 %1256
        %1258 = vadd.xlane.f32.xlu0 %v1012
        %v1259 = vpop.xlane.xlu0 %1258
        %1260 = vadd.xlane.f32.xlu0 %v1013
        %v1261 = vpop.xlane.xlu0 %1260
        %1262 = vadd.xlane.f32.xlu0 %v1014
        %v1263 = vpop.xlane.xlu0 %1262
        %1264 = vadd.xlane.f32.xlu0 %v1015
        %v1265 = vpop.xlane.xlu0 %1264
        %1266 = vadd.xlane.f32.xlu0 %v1016
        %v1267 = vpop.xlane.xlu0 %1266
        %1268 = vadd.xlane.f32.xlu0 %v1017
        %v1269 = vpop.xlane.xlu0 %1268
        %1270 = vadd.xlane.f32.xlu0 %v1018
        %v1271 = vpop.xlane.xlu0 %1270
        %1272 = vadd.xlane.f32.xlu0 %v1019
        %v1273 = vpop.xlane.xlu0 %1272
        %1274 = vadd.xlane.f32.xlu0 %v1020
        %v1275 = vpop.xlane.xlu0 %1274
        %1276 = vadd.xlane.f32.xlu0 %v1021
        %v1277 = vpop.xlane.xlu0 %1276
        %v1278 = vmul.f32 %v1023, %v765
        %v1279 = vmul.f32 %v1025, %v765
        %v1280 = vmul.f32 %v1027, %v765
        %v1281 = vmul.f32 %v1029, %v765
        %v1282 = vmul.f32 %v1031, %v765
        %v1283 = vmul.f32 %v1033, %v765
        %v1284 = vmul.f32 %v1035, %v765
        %v1285 = vmul.f32 %v1037, %v765
        %v1286 = vmul.f32 %v1039, %v765
        %v1287 = vmul.f32 %v1041, %v765
        %v1288 = vmul.f32 %v1043, %v765
        %v1289 = vmul.f32 %v1045, %v765
        %v1290 = vmul.f32 %v1047, %v765
        %v1291 = vmul.f32 %v1049, %v765
        %v1292 = vmul.f32 %v1051, %v765
        %v1293 = vmul.f32 %v1053, %v765
        %v1294 = vmul.f32 %v1055, %v765
        %v1295 = vmul.f32 %v1057, %v765
        %v1296 = vmul.f32 %v1059, %v765
        %v1297 = vmul.f32 %v1061, %v765
        %v1298 = vmul.f32 %v1063, %v765
        %v1299 = vmul.f32 %v1065, %v765
        %v1300 = vmul.f32 %v1067, %v765
        %v1301 = vmul.f32 %v1069, %v765
        %v1302 = vmul.f32 %v1071, %v765
        %v1303 = vmul.f32 %v1073, %v765
        %v1304 = vmul.f32 %v1075, %v765
        %v1305 = vmul.f32 %v1077, %v765
        %v1306 = vmul.f32 %v1079, %v765
        %v1307 = vmul.f32 %v1081, %v765
        %v1308 = vmul.f32 %v1083, %v765
        %v1309 = vmul.f32 %v1085, %v765
        %v1310 = vmul.f32 %v1087, %v765
        %v1311 = vmul.f32 %v1089, %v765
        %v1312 = vmul.f32 %v1091, %v765
        %v1313 = vmul.f32 %v1093, %v765
        %v1314 = vmul.f32 %v1095, %v765
        %v1315 = vmul.f32 %v1097, %v765
        %v1316 = vmul.f32 %v1099, %v765
        %v1317 = vmul.f32 %v1101, %v765
        %v1318 = vmul.f32 %v1103, %v765
        %v1319 = vmul.f32 %v1105, %v765
        %v1320 = vmul.f32 %v1107, %v765
        %v1321 = vmul.f32 %v1109, %v765
        %v1322 = vmul.f32 %v1111, %v765
        %v1323 = vmul.f32 %v1113, %v765
        %v1324 = vmul.f32 %v1115, %v765
        %v1325 = vmul.f32 %v1117, %v765
        %v1326 = vmul.f32 %v1119, %v765
        %v1327 = vmul.f32 %v1121, %v765
        %v1328 = vmul.f32 %v1123, %v765
        %v1329 = vmul.f32 %v1125, %v765
        %v1330 = vmul.f32 %v1127, %v765
        %v1331 = vmul.f32 %v1129, %v765
        %v1332 = vmul.f32 %v1131, %v765
        %v1333 = vmul.f32 %v1133, %v765
        %v1334 = vmul.f32 %v1135, %v765
        %v1335 = vmul.f32 %v1137, %v765
        %v1336 = vmul.f32 %v1139, %v765
        %v1337 = vmul.f32 %v1141, %v765
        %v1338 = vmul.f32 %v1143, %v765
        %v1339 = vmul.f32 %v1145, %v765
        %v1340 = vmul.f32 %v1147, %v765
        %v1341 = vmul.f32 %v1149, %v765
        %v1342 = vmul.f32 %v1151, %v765
        %v1343 = vmul.f32 %v1153, %v765
        %v1344 = vmul.f32 %v1155, %v765
        %v1345 = vmul.f32 %v1157, %v765
        %v1346 = vmul.f32 %v1159, %v765
        %v1347 = vmul.f32 %v1161, %v765
        %v1348 = vmul.f32 %v1163, %v765
        %v1349 = vmul.f32 %v1165, %v765
        %v1350 = vmul.f32 %v1167, %v765
        %v1351 = vmul.f32 %v1169, %v765
        %v1352 = vmul.f32 %v1171, %v765
        %v1353 = vmul.f32 %v1173, %v765
        %v1354 = vmul.f32 %v1175, %v765
        %v1355 = vmul.f32 %v1177, %v765
        %v1356 = vmul.f32 %v1179, %v765
        %v1357 = vmul.f32 %v1181, %v765
        %v1358 = vmul.f32 %v1183, %v765
        %v1359 = vmul.f32 %v1185, %v765
        %v1360 = vmul.f32 %v1187, %v765
        %v1361 = vmul.f32 %v1189, %v765
        %v1362 = vmul.f32 %v1191, %v765
        %v1363 = vmul.f32 %v1193, %v765
        %v1364 = vmul.f32 %v1195, %v765
        %v1365 = vmul.f32 %v1197, %v765
        %v1366 = vmul.f32 %v1199, %v765
        %v1367 = vmul.f32 %v1201, %v765
        %v1368 = vmul.f32 %v1203, %v765
        %v1369 = vmul.f32 %v1205, %v765
        %v1370 = vmul.f32 %v1207, %v765
        %v1371 = vmul.f32 %v1209, %v765
        %v1372 = vmul.f32 %v1211, %v765
        %v1373 = vmul.f32 %v1213, %v765
        %v1374 = vmul.f32 %v1215, %v765
        %v1375 = vmul.f32 %v1217, %v765
        %v1376 = vmul.f32 %v1219, %v765
        %v1377 = vmul.f32 %v1221, %v765
        %v1378 = vmul.f32 %v1223, %v765
        %v1379 = vmul.f32 %v1225, %v765
        %v1380 = vmul.f32 %v1227, %v765
        %v1381 = vmul.f32 %v1229, %v765
        %v1382 = vmul.f32 %v1231, %v765
        %v1383 = vmul.f32 %v1233, %v765
        %v1384 = vmul.f32 %v1235, %v765
        %v1385 = vmul.f32 %v1237, %v765
        %v1386 = vmul.f32 %v1239, %v765
        %v1387 = vmul.f32 %v1241, %v765
        %v1388 = vmul.f32 %v1243, %v765
        %v1389 = vmul.f32 %v1245, %v765
        %v1390 = vmul.f32 %v1247, %v765
        %v1391 = vmul.f32 %v1249, %v765
        %v1392 = vmul.f32 %v1251, %v765
        %v1393 = vmul.f32 %v1253, %v765
        %v1394 = vmul.f32 %v1255, %v765
        %v1395 = vmul.f32 %v1257, %v765
        %v1396 = vmul.f32 %v1259, %v765
        %v1397 = vmul.f32 %v1261, %v765
        %v1398 = vmul.f32 %v1263, %v765
        %v1399 = vmul.f32 %v1265, %v765
        %v1400 = vmul.f32 %v1267, %v765
        %v1401 = vmul.f32 %v1269, %v765
        %v1402 = vmul.f32 %v1271, %v765
        %v1403 = vmul.f32 %v1273, %v765
        %v1404 = vmul.f32 %v1275, %v765
        %v1405 = vmul.f32 %v1277, %v765
        %v1406 = vmul.f32 %v766, %v766
        %v1407 = vmul.f32 %v767, %v767
        %v1408 = vmul.f32 %v768, %v768
        %v1409 = vmul.f32 %v769, %v769
        %v1410 = vmul.f32 %v770, %v770
        %v1411 = vmul.f32 %v771, %v771
        %v1412 = vmul.f32 %v772, %v772
        %v1413 = vmul.f32 %v773, %v773
        %v1414 = vmul.f32 %v774, %v774
        %v1415 = vmul.f32 %v775, %v775
        %v1416 = vmul.f32 %v776, %v776
        %v1417 = vmul.f32 %v777, %v777
        %v1418 = vmul.f32 %v778, %v778
        %v1419 = vmul.f32 %v779, %v779
        %v1420 = vmul.f32 %v780, %v780
        %v1421 = vmul.f32 %v781, %v781
        %v1422 = vmul.f32 %v782, %v782
        %v1423 = vmul.f32 %v783, %v783
        %v1424 = vmul.f32 %v784, %v784
        %v1425 = vmul.f32 %v785, %v785
        %v1426 = vmul.f32 %v786, %v786
        %v1427 = vmul.f32 %v787, %v787
        %v1428 = vmul.f32 %v788, %v788
        %v1429 = vmul.f32 %v789, %v789
        %v1430 = vmul.f32 %v790, %v790
        %v1431 = vmul.f32 %v791, %v791
        %v1432 = vmul.f32 %v792, %v792
        %v1433 = vmul.f32 %v793, %v793
        %v1434 = vmul.f32 %v794, %v794
        %v1435 = vmul.f32 %v795, %v795
        %v1436 = vmul.f32 %v796, %v796
        %v1437 = vmul.f32 %v797, %v797
        %v1438 = vmul.f32 %v798, %v798
        %v1439 = vmul.f32 %v799, %v799
        %v1440 = vmul.f32 %v800, %v800
        %v1441 = vmul.f32 %v801, %v801
        %v1442 = vmul.f32 %v802, %v802
        %v1443 = vmul.f32 %v803, %v803
        %v1444 = vmul.f32 %v804, %v804
        %v1445 = vmul.f32 %v805, %v805
        %v1446 = vmul.f32 %v806, %v806
        %v1447 = vmul.f32 %v807, %v807
        %v1448 = vmul.f32 %v808, %v808
        %v1449 = vmul.f32 %v809, %v809
        %v1450 = vmul.f32 %v810, %v810
        %v1451 = vmul.f32 %v811, %v811
        %v1452 = vmul.f32 %v812, %v812
        %v1453 = vmul.f32 %v813, %v813
        %v1454 = vmul.f32 %v814, %v814
        %v1455 = vmul.f32 %v815, %v815
        %v1456 = vmul.f32 %v816, %v816
        %v1457 = vmul.f32 %v817, %v817
        %v1458 = vmul.f32 %v818, %v818
        %v1459 = vmul.f32 %v819, %v819
        %v1460 = vmul.f32 %v820, %v820
        %v1461 = vmul.f32 %v821, %v821
        %v1462 = vmul.f32 %v822, %v822
        %v1463 = vmul.f32 %v823, %v823
        %v1464 = vmul.f32 %v824, %v824
        %v1465 = vmul.f32 %v825, %v825
        %v1466 = vmul.f32 %v826, %v826
        %v1467 = vmul.f32 %v827, %v827
        %v1468 = vmul.f32 %v828, %v828
        %v1469 = vmul.f32 %v829, %v829
        %v1470 = vmul.f32 %v830, %v830
        %v1471 = vmul.f32 %v831, %v831
        %v1472 = vmul.f32 %v832, %v832
        %v1473 = vmul.f32 %v833, %v833
        %v1474 = vmul.f32 %v834, %v834
        %v1475 = vmul.f32 %v835, %v835
        %v1476 = vmul.f32 %v836, %v836
        %v1477 = vmul.f32 %v837, %v837
        %v1478 = vmul.f32 %v838, %v838
        %v1479 = vmul.f32 %v839, %v839
        %v1480 = vmul.f32 %v840, %v840
        %v1481 = vmul.f32 %v841, %v841
        %v1482 = vmul.f32 %v842, %v842
        %v1483 = vmul.f32 %v843, %v843
        %v1484 = vmul.f32 %v844, %v844
        %v1485 = vmul.f32 %v845, %v845
        %v1486 = vmul.f32 %v846, %v846
        %v1487 = vmul.f32 %v847, %v847
        %v1488 = vmul.f32 %v848, %v848
        %v1489 = vmul.f32 %v849, %v849
        %v1490 = vmul.f32 %v850, %v850
        %v1491 = vmul.f32 %v851, %v851
        %v1492 = vmul.f32 %v852, %v852
        %v1493 = vmul.f32 %v853, %v853
        %v1494 = vmul.f32 %v854, %v854
        %v1495 = vmul.f32 %v855, %v855
        %v1496 = vmul.f32 %v856, %v856
        %v1497 = vmul.f32 %v857, %v857
        %v1498 = vmul.f32 %v858, %v858
        %v1499 = vmul.f32 %v859, %v859
        %v1500 = vmul.f32 %v860, %v860
        %v1501 = vmul.f32 %v861, %v861
        %v1502 = vmul.f32 %v862, %v862
        %v1503 = vmul.f32 %v863, %v863
        %v1504 = vmul.f32 %v864, %v864
        %v1505 = vmul.f32 %v865, %v865
        %v1506 = vmul.f32 %v866, %v866
        %v1507 = vmul.f32 %v867, %v867
        %v1508 = vmul.f32 %v868, %v868
        %v1509 = vmul.f32 %v869, %v869
        %v1510 = vmul.f32 %v870, %v870
        %v1511 = vmul.f32 %v871, %v871
        %v1512 = vmul.f32 %v872, %v872
        %v1513 = vmul.f32 %v873, %v873
        %v1514 = vmul.f32 %v874, %v874
        %v1515 = vmul.f32 %v875, %v875
        %v1516 = vmul.f32 %v876, %v876
        %v1517 = vmul.f32 %v877, %v877
        %v1518 = vmul.f32 %v878, %v878
        %v1519 = vmul.f32 %v879, %v879
        %v1520 = vmul.f32 %v880, %v880
        %v1521 = vmul.f32 %v881, %v881
        %v1522 = vmul.f32 %v882, %v882
        %v1523 = vmul.f32 %v883, %v883
        %v1524 = vmul.f32 %v884, %v884
        %v1525 = vmul.f32 %v885, %v885
        %v1526 = vmul.f32 %v886, %v886
        %v1527 = vmul.f32 %v887, %v887
        %v1528 = vmul.f32 %v888, %v888
        %v1529 = vmul.f32 %v889, %v889
        %v1530 = vmul.f32 %v890, %v890
        %v1531 = vmul.f32 %v891, %v891
        %v1532 = vmul.f32 %v892, %v892
        %v1533 = vmul.f32 %v893, %v893
        %v1534 = vsub.f32 %v1278, %v1406
        %v1535 = vsub.f32 %v1279, %v1407
        %v1536 = vsub.f32 %v1280, %v1408
        %v1537 = vsub.f32 %v1281, %v1409
        %v1538 = vsub.f32 %v1282, %v1410
        %v1539 = vsub.f32 %v1283, %v1411
        %v1540 = vsub.f32 %v1284, %v1412
        %v1541 = vsub.f32 %v1285, %v1413
        %v1542 = vsub.f32 %v1286, %v1414
        %v1543 = vsub.f32 %v1287, %v1415
        %v1544 = vsub.f32 %v1288, %v1416
        %v1545 = vsub.f32 %v1289, %v1417
        %v1546 = vsub.f32 %v1290, %v1418
        %v1547 = vsub.f32 %v1291, %v1419
        %v1548 = vsub.f32 %v1292, %v1420
        %v1549 = vsub.f32 %v1293, %v1421
        %v1550 = vsub.f32 %v1294, %v1422
        %v1551 = vsub.f32 %v1295, %v1423
        %v1552 = vsub.f32 %v1296, %v1424
        %v1553 = vsub.f32 %v1297, %v1425
        %v1554 = vsub.f32 %v1298, %v1426
        %v1555 = vsub.f32 %v1299, %v1427
        %v1556 = vsub.f32 %v1300, %v1428
        %v1557 = vsub.f32 %v1301, %v1429
        %v1558 = vsub.f32 %v1302, %v1430
        %v1559 = vsub.f32 %v1303, %v1431
        %v1560 = vsub.f32 %v1304, %v1432
        %v1561 = vsub.f32 %v1305, %v1433
        %v1562 = vsub.f32 %v1306, %v1434
        %v1563 = vsub.f32 %v1307, %v1435
        %v1564 = vsub.f32 %v1308, %v1436
        %v1565 = vsub.f32 %v1309, %v1437
        %v1566 = vsub.f32 %v1310, %v1438
        %v1567 = vsub.f32 %v1311, %v1439
        %v1568 = vsub.f32 %v1312, %v1440
        %v1569 = vsub.f32 %v1313, %v1441
        %v1570 = vsub.f32 %v1314, %v1442
        %v1571 = vsub.f32 %v1315, %v1443
        %v1572 = vsub.f32 %v1316, %v1444
        %v1573 = vsub.f32 %v1317, %v1445
        %v1574 = vsub.f32 %v1318, %v1446
        %v1575 = vsub.f32 %v1319, %v1447
        %v1576 = vsub.f32 %v1320, %v1448
        %v1577 = vsub.f32 %v1321, %v1449
        %v1578 = vsub.f32 %v1322, %v1450
        %v1579 = vsub.f32 %v1323, %v1451
        %v1580 = vsub.f32 %v1324, %v1452
        %v1581 = vsub.f32 %v1325, %v1453
        %v1582 = vsub.f32 %v1326, %v1454
        %v1583 = vsub.f32 %v1327, %v1455
        %v1584 = vsub.f32 %v1328, %v1456
        %v1585 = vsub.f32 %v1329, %v1457
        %v1586 = vsub.f32 %v1330, %v1458
        %v1587 = vsub.f32 %v1331, %v1459
        %v1588 = vsub.f32 %v1332, %v1460
        %v1589 = vsub.f32 %v1333, %v1461
        %v1590 = vsub.f32 %v1334, %v1462
        %v1591 = vsub.f32 %v1335, %v1463
        %v1592 = vsub.f32 %v1336, %v1464
        %v1593 = vsub.f32 %v1337, %v1465
        %v1594 = vsub.f32 %v1338, %v1466
        %v1595 = vsub.f32 %v1339, %v1467
        %v1596 = vsub.f32 %v1340, %v1468
        %v1597 = vsub.f32 %v1341, %v1469
        %v1598 = vsub.f32 %v1342, %v1470
        %v1599 = vsub.f32 %v1343, %v1471
        %v1600 = vsub.f32 %v1344, %v1472
        %v1601 = vsub.f32 %v1345, %v1473
        %v1602 = vsub.f32 %v1346, %v1474
        %v1603 = vsub.f32 %v1347, %v1475
        %v1604 = vsub.f32 %v1348, %v1476
        %v1605 = vsub.f32 %v1349, %v1477
        %v1606 = vsub.f32 %v1350, %v1478
        %v1607 = vsub.f32 %v1351, %v1479
        %v1608 = vsub.f32 %v1352, %v1480
        %v1609 = vsub.f32 %v1353, %v1481
        %v1610 = vsub.f32 %v1354, %v1482
        %v1611 = vsub.f32 %v1355, %v1483
        %v1612 = vsub.f32 %v1356, %v1484
        %v1613 = vsub.f32 %v1357, %v1485
        %v1614 = vsub.f32 %v1358, %v1486
        %v1615 = vsub.f32 %v1359, %v1487
        %v1616 = vsub.f32 %v1360, %v1488
        %v1617 = vsub.f32 %v1361, %v1489
        %v1618 = vsub.f32 %v1362, %v1490
        %v1619 = vsub.f32 %v1363, %v1491
        %v1620 = vsub.f32 %v1364, %v1492
        %v1621 = vsub.f32 %v1365, %v1493
        %v1622 = vsub.f32 %v1366, %v1494
        %v1623 = vsub.f32 %v1367, %v1495
        %v1624 = vsub.f32 %v1368, %v1496
        %v1625 = vsub.f32 %v1369, %v1497
        %v1626 = vsub.f32 %v1370, %v1498
        %v1627 = vsub.f32 %v1371, %v1499
        %v1628 = vsub.f32 %v1372, %v1500
        %v1629 = vsub.f32 %v1373, %v1501
        %v1630 = vsub.f32 %v1374, %v1502
        %v1631 = vsub.f32 %v1375, %v1503
        %v1632 = vsub.f32 %v1376, %v1504
        %v1633 = vsub.f32 %v1377, %v1505
        %v1634 = vsub.f32 %v1378, %v1506
        %v1635 = vsub.f32 %v1379, %v1507
        %v1636 = vsub.f32 %v1380, %v1508
        %v1637 = vsub.f32 %v1381, %v1509
        %v1638 = vsub.f32 %v1382, %v1510
        %v1639 = vsub.f32 %v1383, %v1511
        %v1640 = vsub.f32 %v1384, %v1512
        %v1641 = vsub.f32 %v1385, %v1513
        %v1642 = vsub.f32 %v1386, %v1514
        %v1643 = vsub.f32 %v1387, %v1515
        %v1644 = vsub.f32 %v1388, %v1516
        %v1645 = vsub.f32 %v1389, %v1517
        %v1646 = vsub.f32 %v1390, %v1518
        %v1647 = vsub.f32 %v1391, %v1519
        %v1648 = vsub.f32 %v1392, %v1520
        %v1649 = vsub.f32 %v1393, %v1521
        %v1650 = vsub.f32 %v1394, %v1522
        %v1651 = vsub.f32 %v1395, %v1523
        %v1652 = vsub.f32 %v1396, %v1524
        %v1653 = vsub.f32 %v1397, %v1525
        %v1654 = vsub.f32 %v1398, %v1526
        %v1655 = vsub.f32 %v1399, %v1527
        %v1656 = vsub.f32 %v1400, %v1528
        %v1657 = vsub.f32 %v1401, %v1529
        %v1658 = vsub.f32 %v1402, %v1530
        %v1659 = vsub.f32 %v1403, %v1531
        %v1660 = vsub.f32 %v1404, %v1532
        %v1661 = vsub.f32 %v1405, %v1533
        %v1662 = vmax.f32 %v1534, 0.0
        %v1663 = vmax.f32 %v1535, 0.0
        %v1664 = vmax.f32 %v1536, 0.0
        %v1665 = vmax.f32 %v1537, 0.0
        %v1666 = vmax.f32 %v1538, 0.0
        %v1667 = vmax.f32 %v1539, 0.0
        %v1668 = vmax.f32 %v1540, 0.0
        %v1669 = vmax.f32 %v1541, 0.0
        %v1670 = vmax.f32 %v1542, 0.0
        %v1671 = vmax.f32 %v1543, 0.0
        %v1672 = vmax.f32 %v1544, 0.0
        %v1673 = vmax.f32 %v1545, 0.0
        %v1674 = vmax.f32 %v1546, 0.0
        %v1675 = vmax.f32 %v1547, 0.0
        %v1676 = vmax.f32 %v1548, 0.0
        %v1677 = vmax.f32 %v1549, 0.0
        %v1678 = vmax.f32 %v1550, 0.0
        %v1679 = vmax.f32 %v1551, 0.0
        %v1680 = vmax.f32 %v1552, 0.0
        %v1681 = vmax.f32 %v1553, 0.0
        %v1682 = vmax.f32 %v1554, 0.0
        %v1683 = vmax.f32 %v1555, 0.0
        %v1684 = vmax.f32 %v1556, 0.0
        %v1685 = vmax.f32 %v1557, 0.0
        %v1686 = vmax.f32 %v1558, 0.0
        %v1687 = vmax.f32 %v1559, 0.0
        %v1688 = vmax.f32 %v1560, 0.0
        %v1689 = vmax.f32 %v1561, 0.0
        %v1690 = vmax.f32 %v1562, 0.0
        %v1691 = vmax.f32 %v1563, 0.0
        %v1692 = vmax.f32 %v1564, 0.0
        %v1693 = vmax.f32 %v1565, 0.0
        %v1694 = vmax.f32 %v1566, 0.0
        %v1695 = vmax.f32 %v1567, 0.0
        %v1696 = vmax.f32 %v1568, 0.0
        %v1697 = vmax.f32 %v1569, 0.0
        %v1698 = vmax.f32 %v1570, 0.0
        %v1699 = vmax.f32 %v1571, 0.0
        %v1700 = vmax.f32 %v1572, 0.0
        %v1701 = vmax.f32 %v1573, 0.0
        %v1702 = vmax.f32 %v1574, 0.0
        %v1703 = vmax.f32 %v1575, 0.0
        %v1704 = vmax.f32 %v1576, 0.0
        %v1705 = vmax.f32 %v1577, 0.0
        %v1706 = vmax.f32 %v1578, 0.0
        %v1707 = vmax.f32 %v1579, 0.0
        %v1708 = vmax.f32 %v1580, 0.0
        %v1709 = vmax.f32 %v1581, 0.0
        %v1710 = vmax.f32 %v1582, 0.0
        %v1711 = vmax.f32 %v1583, 0.0
        %v1712 = vmax.f32 %v1584, 0.0
        %v1713 = vmax.f32 %v1585, 0.0
        %v1714 = vmax.f32 %v1586, 0.0
        %v1715 = vmax.f32 %v1587, 0.0
        %v1716 = vmax.f32 %v1588, 0.0
        %v1717 = vmax.f32 %v1589, 0.0
        %v1718 = vmax.f32 %v1590, 0.0
        %v1719 = vmax.f32 %v1591, 0.0
        %v1720 = vmax.f32 %v1592, 0.0
        %v1721 = vmax.f32 %v1593, 0.0
        %v1722 = vmax.f32 %v1594, 0.0
        %v1723 = vmax.f32 %v1595, 0.0
        %v1724 = vmax.f32 %v1596, 0.0
        %v1725 = vmax.f32 %v1597, 0.0
        %v1726 = vmax.f32 %v1598, 0.0
        %v1727 = vmax.f32 %v1599, 0.0
        %v1728 = vmax.f32 %v1600, 0.0
        %v1729 = vmax.f32 %v1601, 0.0
        %v1730 = vmax.f32 %v1602, 0.0
        %v1731 = vmax.f32 %v1603, 0.0
        %v1732 = vmax.f32 %v1604, 0.0
        %v1733 = vmax.f32 %v1605, 0.0
        %v1734 = vmax.f32 %v1606, 0.0
        %v1735 = vmax.f32 %v1607, 0.0
        %v1736 = vmax.f32 %v1608, 0.0
        %v1737 = vmax.f32 %v1609, 0.0
        %v1738 = vmax.f32 %v1610, 0.0
        %v1739 = vmax.f32 %v1611, 0.0
        %v1740 = vmax.f32 %v1612, 0.0
        %v1741 = vmax.f32 %v1613, 0.0
        %v1742 = vmax.f32 %v1614, 0.0
        %v1743 = vmax.f32 %v1615, 0.0
        %v1744 = vmax.f32 %v1616, 0.0
        %v1745 = vmax.f32 %v1617, 0.0
        %v1746 = vmax.f32 %v1618, 0.0
        %v1747 = vmax.f32 %v1619, 0.0
        %v1748 = vmax.f32 %v1620, 0.0
        %v1749 = vmax.f32 %v1621, 0.0
        %v1750 = vmax.f32 %v1622, 0.0
        %v1751 = vmax.f32 %v1623, 0.0
        %v1752 = vmax.f32 %v1624, 0.0
        %v1753 = vmax.f32 %v1625, 0.0
        %v1754 = vmax.f32 %v1626, 0.0
        %v1755 = vmax.f32 %v1627, 0.0
        %v1756 = vmax.f32 %v1628, 0.0
        %v1757 = vmax.f32 %v1629, 0.0
        %v1758 = vmax.f32 %v1630, 0.0
        %v1759 = vmax.f32 %v1631, 0.0
        %v1760 = vmax.f32 %v1632, 0.0
        %v1761 = vmax.f32 %v1633, 0.0
        %v1762 = vmax.f32 %v1634, 0.0
        %v1763 = vmax.f32 %v1635, 0.0
        %v1764 = vmax.f32 %v1636, 0.0
        %v1765 = vmax.f32 %v1637, 0.0
        %v1766 = vmax.f32 %v1638, 0.0
        %v1767 = vmax.f32 %v1639, 0.0
        %v1768 = vmax.f32 %v1640, 0.0
        %v1769 = vmax.f32 %v1641, 0.0
        %v1770 = vmax.f32 %v1642, 0.0
        %v1771 = vmax.f32 %v1643, 0.0
        %v1772 = vmax.f32 %v1644, 0.0
        %v1773 = vmax.f32 %v1645, 0.0
        %v1774 = vmax.f32 %v1646, 0.0
        %v1775 = vmax.f32 %v1647, 0.0
        %v1776 = vmax.f32 %v1648, 0.0
        %v1777 = vmax.f32 %v1649, 0.0
        %v1778 = vmax.f32 %v1650, 0.0
        %v1779 = vmax.f32 %v1651, 0.0
        %v1780 = vmax.f32 %v1652, 0.0
        %v1781 = vmax.f32 %v1653, 0.0
        %v1782 = vmax.f32 %v1654, 0.0
        %v1783 = vmax.f32 %v1655, 0.0
        %v1784 = vmax.f32 %v1656, 0.0
        %v1785 = vmax.f32 %v1657, 0.0
        %v1786 = vmax.f32 %v1658, 0.0
        %v1787 = vmax.f32 %v1659, 0.0
        %v1788 = vmax.f32 %v1660, 0.0
        %v1789 = vmax.f32 %v1661, 0.0
        %v1790 = vsub.f32 %v379, %v766
        %v1791 = vsub.f32 %v380, %v767
        %v1792 = vsub.f32 %v381, %v768
        %v1793 = vsub.f32 %v382, %v769
        %v1794 = vsub.f32 %v383, %v770
        %v1795 = vsub.f32 %v384, %v771
        %v1796 = vsub.f32 %v385, %v772
        %v1797 = vsub.f32 %v386, %v773
        %v1798 = vsub.f32 %v387, %v774
        %v1799 = vsub.f32 %v388, %v775
        %v1800 = vsub.f32 %v389, %v776
        %v1801 = vsub.f32 %v390, %v777
        %v1802 = vsub.f32 %v391, %v778
        %v1803 = vsub.f32 %v392, %v779
        %v1804 = vsub.f32 %v393, %v780
        %v1805 = vsub.f32 %v394, %v781
        %v1806 = vsub.f32 %v395, %v782
        %v1807 = vsub.f32 %v396, %v783
        %v1808 = vsub.f32 %v397, %v784
        %v1809 = vsub.f32 %v398, %v785
        %v1810 = vsub.f32 %v399, %v786
        %v1811 = vsub.f32 %v400, %v787
        %v1812 = vsub.f32 %v401, %v788
        %v1813 = vsub.f32 %v402, %v789
        %v1814 = vsub.f32 %v403, %v790
        %v1815 = vsub.f32 %v404, %v791
        %v1816 = vsub.f32 %v405, %v792
        %v1817 = vsub.f32 %v406, %v793
        %v1818 = vsub.f32 %v407, %v794
        %v1819 = vsub.f32 %v408, %v795
        %v1820 = vsub.f32 %v409, %v796
        %v1821 = vsub.f32 %v410, %v797
        %v1822 = vsub.f32 %v411, %v798
        %v1823 = vsub.f32 %v412, %v799
        %v1824 = vsub.f32 %v413, %v800
        %v1825 = vsub.f32 %v414, %v801
        %v1826 = vsub.f32 %v415, %v802
        %v1827 = vsub.f32 %v416, %v803
        %v1828 = vsub.f32 %v417, %v804
        %v1829 = vsub.f32 %v418, %v805
        %v1830 = vsub.f32 %v419, %v806
        %v1831 = vsub.f32 %v420, %v807
        %v1832 = vsub.f32 %v421, %v808
        %v1833 = vsub.f32 %v422, %v809
        %v1834 = vsub.f32 %v423, %v810
        %v1835 = vsub.f32 %v424, %v811
        %v1836 = vsub.f32 %v425, %v812
        %v1837 = vsub.f32 %v426, %v813
        %v1838 = vsub.f32 %v427, %v814
        %v1839 = vsub.f32 %v428, %v815
        %v1840 = vsub.f32 %v429, %v816
        %v1841 = vsub.f32 %v430, %v817
        %v1842 = vsub.f32 %v431, %v818
        %v1843 = vsub.f32 %v432, %v819
        %v1844 = vsub.f32 %v433, %v820
        %v1845 = vsub.f32 %v434, %v821
        %v1846 = vsub.f32 %v435, %v822
        %v1847 = vsub.f32 %v436, %v823
        %v1848 = vsub.f32 %v437, %v824
        %v1849 = vsub.f32 %v438, %v825
        %v1850 = vsub.f32 %v439, %v826
        %v1851 = vsub.f32 %v440, %v827
        %v1852 = vsub.f32 %v441, %v828
        %v1853 = vsub.f32 %v442, %v829
        %v1854 = vsub.f32 %v443, %v830
        %v1855 = vsub.f32 %v444, %v831
        %v1856 = vsub.f32 %v445, %v832
        %v1857 = vsub.f32 %v446, %v833
        %v1858 = vsub.f32 %v447, %v834
        %v1859 = vsub.f32 %v448, %v835
        %v1860 = vsub.f32 %v449, %v836
        %v1861 = vsub.f32 %v450, %v837
        %v1862 = vsub.f32 %v451, %v838
        %v1863 = vsub.f32 %v452, %v839
        %v1864 = vsub.f32 %v453, %v840
        %v1865 = vsub.f32 %v454, %v841
        %v1866 = vsub.f32 %v455, %v842
        %v1867 = vsub.f32 %v456, %v843
        %v1868 = vsub.f32 %v457, %v844
        %v1869 = vsub.f32 %v458, %v845
        %v1870 = vsub.f32 %v459, %v846
        %v1871 = vsub.f32 %v460, %v847
        %v1872 = vsub.f32 %v461, %v848
        %v1873 = vsub.f32 %v462, %v849
        %v1874 = vsub.f32 %v463, %v850
        %v1875 = vsub.f32 %v464, %v851
        %v1876 = vsub.f32 %v465, %v852
        %v1877 = vsub.f32 %v466, %v853
        %v1878 = vsub.f32 %v467, %v854
        %v1879 = vsub.f32 %v468, %v855
        %v1880 = vsub.f32 %v469, %v856
        %v1881 = vsub.f32 %v470, %v857
        %v1882 = vsub.f32 %v471, %v858
        %v1883 = vsub.f32 %v472, %v859
        %v1884 = vsub.f32 %v473, %v860
        %v1885 = vsub.f32 %v474, %v861
        %v1886 = vsub.f32 %v475, %v862
        %v1887 = vsub.f32 %v476, %v863
        %v1888 = vsub.f32 %v477, %v864
        %v1889 = vsub.f32 %v478, %v865
        %v1890 = vsub.f32 %v479, %v866
        %v1891 = vsub.f32 %v480, %v867
        %v1892 = vsub.f32 %v481, %v868
        %v1893 = vsub.f32 %v482, %v869
        %v1894 = vsub.f32 %v483, %v870
        %v1895 = vsub.f32 %v484, %v871
        %v1896 = vsub.f32 %v485, %v872
        %v1897 = vsub.f32 %v486, %v873
        %v1898 = vsub.f32 %v487, %v874
        %v1899 = vsub.f32 %v488, %v875
        %v1900 = vsub.f32 %v489, %v876
        %v1901 = vsub.f32 %v490, %v877
        %v1902 = vsub.f32 %v491, %v878
        %v1903 = vsub.f32 %v492, %v879
        %v1904 = vsub.f32 %v493, %v880
        %v1905 = vsub.f32 %v494, %v881
        %v1906 = vsub.f32 %v495, %v882
        %v1907 = vsub.f32 %v496, %v883
        %v1908 = vsub.f32 %v497, %v884
        %v1909 = vsub.f32 %v498, %v885
        %v1910 = vsub.f32 %v499, %v886
        %v1911 = vsub.f32 %v500, %v887
        %v1912 = vsub.f32 %v501, %v888
        %v1913 = vsub.f32 %v502, %v889
        %v1914 = vsub.f32 %v503, %v890
        %v1915 = vsub.f32 %v504, %v891
        %v1916 = vsub.f32 %v505, %v892
        %v1917 = vsub.f32 %v506, %v893
        %v1918 = vadd.f32 %v1662, 1e-05
        %v1919 = vadd.f32 %v1663, 1e-05
        %v1920 = vadd.f32 %v1664, 1e-05
        %v1921 = vadd.f32 %v1665, 1e-05
        %v1922 = vadd.f32 %v1666, 1e-05
        %v1923 = vadd.f32 %v1667, 1e-05
        %v1924 = vadd.f32 %v1668, 1e-05
        %v1925 = vadd.f32 %v1669, 1e-05
        %v1926 = vadd.f32 %v1670, 1e-05
        %v1927 = vadd.f32 %v1671, 1e-05
        %v1928 = vadd.f32 %v1672, 1e-05
        %v1929 = vadd.f32 %v1673, 1e-05
        %v1930 = vadd.f32 %v1674, 1e-05
        %v1931 = vadd.f32 %v1675, 1e-05
        %v1932 = vadd.f32 %v1676, 1e-05
        %v1933 = vadd.f32 %v1677, 1e-05
        %v1934 = vadd.f32 %v1678, 1e-05
        %v1935 = vadd.f32 %v1679, 1e-05
        %v1936 = vadd.f32 %v1680, 1e-05
        %v1937 = vadd.f32 %v1681, 1e-05
        %v1938 = vadd.f32 %v1682, 1e-05
        %v1939 = vadd.f32 %v1683, 1e-05
        %v1940 = vadd.f32 %v1684, 1e-05
        %v1941 = vadd.f32 %v1685, 1e-05
        %v1942 = vadd.f32 %v1686, 1e-05
        %v1943 = vadd.f32 %v1687, 1e-05
        %v1944 = vadd.f32 %v1688, 1e-05
        %v1945 = vadd.f32 %v1689, 1e-05
        %v1946 = vadd.f32 %v1690, 1e-05
        %v1947 = vadd.f32 %v1691, 1e-05
        %v1948 = vadd.f32 %v1692, 1e-05
        %v1949 = vadd.f32 %v1693, 1e-05
        %v1950 = vadd.f32 %v1694, 1e-05
        %v1951 = vadd.f32 %v1695, 1e-05
        %v1952 = vadd.f32 %v1696, 1e-05
        %v1953 = vadd.f32 %v1697, 1e-05
        %v1954 = vadd.f32 %v1698, 1e-05
        %v1955 = vadd.f32 %v1699, 1e-05
        %v1956 = vadd.f32 %v1700, 1e-05
        %v1957 = vadd.f32 %v1701, 1e-05
        %v1958 = vadd.f32 %v1702, 1e-05
        %v1959 = vadd.f32 %v1703, 1e-05
        %v1960 = vadd.f32 %v1704, 1e-05
        %v1961 = vadd.f32 %v1705, 1e-05
        %v1962 = vadd.f32 %v1706, 1e-05
        %v1963 = vadd.f32 %v1707, 1e-05
        %v1964 = vadd.f32 %v1708, 1e-05
        %v1965 = vadd.f32 %v1709, 1e-05
        %v1966 = vadd.f32 %v1710, 1e-05
        %v1967 = vadd.f32 %v1711, 1e-05
        %v1968 = vadd.f32 %v1712, 1e-05
        %v1969 = vadd.f32 %v1713, 1e-05
        %v1970 = vadd.f32 %v1714, 1e-05
        %v1971 = vadd.f32 %v1715, 1e-05
        %v1972 = vadd.f32 %v1716, 1e-05
        %v1973 = vadd.f32 %v1717, 1e-05
        %v1974 = vadd.f32 %v1718, 1e-05
        %v1975 = vadd.f32 %v1719, 1e-05
        %v1976 = vadd.f32 %v1720, 1e-05
        %v1977 = vadd.f32 %v1721, 1e-05
        %v1978 = vadd.f32 %v1722, 1e-05
        %v1979 = vadd.f32 %v1723, 1e-05
        %v1980 = vadd.f32 %v1724, 1e-05
        %v1981 = vadd.f32 %v1725, 1e-05
        %v1982 = vadd.f32 %v1726, 1e-05
        %v1983 = vadd.f32 %v1727, 1e-05
        %v1984 = vadd.f32 %v1728, 1e-05
        %v1985 = vadd.f32 %v1729, 1e-05
        %v1986 = vadd.f32 %v1730, 1e-05
        %v1987 = vadd.f32 %v1731, 1e-05
        %v1988 = vadd.f32 %v1732, 1e-05
        %v1989 = vadd.f32 %v1733, 1e-05
        %v1990 = vadd.f32 %v1734, 1e-05
        %v1991 = vadd.f32 %v1735, 1e-05
        %v1992 = vadd.f32 %v1736, 1e-05
        %v1993 = vadd.f32 %v1737, 1e-05
        %v1994 = vadd.f32 %v1738, 1e-05
        %v1995 = vadd.f32 %v1739, 1e-05
        %v1996 = vadd.f32 %v1740, 1e-05
        %v1997 = vadd.f32 %v1741, 1e-05
        %v1998 = vadd.f32 %v1742, 1e-05
        %v1999 = vadd.f32 %v1743, 1e-05
        %v2000 = vadd.f32 %v1744, 1e-05
        %v2001 = vadd.f32 %v1745, 1e-05
        %v2002 = vadd.f32 %v1746, 1e-05
        %v2003 = vadd.f32 %v1747, 1e-05
        %v2004 = vadd.f32 %v1748, 1e-05
        %v2005 = vadd.f32 %v1749, 1e-05
        %v2006 = vadd.f32 %v1750, 1e-05
        %v2007 = vadd.f32 %v1751, 1e-05
        %v2008 = vadd.f32 %v1752, 1e-05
        %v2009 = vadd.f32 %v1753, 1e-05
        %v2010 = vadd.f32 %v1754, 1e-05
        %v2011 = vadd.f32 %v1755, 1e-05
        %v2012 = vadd.f32 %v1756, 1e-05
        %v2013 = vadd.f32 %v1757, 1e-05
        %v2014 = vadd.f32 %v1758, 1e-05
        %v2015 = vadd.f32 %v1759, 1e-05
        %v2016 = vadd.f32 %v1760, 1e-05
        %v2017 = vadd.f32 %v1761, 1e-05
        %v2018 = vadd.f32 %v1762, 1e-05
        %v2019 = vadd.f32 %v1763, 1e-05
        %v2020 = vadd.f32 %v1764, 1e-05
        %v2021 = vadd.f32 %v1765, 1e-05
        %v2022 = vadd.f32 %v1766, 1e-05
        %v2023 = vadd.f32 %v1767, 1e-05
        %v2024 = vadd.f32 %v1768, 1e-05
        %v2025 = vadd.f32 %v1769, 1e-05
        %v2026 = vadd.f32 %v1770, 1e-05
        %v2027 = vadd.f32 %v1771, 1e-05
        %v2028 = vadd.f32 %v1772, 1e-05
        %v2029 = vadd.f32 %v1773, 1e-05
        %v2030 = vadd.f32 %v1774, 1e-05
        %v2031 = vadd.f32 %v1775, 1e-05
        %v2032 = vadd.f32 %v1776, 1e-05
        %v2033 = vadd.f32 %v1777, 1e-05
        %v2034 = vadd.f32 %v1778, 1e-05
        %v2035 = vadd.f32 %v1779, 1e-05
        %v2036 = vadd.f32 %v1780, 1e-05
        %v2037 = vadd.f32 %v1781, 1e-05
        %v2038 = vadd.f32 %v1782, 1e-05
        %v2039 = vadd.f32 %v1783, 1e-05
        %v2040 = vadd.f32 %v1784, 1e-05
        %v2041 = vadd.f32 %v1785, 1e-05
        %v2042 = vadd.f32 %v1786, 1e-05
        %v2043 = vadd.f32 %v1787, 1e-05
        %v2044 = vadd.f32 %v1788, 1e-05
        %v2045 = vadd.f32 %v1789, 1e-05
        %v2046 = vrsqrt.pop %v1918
        %v2047 = vrsqrt.pop %v1919
        %v2048 = vrsqrt.pop %v1920
        %v2049 = vrsqrt.pop %v1921
        %v2050 = vrsqrt.pop %v1922
        %v2051 = vrsqrt.pop %v1923
        %v2052 = vrsqrt.pop %v1924
        %v2053 = vrsqrt.pop %v1925
        %v2054 = vrsqrt.pop %v1926
        %v2055 = vrsqrt.pop %v1927
        %v2056 = vrsqrt.pop %v1928
        %v2057 = vrsqrt.pop %v1929
        %v2058 = vrsqrt.pop %v1930
        %v2059 = vrsqrt.pop %v1931
        %v2060 = vrsqrt.pop %v1932
        %v2061 = vrsqrt.pop %v1933
        %v2062 = vrsqrt.pop %v1934
        %v2063 = vrsqrt.pop %v1935
        %v2064 = vrsqrt.pop %v1936
        %v2065 = vrsqrt.pop %v1937
        %v2066 = vrsqrt.pop %v1938
        %v2067 = vrsqrt.pop %v1939
        %v2068 = vrsqrt.pop %v1940
        %v2069 = vrsqrt.pop %v1941
        %v2070 = vrsqrt.pop %v1942
        %v2071 = vrsqrt.pop %v1943
        %v2072 = vrsqrt.pop %v1944
        %v2073 = vrsqrt.pop %v1945
        %v2074 = vrsqrt.pop %v1946
        %v2075 = vrsqrt.pop %v1947
        %v2076 = vrsqrt.pop %v1948
        %v2077 = vrsqrt.pop %v1949
        %v2078 = vrsqrt.pop %v1950
        %v2079 = vrsqrt.pop %v1951
        %v2080 = vrsqrt.pop %v1952
        %v2081 = vrsqrt.pop %v1953
        %v2082 = vrsqrt.pop %v1954
        %v2083 = vrsqrt.pop %v1955
        %v2084 = vrsqrt.pop %v1956
        %v2085 = vrsqrt.pop %v1957
        %v2086 = vrsqrt.pop %v1958
        %v2087 = vrsqrt.pop %v1959
        %v2088 = vrsqrt.pop %v1960
        %v2089 = vrsqrt.pop %v1961
        %v2090 = vrsqrt.pop %v1962
        %v2091 = vrsqrt.pop %v1963
        %v2092 = vrsqrt.pop %v1964
        %v2093 = vrsqrt.pop %v1965
        %v2094 = vrsqrt.pop %v1966
        %v2095 = vrsqrt.pop %v1967
        %v2096 = vrsqrt.pop %v1968
        %v2097 = vrsqrt.pop %v1969
        %v2098 = vrsqrt.pop %v1970
        %v2099 = vrsqrt.pop %v1971
        %v2100 = vrsqrt.pop %v1972
        %v2101 = vrsqrt.pop %v1973
        %v2102 = vrsqrt.pop %v1974
        %v2103 = vrsqrt.pop %v1975
        %v2104 = vrsqrt.pop %v1976
        %v2105 = vrsqrt.pop %v1977
        %v2106 = vrsqrt.pop %v1978
        %v2107 = vrsqrt.pop %v1979
        %v2108 = vrsqrt.pop %v1980
        %v2109 = vrsqrt.pop %v1981
        %v2110 = vrsqrt.pop %v1982
        %v2111 = vrsqrt.pop %v1983
        %v2112 = vrsqrt.pop %v1984
        %v2113 = vrsqrt.pop %v1985
        %v2114 = vrsqrt.pop %v1986
        %v2115 = vrsqrt.pop %v1987
        %v2116 = vrsqrt.pop %v1988
        %v2117 = vrsqrt.pop %v1989
        %v2118 = vrsqrt.pop %v1990
        %v2119 = vrsqrt.pop %v1991
        %v2120 = vrsqrt.pop %v1992
        %v2121 = vrsqrt.pop %v1993
        %v2122 = vrsqrt.pop %v1994
        %v2123 = vrsqrt.pop %v1995
        %v2124 = vrsqrt.pop %v1996
        %v2125 = vrsqrt.pop %v1997
        %v2126 = vrsqrt.pop %v1998
        %v2127 = vrsqrt.pop %v1999
        %v2128 = vrsqrt.pop %v2000
        %v2129 = vrsqrt.pop %v2001
        %v2130 = vrsqrt.pop %v2002
        %v2131 = vrsqrt.pop %v2003
        %v2132 = vrsqrt.pop %v2004
        %v2133 = vrsqrt.pop %v2005
        %v2134 = vrsqrt.pop %v2006
        %v2135 = vrsqrt.pop %v2007
        %v2136 = vrsqrt.pop %v2008
        %v2137 = vrsqrt.pop %v2009
        %v2138 = vrsqrt.pop %v2010
        %v2139 = vrsqrt.pop %v2011
        %v2140 = vrsqrt.pop %v2012
        %v2141 = vrsqrt.pop %v2013
        %v2142 = vrsqrt.pop %v2014
        %v2143 = vrsqrt.pop %v2015
        %v2144 = vrsqrt.pop %v2016
        %v2145 = vrsqrt.pop %v2017
        %v2146 = vrsqrt.pop %v2018
        %v2147 = vrsqrt.pop %v2019
        %v2148 = vrsqrt.pop %v2020
        %v2149 = vrsqrt.pop %v2021
        %v2150 = vrsqrt.pop %v2022
        %v2151 = vrsqrt.pop %v2023
        %v2152 = vrsqrt.pop %v2024
        %v2153 = vrsqrt.pop %v2025
        %v2154 = vrsqrt.pop %v2026
        %v2155 = vrsqrt.pop %v2027
        %v2156 = vrsqrt.pop %v2028
        %v2157 = vrsqrt.pop %v2029
        %v2158 = vrsqrt.pop %v2030
        %v2159 = vrsqrt.pop %v2031
        %v2160 = vrsqrt.pop %v2032
        %v2161 = vrsqrt.pop %v2033
        %v2162 = vrsqrt.pop %v2034
        %v2163 = vrsqrt.pop %v2035
        %v2164 = vrsqrt.pop %v2036
        %v2165 = vrsqrt.pop %v2037
        %v2166 = vrsqrt.pop %v2038
        %v2167 = vrsqrt.pop %v2039
        %v2168 = vrsqrt.pop %v2040
        %v2169 = vrsqrt.pop %v2041
        %v2170 = vrsqrt.pop %v2042
        %v2171 = vrsqrt.pop %v2043
        %v2172 = vrsqrt.pop %v2044
        %v2173 = vrsqrt.pop %v2045
        %v2174 = vmul.f32 %v1790, %v2046
        %v2175 = vmul.f32 %v1791, %v2047
        %v2176 = vmul.f32 %v1792, %v2048
        %v2177 = vmul.f32 %v1793, %v2049
        %v2178 = vmul.f32 %v1794, %v2050
        %v2179 = vmul.f32 %v1795, %v2051
        %v2180 = vmul.f32 %v1796, %v2052
        %v2181 = vmul.f32 %v1797, %v2053
        %v2182 = vmul.f32 %v1798, %v2054
        %v2183 = vmul.f32 %v1799, %v2055
        %v2184 = vmul.f32 %v1800, %v2056
        %v2185 = vmul.f32 %v1801, %v2057
        %v2186 = vmul.f32 %v1802, %v2058
        %v2187 = vmul.f32 %v1803, %v2059
        %v2188 = vmul.f32 %v1804, %v2060
        %v2189 = vmul.f32 %v1805, %v2061
        %v2190 = vmul.f32 %v1806, %v2062
        %v2191 = vmul.f32 %v1807, %v2063
        %v2192 = vmul.f32 %v1808, %v2064
        %v2193 = vmul.f32 %v1809, %v2065
        %v2194 = vmul.f32 %v1810, %v2066
        %v2195 = vmul.f32 %v1811, %v2067
        %v2196 = vmul.f32 %v1812, %v2068
        %v2197 = vmul.f32 %v1813, %v2069
        %v2198 = vmul.f32 %v1814, %v2070
        %v2199 = vmul.f32 %v1815, %v2071
        %v2200 = vmul.f32 %v1816, %v2072
        %v2201 = vmul.f32 %v1817, %v2073
        %v2202 = vmul.f32 %v1818, %v2074
        %v2203 = vmul.f32 %v1819, %v2075
        %v2204 = vmul.f32 %v1820, %v2076
        %v2205 = vmul.f32 %v1821, %v2077
        %v2206 = vmul.f32 %v1822, %v2078
        %v2207 = vmul.f32 %v1823, %v2079
        %v2208 = vmul.f32 %v1824, %v2080
        %v2209 = vmul.f32 %v1825, %v2081
        %v2210 = vmul.f32 %v1826, %v2082
        %v2211 = vmul.f32 %v1827, %v2083
        %v2212 = vmul.f32 %v1828, %v2084
        %v2213 = vmul.f32 %v1829, %v2085
        %v2214 = vmul.f32 %v1830, %v2086
        %v2215 = vmul.f32 %v1831, %v2087
        %v2216 = vmul.f32 %v1832, %v2088
        %v2217 = vmul.f32 %v1833, %v2089
        %v2218 = vmul.f32 %v1834, %v2090
        %v2219 = vmul.f32 %v1835, %v2091
        %v2220 = vmul.f32 %v1836, %v2092
        %v2221 = vmul.f32 %v1837, %v2093
        %v2222 = vmul.f32 %v1838, %v2094
        %v2223 = vmul.f32 %v1839, %v2095
        %v2224 = vmul.f32 %v1840, %v2096
        %v2225 = vmul.f32 %v1841, %v2097
        %v2226 = vmul.f32 %v1842, %v2098
        %v2227 = vmul.f32 %v1843, %v2099
        %v2228 = vmul.f32 %v1844, %v2100
        %v2229 = vmul.f32 %v1845, %v2101
        %v2230 = vmul.f32 %v1846, %v2102
        %v2231 = vmul.f32 %v1847, %v2103
        %v2232 = vmul.f32 %v1848, %v2104
        %v2233 = vmul.f32 %v1849, %v2105
        %v2234 = vmul.f32 %v1850, %v2106
        %v2235 = vmul.f32 %v1851, %v2107
        %v2236 = vmul.f32 %v1852, %v2108
        %v2237 = vmul.f32 %v1853, %v2109
        %v2238 = vmul.f32 %v1854, %v2110
        %v2239 = vmul.f32 %v1855, %v2111
        %v2240 = vmul.f32 %v1856, %v2112
        %v2241 = vmul.f32 %v1857, %v2113
        %v2242 = vmul.f32 %v1858, %v2114
        %v2243 = vmul.f32 %v1859, %v2115
        %v2244 = vmul.f32 %v1860, %v2116
        %v2245 = vmul.f32 %v1861, %v2117
        %v2246 = vmul.f32 %v1862, %v2118
        %v2247 = vmul.f32 %v1863, %v2119
        %v2248 = vmul.f32 %v1864, %v2120
        %v2249 = vmul.f32 %v1865, %v2121
        %v2250 = vmul.f32 %v1866, %v2122
        %v2251 = vmul.f32 %v1867, %v2123
        %v2252 = vmul.f32 %v1868, %v2124
        %v2253 = vmul.f32 %v1869, %v2125
        %v2254 = vmul.f32 %v1870, %v2126
        %v2255 = vmul.f32 %v1871, %v2127
        %v2256 = vmul.f32 %v1872, %v2128
        %v2257 = vmul.f32 %v1873, %v2129
        %v2258 = vmul.f32 %v1874, %v2130
        %v2259 = vmul.f32 %v1875, %v2131
        %v2260 = vmul.f32 %v1876, %v2132
        %v2261 = vmul.f32 %v1877, %v2133
        %v2262 = vmul.f32 %v1878, %v2134
        %v2263 = vmul.f32 %v1879, %v2135
        %v2264 = vmul.f32 %v1880, %v2136
        %v2265 = vmul.f32 %v1881, %v2137
        %v2266 = vmul.f32 %v1882, %v2138
        %v2267 = vmul.f32 %v1883, %v2139
        %v2268 = vmul.f32 %v1884, %v2140
        %v2269 = vmul.f32 %v1885, %v2141
        %v2270 = vmul.f32 %v1886, %v2142
        %v2271 = vmul.f32 %v1887, %v2143
        %v2272 = vmul.f32 %v1888, %v2144
        %v2273 = vmul.f32 %v1889, %v2145
        %v2274 = vmul.f32 %v1890, %v2146
        %v2275 = vmul.f32 %v1891, %v2147
        %v2276 = vmul.f32 %v1892, %v2148
        %v2277 = vmul.f32 %v1893, %v2149
        %v2278 = vmul.f32 %v1894, %v2150
        %v2279 = vmul.f32 %v1895, %v2151
        %v2280 = vmul.f32 %v1896, %v2152
        %v2281 = vmul.f32 %v1897, %v2153
        %v2282 = vmul.f32 %v1898, %v2154
        %v2283 = vmul.f32 %v1899, %v2155
        %v2284 = vmul.f32 %v1900, %v2156
        %v2285 = vmul.f32 %v1901, %v2157
        %v2286 = vmul.f32 %v1902, %v2158
        %v2287 = vmul.f32 %v1903, %v2159
        %v2288 = vmul.f32 %v1904, %v2160
        %v2289 = vmul.f32 %v1905, %v2161
        %v2290 = vmul.f32 %v1906, %v2162
        %v2291 = vmul.f32 %v1907, %v2163
        %v2292 = vmul.f32 %v1908, %v2164
        %v2293 = vmul.f32 %v1909, %v2165
        %v2294 = vmul.f32 %v1910, %v2166
        %v2295 = vmul.f32 %v1911, %v2167
        %v2296 = vmul.f32 %v1912, %v2168
        %v2297 = vmul.f32 %v1913, %v2169
        %v2298 = vmul.f32 %v1914, %v2170
        %v2299 = vmul.f32 %v1915, %v2171
        %v2300 = vmul.f32 %v1916, %v2172
        %v2301 = vmul.f32 %v1917, %v2173
        %v2302 = vlaneseq
        %v2303 = vshrl.u32 %v2302, 7
        %v2304 = vsub.s32 0, %v2303
        %v2305 = vrot.slane %v507, %v2304
        %v2306 = vmul.f32 %v2174, %v2305
        %v2307 = vmul.f32 %v2175, %v2305
        %v2308 = vmul.f32 %v2176, %v2305
        %v2309 = vmul.f32 %v2177, %v2305
        %v2310 = vmul.f32 %v2178, %v2305
        %v2311 = vmul.f32 %v2179, %v2305
        %v2312 = vmul.f32 %v2180, %v2305
        %v2313 = vmul.f32 %v2181, %v2305
        %v2314 = vmul.f32 %v2182, %v2305
        %v2315 = vmul.f32 %v2183, %v2305
        %v2316 = vmul.f32 %v2184, %v2305
        %v2317 = vmul.f32 %v2185, %v2305
        %v2318 = vmul.f32 %v2186, %v2305
        %v2319 = vmul.f32 %v2187, %v2305
        %v2320 = vmul.f32 %v2188, %v2305
        %v2321 = vmul.f32 %v2189, %v2305
        %v2322 = vmul.f32 %v2190, %v2305
        %v2323 = vmul.f32 %v2191, %v2305
        %v2324 = vmul.f32 %v2192, %v2305
        %v2325 = vmul.f32 %v2193, %v2305
        %v2326 = vmul.f32 %v2194, %v2305
        %v2327 = vmul.f32 %v2195, %v2305
        %v2328 = vmul.f32 %v2196, %v2305
        %v2329 = vmul.f32 %v2197, %v2305
        %v2330 = vmul.f32 %v2198, %v2305
        %v2331 = vmul.f32 %v2199, %v2305
        %v2332 = vmul.f32 %v2200, %v2305
        %v2333 = vmul.f32 %v2201, %v2305
        %v2334 = vmul.f32 %v2202, %v2305
        %v2335 = vmul.f32 %v2203, %v2305
        %v2336 = vmul.f32 %v2204, %v2305
        %v2337 = vmul.f32 %v2205, %v2305
        %v2338 = vmul.f32 %v2206, %v2305
        %v2339 = vmul.f32 %v2207, %v2305
        %v2340 = vmul.f32 %v2208, %v2305
        %v2341 = vmul.f32 %v2209, %v2305
        %v2342 = vmul.f32 %v2210, %v2305
        %v2343 = vmul.f32 %v2211, %v2305
        %v2344 = vmul.f32 %v2212, %v2305
        %v2345 = vmul.f32 %v2213, %v2305
        %v2346 = vmul.f32 %v2214, %v2305
        %v2347 = vmul.f32 %v2215, %v2305
        %v2348 = vmul.f32 %v2216, %v2305
        %v2349 = vmul.f32 %v2217, %v2305
        %v2350 = vmul.f32 %v2218, %v2305
        %v2351 = vmul.f32 %v2219, %v2305
        %v2352 = vmul.f32 %v2220, %v2305
        %v2353 = vmul.f32 %v2221, %v2305
        %v2354 = vmul.f32 %v2222, %v2305
        %v2355 = vmul.f32 %v2223, %v2305
        %v2356 = vmul.f32 %v2224, %v2305
        %v2357 = vmul.f32 %v2225, %v2305
        %v2358 = vmul.f32 %v2226, %v2305
        %v2359 = vmul.f32 %v2227, %v2305
        %v2360 = vmul.f32 %v2228, %v2305
        %v2361 = vmul.f32 %v2229, %v2305
        %v2362 = vmul.f32 %v2230, %v2305
        %v2363 = vmul.f32 %v2231, %v2305
        %v2364 = vmul.f32 %v2232, %v2305
        %v2365 = vmul.f32 %v2233, %v2305
        %v2366 = vmul.f32 %v2234, %v2305
        %v2367 = vmul.f32 %v2235, %v2305
        %v2368 = vmul.f32 %v2236, %v2305
        %v2369 = vmul.f32 %v2237, %v2305
        %v2370 = vmul.f32 %v2238, %v2305
        %v2371 = vmul.f32 %v2239, %v2305
        %v2372 = vmul.f32 %v2240, %v2305
        %v2373 = vmul.f32 %v2241, %v2305
        %v2374 = vmul.f32 %v2242, %v2305
        %v2375 = vmul.f32 %v2243, %v2305
        %v2376 = vmul.f32 %v2244, %v2305
        %v2377 = vmul.f32 %v2245, %v2305
        %v2378 = vmul.f32 %v2246, %v2305
        %v2379 = vmul.f32 %v2247, %v2305
        %v2380 = vmul.f32 %v2248, %v2305
        %v2381 = vmul.f32 %v2249, %v2305
        %v2382 = vmul.f32 %v2250, %v2305
        %v2383 = vmul.f32 %v2251, %v2305
        %v2384 = vmul.f32 %v2252, %v2305
        %v2385 = vmul.f32 %v2253, %v2305
        %v2386 = vmul.f32 %v2254, %v2305
        %v2387 = vmul.f32 %v2255, %v2305
        %v2388 = vmul.f32 %v2256, %v2305
        %v2389 = vmul.f32 %v2257, %v2305
        %v2390 = vmul.f32 %v2258, %v2305
        %v2391 = vmul.f32 %v2259, %v2305
        %v2392 = vmul.f32 %v2260, %v2305
        %v2393 = vmul.f32 %v2261, %v2305
        %v2394 = vmul.f32 %v2262, %v2305
        %v2395 = vmul.f32 %v2263, %v2305
        %v2396 = vmul.f32 %v2264, %v2305
        %v2397 = vmul.f32 %v2265, %v2305
        %v2398 = vmul.f32 %v2266, %v2305
        %v2399 = vmul.f32 %v2267, %v2305
        %v2400 = vmul.f32 %v2268, %v2305
        %v2401 = vmul.f32 %v2269, %v2305
        %v2402 = vmul.f32 %v2270, %v2305
        %v2403 = vmul.f32 %v2271, %v2305
        %v2404 = vmul.f32 %v2272, %v2305
        %v2405 = vmul.f32 %v2273, %v2305
        %v2406 = vmul.f32 %v2274, %v2305
        %v2407 = vmul.f32 %v2275, %v2305
        %v2408 = vmul.f32 %v2276, %v2305
        %v2409 = vmul.f32 %v2277, %v2305
        %v2410 = vmul.f32 %v2278, %v2305
        %v2411 = vmul.f32 %v2279, %v2305
        %v2412 = vmul.f32 %v2280, %v2305
        %v2413 = vmul.f32 %v2281, %v2305
        %v2414 = vmul.f32 %v2282, %v2305
        %v2415 = vmul.f32 %v2283, %v2305
        %v2416 = vmul.f32 %v2284, %v2305
        %v2417 = vmul.f32 %v2285, %v2305
        %v2418 = vmul.f32 %v2286, %v2305
        %v2419 = vmul.f32 %v2287, %v2305
        %v2420 = vmul.f32 %v2288, %v2305
        %v2421 = vmul.f32 %v2289, %v2305
        %v2422 = vmul.f32 %v2290, %v2305
        %v2423 = vmul.f32 %v2291, %v2305
        %v2424 = vmul.f32 %v2292, %v2305
        %v2425 = vmul.f32 %v2293, %v2305
        %v2426 = vmul.f32 %v2294, %v2305
        %v2427 = vmul.f32 %v2295, %v2305
        %v2428 = vmul.f32 %v2296, %v2305
        %v2429 = vmul.f32 %v2297, %v2305
        %v2430 = vmul.f32 %v2298, %v2305
        %v2431 = vmul.f32 %v2299, %v2305
        %v2432 = vmul.f32 %v2300, %v2305
        %v2433 = vmul.f32 %v2301, %v2305
        %v2434 = vlaneseq
        %v2435 = vshrl.u32 %v2434, 7
        %v2436 = vsub.s32 0, %v2435
        %v2437 = vrot.slane %v508, %v2436
        %v2438 = vadd.f32 %v2306, %v2437
        %v2439 = vadd.f32 %v2307, %v2437
        %v2440 = vadd.f32 %v2308, %v2437
        %v2441 = vadd.f32 %v2309, %v2437
        %v2442 = vadd.f32 %v2310, %v2437
        %v2443 = vadd.f32 %v2311, %v2437
        %v2444 = vadd.f32 %v2312, %v2437
        %v2445 = vadd.f32 %v2313, %v2437
        %v2446 = vadd.f32 %v2314, %v2437
        %v2447 = vadd.f32 %v2315, %v2437
        %v2448 = vadd.f32 %v2316, %v2437
        %v2449 = vadd.f32 %v2317, %v2437
        %v2450 = vadd.f32 %v2318, %v2437
        %v2451 = vadd.f32 %v2319, %v2437
        %v2452 = vadd.f32 %v2320, %v2437
        %v2453 = vadd.f32 %v2321, %v2437
        %v2454 = vadd.f32 %v2322, %v2437
        %v2455 = vadd.f32 %v2323, %v2437
        %v2456 = vadd.f32 %v2324, %v2437
        %v2457 = vadd.f32 %v2325, %v2437
        %v2458 = vadd.f32 %v2326, %v2437
        %v2459 = vadd.f32 %v2327, %v2437
        %v2460 = vadd.f32 %v2328, %v2437
        %v2461 = vadd.f32 %v2329, %v2437
        %v2462 = vadd.f32 %v2330, %v2437
        %v2463 = vadd.f32 %v2331, %v2437
        %v2464 = vadd.f32 %v2332, %v2437
        %v2465 = vadd.f32 %v2333, %v2437
        %v2466 = vadd.f32 %v2334, %v2437
        %v2467 = vadd.f32 %v2335, %v2437
        %v2468 = vadd.f32 %v2336, %v2437
        %v2469 = vadd.f32 %v2337, %v2437
        %v2470 = vadd.f32 %v2338, %v2437
        %v2471 = vadd.f32 %v2339, %v2437
        %v2472 = vadd.f32 %v2340, %v2437
        %v2473 = vadd.f32 %v2341, %v2437
        %v2474 = vadd.f32 %v2342, %v2437
        %v2475 = vadd.f32 %v2343, %v2437
        %v2476 = vadd.f32 %v2344, %v2437
        %v2477 = vadd.f32 %v2345, %v2437
        %v2478 = vadd.f32 %v2346, %v2437
        %v2479 = vadd.f32 %v2347, %v2437
        %v2480 = vadd.f32 %v2348, %v2437
        %v2481 = vadd.f32 %v2349, %v2437
        %v2482 = vadd.f32 %v2350, %v2437
        %v2483 = vadd.f32 %v2351, %v2437
        %v2484 = vadd.f32 %v2352, %v2437
        %v2485 = vadd.f32 %v2353, %v2437
        %v2486 = vadd.f32 %v2354, %v2437
        %v2487 = vadd.f32 %v2355, %v2437
        %v2488 = vadd.f32 %v2356, %v2437
        %v2489 = vadd.f32 %v2357, %v2437
        %v2490 = vadd.f32 %v2358, %v2437
        %v2491 = vadd.f32 %v2359, %v2437
        %v2492 = vadd.f32 %v2360, %v2437
        %v2493 = vadd.f32 %v2361, %v2437
        %v2494 = vadd.f32 %v2362, %v2437
        %v2495 = vadd.f32 %v2363, %v2437
        %v2496 = vadd.f32 %v2364, %v2437
        %v2497 = vadd.f32 %v2365, %v2437
        %v2498 = vadd.f32 %v2366, %v2437
        %v2499 = vadd.f32 %v2367, %v2437
        %v2500 = vadd.f32 %v2368, %v2437
        %v2501 = vadd.f32 %v2369, %v2437
        %v2502 = vadd.f32 %v2370, %v2437
        %v2503 = vadd.f32 %v2371, %v2437
        %v2504 = vadd.f32 %v2372, %v2437
        %v2505 = vadd.f32 %v2373, %v2437
        %v2506 = vadd.f32 %v2374, %v2437
        %v2507 = vadd.f32 %v2375, %v2437
        %v2508 = vadd.f32 %v2376, %v2437
        %v2509 = vadd.f32 %v2377, %v2437
        %v2510 = vadd.f32 %v2378, %v2437
        %v2511 = vadd.f32 %v2379, %v2437
        %v2512 = vadd.f32 %v2380, %v2437
        %v2513 = vadd.f32 %v2381, %v2437
        %v2514 = vadd.f32 %v2382, %v2437
        %v2515 = vadd.f32 %v2383, %v2437
        %v2516 = vadd.f32 %v2384, %v2437
        %v2517 = vadd.f32 %v2385, %v2437
        %v2518 = vadd.f32 %v2386, %v2437
        %v2519 = vadd.f32 %v2387, %v2437
        %v2520 = vadd.f32 %v2388, %v2437
        %v2521 = vadd.f32 %v2389, %v2437
        %v2522 = vadd.f32 %v2390, %v2437
        %v2523 = vadd.f32 %v2391, %v2437
        %v2524 = vadd.f32 %v2392, %v2437
        %v2525 = vadd.f32 %v2393, %v2437
        %v2526 = vadd.f32 %v2394, %v2437
        %v2527 = vadd.f32 %v2395, %v2437
        %v2528 = vadd.f32 %v2396, %v2437
        %v2529 = vadd.f32 %v2397, %v2437
        %v2530 = vadd.f32 %v2398, %v2437
        %v2531 = vadd.f32 %v2399, %v2437
        %v2532 = vadd.f32 %v2400, %v2437
        %v2533 = vadd.f32 %v2401, %v2437
        %v2534 = vadd.f32 %v2402, %v2437
        %v2535 = vadd.f32 %v2403, %v2437
        %v2536 = vadd.f32 %v2404, %v2437
        %v2537 = vadd.f32 %v2405, %v2437
        %v2538 = vadd.f32 %v2406, %v2437
        %v2539 = vadd.f32 %v2407, %v2437
        %v2540 = vadd.f32 %v2408, %v2437
        %v2541 = vadd.f32 %v2409, %v2437
        %v2542 = vadd.f32 %v2410, %v2437
        %v2543 = vadd.f32 %v2411, %v2437
        %v2544 = vadd.f32 %v2412, %v2437
        %v2545 = vadd.f32 %v2413, %v2437
        %v2546 = vadd.f32 %v2414, %v2437
        %v2547 = vadd.f32 %v2415, %v2437
        %v2548 = vadd.f32 %v2416, %v2437
        %v2549 = vadd.f32 %v2417, %v2437
        %v2550 = vadd.f32 %v2418, %v2437
        %v2551 = vadd.f32 %v2419, %v2437
        %v2552 = vadd.f32 %v2420, %v2437
        %v2553 = vadd.f32 %v2421, %v2437
        %v2554 = vadd.f32 %v2422, %v2437
        %v2555 = vadd.f32 %v2423, %v2437
        %v2556 = vadd.f32 %v2424, %v2437
        %v2557 = vadd.f32 %v2425, %v2437
        %v2558 = vadd.f32 %v2426, %v2437
        %v2559 = vadd.f32 %v2427, %v2437
        %v2560 = vadd.f32 %v2428, %v2437
        %v2561 = vadd.f32 %v2429, %v2437
        %v2562 = vadd.f32 %v2430, %v2437
        %v2563 = vadd.f32 %v2431, %v2437
        %v2564 = vadd.f32 %v2432, %v2437
        %v2565 = vadd.f32 %v2433, %v2437
        %v2566 = vpack.c.bf16 %v2439, %v2438
        %v2567 = vpack.c.bf16 %v2441, %v2440
        %v2568 = vpack.c.bf16 %v2443, %v2442
        %v2569 = vpack.c.bf16 %v2445, %v2444
        %v2570 = vpack.c.bf16 %v2447, %v2446
        %v2571 = vpack.c.bf16 %v2449, %v2448
        %v2572 = vpack.c.bf16 %v2451, %v2450
        %v2573 = vpack.c.bf16 %v2453, %v2452
        %v2574 = vpack.c.bf16 %v2455, %v2454
        %v2575 = vpack.c.bf16 %v2457, %v2456
        %v2576 = vpack.c.bf16 %v2459, %v2458
        %v2577 = vpack.c.bf16 %v2461, %v2460
        %v2578 = vpack.c.bf16 %v2463, %v2462
        %v2579 = vpack.c.bf16 %v2465, %v2464
        %v2580 = vpack.c.bf16 %v2467, %v2466
        %v2581 = vpack.c.bf16 %v2469, %v2468
        %v2582 = vpack.c.bf16 %v2471, %v2470
        %v2583 = vpack.c.bf16 %v2473, %v2472
        %v2584 = vpack.c.bf16 %v2475, %v2474
        %v2585 = vpack.c.bf16 %v2477, %v2476
        %v2586 = vpack.c.bf16 %v2479, %v2478
        %v2587 = vpack.c.bf16 %v2481, %v2480
        %v2588 = vpack.c.bf16 %v2483, %v2482
        %v2589 = vpack.c.bf16 %v2485, %v2484
        %v2590 = vpack.c.bf16 %v2487, %v2486
        %v2591 = vpack.c.bf16 %v2489, %v2488
        %v2592 = vpack.c.bf16 %v2491, %v2490
        %v2593 = vpack.c.bf16 %v2493, %v2492
        %v2594 = vpack.c.bf16 %v2495, %v2494
        %v2595 = vpack.c.bf16 %v2497, %v2496
        %v2596 = vpack.c.bf16 %v2499, %v2498
        %v2597 = vpack.c.bf16 %v2501, %v2500
        %v2598 = vpack.c.bf16 %v2503, %v2502
        %v2599 = vpack.c.bf16 %v2505, %v2504
        %v2600 = vpack.c.bf16 %v2507, %v2506
        %v2601 = vpack.c.bf16 %v2509, %v2508
        %v2602 = vpack.c.bf16 %v2511, %v2510
        %v2603 = vpack.c.bf16 %v2513, %v2512
        %v2604 = vpack.c.bf16 %v2515, %v2514
        %v2605 = vpack.c.bf16 %v2517, %v2516
        %v2606 = vpack.c.bf16 %v2519, %v2518
        %v2607 = vpack.c.bf16 %v2521, %v2520
        %v2608 = vpack.c.bf16 %v2523, %v2522
        %v2609 = vpack.c.bf16 %v2525, %v2524
        %v2610 = vpack.c.bf16 %v2527, %v2526
        %v2611 = vpack.c.bf16 %v2529, %v2528
        %v2612 = vpack.c.bf16 %v2531, %v2530
        %v2613 = vpack.c.bf16 %v2533, %v2532
        %v2614 = vpack.c.bf16 %v2535, %v2534
        %v2615 = vpack.c.bf16 %v2537, %v2536
        %v2616 = vpack.c.bf16 %v2539, %v2538
        %v2617 = vpack.c.bf16 %v2541, %v2540
        %v2618 = vpack.c.bf16 %v2543, %v2542
        %v2619 = vpack.c.bf16 %v2545, %v2544
        %v2620 = vpack.c.bf16 %v2547, %v2546
        %v2621 = vpack.c.bf16 %v2549, %v2548
        %v2622 = vpack.c.bf16 %v2551, %v2550
        %v2623 = vpack.c.bf16 %v2553, %v2552
        %v2624 = vpack.c.bf16 %v2555, %v2554
        %v2625 = vpack.c.bf16 %v2557, %v2556
        %v2626 = vpack.c.bf16 %v2559, %v2558
        %v2627 = vpack.c.bf16 %v2561, %v2560
        %v2628 = vpack.c.bf16 %v2563, %v2562
        %v2629 = vpack.c.bf16 %v2565, %v2564
        %v2630 = vld [vmem:[%s2] sm:$0xf]
        %v2631 = vld [vmem:[%s2 + $0x4] sm:$0xf]
        %v2632 = vld [vmem:[%s2 + $0x8] sm:$0xf]
        %v2633 = vld [vmem:[%s2 + $0xc] sm:$0xf]
        %v2634 = vld [vmem:[%s2 + $0x10] sm:$0xf]
        %v2635 = vld [vmem:[%s2 + $0x14] sm:$0xf]
        %v2636 = vld [vmem:[%s2 + $0x18] sm:$0xf]
        %v2637 = vld [vmem:[%s2 + $0x1c] sm:$0xf]
        %v2638 = vld [vmem:[%s2 + $0x20] sm:$0xf]
        %v2639 = vld [vmem:[%s2 + $0x24] sm:$0xf]
        %v2640 = vld [vmem:[%s2 + $0x28] sm:$0xf]
        %v2641 = vld [vmem:[%s2 + $0x2c] sm:$0xf]
        %v2642 = vld [vmem:[%s2 + $0x30] sm:$0xf]
        %v2643 = vld [vmem:[%s2 + $0x34] sm:$0xf]
        %v2644 = vld [vmem:[%s2 + $0x38] sm:$0xf]
        %v2645 = vld [vmem:[%s2 + $0x3c] sm:$0xf]
        %v2646 = vld [vmem:[%s3] sm:$0x1]
        %v2648 = vlaneseq
        %v2649 = vshrl.u32 %v2648, 7
        %v2650 = vsub.s32 0, %v2649
        %v2651 = vrot.slane %v2646, %v2650
        %v2669 = vunpack.c.l.b16 %v2630
        %v2670 = vunpack.c.l.b16 %v2631
        %v2671 = vunpack.c.l.b16 %v2632
        %v2672 = vunpack.c.l.b16 %v2633
        %v2673 = vunpack.c.l.b16 %v2634
        %v2674 = vunpack.c.l.b16 %v2635
        %v2675 = vunpack.c.l.b16 %v2636
        %v2676 = vunpack.c.l.b16 %v2637
        %v2677 = vunpack.c.l.b16 %v2638
        %v2678 = vunpack.c.l.b16 %v2639
        %v2679 = vunpack.c.l.b16 %v2640
        %v2680 = vunpack.c.l.b16 %v2641
        %v2681 = vunpack.c.l.b16 %v2642
        %v2682 = vunpack.c.l.b16 %v2643
        %v2683 = vunpack.c.l.b16 %v2644
        %v2684 = vunpack.c.l.b16 %v2645
        %v2685 = vpack.c.b16 %v2670, %v2669
        %v2686 = vpack.c.b16 %v2672, %v2671
        %v2687 = vpack.c.b16 %v2674, %v2673
        %v2688 = vpack.c.b16 %v2676, %v2675
        %v2689 = vpack.c.b16 %v2678, %v2677
        %v2690 = vpack.c.b16 %v2680, %v2679
        %v2691 = vpack.c.b16 %v2682, %v2681
        %v2692 = vpack.c.b16 %v2684, %v2683
        %2701 = vmatprep.subr.bf16.mxu0 0
        %2702 = vmatpush1.bf16.msra.mxu0 %v2685
        %2703 = vmatprep.subr.bf16.mxu0 0
        %2704 = vmatpush1.bf16.msra.mxu0 %v2686
        %2705 = vmatprep.subr.bf16.mxu0 0
        %2706 = vmatpush1.bf16.msra.mxu0 %v2687
        %2707 = vmatprep.subr.bf16.mxu0 0
        %2708 = vmatpush1.bf16.msra.mxu0 %v2688
        %2709 = vmatprep.subr.bf16.mxu0 0
        %2710 = vmatpush1.bf16.msra.mxu0 %v2689
        %2711 = vmatprep.subr.bf16.mxu0 0
        %2712 = vmatpush1.bf16.msra.mxu0 %v2690
        %2713 = vmatprep.subr.bf16.mxu0 0
        %2714 = vmatpush1.bf16.msra.mxu0 %v2691
        %2715 = vmatprep.subr.bf16.mxu0 0
        %2716 = vmatpush1.bf16.msra.mxu0 %v2692
        %2717 = vmatprep.subr.bf16.mxu0 0
        %2718 = vmatpush1.bf16.msra.mxu0 0
        %2719 = vmatprep.subr.bf16.mxu0 0
        %2720 = vmatpush1.bf16.msra.mxu0 0
        %2721 = vmatprep.subr.bf16.mxu0 0
        %2722 = vmatpush1.bf16.msra.mxu0 0
        %2723 = vmatprep.subr.bf16.mxu0 0
        %2724 = vmatpush1.bf16.msra.mxu0 0
        %2725 = vmatprep.subr.bf16.mxu0 0
        %2726 = vmatpush1.bf16.msra.mxu0 0
        %2727 = vmatprep.subr.bf16.mxu0 0
        %2728 = vmatpush1.bf16.msra.mxu0 0
        %2729 = vmatprep.subr.bf16.mxu0 0
        %2730 = vmatpush1.bf16.msra.mxu0 0
        %2731 = vmatprep.subr.bf16.mxu0 0
        %2732 = vmatpush1.bf16.msra.mxu0 0
        %2733 = vmatprep.mubr.bf16.mxu0 0
        %2734 = vmatmul.mubr.bf16.gmra.mrb[0].mxu0 %v2566
        %v2735 = vpop.f32.mrb[0].mxu0
        %v2736 = vadd.f32 %v2651, %v2735
        %v2737 = vpop.f32.mrb[0].mxu0
        %v2738 = vpop.f32.mrb[0].mxu0
        %v2739 = vadd.f32 %v2651, %v2738
        %v2740 = vpop.f32.mrb[0].mxu0
        %2741 = vmatprep.mubr.bf16.mxu0 0
        %2742 = vmatmul.mubr.bf16.gmra.mrb[0].mxu0 %v2567
        %v2743 = vpop.f32.mrb[0].mxu0
        %v2744 = vadd.f32 %v2651, %v2743
        %v2745 = vpop.f32.mrb[0].mxu0
        %v2746 = vpop.f32.mrb[0].mxu0
        %v2747 = vadd.f32 %v2651, %v2746
        %v2748 = vpop.f32.mrb[0].mxu0
        %2749 = vmatprep.mubr.bf16.mxu0 0
        %2750 = vmatmul.mubr.bf16.gmra.mrb[0].mxu0 %v2568
        %v2751 = vpop.f32.mrb[0].mxu0
        %v2752 = vadd.f32 %v2651, %v2751
        %v2753 = vpop.f32.mrb[0].mxu0
        %v2754 = vpop.f32.mrb[0].mxu0
        %v2755 = vadd.f32 %v2651, %v2754
        %v2756 = vpop.f32.mrb[0].mxu0
        %2757 = vmatprep.mubr.bf16.mxu0 0
        %2758 = vmatmul.mubr.bf16.gmra.mrb[0].mxu0 %v2569
        %v2759 = vpop.f32.mrb[0].mxu0
        %v2760 = vadd.f32 %v2651, %v2759
        %v2761 = vpop.f32.mrb[0].mxu0
        %v2762 = vpop.f32.mrb[0].mxu0
        %v2763 = vadd.f32 %v2651, %v2762
        %v2764 = vpop.f32.mrb[0].mxu0
        %2765 = vmatprep.mubr.bf16.mxu0 0
        %2766 = vmatmul.mubr.bf16.gmra.mrb[0].mxu0 %v2570
        %v2767 = vpop.f32.mrb[0].mxu0
        %v2768 = vadd.f32 %v2651, %v2767
        %v2769 = vpop.f32.mrb[0].mxu0
        %v2770 = vpop.f32.mrb[0].mxu0
        %v2771 = vadd.f32 %v2651, %v2770
        %v2772 = vpop.f32.mrb[0].mxu0
        %2773 = vmatprep.mubr.bf16.mxu0 0
        %2774 = vmatmul.mubr.bf16.gmra.mrb[0].mxu0 %v2571
        %v2775 = vpop.f32.mrb[0].mxu0
        %v2776 = vadd.f32 %v2651, %v2775
        %v2777 = vpop.f32.mrb[0].mxu0
        %v2778 = vpop.f32.mrb[0].mxu0
        %v2779 = vadd.f32 %v2651, %v2778
        %v2780 = vpop.f32.mrb[0].mxu0
        %2781 = vmatprep.mubr.bf16.mxu0 0
        %2782 = vmatmul.mubr.bf16.gmra.mrb[0].mxu0 %v2572
        %v2783 = vpop.f32.mrb[0].mxu0
        %v2784 = vadd.f32 %v2651, %v2783
        %v2785 = vpop.f32.mrb[0].mxu0
        %v2786 = vpop.f32.mrb[0].mxu0
        %v2787 = vadd.f32 %v2651, %v2786
        %v2788 = vpop.f32.mrb[0].mxu0
        %2789 = vmatprep.mubr.bf16.mxu0 0
        %2790 = vmatmul.mubr.bf16.gmra.mrb[0].mxu0 %v2573
        %v2791 = vpop.f32.mrb[0].mxu0
        %v2792 = vadd.f32 %v2651, %v2791
        %v2793 = vpop.f32.mrb[0].mxu0
        %v2794 = vpop.f32.mrb[0].mxu0
        %v2795 = vadd.f32 %v2651, %v2794
        %v2796 = vpop.f32.mrb[0].mxu0
        %2797 = vmatprep.mubr.bf16.mxu0 0
        %2798 = vmatmul.mubr.bf16.gmra.mrb[0].mxu0 %v2574
        %v2799 = vpop.f32.mrb[0].mxu0
        %v2800 = vadd.f32 %v2651, %v2799
        %v2801 = vpop.f32.mrb[0].mxu0
        %v2802 = vpop.f32.mrb[0].mxu0
        %v2803 = vadd.f32 %v2651, %v2802
        %v2804 = vpop.f32.mrb[0].mxu0
        %2805 = vmatprep.mubr.bf16.mxu0 0
        %2806 = vmatmul.mubr.bf16.gmra.mrb[0].mxu0 %v2575
        %v2807 = vpop.f32.mrb[0].mxu0
        %v2808 = vadd.f32 %v2651, %v2807
        %v2809 = vpop.f32.mrb[0].mxu0
        %v2810 = vpop.f32.mrb[0].mxu0
        %v2811 = vadd.f32 %v2651, %v2810
        %v2812 = vpop.f32.mrb[0].mxu0
        %2813 = vmatprep.mubr.bf16.mxu0 0
        %2814 = vmatmul.mubr.bf16.gmra.mrb[0].mxu0 %v2576
        %v2815 = vpop.f32.mrb[0].mxu0
        %v2816 = vadd.f32 %v2651, %v2815
        %v2817 = vpop.f32.mrb[0].mxu0
        %v2818 = vpop.f32.mrb[0].mxu0
        %v2819 = vadd.f32 %v2651, %v2818
        %v2820 = vpop.f32.mrb[0].mxu0
        %2821 = vmatprep.mubr.bf16.mxu0 0
        %2822 = vmatmul.mubr.bf16.gmra.mrb[0].mxu0 %v2577
        %v2823 = vpop.f32.mrb[0].mxu0
        %v2824 = vadd.f32 %v2651, %v2823
        %v2825 = vpop.f32.mrb[0].mxu0
        %v2826 = vpop.f32.mrb[0].mxu0
        %v2827 = vadd.f32 %v2651, %v2826
        %v2828 = vpop.f32.mrb[0].mxu0
        %2829 = vmatprep.mubr.bf16.mxu0 0
        %2830 = vmatmul.mubr.bf16.gmra.mrb[0].mxu0 %v2578
        %v2831 = vpop.f32.mrb[0].mxu0
        %v2832 = vadd.f32 %v2651, %v2831
        %v2833 = vpop.f32.mrb[0].mxu0
        %v2834 = vpop.f32.mrb[0].mxu0
        %v2835 = vadd.f32 %v2651, %v2834
        %v2836 = vpop.f32.mrb[0].mxu0
        %2837 = vmatprep.mubr.bf16.mxu0 0
        %2838 = vmatmul.mubr.bf16.gmra.mrb[0].mxu0 %v2579
        %v2839 = vpop.f32.mrb[0].mxu0
        %v2840 = vadd.f32 %v2651, %v2839
        %v2841 = vpop.f32.mrb[0].mxu0
        %v2842 = vpop.f32.mrb[0].mxu0
        %v2843 = vadd.f32 %v2651, %v2842
        %v2844 = vpop.f32.mrb[0].mxu0
        %2845 = vmatprep.mubr.bf16.mxu0 0
        %2846 = vmatmul.mubr.bf16.gmra.mrb[0].mxu0 %v2580
        %v2847 = vpop.f32.mrb[0].mxu0
        %v2848 = vadd.f32 %v2651, %v2847
        %v2849 = vpop.f32.mrb[0].mxu0
        %v2850 = vpop.f32.mrb[0].mxu0
        %v2851 = vadd.f32 %v2651, %v2850
        %v2852 = vpop.f32.mrb[0].mxu0
        %2853 = vmatprep.mubr.bf16.mxu0 0
        %2854 = vmatmul.mubr.bf16.gmra.mrb[0].mxu0 %v2581
        %v2855 = vpop.f32.mrb[0].mxu0
        %v2856 = vadd.f32 %v2651, %v2855
        %v2857 = vpop.f32.mrb[0].mxu0
        %v2858 = vpop.f32.mrb[0].mxu0
        %v2859 = vadd.f32 %v2651, %v2858
        %v2860 = vpop.f32.mrb[0].mxu0
        %2861 = vmatprep.mubr.bf16.mxu0 0
        %2862 = vmatmul.mubr.bf16.gmra.mrb[0].mxu0 %v2582
        %v2863 = vpop.f32.mrb[0].mxu0
        %v2864 = vadd.f32 %v2651, %v2863
        %v2865 = vpop.f32.mrb[0].mxu0
        %v2866 = vpop.f32.mrb[0].mxu0
        %v2867 = vadd.f32 %v2651, %v2866
        %v2868 = vpop.f32.mrb[0].mxu0
        %2869 = vmatprep.mubr.bf16.mxu0 0
        %2870 = vmatmul.mubr.bf16.gmra.mrb[0].mxu0 %v2583
        %v2871 = vpop.f32.mrb[0].mxu0
        %v2872 = vadd.f32 %v2651, %v2871
        %v2873 = vpop.f32.mrb[0].mxu0
        %v2874 = vpop.f32.mrb[0].mxu0
        %v2875 = vadd.f32 %v2651, %v2874
        %v2876 = vpop.f32.mrb[0].mxu0
        %2877 = vmatprep.mubr.bf16.mxu0 0
        %2878 = vmatmul.mubr.bf16.gmra.mrb[0].mxu0 %v2584
        %v2879 = vpop.f32.mrb[0].mxu0
        %v2880 = vadd.f32 %v2651, %v2879
        %v2881 = vpop.f32.mrb[0].mxu0
        %v2882 = vpop.f32.mrb[0].mxu0
        %v2883 = vadd.f32 %v2651, %v2882
        %v2884 = vpop.f32.mrb[0].mxu0
        %2885 = vmatprep.mubr.bf16.mxu0 0
        %2886 = vmatmul.mubr.bf16.gmra.mrb[0].mxu0 %v2585
        %v2887 = vpop.f32.mrb[0].mxu0
        %v2888 = vadd.f32 %v2651, %v2887
        %v2889 = vpop.f32.mrb[0].mxu0
        %v2890 = vpop.f32.mrb[0].mxu0
        %v2891 = vadd.f32 %v2651, %v2890
        %v2892 = vpop.f32.mrb[0].mxu0
        %2893 = vmatprep.mubr.bf16.mxu0 0
        %2894 = vmatmul.mubr.bf16.gmra.mrb[0].mxu0 %v2586
        %v2895 = vpop.f32.mrb[0].mxu0
        %v2896 = vadd.f32 %v2651, %v2895
        %v2897 = vpop.f32.mrb[0].mxu0
        %v2898 = vpop.f32.mrb[0].mxu0
        %v2899 = vadd.f32 %v2651, %v2898
        %v2900 = vpop.f32.mrb[0].mxu0
        %2901 = vmatprep.mubr.bf16.mxu0 0
        %2902 = vmatmul.mubr.bf16.gmra.mrb[0].mxu0 %v2587
        %v2903 = vpop.f32.mrb[0].mxu0
        %v2904 = vadd.f32 %v2651, %v2903
        %v2905 = vpop.f32.mrb[0].mxu0
        %v2906 = vpop.f32.mrb[0].mxu0
        %v2907 = vadd.f32 %v2651, %v2906
        %v2908 = vpop.f32.mrb[0].mxu0
        %2909 = vmatprep.mubr.bf16.mxu0 0
        %2910 = vmatmul.mubr.bf16.gmra.mrb[0].mxu0 %v2588
        %v2911 = vpop.f32.mrb[0].mxu0
        %v2912 = vadd.f32 %v2651, %v2911
        %v2913 = vpop.f32.mrb[0].mxu0
        %v2914 = vpop.f32.mrb[0].mxu0
        %v2915 = vadd.f32 %v2651, %v2914
        %v2916 = vpop.f32.mrb[0].mxu0
        %2917 = vmatprep.mubr.bf16.mxu0 0
        %2918 = vmatmul.mubr.bf16.gmra.mrb[0].mxu0 %v2589
        %v2919 = vpop.f32.mrb[0].mxu0
        %v2920 = vadd.f32 %v2651, %v2919
        %v2921 = vpop.f32.mrb[0].mxu0
        %v2922 = vpop.f32.mrb[0].mxu0
        %v2923 = vadd.f32 %v2651, %v2922
        %v2924 = vpop.f32.mrb[0].mxu0
        %2925 = vmatprep.mubr.bf16.mxu0 0
        %2926 = vmatmul.mubr.bf16.gmra.mrb[0].mxu0 %v2590
        %v2927 = vpop.f32.mrb[0].mxu0
        %v2928 = vadd.f32 %v2651, %v2927
        %v2929 = vpop.f32.mrb[0].mxu0
        %v2930 = vpop.f32.mrb[0].mxu0
        %v2931 = vadd.f32 %v2651, %v2930
        %v2932 = vpop.f32.mrb[0].mxu0
        %2933 = vmatprep.mubr.bf16.mxu0 0
        %2934 = vmatmul.mubr.bf16.gmra.mrb[0].mxu0 %v2591
        %v2935 = vpop.f32.mrb[0].mxu0
        %v2936 = vadd.f32 %v2651, %v2935
        %v2937 = vpop.f32.mrb[0].mxu0
        %v2938 = vpop.f32.mrb[0].mxu0
        %v2939 = vadd.f32 %v2651, %v2938
        %v2940 = vpop.f32.mrb[0].mxu0
        %2941 = vmatprep.mubr.bf16.mxu0 0
        %2942 = vmatmul.mubr.bf16.gmra.mrb[0].mxu0 %v2592
        %v2943 = vpop.f32.mrb[0].mxu0
        %v2944 = vadd.f32 %v2651, %v2943
        %v2945 = vpop.f32.mrb[0].mxu0
        %v2946 = vpop.f32.mrb[0].mxu0
        %v2947 = vadd.f32 %v2651, %v2946
        %v2948 = vpop.f32.mrb[0].mxu0
        %2949 = vmatprep.mubr.bf16.mxu0 0
        %2950 = vmatmul.mubr.bf16.gmra.mrb[0].mxu0 %v2593
        %v2951 = vpop.f32.mrb[0].mxu0
        %v2952 = vadd.f32 %v2651, %v2951
        %v2953 = vpop.f32.mrb[0].mxu0
        %v2954 = vpop.f32.mrb[0].mxu0
        %v2955 = vadd.f32 %v2651, %v2954
        %v2956 = vpop.f32.mrb[0].mxu0
        %2957 = vmatprep.mubr.bf16.mxu0 0
        %2958 = vmatmul.mubr.bf16.gmra.mrb[0].mxu0 %v2594
        %v2959 = vpop.f32.mrb[0].mxu0
        %v2960 = vadd.f32 %v2651, %v2959
        %v2961 = vpop.f32.mrb[0].mxu0
        %v2962 = vpop.f32.mrb[0].mxu0
        %v2963 = vadd.f32 %v2651, %v2962
        %v2964 = vpop.f32.mrb[0].mxu0
        %2965 = vmatprep.mubr.bf16.mxu0 0
        %2966 = vmatmul.mubr.bf16.gmra.mrb[0].mxu0 %v2595
        %v2967 = vpop.f32.mrb[0].mxu0
        %v2968 = vadd.f32 %v2651, %v2967
        %v2969 = vpop.f32.mrb[0].mxu0
        %v2970 = vpop.f32.mrb[0].mxu0
        %v2971 = vadd.f32 %v2651, %v2970
        %v2972 = vpop.f32.mrb[0].mxu0
        %2973 = vmatprep.mubr.bf16.mxu0 0
        %2974 = vmatmul.mubr.bf16.gmra.mrb[0].mxu0 %v2596
        %v2975 = vpop.f32.mrb[0].mxu0
        %v2976 = vadd.f32 %v2651, %v2975
        %v2977 = vpop.f32.mrb[0].mxu0
        %v2978 = vpop.f32.mrb[0].mxu0
        %v2979 = vadd.f32 %v2651, %v2978
        %v2980 = vpop.f32.mrb[0].mxu0
        %2981 = vmatprep.mubr.bf16.mxu0 0
        %2982 = vmatmul.mubr.bf16.gmra.mrb[0].mxu0 %v2597
        %v2983 = vpop.f32.mrb[0].mxu0
        %v2984 = vadd.f32 %v2651, %v2983
        %v2985 = vpop.f32.mrb[0].mxu0
        %v2986 = vpop.f32.mrb[0].mxu0
        %v2987 = vadd.f32 %v2651, %v2986
        %v2988 = vpop.f32.mrb[0].mxu0
        %2989 = vmatprep.mubr.bf16.mxu0 0
        %2990 = vmatmul.mubr.bf16.gmra.mrb[0].mxu0 %v2598
        %v2991 = vpop.f32.mrb[0].mxu0
        %v2992 = vadd.f32 %v2651, %v2991
        %v2993 = vpop.f32.mrb[0].mxu0
        %v2994 = vpop.f32.mrb[0].mxu0
        %v2995 = vadd.f32 %v2651, %v2994
        %v2996 = vpop.f32.mrb[0].mxu0
        %2997 = vmatprep.mubr.bf16.mxu0 0
        %2998 = vmatmul.mubr.bf16.gmra.mrb[0].mxu0 %v2599
        %v2999 = vpop.f32.mrb[0].mxu0
        %v3000 = vadd.f32 %v2651, %v2999
        %v3001 = vpop.f32.mrb[0].mxu0
        %v3002 = vpop.f32.mrb[0].mxu0
        %v3003 = vadd.f32 %v2651, %v3002
        %v3004 = vpop.f32.mrb[0].mxu0
        %3005 = vmatprep.mubr.bf16.mxu0 0
        %3006 = vmatmul.mubr.bf16.gmra.mrb[0].mxu0 %v2600
        %v3007 = vpop.f32.mrb[0].mxu0
        %v3008 = vadd.f32 %v2651, %v3007
        %v3009 = vpop.f32.mrb[0].mxu0
        %v3010 = vpop.f32.mrb[0].mxu0
        %v3011 = vadd.f32 %v2651, %v3010
        %v3012 = vpop.f32.mrb[0].mxu0
        %3013 = vmatprep.mubr.bf16.mxu0 0
        %3014 = vmatmul.mubr.bf16.gmra.mrb[0].mxu0 %v2601
        %v3015 = vpop.f32.mrb[0].mxu0
        %v3016 = vadd.f32 %v2651, %v3015
        %v3017 = vpop.f32.mrb[0].mxu0
        %v3018 = vpop.f32.mrb[0].mxu0
        %v3019 = vadd.f32 %v2651, %v3018
        %v3020 = vpop.f32.mrb[0].mxu0
        %3021 = vmatprep.mubr.bf16.mxu0 0
        %3022 = vmatmul.mubr.bf16.gmra.mrb[0].mxu0 %v2602
        %v3023 = vpop.f32.mrb[0].mxu0
        %v3024 = vadd.f32 %v2651, %v3023
        %v3025 = vpop.f32.mrb[0].mxu0
        %v3026 = vpop.f32.mrb[0].mxu0
        %v3027 = vadd.f32 %v2651, %v3026
        %v3028 = vpop.f32.mrb[0].mxu0
        %3029 = vmatprep.mubr.bf16.mxu0 0
        %3030 = vmatmul.mubr.bf16.gmra.mrb[0].mxu0 %v2603
        %v3031 = vpop.f32.mrb[0].mxu0
        %v3032 = vadd.f32 %v2651, %v3031
        %v3033 = vpop.f32.mrb[0].mxu0
        %v3034 = vpop.f32.mrb[0].mxu0
        %v3035 = vadd.f32 %v2651, %v3034
        %v3036 = vpop.f32.mrb[0].mxu0
        %3037 = vmatprep.mubr.bf16.mxu0 0
        %3038 = vmatmul.mubr.bf16.gmra.mrb[0].mxu0 %v2604
        %v3039 = vpop.f32.mrb[0].mxu0
        %v3040 = vadd.f32 %v2651, %v3039
        %v3041 = vpop.f32.mrb[0].mxu0
        %v3042 = vpop.f32.mrb[0].mxu0
        %v3043 = vadd.f32 %v2651, %v3042
        %v3044 = vpop.f32.mrb[0].mxu0
        %3045 = vmatprep.mubr.bf16.mxu0 0
        %3046 = vmatmul.mubr.bf16.gmra.mrb[0].mxu0 %v2605
        %v3047 = vpop.f32.mrb[0].mxu0
        %v3048 = vadd.f32 %v2651, %v3047
        %v3049 = vpop.f32.mrb[0].mxu0
        %v3050 = vpop.f32.mrb[0].mxu0
        %v3051 = vadd.f32 %v2651, %v3050
        %v3052 = vpop.f32.mrb[0].mxu0
        %3053 = vmatprep.mubr.bf16.mxu0 0
        %3054 = vmatmul.mubr.bf16.gmra.mrb[0].mxu0 %v2606
        %v3055 = vpop.f32.mrb[0].mxu0
        %v3056 = vadd.f32 %v2651, %v3055
        %v3057 = vpop.f32.mrb[0].mxu0
        %v3058 = vpop.f32.mrb[0].mxu0
        %v3059 = vadd.f32 %v2651, %v3058
        %v3060 = vpop.f32.mrb[0].mxu0
        %3061 = vmatprep.mubr.bf16.mxu0 0
        %3062 = vmatmul.mubr.bf16.gmra.mrb[0].mxu0 %v2607
        %v3063 = vpop.f32.mrb[0].mxu0
        %v3064 = vadd.f32 %v2651, %v3063
        %v3065 = vpop.f32.mrb[0].mxu0
        %v3066 = vpop.f32.mrb[0].mxu0
        %v3067 = vadd.f32 %v2651, %v3066
        %v3068 = vpop.f32.mrb[0].mxu0
        %3069 = vmatprep.mubr.bf16.mxu0 0
        %3070 = vmatmul.mubr.bf16.gmra.mrb[0].mxu0 %v2608
        %v3071 = vpop.f32.mrb[0].mxu0
        %v3072 = vadd.f32 %v2651, %v3071
        %v3073 = vpop.f32.mrb[0].mxu0
        %v3074 = vpop.f32.mrb[0].mxu0
        %v3075 = vadd.f32 %v2651, %v3074
        %v3076 = vpop.f32.mrb[0].mxu0
        %3077 = vmatprep.mubr.bf16.mxu0 0
        %3078 = vmatmul.mubr.bf16.gmra.mrb[0].mxu0 %v2609
        %v3079 = vpop.f32.mrb[0].mxu0
        %v3080 = vadd.f32 %v2651, %v3079
        %v3081 = vpop.f32.mrb[0].mxu0
        %v3082 = vpop.f32.mrb[0].mxu0
        %v3083 = vadd.f32 %v2651, %v3082
        %v3084 = vpop.f32.mrb[0].mxu0
        %3085 = vmatprep.mubr.bf16.mxu0 0
        %3086 = vmatmul.mubr.bf16.gmra.mrb[0].mxu0 %v2610
        %v3087 = vpop.f32.mrb[0].mxu0
        %v3088 = vadd.f32 %v2651, %v3087
        %v3089 = vpop.f32.mrb[0].mxu0
        %v3090 = vpop.f32.mrb[0].mxu0
        %v3091 = vadd.f32 %v2651, %v3090
        %v3092 = vpop.f32.mrb[0].mxu0
        %3093 = vmatprep.mubr.bf16.mxu0 0
        %3094 = vmatmul.mubr.bf16.gmra.mrb[0].mxu0 %v2611
        %v3095 = vpop.f32.mrb[0].mxu0
        %v3096 = vadd.f32 %v2651, %v3095
        %v3097 = vpop.f32.mrb[0].mxu0
        %v3098 = vpop.f32.mrb[0].mxu0
        %v3099 = vadd.f32 %v2651, %v3098
        %v3100 = vpop.f32.mrb[0].mxu0
        %3101 = vmatprep.mubr.bf16.mxu0 0
        %3102 = vmatmul.mubr.bf16.gmra.mrb[0].mxu0 %v2612
        %v3103 = vpop.f32.mrb[0].mxu0
        %v3104 = vadd.f32 %v2651, %v3103
        %v3105 = vpop.f32.mrb[0].mxu0
        %v3106 = vpop.f32.mrb[0].mxu0
        %v3107 = vadd.f32 %v2651, %v3106
        %v3108 = vpop.f32.mrb[0].mxu0
        %3109 = vmatprep.mubr.bf16.mxu0 0
        %3110 = vmatmul.mubr.bf16.gmra.mrb[0].mxu0 %v2613
        %v3111 = vpop.f32.mrb[0].mxu0
        %v3112 = vadd.f32 %v2651, %v3111
        %v3113 = vpop.f32.mrb[0].mxu0
        %v3114 = vpop.f32.mrb[0].mxu0
        %v3115 = vadd.f32 %v2651, %v3114
        %v3116 = vpop.f32.mrb[0].mxu0
        %3117 = vmatprep.mubr.bf16.mxu0 0
        %3118 = vmatmul.mubr.bf16.gmra.mrb[0].mxu0 %v2614
        %v3119 = vpop.f32.mrb[0].mxu0
        %v3120 = vadd.f32 %v2651, %v3119
        %v3121 = vpop.f32.mrb[0].mxu0
        %v3122 = vpop.f32.mrb[0].mxu0
        %v3123 = vadd.f32 %v2651, %v3122
        %v3124 = vpop.f32.mrb[0].mxu0
        %3125 = vmatprep.mubr.bf16.mxu0 0
        %3126 = vmatmul.mubr.bf16.gmra.mrb[0].mxu0 %v2615
        %v3127 = vpop.f32.mrb[0].mxu0
        %v3128 = vadd.f32 %v2651, %v3127
        %v3129 = vpop.f32.mrb[0].mxu0
        %v3130 = vpop.f32.mrb[0].mxu0
        %v3131 = vadd.f32 %v2651, %v3130
        %v3132 = vpop.f32.mrb[0].mxu0
        %3133 = vmatprep.mubr.bf16.mxu0 0
        %3134 = vmatmul.mubr.bf16.gmra.mrb[0].mxu0 %v2616
        %v3135 = vpop.f32.mrb[0].mxu0
        %v3136 = vadd.f32 %v2651, %v3135
        %v3137 = vpop.f32.mrb[0].mxu0
        %v3138 = vpop.f32.mrb[0].mxu0
        %v3139 = vadd.f32 %v2651, %v3138
        %v3140 = vpop.f32.mrb[0].mxu0
        %3141 = vmatprep.mubr.bf16.mxu0 0
        %3142 = vmatmul.mubr.bf16.gmra.mrb[0].mxu0 %v2617
        %v3143 = vpop.f32.mrb[0].mxu0
        %v3144 = vadd.f32 %v2651, %v3143
        %v3145 = vpop.f32.mrb[0].mxu0
        %v3146 = vpop.f32.mrb[0].mxu0
        %v3147 = vadd.f32 %v2651, %v3146
        %v3148 = vpop.f32.mrb[0].mxu0
        %3149 = vmatprep.mubr.bf16.mxu0 0
        %3150 = vmatmul.mubr.bf16.gmra.mrb[0].mxu0 %v2618
        %v3151 = vpop.f32.mrb[0].mxu0
        %v3152 = vadd.f32 %v2651, %v3151
        %v3153 = vpop.f32.mrb[0].mxu0
        %v3154 = vpop.f32.mrb[0].mxu0
        %v3155 = vadd.f32 %v2651, %v3154
        %v3156 = vpop.f32.mrb[0].mxu0
        %3157 = vmatprep.mubr.bf16.mxu0 0
        %3158 = vmatmul.mubr.bf16.gmra.mrb[0].mxu0 %v2619
        %v3159 = vpop.f32.mrb[0].mxu0
        %v3160 = vadd.f32 %v2651, %v3159
        %v3161 = vpop.f32.mrb[0].mxu0
        %v3162 = vpop.f32.mrb[0].mxu0
        %v3163 = vadd.f32 %v2651, %v3162
        %v3164 = vpop.f32.mrb[0].mxu0
        %3165 = vmatprep.mubr.bf16.mxu0 0
        %3166 = vmatmul.mubr.bf16.gmra.mrb[0].mxu0 %v2620
        %v3167 = vpop.f32.mrb[0].mxu0
        %v3168 = vadd.f32 %v2651, %v3167
        %v3169 = vpop.f32.mrb[0].mxu0
        %v3170 = vpop.f32.mrb[0].mxu0
        %v3171 = vadd.f32 %v2651, %v3170
        %v3172 = vpop.f32.mrb[0].mxu0
        %3173 = vmatprep.mubr.bf16.mxu0 0
        %3174 = vmatmul.mubr.bf16.gmra.mrb[0].mxu0 %v2621
        %v3175 = vpop.f32.mrb[0].mxu0
        %v3176 = vadd.f32 %v2651, %v3175
        %v3177 = vpop.f32.mrb[0].mxu0
        %v3178 = vpop.f32.mrb[0].mxu0
        %v3179 = vadd.f32 %v2651, %v3178
        %v3180 = vpop.f32.mrb[0].mxu0
        %3181 = vmatprep.mubr.bf16.mxu0 0
        %3182 = vmatmul.mubr.bf16.gmra.mrb[0].mxu0 %v2622
        %v3183 = vpop.f32.mrb[0].mxu0
        %v3184 = vadd.f32 %v2651, %v3183
        %v3185 = vpop.f32.mrb[0].mxu0
        %v3186 = vpop.f32.mrb[0].mxu0
        %v3187 = vadd.f32 %v2651, %v3186
        %v3188 = vpop.f32.mrb[0].mxu0
        %3189 = vmatprep.mubr.bf16.mxu0 0
        %3190 = vmatmul.mubr.bf16.gmra.mrb[0].mxu0 %v2623
        %v3191 = vpop.f32.mrb[0].mxu0
        %v3192 = vadd.f32 %v2651, %v3191
        %v3193 = vpop.f32.mrb[0].mxu0
        %v3194 = vpop.f32.mrb[0].mxu0
        %v3195 = vadd.f32 %v2651, %v3194
        %v3196 = vpop.f32.mrb[0].mxu0
        %3197 = vmatprep.mubr.bf16.mxu0 0
        %3198 = vmatmul.mubr.bf16.gmra.mrb[0].mxu0 %v2624
        %v3199 = vpop.f32.mrb[0].mxu0
        %v3200 = vadd.f32 %v2651, %v3199
        %v3201 = vpop.f32.mrb[0].mxu0
        %v3202 = vpop.f32.mrb[0].mxu0
        %v3203 = vadd.f32 %v2651, %v3202
        %v3204 = vpop.f32.mrb[0].mxu0
        %3205 = vmatprep.mubr.bf16.mxu0 0
        %3206 = vmatmul.mubr.bf16.gmra.mrb[0].mxu0 %v2625
        %v3207 = vpop.f32.mrb[0].mxu0
        %v3208 = vadd.f32 %v2651, %v3207
        %v3209 = vpop.f32.mrb[0].mxu0
        %v3210 = vpop.f32.mrb[0].mxu0
        %v3211 = vadd.f32 %v2651, %v3210
        %v3212 = vpop.f32.mrb[0].mxu0
        %3213 = vmatprep.mubr.bf16.mxu0 0
        %3214 = vmatmul.mubr.bf16.gmra.mrb[0].mxu0 %v2626
        %v3215 = vpop.f32.mrb[0].mxu0
        %v3216 = vadd.f32 %v2651, %v3215
        %v3217 = vpop.f32.mrb[0].mxu0
        %v3218 = vpop.f32.mrb[0].mxu0
        %v3219 = vadd.f32 %v2651, %v3218
        %v3220 = vpop.f32.mrb[0].mxu0
        %3221 = vmatprep.mubr.bf16.mxu0 0
        %3222 = vmatmul.mubr.bf16.gmra.mrb[0].mxu0 %v2627
        %v3223 = vpop.f32.mrb[0].mxu0
        %v3224 = vadd.f32 %v2651, %v3223
        %v3225 = vpop.f32.mrb[0].mxu0
        %v3226 = vpop.f32.mrb[0].mxu0
        %v3227 = vadd.f32 %v2651, %v3226
        %v3228 = vpop.f32.mrb[0].mxu0
        %3229 = vmatprep.mubr.bf16.mxu0 0
        %3230 = vmatmul.mubr.bf16.gmra.mrb[0].mxu0 %v2628
        %v3231 = vpop.f32.mrb[0].mxu0
        %v3232 = vadd.f32 %v2651, %v3231
        %v3233 = vpop.f32.mrb[0].mxu0
        %v3234 = vpop.f32.mrb[0].mxu0
        %v3235 = vadd.f32 %v2651, %v3234
        %v3236 = vpop.f32.mrb[0].mxu0
        %3237 = vmatprep.mubr.bf16.mxu0 0
        %3238 = vmatmul.mubr.bf16.gmra.mrb[0].mxu0 %v2629
        %v3239 = vpop.f32.mrb[0].mxu0
        %v3240 = vadd.f32 %v2651, %v3239
        %v3241 = vpop.f32.mrb[0].mxu0
        %v3242 = vpop.f32.mrb[0].mxu0
        %v3243 = vadd.f32 %v2651, %v3242
        %v3244 = vpop.f32.mrb[0].mxu0
        %3245 = vdwg.mxu0
        %v3246 = vxor.u32 %v2736, 2147483648
        %v3247 = vxor.u32 %v2739, 2147483648
        %v3248 = vxor.u32 %v2744, 2147483648
        %v3249 = vxor.u32 %v2747, 2147483648
        %v3250 = vxor.u32 %v2752, 2147483648
        %v3251 = vxor.u32 %v2755, 2147483648
        %v3252 = vxor.u32 %v2760, 2147483648
        %v3253 = vxor.u32 %v2763, 2147483648
        %v3254 = vxor.u32 %v2768, 2147483648
        %v3255 = vxor.u32 %v2771, 2147483648
        %v3256 = vxor.u32 %v2776, 2147483648
        %v3257 = vxor.u32 %v2779, 2147483648
        %v3258 = vxor.u32 %v2784, 2147483648
        %v3259 = vxor.u32 %v2787, 2147483648
        %v3260 = vxor.u32 %v2792, 2147483648
        %v3261 = vxor.u32 %v2795, 2147483648
        %v3262 = vxor.u32 %v2800, 2147483648
        %v3263 = vxor.u32 %v2803, 2147483648
        %v3264 = vxor.u32 %v2808, 2147483648
        %v3265 = vxor.u32 %v2811, 2147483648
        %v3266 = vxor.u32 %v2816, 2147483648
        %v3267 = vxor.u32 %v2819, 2147483648
        %v3268 = vxor.u32 %v2824, 2147483648
        %v3269 = vxor.u32 %v2827, 2147483648
        %v3270 = vxor.u32 %v2832, 2147483648
        %v3271 = vxor.u32 %v2835, 2147483648
        %v3272 = vxor.u32 %v2840, 2147483648
        %v3273 = vxor.u32 %v2843, 2147483648
        %v3274 = vxor.u32 %v2848, 2147483648
        %v3275 = vxor.u32 %v2851, 2147483648
        %v3276 = vxor.u32 %v2856, 2147483648
        %v3277 = vxor.u32 %v2859, 2147483648
        %v3278 = vxor.u32 %v2864, 2147483648
        %v3279 = vxor.u32 %v2867, 2147483648
        %v3280 = vxor.u32 %v2872, 2147483648
        %v3281 = vxor.u32 %v2875, 2147483648
        %v3282 = vxor.u32 %v2880, 2147483648
        %v3283 = vxor.u32 %v2883, 2147483648
        %v3284 = vxor.u32 %v2888, 2147483648
        %v3285 = vxor.u32 %v2891, 2147483648
        %v3286 = vxor.u32 %v2896, 2147483648
        %v3287 = vxor.u32 %v2899, 2147483648
        %v3288 = vxor.u32 %v2904, 2147483648
        %v3289 = vxor.u32 %v2907, 2147483648
        %v3290 = vxor.u32 %v2912, 2147483648
        %v3291 = vxor.u32 %v2915, 2147483648
        %v3292 = vxor.u32 %v2920, 2147483648
        %v3293 = vxor.u32 %v2923, 2147483648
        %v3294 = vxor.u32 %v2928, 2147483648
        %v3295 = vxor.u32 %v2931, 2147483648
        %v3296 = vxor.u32 %v2936, 2147483648
        %v3297 = vxor.u32 %v2939, 2147483648
        %v3298 = vxor.u32 %v2944, 2147483648
        %v3299 = vxor.u32 %v2947, 2147483648
        %v3300 = vxor.u32 %v2952, 2147483648
        %v3301 = vxor.u32 %v2955, 2147483648
        %v3302 = vxor.u32 %v2960, 2147483648
        %v3303 = vxor.u32 %v2963, 2147483648
        %v3304 = vxor.u32 %v2968, 2147483648
        %v3305 = vxor.u32 %v2971, 2147483648
        %v3306 = vxor.u32 %v2976, 2147483648
        %v3307 = vxor.u32 %v2979, 2147483648
        %v3308 = vxor.u32 %v2984, 2147483648
        %v3309 = vxor.u32 %v2987, 2147483648
        %v3310 = vxor.u32 %v2992, 2147483648
        %v3311 = vxor.u32 %v2995, 2147483648
        %v3312 = vxor.u32 %v3000, 2147483648
        %v3313 = vxor.u32 %v3003, 2147483648
        %v3314 = vxor.u32 %v3008, 2147483648
        %v3315 = vxor.u32 %v3011, 2147483648
        %v3316 = vxor.u32 %v3016, 2147483648
        %v3317 = vxor.u32 %v3019, 2147483648
        %v3318 = vxor.u32 %v3024, 2147483648
        %v3319 = vxor.u32 %v3027, 2147483648
        %v3320 = vxor.u32 %v3032, 2147483648
        %v3321 = vxor.u32 %v3035, 2147483648
        %v3322 = vxor.u32 %v3040, 2147483648
        %v3323 = vxor.u32 %v3043, 2147483648
        %v3324 = vxor.u32 %v3048, 2147483648
        %v3325 = vxor.u32 %v3051, 2147483648
        %v3326 = vxor.u32 %v3056, 2147483648
        %v3327 = vxor.u32 %v3059, 2147483648
        %v3328 = vxor.u32 %v3064, 2147483648
        %v3329 = vxor.u32 %v3067, 2147483648
        %v3330 = vxor.u32 %v3072, 2147483648
        %v3331 = vxor.u32 %v3075, 2147483648
        %v3332 = vxor.u32 %v3080, 2147483648
        %v3333 = vxor.u32 %v3083, 2147483648
        %v3334 = vxor.u32 %v3088, 2147483648
        %v3335 = vxor.u32 %v3091, 2147483648
        %v3336 = vxor.u32 %v3096, 2147483648
        %v3337 = vxor.u32 %v3099, 2147483648
        %v3338 = vxor.u32 %v3104, 2147483648
        %v3339 = vxor.u32 %v3107, 2147483648
        %v3340 = vxor.u32 %v3112, 2147483648
        %v3341 = vxor.u32 %v3115, 2147483648
        %v3342 = vxor.u32 %v3120, 2147483648
        %v3343 = vxor.u32 %v3123, 2147483648
        %v3344 = vxor.u32 %v3128, 2147483648
        %v3345 = vxor.u32 %v3131, 2147483648
        %v3346 = vxor.u32 %v3136, 2147483648
        %v3347 = vxor.u32 %v3139, 2147483648
        %v3348 = vxor.u32 %v3144, 2147483648
        %v3349 = vxor.u32 %v3147, 2147483648
        %v3350 = vxor.u32 %v3152, 2147483648
        %v3351 = vxor.u32 %v3155, 2147483648
        %v3352 = vxor.u32 %v3160, 2147483648
        %v3353 = vxor.u32 %v3163, 2147483648
        %v3354 = vxor.u32 %v3168, 2147483648
        %v3355 = vxor.u32 %v3171, 2147483648
        %v3356 = vxor.u32 %v3176, 2147483648
        %v3357 = vxor.u32 %v3179, 2147483648
        %v3358 = vxor.u32 %v3184, 2147483648
        %v3359 = vxor.u32 %v3187, 2147483648
        %v3360 = vxor.u32 %v3192, 2147483648
        %v3361 = vxor.u32 %v3195, 2147483648
        %v3362 = vxor.u32 %v3200, 2147483648
        %v3363 = vxor.u32 %v3203, 2147483648
        %v3364 = vxor.u32 %v3208, 2147483648
        %v3365 = vxor.u32 %v3211, 2147483648
        %v3366 = vxor.u32 %v3216, 2147483648
        %v3367 = vxor.u32 %v3219, 2147483648
        %v3368 = vxor.u32 %v3224, 2147483648
        %v3369 = vxor.u32 %v3227, 2147483648
        %v3370 = vxor.u32 %v3232, 2147483648
        %v3371 = vxor.u32 %v3235, 2147483648
        %v3372 = vxor.u32 %v3240, 2147483648
        %v3373 = vxor.u32 %v3243, 2147483648
        %v3374 = vmul.f32 %v3246, 1.442695
        %v3375 = vpow.pop %v3374
        %v3376 = vmul.f32 %v3247, 1.442695
        %v3377 = vpow.pop %v3376
        %v3378 = vmul.f32 %v3248, 1.442695
        %v3379 = vpow.pop %v3378
        %v3380 = vmul.f32 %v3249, 1.442695
        %v3381 = vpow.pop %v3380
        %v3382 = vmul.f32 %v3250, 1.442695
        %v3383 = vpow.pop %v3382
        %v3384 = vmul.f32 %v3251, 1.442695
        %v3385 = vpow.pop %v3384
        %v3386 = vmul.f32 %v3252, 1.442695
        %v3387 = vpow.pop %v3386
        %v3388 = vmul.f32 %v3253, 1.442695
        %v3389 = vpow.pop %v3388
        %v3390 = vmul.f32 %v3254, 1.442695
        %v3391 = vpow.pop %v3390
        %v3392 = vmul.f32 %v3255, 1.442695
        %v3393 = vpow.pop %v3392
        %v3394 = vmul.f32 %v3256, 1.442695
        %v3395 = vpow.pop %v3394
        %v3396 = vmul.f32 %v3257, 1.442695
        %v3397 = vpow.pop %v3396
        %v3398 = vmul.f32 %v3258, 1.442695
        %v3399 = vpow.pop %v3398
        %v3400 = vmul.f32 %v3259, 1.442695
        %v3401 = vpow.pop %v3400
        %v3402 = vmul.f32 %v3260, 1.442695
        %v3403 = vpow.pop %v3402
        %v3404 = vmul.f32 %v3261, 1.442695
        %v3405 = vpow.pop %v3404
        %v3406 = vmul.f32 %v3262, 1.442695
        %v3407 = vpow.pop %v3406
        %v3408 = vmul.f32 %v3263, 1.442695
        %v3409 = vpow.pop %v3408
        %v3410 = vmul.f32 %v3264, 1.442695
        %v3411 = vpow.pop %v3410
        %v3412 = vmul.f32 %v3265, 1.442695
        %v3413 = vpow.pop %v3412
        %v3414 = vmul.f32 %v3266, 1.442695
        %v3415 = vpow.pop %v3414
        %v3416 = vmul.f32 %v3267, 1.442695
        %v3417 = vpow.pop %v3416
        %v3418 = vmul.f32 %v3268, 1.442695
        %v3419 = vpow.pop %v3418
        %v3420 = vmul.f32 %v3269, 1.442695
        %v3421 = vpow.pop %v3420
        %v3422 = vmul.f32 %v3270, 1.442695
        %v3423 = vpow.pop %v3422
        %v3424 = vmul.f32 %v3271, 1.442695
        %v3425 = vpow.pop %v3424
        %v3426 = vmul.f32 %v3272, 1.442695
        %v3427 = vpow.pop %v3426
        %v3428 = vmul.f32 %v3273, 1.442695
        %v3429 = vpow.pop %v3428
        %v3430 = vmul.f32 %v3274, 1.442695
        %v3431 = vpow.pop %v3430
        %v3432 = vmul.f32 %v3275, 1.442695
        %v3433 = vpow.pop %v3432
        %v3434 = vmul.f32 %v3276, 1.442695
        %v3435 = vpow.pop %v3434
        %v3436 = vmul.f32 %v3277, 1.442695
        %v3437 = vpow.pop %v3436
        %v3438 = vmul.f32 %v3278, 1.442695
        %v3439 = vpow.pop %v3438
        %v3440 = vmul.f32 %v3279, 1.442695
        %v3441 = vpow.pop %v3440
        %v3442 = vmul.f32 %v3280, 1.442695
        %v3443 = vpow.pop %v3442
        %v3444 = vmul.f32 %v3281, 1.442695
        %v3445 = vpow.pop %v3444
        %v3446 = vmul.f32 %v3282, 1.442695
        %v3447 = vpow.pop %v3446
        %v3448 = vmul.f32 %v3283, 1.442695
        %v3449 = vpow.pop %v3448
        %v3450 = vmul.f32 %v3284, 1.442695
        %v3451 = vpow.pop %v3450
        %v3452 = vmul.f32 %v3285, 1.442695
        %v3453 = vpow.pop %v3452
        %v3454 = vmul.f32 %v3286, 1.442695
        %v3455 = vpow.pop %v3454
        %v3456 = vmul.f32 %v3287, 1.442695
        %v3457 = vpow.pop %v3456
        %v3458 = vmul.f32 %v3288, 1.442695
        %v3459 = vpow.pop %v3458
        %v3460 = vmul.f32 %v3289, 1.442695
        %v3461 = vpow.pop %v3460
        %v3462 = vmul.f32 %v3290, 1.442695
        %v3463 = vpow.pop %v3462
        %v3464 = vmul.f32 %v3291, 1.442695
        %v3465 = vpow.pop %v3464
        %v3466 = vmul.f32 %v3292, 1.442695
        %v3467 = vpow.pop %v3466
        %v3468 = vmul.f32 %v3293, 1.442695
        %v3469 = vpow.pop %v3468
        %v3470 = vmul.f32 %v3294, 1.442695
        %v3471 = vpow.pop %v3470
        %v3472 = vmul.f32 %v3295, 1.442695
        %v3473 = vpow.pop %v3472
        %v3474 = vmul.f32 %v3296, 1.442695
        %v3475 = vpow.pop %v3474
        %v3476 = vmul.f32 %v3297, 1.442695
        %v3477 = vpow.pop %v3476
        %v3478 = vmul.f32 %v3298, 1.442695
        %v3479 = vpow.pop %v3478
        %v3480 = vmul.f32 %v3299, 1.442695
        %v3481 = vpow.pop %v3480
        %v3482 = vmul.f32 %v3300, 1.442695
        %v3483 = vpow.pop %v3482
        %v3484 = vmul.f32 %v3301, 1.442695
        %v3485 = vpow.pop %v3484
        %v3486 = vmul.f32 %v3302, 1.442695
        %v3487 = vpow.pop %v3486
        %v3488 = vmul.f32 %v3303, 1.442695
        %v3489 = vpow.pop %v3488
        %v3490 = vmul.f32 %v3304, 1.442695
        %v3491 = vpow.pop %v3490
        %v3492 = vmul.f32 %v3305, 1.442695
        %v3493 = vpow.pop %v3492
        %v3494 = vmul.f32 %v3306, 1.442695
        %v3495 = vpow.pop %v3494
        %v3496 = vmul.f32 %v3307, 1.442695
        %v3497 = vpow.pop %v3496
        %v3498 = vmul.f32 %v3308, 1.442695
        %v3499 = vpow.pop %v3498
        %v3500 = vmul.f32 %v3309, 1.442695
        %v3501 = vpow.pop %v3500
        %v3502 = vmul.f32 %v3310, 1.442695
        %v3503 = vpow.pop %v3502
        %v3504 = vmul.f32 %v3311, 1.442695
        %v3505 = vpow.pop %v3504
        %v3506 = vmul.f32 %v3312, 1.442695
        %v3507 = vpow.pop %v3506
        %v3508 = vmul.f32 %v3313, 1.442695
        %v3509 = vpow.pop %v3508
        %v3510 = vmul.f32 %v3314, 1.442695
        %v3511 = vpow.pop %v3510
        %v3512 = vmul.f32 %v3315, 1.442695
        %v3513 = vpow.pop %v3512
        %v3514 = vmul.f32 %v3316, 1.442695
        %v3515 = vpow.pop %v3514
        %v3516 = vmul.f32 %v3317, 1.442695
        %v3517 = vpow.pop %v3516
        %v3518 = vmul.f32 %v3318, 1.442695
        %v3519 = vpow.pop %v3518
        %v3520 = vmul.f32 %v3319, 1.442695
        %v3521 = vpow.pop %v3520
        %v3522 = vmul.f32 %v3320, 1.442695
        %v3523 = vpow.pop %v3522
        %v3524 = vmul.f32 %v3321, 1.442695
        %v3525 = vpow.pop %v3524
        %v3526 = vmul.f32 %v3322, 1.442695
        %v3527 = vpow.pop %v3526
        %v3528 = vmul.f32 %v3323, 1.442695
        %v3529 = vpow.pop %v3528
        %v3530 = vmul.f32 %v3324, 1.442695
        %v3531 = vpow.pop %v3530
        %v3532 = vmul.f32 %v3325, 1.442695
        %v3533 = vpow.pop %v3532
        %v3534 = vmul.f32 %v3326, 1.442695
        %v3535 = vpow.pop %v3534
        %v3536 = vmul.f32 %v3327, 1.442695
        %v3537 = vpow.pop %v3536
        %v3538 = vmul.f32 %v3328, 1.442695
        %v3539 = vpow.pop %v3538
        %v3540 = vmul.f32 %v3329, 1.442695
        %v3541 = vpow.pop %v3540
        %v3542 = vmul.f32 %v3330, 1.442695
        %v3543 = vpow.pop %v3542
        %v3544 = vmul.f32 %v3331, 1.442695
        %v3545 = vpow.pop %v3544
        %v3546 = vmul.f32 %v3332, 1.442695
        %v3547 = vpow.pop %v3546
        %v3548 = vmul.f32 %v3333, 1.442695
        %v3549 = vpow.pop %v3548
        %v3550 = vmul.f32 %v3334, 1.442695
        %v3551 = vpow.pop %v3550
        %v3552 = vmul.f32 %v3335, 1.442695
        %v3553 = vpow.pop %v3552
        %v3554 = vmul.f32 %v3336, 1.442695
        %v3555 = vpow.pop %v3554
        %v3556 = vmul.f32 %v3337, 1.442695
        %v3557 = vpow.pop %v3556
        %v3558 = vmul.f32 %v3338, 1.442695
        %v3559 = vpow.pop %v3558
        %v3560 = vmul.f32 %v3339, 1.442695
        %v3561 = vpow.pop %v3560
        %v3562 = vmul.f32 %v3340, 1.442695
        %v3563 = vpow.pop %v3562
        %v3564 = vmul.f32 %v3341, 1.442695
        %v3565 = vpow.pop %v3564
        %v3566 = vmul.f32 %v3342, 1.442695
        %v3567 = vpow.pop %v3566
        %v3568 = vmul.f32 %v3343, 1.442695
        %v3569 = vpow.pop %v3568
        %v3570 = vmul.f32 %v3344, 1.442695
        %v3571 = vpow.pop %v3570
        %v3572 = vmul.f32 %v3345, 1.442695
        %v3573 = vpow.pop %v3572
        %v3574 = vmul.f32 %v3346, 1.442695
        %v3575 = vpow.pop %v3574
        %v3576 = vmul.f32 %v3347, 1.442695
        %v3577 = vpow.pop %v3576
        %v3578 = vmul.f32 %v3348, 1.442695
        %v3579 = vpow.pop %v3578
        %v3580 = vmul.f32 %v3349, 1.442695
        %v3581 = vpow.pop %v3580
        %v3582 = vmul.f32 %v3350, 1.442695
        %v3583 = vpow.pop %v3582
        %v3584 = vmul.f32 %v3351, 1.442695
        %v3585 = vpow.pop %v3584
        %v3586 = vmul.f32 %v3352, 1.442695
        %v3587 = vpow.pop %v3586
        %v3588 = vmul.f32 %v3353, 1.442695
        %v3589 = vpow.pop %v3588
        %v3590 = vmul.f32 %v3354, 1.442695
        %v3591 = vpow.pop %v3590
        %v3592 = vmul.f32 %v3355, 1.442695
        %v3593 = vpow.pop %v3592
        %v3594 = vmul.f32 %v3356, 1.442695
        %v3595 = vpow.pop %v3594
        %v3596 = vmul.f32 %v3357, 1.442695
        %v3597 = vpow.pop %v3596
        %v3598 = vmul.f32 %v3358, 1.442695
        %v3599 = vpow.pop %v3598
        %v3600 = vmul.f32 %v3359, 1.442695
        %v3601 = vpow.pop %v3600
        %v3602 = vmul.f32 %v3360, 1.442695
        %v3603 = vpow.pop %v3602
        %v3604 = vmul.f32 %v3361, 1.442695
        %v3605 = vpow.pop %v3604
        %v3606 = vmul.f32 %v3362, 1.442695
        %v3607 = vpow.pop %v3606
        %v3608 = vmul.f32 %v3363, 1.442695
        %v3609 = vpow.pop %v3608
        %v3610 = vmul.f32 %v3364, 1.442695
        %v3611 = vpow.pop %v3610
        %v3612 = vmul.f32 %v3365, 1.442695
        %v3613 = vpow.pop %v3612
        %v3614 = vmul.f32 %v3366, 1.442695
        %v3615 = vpow.pop %v3614
        %v3616 = vmul.f32 %v3367, 1.442695
        %v3617 = vpow.pop %v3616
        %v3618 = vmul.f32 %v3368, 1.442695
        %v3619 = vpow.pop %v3618
        %v3620 = vmul.f32 %v3369, 1.442695
        %v3621 = vpow.pop %v3620
        %v3622 = vmul.f32 %v3370, 1.442695
        %v3623 = vpow.pop %v3622
        %v3624 = vmul.f32 %v3371, 1.442695
        %v3625 = vpow.pop %v3624
        %v3626 = vmul.f32 %v3372, 1.442695
        %v3627 = vpow.pop %v3626
        %v3628 = vmul.f32 %v3373, 1.442695
        %v3629 = vpow.pop %v3628
        %v3630 = vadd.f32 %v3375, 1.0
        %v3631 = vadd.f32 %v3377, 1.0
        %v3632 = vadd.f32 %v3379, 1.0
        %v3633 = vadd.f32 %v3381, 1.0
        %v3634 = vadd.f32 %v3383, 1.0
        %v3635 = vadd.f32 %v3385, 1.0
        %v3636 = vadd.f32 %v3387, 1.0
        %v3637 = vadd.f32 %v3389, 1.0
        %v3638 = vadd.f32 %v3391, 1.0
        %v3639 = vadd.f32 %v3393, 1.0
        %v3640 = vadd.f32 %v3395, 1.0
        %v3641 = vadd.f32 %v3397, 1.0
        %v3642 = vadd.f32 %v3399, 1.0
        %v3643 = vadd.f32 %v3401, 1.0
        %v3644 = vadd.f32 %v3403, 1.0
        %v3645 = vadd.f32 %v3405, 1.0
        %v3646 = vadd.f32 %v3407, 1.0
        %v3647 = vadd.f32 %v3409, 1.0
        %v3648 = vadd.f32 %v3411, 1.0
        %v3649 = vadd.f32 %v3413, 1.0
        %v3650 = vadd.f32 %v3415, 1.0
        %v3651 = vadd.f32 %v3417, 1.0
        %v3652 = vadd.f32 %v3419, 1.0
        %v3653 = vadd.f32 %v3421, 1.0
        %v3654 = vadd.f32 %v3423, 1.0
        %v3655 = vadd.f32 %v3425, 1.0
        %v3656 = vadd.f32 %v3427, 1.0
        %v3657 = vadd.f32 %v3429, 1.0
        %v3658 = vadd.f32 %v3431, 1.0
        %v3659 = vadd.f32 %v3433, 1.0
        %v3660 = vadd.f32 %v3435, 1.0
        %v3661 = vadd.f32 %v3437, 1.0
        %v3662 = vadd.f32 %v3439, 1.0
        %v3663 = vadd.f32 %v3441, 1.0
        %v3664 = vadd.f32 %v3443, 1.0
        %v3665 = vadd.f32 %v3445, 1.0
        %v3666 = vadd.f32 %v3447, 1.0
        %v3667 = vadd.f32 %v3449, 1.0
        %v3668 = vadd.f32 %v3451, 1.0
        %v3669 = vadd.f32 %v3453, 1.0
        %v3670 = vadd.f32 %v3455, 1.0
        %v3671 = vadd.f32 %v3457, 1.0
        %v3672 = vadd.f32 %v3459, 1.0
        %v3673 = vadd.f32 %v3461, 1.0
        %v3674 = vadd.f32 %v3463, 1.0
        %v3675 = vadd.f32 %v3465, 1.0
        %v3676 = vadd.f32 %v3467, 1.0
        %v3677 = vadd.f32 %v3469, 1.0
        %v3678 = vadd.f32 %v3471, 1.0
        %v3679 = vadd.f32 %v3473, 1.0
        %v3680 = vadd.f32 %v3475, 1.0
        %v3681 = vadd.f32 %v3477, 1.0
        %v3682 = vadd.f32 %v3479, 1.0
        %v3683 = vadd.f32 %v3481, 1.0
        %v3684 = vadd.f32 %v3483, 1.0
        %v3685 = vadd.f32 %v3485, 1.0
        %v3686 = vadd.f32 %v3487, 1.0
        %v3687 = vadd.f32 %v3489, 1.0
        %v3688 = vadd.f32 %v3491, 1.0
        %v3689 = vadd.f32 %v3493, 1.0
        %v3690 = vadd.f32 %v3495, 1.0
        %v3691 = vadd.f32 %v3497, 1.0
        %v3692 = vadd.f32 %v3499, 1.0
        %v3693 = vadd.f32 %v3501, 1.0
        %v3694 = vadd.f32 %v3503, 1.0
        %v3695 = vadd.f32 %v3505, 1.0
        %v3696 = vadd.f32 %v3507, 1.0
        %v3697 = vadd.f32 %v3509, 1.0
        %v3698 = vadd.f32 %v3511, 1.0
        %v3699 = vadd.f32 %v3513, 1.0
        %v3700 = vadd.f32 %v3515, 1.0
        %v3701 = vadd.f32 %v3517, 1.0
        %v3702 = vadd.f32 %v3519, 1.0
        %v3703 = vadd.f32 %v3521, 1.0
        %v3704 = vadd.f32 %v3523, 1.0
        %v3705 = vadd.f32 %v3525, 1.0
        %v3706 = vadd.f32 %v3527, 1.0
        %v3707 = vadd.f32 %v3529, 1.0
        %v3708 = vadd.f32 %v3531, 1.0
        %v3709 = vadd.f32 %v3533, 1.0
        %v3710 = vadd.f32 %v3535, 1.0
        %v3711 = vadd.f32 %v3537, 1.0
        %v3712 = vadd.f32 %v3539, 1.0
        %v3713 = vadd.f32 %v3541, 1.0
        %v3714 = vadd.f32 %v3543, 1.0
        %v3715 = vadd.f32 %v3545, 1.0
        %v3716 = vadd.f32 %v3547, 1.0
        %v3717 = vadd.f32 %v3549, 1.0
        %v3718 = vadd.f32 %v3551, 1.0
        %v3719 = vadd.f32 %v3553, 1.0
        %v3720 = vadd.f32 %v3555, 1.0
        %v3721 = vadd.f32 %v3557, 1.0
        %v3722 = vadd.f32 %v3559, 1.0
        %v3723 = vadd.f32 %v3561, 1.0
        %v3724 = vadd.f32 %v3563, 1.0
        %v3725 = vadd.f32 %v3565, 1.0
        %v3726 = vadd.f32 %v3567, 1.0
        %v3727 = vadd.f32 %v3569, 1.0
        %v3728 = vadd.f32 %v3571, 1.0
        %v3729 = vadd.f32 %v3573, 1.0
        %v3730 = vadd.f32 %v3575, 1.0
        %v3731 = vadd.f32 %v3577, 1.0
        %v3732 = vadd.f32 %v3579, 1.0
        %v3733 = vadd.f32 %v3581, 1.0
        %v3734 = vadd.f32 %v3583, 1.0
        %v3735 = vadd.f32 %v3585, 1.0
        %v3736 = vadd.f32 %v3587, 1.0
        %v3737 = vadd.f32 %v3589, 1.0
        %v3738 = vadd.f32 %v3591, 1.0
        %v3739 = vadd.f32 %v3593, 1.0
        %v3740 = vadd.f32 %v3595, 1.0
        %v3741 = vadd.f32 %v3597, 1.0
        %v3742 = vadd.f32 %v3599, 1.0
        %v3743 = vadd.f32 %v3601, 1.0
        %v3744 = vadd.f32 %v3603, 1.0
        %v3745 = vadd.f32 %v3605, 1.0
        %v3746 = vadd.f32 %v3607, 1.0
        %v3747 = vadd.f32 %v3609, 1.0
        %v3748 = vadd.f32 %v3611, 1.0
        %v3749 = vadd.f32 %v3613, 1.0
        %v3750 = vadd.f32 %v3615, 1.0
        %v3751 = vadd.f32 %v3617, 1.0
        %v3752 = vadd.f32 %v3619, 1.0
        %v3753 = vadd.f32 %v3621, 1.0
        %v3754 = vadd.f32 %v3623, 1.0
        %v3755 = vadd.f32 %v3625, 1.0
        %v3756 = vadd.f32 %v3627, 1.0
        %v3757 = vadd.f32 %v3629, 1.0
        %v3758 = vrcp.pop %v3630
        %v3759 = vmul.f32 1.0, %v3758
        %v3760 = vrcp.pop %v3631
        %v3761 = vmul.f32 1.0, %v3760
        %v3762 = vrcp.pop %v3632
        %v3763 = vmul.f32 1.0, %v3762
        %v3764 = vrcp.pop %v3633
        %v3765 = vmul.f32 1.0, %v3764
        %v3766 = vrcp.pop %v3634
        %v3767 = vmul.f32 1.0, %v3766
        %v3768 = vrcp.pop %v3635
        %v3769 = vmul.f32 1.0, %v3768
        %v3770 = vrcp.pop %v3636
        %v3771 = vmul.f32 1.0, %v3770
        %v3772 = vrcp.pop %v3637
        %v3773 = vmul.f32 1.0, %v3772
        %v3774 = vrcp.pop %v3638
        %v3775 = vmul.f32 1.0, %v3774
        %v3776 = vrcp.pop %v3639
        %v3777 = vmul.f32 1.0, %v3776
        %v3778 = vrcp.pop %v3640
        %v3779 = vmul.f32 1.0, %v3778
        %v3780 = vrcp.pop %v3641
        %v3781 = vmul.f32 1.0, %v3780
        %v3782 = vrcp.pop %v3642
        %v3783 = vmul.f32 1.0, %v3782
        %v3784 = vrcp.pop %v3643
        %v3785 = vmul.f32 1.0, %v3784
        %v3786 = vrcp.pop %v3644
        %v3787 = vmul.f32 1.0, %v3786
        %v3788 = vrcp.pop %v3645
        %v3789 = vmul.f32 1.0, %v3788
        %v3790 = vrcp.pop %v3646
        %v3791 = vmul.f32 1.0, %v3790
        %v3792 = vrcp.pop %v3647
        %v3793 = vmul.f32 1.0, %v3792
        %v3794 = vrcp.pop %v3648
        %v3795 = vmul.f32 1.0, %v3794
        %v3796 = vrcp.pop %v3649
        %v3797 = vmul.f32 1.0, %v3796
        %v3798 = vrcp.pop %v3650
        %v3799 = vmul.f32 1.0, %v3798
        %v3800 = vrcp.pop %v3651
        %v3801 = vmul.f32 1.0, %v3800
        %v3802 = vrcp.pop %v3652
        %v3803 = vmul.f32 1.0, %v3802
        %v3804 = vrcp.pop %v3653
        %v3805 = vmul.f32 1.0, %v3804
        %v3806 = vrcp.pop %v3654
        %v3807 = vmul.f32 1.0, %v3806
        %v3808 = vrcp.pop %v3655
        %v3809 = vmul.f32 1.0, %v3808
        %v3810 = vrcp.pop %v3656
        %v3811 = vmul.f32 1.0, %v3810
        %v3812 = vrcp.pop %v3657
        %v3813 = vmul.f32 1.0, %v3812
        %v3814 = vrcp.pop %v3658
        %v3815 = vmul.f32 1.0, %v3814
        %v3816 = vrcp.pop %v3659
        %v3817 = vmul.f32 1.0, %v3816
        %v3818 = vrcp.pop %v3660
        %v3819 = vmul.f32 1.0, %v3818
        %v3820 = vrcp.pop %v3661
        %v3821 = vmul.f32 1.0, %v3820
        %v3822 = vrcp.pop %v3662
        %v3823 = vmul.f32 1.0, %v3822
        %v3824 = vrcp.pop %v3663
        %v3825 = vmul.f32 1.0, %v3824
        %v3826 = vrcp.pop %v3664
        %v3827 = vmul.f32 1.0, %v3826
        %v3828 = vrcp.pop %v3665
        %v3829 = vmul.f32 1.0, %v3828
        %v3830 = vrcp.pop %v3666
        %v3831 = vmul.f32 1.0, %v3830
        %v3832 = vrcp.pop %v3667
        %v3833 = vmul.f32 1.0, %v3832
        %v3834 = vrcp.pop %v3668
        %v3835 = vmul.f32 1.0, %v3834
        %v3836 = vrcp.pop %v3669
        %v3837 = vmul.f32 1.0, %v3836
        %v3838 = vrcp.pop %v3670
        %v3839 = vmul.f32 1.0, %v3838
        %v3840 = vrcp.pop %v3671
        %v3841 = vmul.f32 1.0, %v3840
        %v3842 = vrcp.pop %v3672
        %v3843 = vmul.f32 1.0, %v3842
        %v3844 = vrcp.pop %v3673
        %v3845 = vmul.f32 1.0, %v3844
        %v3846 = vrcp.pop %v3674
        %v3847 = vmul.f32 1.0, %v3846
        %v3848 = vrcp.pop %v3675
        %v3849 = vmul.f32 1.0, %v3848
        %v3850 = vrcp.pop %v3676
        %v3851 = vmul.f32 1.0, %v3850
        %v3852 = vrcp.pop %v3677
        %v3853 = vmul.f32 1.0, %v3852
        %v3854 = vrcp.pop %v3678
        %v3855 = vmul.f32 1.0, %v3854
        %v3856 = vrcp.pop %v3679
        %v3857 = vmul.f32 1.0, %v3856
        %v3858 = vrcp.pop %v3680
        %v3859 = vmul.f32 1.0, %v3858
        %v3860 = vrcp.pop %v3681
        %v3861 = vmul.f32 1.0, %v3860
        %v3862 = vrcp.pop %v3682
        %v3863 = vmul.f32 1.0, %v3862
        %v3864 = vrcp.pop %v3683
        %v3865 = vmul.f32 1.0, %v3864
        %v3866 = vrcp.pop %v3684
        %v3867 = vmul.f32 1.0, %v3866
        %v3868 = vrcp.pop %v3685
        %v3869 = vmul.f32 1.0, %v3868
        %v3870 = vrcp.pop %v3686
        %v3871 = vmul.f32 1.0, %v3870
        %v3872 = vrcp.pop %v3687
        %v3873 = vmul.f32 1.0, %v3872
        %v3874 = vrcp.pop %v3688
        %v3875 = vmul.f32 1.0, %v3874
        %v3876 = vrcp.pop %v3689
        %v3877 = vmul.f32 1.0, %v3876
        %v3878 = vrcp.pop %v3690
        %v3879 = vmul.f32 1.0, %v3878
        %v3880 = vrcp.pop %v3691
        %v3881 = vmul.f32 1.0, %v3880
        %v3882 = vrcp.pop %v3692
        %v3883 = vmul.f32 1.0, %v3882
        %v3884 = vrcp.pop %v3693
        %v3885 = vmul.f32 1.0, %v3884
        %v3886 = vrcp.pop %v3694
        %v3887 = vmul.f32 1.0, %v3886
        %v3888 = vrcp.pop %v3695
        %v3889 = vmul.f32 1.0, %v3888
        %v3890 = vrcp.pop %v3696
        %v3891 = vmul.f32 1.0, %v3890
        %v3892 = vrcp.pop %v3697
        %v3893 = vmul.f32 1.0, %v3892
        %v3894 = vrcp.pop %v3698
        %v3895 = vmul.f32 1.0, %v3894
        %v3896 = vrcp.pop %v3699
        %v3897 = vmul.f32 1.0, %v3896
        %v3898 = vrcp.pop %v3700
        %v3899 = vmul.f32 1.0, %v3898
        %v3900 = vrcp.pop %v3701
        %v3901 = vmul.f32 1.0, %v3900
        %v3902 = vrcp.pop %v3702
        %v3903 = vmul.f32 1.0, %v3902
        %v3904 = vrcp.pop %v3703
        %v3905 = vmul.f32 1.0, %v3904
        %v3906 = vrcp.pop %v3704
        %v3907 = vmul.f32 1.0, %v3906
        %v3908 = vrcp.pop %v3705
        %v3909 = vmul.f32 1.0, %v3908
        %v3910 = vrcp.pop %v3706
        %v3911 = vmul.f32 1.0, %v3910
        %v3912 = vrcp.pop %v3707
        %v3913 = vmul.f32 1.0, %v3912
        %v3914 = vrcp.pop %v3708
        %v3915 = vmul.f32 1.0, %v3914
        %v3916 = vrcp.pop %v3709
        %v3917 = vmul.f32 1.0, %v3916
        %v3918 = vrcp.pop %v3710
        %v3919 = vmul.f32 1.0, %v3918
        %v3920 = vrcp.pop %v3711
        %v3921 = vmul.f32 1.0, %v3920
        %v3922 = vrcp.pop %v3712
        %v3923 = vmul.f32 1.0, %v3922
        %v3924 = vrcp.pop %v3713
        %v3925 = vmul.f32 1.0, %v3924
        %v3926 = vrcp.pop %v3714
        %v3927 = vmul.f32 1.0, %v3926
        %v3928 = vrcp.pop %v3715
        %v3929 = vmul.f32 1.0, %v3928
        %v3930 = vrcp.pop %v3716
        %v3931 = vmul.f32 1.0, %v3930
        %v3932 = vrcp.pop %v3717
        %v3933 = vmul.f32 1.0, %v3932
        %v3934 = vrcp.pop %v3718
        %v3935 = vmul.f32 1.0, %v3934
        %v3936 = vrcp.pop %v3719
        %v3937 = vmul.f32 1.0, %v3936
        %v3938 = vrcp.pop %v3720
        %v3939 = vmul.f32 1.0, %v3938
        %v3940 = vrcp.pop %v3721
        %v3941 = vmul.f32 1.0, %v3940
        %v3942 = vrcp.pop %v3722
        %v3943 = vmul.f32 1.0, %v3942
        %v3944 = vrcp.pop %v3723
        %v3945 = vmul.f32 1.0, %v3944
        %v3946 = vrcp.pop %v3724
        %v3947 = vmul.f32 1.0, %v3946
        %v3948 = vrcp.pop %v3725
        %v3949 = vmul.f32 1.0, %v3948
        %v3950 = vrcp.pop %v3726
        %v3951 = vmul.f32 1.0, %v3950
        %v3952 = vrcp.pop %v3727
        %v3953 = vmul.f32 1.0, %v3952
        %v3954 = vrcp.pop %v3728
        %v3955 = vmul.f32 1.0, %v3954
        %v3956 = vrcp.pop %v3729
        %v3957 = vmul.f32 1.0, %v3956
        %v3958 = vrcp.pop %v3730
        %v3959 = vmul.f32 1.0, %v3958
        %v3960 = vrcp.pop %v3731
        %v3961 = vmul.f32 1.0, %v3960
        %v3962 = vrcp.pop %v3732
        %v3963 = vmul.f32 1.0, %v3962
        %v3964 = vrcp.pop %v3733
        %v3965 = vmul.f32 1.0, %v3964
        %v3966 = vrcp.pop %v3734
        %v3967 = vmul.f32 1.0, %v3966
        %v3968 = vrcp.pop %v3735
        %v3969 = vmul.f32 1.0, %v3968
        %v3970 = vrcp.pop %v3736
        %v3971 = vmul.f32 1.0, %v3970
        %v3972 = vrcp.pop %v3737
        %v3973 = vmul.f32 1.0, %v3972
        %v3974 = vrcp.pop %v3738
        %v3975 = vmul.f32 1.0, %v3974
        %v3976 = vrcp.pop %v3739
        %v3977 = vmul.f32 1.0, %v3976
        %v3978 = vrcp.pop %v3740
        %v3979 = vmul.f32 1.0, %v3978
        %v3980 = vrcp.pop %v3741
        %v3981 = vmul.f32 1.0, %v3980
        %v3982 = vrcp.pop %v3742
        %v3983 = vmul.f32 1.0, %v3982
        %v3984 = vrcp.pop %v3743
        %v3985 = vmul.f32 1.0, %v3984
        %v3986 = vrcp.pop %v3744
        %v3987 = vmul.f32 1.0, %v3986
        %v3988 = vrcp.pop %v3745
        %v3989 = vmul.f32 1.0, %v3988
        %v3990 = vrcp.pop %v3746
        %v3991 = vmul.f32 1.0, %v3990
        %v3992 = vrcp.pop %v3747
        %v3993 = vmul.f32 1.0, %v3992
        %v3994 = vrcp.pop %v3748
        %v3995 = vmul.f32 1.0, %v3994
        %v3996 = vrcp.pop %v3749
        %v3997 = vmul.f32 1.0, %v3996
        %v3998 = vrcp.pop %v3750
        %v3999 = vmul.f32 1.0, %v3998
        %v4000 = vrcp.pop %v3751
        %v4001 = vmul.f32 1.0, %v4000
        %v4002 = vrcp.pop %v3752
        %v4003 = vmul.f32 1.0, %v4002
        %v4004 = vrcp.pop %v3753
        %v4005 = vmul.f32 1.0, %v4004
        %v4006 = vrcp.pop %v3754
        %v4007 = vmul.f32 1.0, %v4006
        %v4008 = vrcp.pop %v3755
        %v4009 = vmul.f32 1.0, %v4008
        %v4010 = vrcp.pop %v3756
        %v4011 = vmul.f32 1.0, %v4010
        %v4012 = vrcp.pop %v3757
        %v4013 = vmul.f32 1.0, %v4012
        %v4014 = vmul.f32 %v2736, %v3759
        %v4015 = vmul.f32 %v2739, %v3761
        %v4016 = vmul.f32 %v2744, %v3763
        %v4017 = vmul.f32 %v2747, %v3765
        %v4018 = vmul.f32 %v2752, %v3767
        %v4019 = vmul.f32 %v2755, %v3769
        %v4020 = vmul.f32 %v2760, %v3771
        %v4021 = vmul.f32 %v2763, %v3773
        %v4022 = vmul.f32 %v2768, %v3775
        %v4023 = vmul.f32 %v2771, %v3777
        %v4024 = vmul.f32 %v2776, %v3779
        %v4025 = vmul.f32 %v2779, %v3781
        %v4026 = vmul.f32 %v2784, %v3783
        %v4027 = vmul.f32 %v2787, %v3785
        %v4028 = vmul.f32 %v2792, %v3787
        %v4029 = vmul.f32 %v2795, %v3789
        %v4030 = vmul.f32 %v2800, %v3791
        %v4031 = vmul.f32 %v2803, %v3793
        %v4032 = vmul.f32 %v2808, %v3795
        %v4033 = vmul.f32 %v2811, %v3797
        %v4034 = vmul.f32 %v2816, %v3799
        %v4035 = vmul.f32 %v2819, %v3801
        %v4036 = vmul.f32 %v2824, %v3803
        %v4037 = vmul.f32 %v2827, %v3805
        %v4038 = vmul.f32 %v2832, %v3807
        %v4039 = vmul.f32 %v2835, %v3809
        %v4040 = vmul.f32 %v2840, %v3811
        %v4041 = vmul.f32 %v2843, %v3813
        %v4042 = vmul.f32 %v2848, %v3815
        %v4043 = vmul.f32 %v2851, %v3817
        %v4044 = vmul.f32 %v2856, %v3819
        %v4045 = vmul.f32 %v2859, %v3821
        %v4046 = vmul.f32 %v2864, %v3823
        %v4047 = vmul.f32 %v2867, %v3825
        %v4048 = vmul.f32 %v2872, %v3827
        %v4049 = vmul.f32 %v2875, %v3829
        %v4050 = vmul.f32 %v2880, %v3831
        %v4051 = vmul.f32 %v2883, %v3833
        %v4052 = vmul.f32 %v2888, %v3835
        %v4053 = vmul.f32 %v2891, %v3837
        %v4054 = vmul.f32 %v2896, %v3839
        %v4055 = vmul.f32 %v2899, %v3841
        %v4056 = vmul.f32 %v2904, %v3843
        %v4057 = vmul.f32 %v2907, %v3845
        %v4058 = vmul.f32 %v2912, %v3847
        %v4059 = vmul.f32 %v2915, %v3849
        %v4060 = vmul.f32 %v2920, %v3851
        %v4061 = vmul.f32 %v2923, %v3853
        %v4062 = vmul.f32 %v2928, %v3855
        %v4063 = vmul.f32 %v2931, %v3857
        %v4064 = vmul.f32 %v2936, %v3859
        %v4065 = vmul.f32 %v2939, %v3861
        %v4066 = vmul.f32 %v2944, %v3863
        %v4067 = vmul.f32 %v2947, %v3865
        %v4068 = vmul.f32 %v2952, %v3867
        %v4069 = vmul.f32 %v2955, %v3869
        %v4070 = vmul.f32 %v2960, %v3871
        %v4071 = vmul.f32 %v2963, %v3873
        %v4072 = vmul.f32 %v2968, %v3875
        %v4073 = vmul.f32 %v2971, %v3877
        %v4074 = vmul.f32 %v2976, %v3879
        %v4075 = vmul.f32 %v2979, %v3881
        %v4076 = vmul.f32 %v2984, %v3883
        %v4077 = vmul.f32 %v2987, %v3885
        %v4078 = vmul.f32 %v2992, %v3887
        %v4079 = vmul.f32 %v2995, %v3889
        %v4080 = vmul.f32 %v3000, %v3891
        %v4081 = vmul.f32 %v3003, %v3893
        %v4082 = vmul.f32 %v3008, %v3895
        %v4083 = vmul.f32 %v3011, %v3897
        %v4084 = vmul.f32 %v3016, %v3899
        %v4085 = vmul.f32 %v3019, %v3901
        %v4086 = vmul.f32 %v3024, %v3903
        %v4087 = vmul.f32 %v3027, %v3905
        %v4088 = vmul.f32 %v3032, %v3907
        %v4089 = vmul.f32 %v3035, %v3909
        %v4090 = vmul.f32 %v3040, %v3911
        %v4091 = vmul.f32 %v3043, %v3913
        %v4092 = vmul.f32 %v3048, %v3915
        %v4093 = vmul.f32 %v3051, %v3917
        %v4094 = vmul.f32 %v3056, %v3919
        %v4095 = vmul.f32 %v3059, %v3921
        %v4096 = vmul.f32 %v3064, %v3923
        %v4097 = vmul.f32 %v3067, %v3925
        %v4098 = vmul.f32 %v3072, %v3927
        %v4099 = vmul.f32 %v3075, %v3929
        %v4100 = vmul.f32 %v3080, %v3931
        %v4101 = vmul.f32 %v3083, %v3933
        %v4102 = vmul.f32 %v3088, %v3935
        %v4103 = vmul.f32 %v3091, %v3937
        %v4104 = vmul.f32 %v3096, %v3939
        %v4105 = vmul.f32 %v3099, %v3941
        %v4106 = vmul.f32 %v3104, %v3943
        %v4107 = vmul.f32 %v3107, %v3945
        %v4108 = vmul.f32 %v3112, %v3947
        %v4109 = vmul.f32 %v3115, %v3949
        %v4110 = vmul.f32 %v3120, %v3951
        %v4111 = vmul.f32 %v3123, %v3953
        %v4112 = vmul.f32 %v3128, %v3955
        %v4113 = vmul.f32 %v3131, %v3957
        %v4114 = vmul.f32 %v3136, %v3959
        %v4115 = vmul.f32 %v3139, %v3961
        %v4116 = vmul.f32 %v3144, %v3963
        %v4117 = vmul.f32 %v3147, %v3965
        %v4118 = vmul.f32 %v3152, %v3967
        %v4119 = vmul.f32 %v3155, %v3969
        %v4120 = vmul.f32 %v3160, %v3971
        %v4121 = vmul.f32 %v3163, %v3973
        %v4122 = vmul.f32 %v3168, %v3975
        %v4123 = vmul.f32 %v3171, %v3977
        %v4124 = vmul.f32 %v3176, %v3979
        %v4125 = vmul.f32 %v3179, %v3981
        %v4126 = vmul.f32 %v3184, %v3983
        %v4127 = vmul.f32 %v3187, %v3985
        %v4128 = vmul.f32 %v3192, %v3987
        %v4129 = vmul.f32 %v3195, %v3989
        %v4130 = vmul.f32 %v3200, %v3991
        %v4131 = vmul.f32 %v3203, %v3993
        %v4132 = vmul.f32 %v3208, %v3995
        %v4133 = vmul.f32 %v3211, %v3997
        %v4134 = vmul.f32 %v3216, %v3999
        %v4135 = vmul.f32 %v3219, %v4001
        %v4136 = vmul.f32 %v3224, %v4003
        %v4137 = vmul.f32 %v3227, %v4005
        %v4138 = vmul.f32 %v3232, %v4007
        %v4139 = vmul.f32 %v3235, %v4009
        %v4140 = vmul.f32 %v3240, %v4011
        %v4141 = vmul.f32 %v3243, %v4013
        %v4142 = vpack.c.bf16 %v4015, %v4014
        %v4143 = vpack.c.bf16 %v4017, %v4016
        %v4144 = vpack.c.bf16 %v4019, %v4018
        %v4145 = vpack.c.bf16 %v4021, %v4020
        %v4146 = vpack.c.bf16 %v4023, %v4022
        %v4147 = vpack.c.bf16 %v4025, %v4024
        %v4148 = vpack.c.bf16 %v4027, %v4026
        %v4149 = vpack.c.bf16 %v4029, %v4028
        %v4150 = vpack.c.bf16 %v4031, %v4030
        %v4151 = vpack.c.bf16 %v4033, %v4032
        %v4152 = vpack.c.bf16 %v4035, %v4034
        %v4153 = vpack.c.bf16 %v4037, %v4036
        %v4154 = vpack.c.bf16 %v4039, %v4038
        %v4155 = vpack.c.bf16 %v4041, %v4040
        %v4156 = vpack.c.bf16 %v4043, %v4042
        %v4157 = vpack.c.bf16 %v4045, %v4044
        %v4158 = vpack.c.bf16 %v4047, %v4046
        %v4159 = vpack.c.bf16 %v4049, %v4048
        %v4160 = vpack.c.bf16 %v4051, %v4050
        %v4161 = vpack.c.bf16 %v4053, %v4052
        %v4162 = vpack.c.bf16 %v4055, %v4054
        %v4163 = vpack.c.bf16 %v4057, %v4056
        %v4164 = vpack.c.bf16 %v4059, %v4058
        %v4165 = vpack.c.bf16 %v4061, %v4060
        %v4166 = vpack.c.bf16 %v4063, %v4062
        %v4167 = vpack.c.bf16 %v4065, %v4064
        %v4168 = vpack.c.bf16 %v4067, %v4066
        %v4169 = vpack.c.bf16 %v4069, %v4068
        %v4170 = vpack.c.bf16 %v4071, %v4070
        %v4171 = vpack.c.bf16 %v4073, %v4072
        %v4172 = vpack.c.bf16 %v4075, %v4074
        %v4173 = vpack.c.bf16 %v4077, %v4076
        %v4174 = vpack.c.bf16 %v4079, %v4078
        %v4175 = vpack.c.bf16 %v4081, %v4080
        %v4176 = vpack.c.bf16 %v4083, %v4082
        %v4177 = vpack.c.bf16 %v4085, %v4084
        %v4178 = vpack.c.bf16 %v4087, %v4086
        %v4179 = vpack.c.bf16 %v4089, %v4088
        %v4180 = vpack.c.bf16 %v4091, %v4090
        %v4181 = vpack.c.bf16 %v4093, %v4092
        %v4182 = vpack.c.bf16 %v4095, %v4094
        %v4183 = vpack.c.bf16 %v4097, %v4096
        %v4184 = vpack.c.bf16 %v4099, %v4098
        %v4185 = vpack.c.bf16 %v4101, %v4100
        %v4186 = vpack.c.bf16 %v4103, %v4102
        %v4187 = vpack.c.bf16 %v4105, %v4104
        %v4188 = vpack.c.bf16 %v4107, %v4106
        %v4189 = vpack.c.bf16 %v4109, %v4108
        %v4190 = vpack.c.bf16 %v4111, %v4110
        %v4191 = vpack.c.bf16 %v4113, %v4112
        %v4192 = vpack.c.bf16 %v4115, %v4114
        %v4193 = vpack.c.bf16 %v4117, %v4116
        %v4194 = vpack.c.bf16 %v4119, %v4118
        %v4195 = vpack.c.bf16 %v4121, %v4120
        %v4196 = vpack.c.bf16 %v4123, %v4122
        %v4197 = vpack.c.bf16 %v4125, %v4124
        %v4198 = vpack.c.bf16 %v4127, %v4126
        %v4199 = vpack.c.bf16 %v4129, %v4128
        %v4200 = vpack.c.bf16 %v4131, %v4130
        %v4201 = vpack.c.bf16 %v4133, %v4132
        %v4202 = vpack.c.bf16 %v4135, %v4134
        %v4203 = vpack.c.bf16 %v4137, %v4136
        %v4204 = vpack.c.bf16 %v4139, %v4138
        %v4205 = vpack.c.bf16 %v4141, %v4140
        %v4206 = vld [vmem:[%s4] sm:$0xf]
        %v4207 = vld [vmem:[%s4 + $0x4] sm:$0xf]
        %v4208 = vld [vmem:[%s4 + $0x8] sm:$0xf]
        %v4209 = vld [vmem:[%s4 + $0xc] sm:$0xf]
        %v4210 = vld [vmem:[%s4 + $0x10] sm:$0xf]
        %v4211 = vld [vmem:[%s4 + $0x14] sm:$0xf]
        %v4212 = vld [vmem:[%s4 + $0x18] sm:$0xf]
        %v4213 = vld [vmem:[%s4 + $0x1c] sm:$0xf]
        %v4214 = vld [vmem:[%s4 + $0x20] sm:$0xf]
        %v4215 = vld [vmem:[%s4 + $0x24] sm:$0xf]
        %v4216 = vld [vmem:[%s4 + $0x28] sm:$0xf]
        %v4217 = vld [vmem:[%s4 + $0x2c] sm:$0xf]
        %v4218 = vld [vmem:[%s4 + $0x30] sm:$0xf]
        %v4219 = vld [vmem:[%s4 + $0x34] sm:$0xf]
        %v4220 = vld [vmem:[%s4 + $0x38] sm:$0xf]
        %v4221 = vld [vmem:[%s4 + $0x3c] sm:$0xf]
        %v4222 = vld [vmem:[%s1 + $0x3] sm:$0x1]
        %v4223 = vlaneseq
        %v4224 = vshrl.u32 %v4223, 7
        %v4225 = vsub.s32 0, %v4224
        %v4226 = vrot.slane %v4222, %v4225
        %v4243 = vunpack.c.l.b16 %v4206
        %v4244 = vunpack.c.l.b16 %v4207
        %v4245 = vunpack.c.l.b16 %v4208
        %v4246 = vunpack.c.l.b16 %v4209
        %v4247 = vunpack.c.l.b16 %v4210
        %v4248 = vunpack.c.l.b16 %v4211
        %v4249 = vunpack.c.l.b16 %v4212
        %v4250 = vunpack.c.l.b16 %v4213
        %v4251 = vunpack.c.l.b16 %v4214
        %v4252 = vunpack.c.l.b16 %v4215
        %v4253 = vunpack.c.l.b16 %v4216
        %v4254 = vunpack.c.l.b16 %v4217
        %v4255 = vunpack.c.l.b16 %v4218
        %v4256 = vunpack.c.l.b16 %v4219
        %v4257 = vunpack.c.l.b16 %v4220
        %v4258 = vunpack.c.l.b16 %v4221
        %v4259 = vpack.c.b16 %v4244, %v4243
        %v4260 = vpack.c.b16 %v4246, %v4245
        %v4261 = vpack.c.b16 %v4248, %v4247
        %v4262 = vpack.c.b16 %v4250, %v4249
        %v4263 = vpack.c.b16 %v4252, %v4251
        %v4264 = vpack.c.b16 %v4254, %v4253
        %v4265 = vpack.c.b16 %v4256, %v4255
        %v4266 = vpack.c.b16 %v4258, %v4257
        %4275 = vmatprep.subr.bf16.mxu0 0
        %4276 = vmatpush1.bf16.msra.mxu0 %v4259
        %4277 = vmatprep.subr.bf16.mxu0 0
        %4278 = vmatpush1.bf16.msra.mxu0 %v4260
        %4279 = vmatprep.subr.bf16.mxu0 0
        %4280 = vmatpush1.bf16.msra.mxu0 %v4261
        %4281 = vmatprep.subr.bf16.mxu0 0
        %4282 = vmatpush1.bf16.msra.mxu0 %v4262
        %4283 = vmatprep.subr.bf16.mxu0 0
        %4284 = vmatpush1.bf16.msra.mxu0 %v4263
        %4285 = vmatprep.subr.bf16.mxu0 0
        %4286 = vmatpush1.bf16.msra.mxu0 %v4264
        %4287 = vmatprep.subr.bf16.mxu0 0
        %4288 = vmatpush1.bf16.msra.mxu0 %v4265
        %4289 = vmatprep.subr.bf16.mxu0 0
        %4290 = vmatpush1.bf16.msra.mxu0 %v4266
        %4291 = vmatprep.subr.bf16.mxu0 0
        %4292 = vmatpush1.bf16.msra.mxu0 0
        %4293 = vmatprep.subr.bf16.mxu0 0
        %4294 = vmatpush1.bf16.msra.mxu0 0
        %4295 = vmatprep.subr.bf16.mxu0 0
        %4296 = vmatpush1.bf16.msra.mxu0 0
        %4297 = vmatprep.subr.bf16.mxu0 0
        %4298 = vmatpush1.bf16.msra.mxu0 0
        %4299 = vmatprep.subr.bf16.mxu0 0
        %4300 = vmatpush1.bf16.msra.mxu0 0
        %4301 = vmatprep.subr.bf16.mxu0 0
        %4302 = vmatpush1.bf16.msra.mxu0 0
        %4303 = vmatprep.subr.bf16.mxu0 0
        %4304 = vmatpush1.bf16.msra.mxu0 0
        %4305 = vmatprep.subr.bf16.mxu0 0
        %4306 = vmatpush1.bf16.msra.mxu0 0
        %4307 = vmatprep.mubr.bf16.mxu0 0
        %4308 = vmatmul.mubr.bf16.gmra.mrb[0].mxu0 %v4142
        %v4309 = vpop.f32.mrb[0].mxu0
        %v4310 = vadd.f32 %v4226, %v4309
        %v4311 = vpop.f32.mrb[0].mxu0
        %v4312 = vpop.f32.mrb[0].mxu0
        %v4313 = vadd.f32 %v4226, %v4312
        %v4314 = vpop.f32.mrb[0].mxu0
        %4315 = vmatprep.mubr.bf16.mxu0 0
        %4316 = vmatmul.mubr.bf16.gmra.mrb[0].mxu0 %v4143
        %v4317 = vpop.f32.mrb[0].mxu0
        %v4318 = vadd.f32 %v4226, %v4317
        %v4319 = vpop.f32.mrb[0].mxu0
        %v4320 = vpop.f32.mrb[0].mxu0
        %v4321 = vadd.f32 %v4226, %v4320
        %v4322 = vpop.f32.mrb[0].mxu0
        %4323 = vmatprep.mubr.bf16.mxu0 0
        %4324 = vmatmul.mubr.bf16.gmra.mrb[0].mxu0 %v4144
        %v4325 = vpop.f32.mrb[0].mxu0
        %v4326 = vadd.f32 %v4226, %v4325
        %v4327 = vpop.f32.mrb[0].mxu0
        %v4328 = vpop.f32.mrb[0].mxu0
        %v4329 = vadd.f32 %v4226, %v4328
        %v4330 = vpop.f32.mrb[0].mxu0
        %4331 = vmatprep.mubr.bf16.mxu0 0
        %4332 = vmatmul.mubr.bf16.gmra.mrb[0].mxu0 %v4145
        %v4333 = vpop.f32.mrb[0].mxu0
        %v4334 = vadd.f32 %v4226, %v4333
        %v4335 = vpop.f32.mrb[0].mxu0
        %v4336 = vpop.f32.mrb[0].mxu0
        %v4337 = vadd.f32 %v4226, %v4336
        %v4338 = vpop.f32.mrb[0].mxu0
        %4339 = vmatprep.mubr.bf16.mxu0 0
        %4340 = vmatmul.mubr.bf16.gmra.mrb[0].mxu0 %v4146
        %v4341 = vpop.f32.mrb[0].mxu0
        %v4342 = vadd.f32 %v4226, %v4341
        %v4343 = vpop.f32.mrb[0].mxu0
        %v4344 = vpop.f32.mrb[0].mxu0
        %v4345 = vadd.f32 %v4226, %v4344
        %v4346 = vpop.f32.mrb[0].mxu0
        %4347 = vmatprep.mubr.bf16.mxu0 0
        %4348 = vmatmul.mubr.bf16.gmra.mrb[0].mxu0 %v4147
        %v4349 = vpop.f32.mrb[0].mxu0
        %v4350 = vadd.f32 %v4226, %v4349
        %v4351 = vpop.f32.mrb[0].mxu0
        %v4352 = vpop.f32.mrb[0].mxu0
        %v4353 = vadd.f32 %v4226, %v4352
        %v4354 = vpop.f32.mrb[0].mxu0
        %4355 = vmatprep.mubr.bf16.mxu0 0
        %4356 = vmatmul.mubr.bf16.gmra.mrb[0].mxu0 %v4148
        %v4357 = vpop.f32.mrb[0].mxu0
        %v4358 = vadd.f32 %v4226, %v4357
        %v4359 = vpop.f32.mrb[0].mxu0
        %v4360 = vpop.f32.mrb[0].mxu0
        %v4361 = vadd.f32 %v4226, %v4360
        %v4362 = vpop.f32.mrb[0].mxu0
        %4363 = vmatprep.mubr.bf16.mxu0 0
        %4364 = vmatmul.mubr.bf16.gmra.mrb[0].mxu0 %v4149
        %v4365 = vpop.f32.mrb[0].mxu0
        %v4366 = vadd.f32 %v4226, %v4365
        %v4367 = vpop.f32.mrb[0].mxu0
        %v4368 = vpop.f32.mrb[0].mxu0
        %v4369 = vadd.f32 %v4226, %v4368
        %v4370 = vpop.f32.mrb[0].mxu0
        %4371 = vmatprep.mubr.bf16.mxu0 0
        %4372 = vmatmul.mubr.bf16.gmra.mrb[0].mxu0 %v4150
        %v4373 = vpop.f32.mrb[0].mxu0
        %v4374 = vadd.f32 %v4226, %v4373
        %v4375 = vpop.f32.mrb[0].mxu0
        %v4376 = vpop.f32.mrb[0].mxu0
        %v4377 = vadd.f32 %v4226, %v4376
        %v4378 = vpop.f32.mrb[0].mxu0
        %4379 = vmatprep.mubr.bf16.mxu0 0
        %4380 = vmatmul.mubr.bf16.gmra.mrb[0].mxu0 %v4151
        %v4381 = vpop.f32.mrb[0].mxu0
        %v4382 = vadd.f32 %v4226, %v4381
        %v4383 = vpop.f32.mrb[0].mxu0
        %v4384 = vpop.f32.mrb[0].mxu0
        %v4385 = vadd.f32 %v4226, %v4384
        %v4386 = vpop.f32.mrb[0].mxu0
        %4387 = vmatprep.mubr.bf16.mxu0 0
        %4388 = vmatmul.mubr.bf16.gmra.mrb[0].mxu0 %v4152
        %v4389 = vpop.f32.mrb[0].mxu0
        %v4390 = vadd.f32 %v4226, %v4389
        %v4391 = vpop.f32.mrb[0].mxu0
        %v4392 = vpop.f32.mrb[0].mxu0
        %v4393 = vadd.f32 %v4226, %v4392
        %v4394 = vpop.f32.mrb[0].mxu0
        %4395 = vmatprep.mubr.bf16.mxu0 0
        %4396 = vmatmul.mubr.bf16.gmra.mrb[0].mxu0 %v4153
        %v4397 = vpop.f32.mrb[0].mxu0
        %v4398 = vadd.f32 %v4226, %v4397
        %v4399 = vpop.f32.mrb[0].mxu0
        %v4400 = vpop.f32.mrb[0].mxu0
        %v4401 = vadd.f32 %v4226, %v4400
        %v4402 = vpop.f32.mrb[0].mxu0
        %4403 = vmatprep.mubr.bf16.mxu0 0
        %4404 = vmatmul.mubr.bf16.gmra.mrb[0].mxu0 %v4154
        %v4405 = vpop.f32.mrb[0].mxu0
        %v4406 = vadd.f32 %v4226, %v4405
        %v4407 = vpop.f32.mrb[0].mxu0
        %v4408 = vpop.f32.mrb[0].mxu0
        %v4409 = vadd.f32 %v4226, %v4408
        %v4410 = vpop.f32.mrb[0].mxu0
        %4411 = vmatprep.mubr.bf16.mxu0 0
        %4412 = vmatmul.mubr.bf16.gmra.mrb[0].mxu0 %v4155
        %v4413 = vpop.f32.mrb[0].mxu0
        %v4414 = vadd.f32 %v4226, %v4413
        %v4415 = vpop.f32.mrb[0].mxu0
        %v4416 = vpop.f32.mrb[0].mxu0
        %v4417 = vadd.f32 %v4226, %v4416
        %v4418 = vpop.f32.mrb[0].mxu0
        %4419 = vmatprep.mubr.bf16.mxu0 0
        %4420 = vmatmul.mubr.bf16.gmra.mrb[0].mxu0 %v4156
        %v4421 = vpop.f32.mrb[0].mxu0
        %v4422 = vadd.f32 %v4226, %v4421
        %v4423 = vpop.f32.mrb[0].mxu0
        %v4424 = vpop.f32.mrb[0].mxu0
        %v4425 = vadd.f32 %v4226, %v4424
        %v4426 = vpop.f32.mrb[0].mxu0
        %4427 = vmatprep.mubr.bf16.mxu0 0
        %4428 = vmatmul.mubr.bf16.gmra.mrb[0].mxu0 %v4157
        %v4429 = vpop.f32.mrb[0].mxu0
        %v4430 = vadd.f32 %v4226, %v4429
        %v4431 = vpop.f32.mrb[0].mxu0
        %v4432 = vpop.f32.mrb[0].mxu0
        %v4433 = vadd.f32 %v4226, %v4432
        %v4434 = vpop.f32.mrb[0].mxu0
        %4435 = vmatprep.mubr.bf16.mxu0 0
        %4436 = vmatmul.mubr.bf16.gmra.mrb[0].mxu0 %v4158
        %v4437 = vpop.f32.mrb[0].mxu0
        %v4438 = vadd.f32 %v4226, %v4437
        %v4439 = vpop.f32.mrb[0].mxu0
        %v4440 = vpop.f32.mrb[0].mxu0
        %v4441 = vadd.f32 %v4226, %v4440
        %v4442 = vpop.f32.mrb[0].mxu0
        %4443 = vmatprep.mubr.bf16.mxu0 0
        %4444 = vmatmul.mubr.bf16.gmra.mrb[0].mxu0 %v4159
        %v4445 = vpop.f32.mrb[0].mxu0
        %v4446 = vadd.f32 %v4226, %v4445
        %v4447 = vpop.f32.mrb[0].mxu0
        %v4448 = vpop.f32.mrb[0].mxu0
        %v4449 = vadd.f32 %v4226, %v4448
        %v4450 = vpop.f32.mrb[0].mxu0
        %4451 = vmatprep.mubr.bf16.mxu0 0
        %4452 = vmatmul.mubr.bf16.gmra.mrb[0].mxu0 %v4160
        %v4453 = vpop.f32.mrb[0].mxu0
        %v4454 = vadd.f32 %v4226, %v4453
        %v4455 = vpop.f32.mrb[0].mxu0
        %v4456 = vpop.f32.mrb[0].mxu0
        %v4457 = vadd.f32 %v4226, %v4456
        %v4458 = vpop.f32.mrb[0].mxu0
        %4459 = vmatprep.mubr.bf16.mxu0 0
        %4460 = vmatmul.mubr.bf16.gmra.mrb[0].mxu0 %v4161
        %v4461 = vpop.f32.mrb[0].mxu0
        %v4462 = vadd.f32 %v4226, %v4461
        %v4463 = vpop.f32.mrb[0].mxu0
        %v4464 = vpop.f32.mrb[0].mxu0
        %v4465 = vadd.f32 %v4226, %v4464
        %v4466 = vpop.f32.mrb[0].mxu0
        %4467 = vmatprep.mubr.bf16.mxu0 0
        %4468 = vmatmul.mubr.bf16.gmra.mrb[0].mxu0 %v4162
        %v4469 = vpop.f32.mrb[0].mxu0
        %v4470 = vadd.f32 %v4226, %v4469
        %v4471 = vpop.f32.mrb[0].mxu0
        %v4472 = vpop.f32.mrb[0].mxu0
        %v4473 = vadd.f32 %v4226, %v4472
        %v4474 = vpop.f32.mrb[0].mxu0
        %4475 = vmatprep.mubr.bf16.mxu0 0
        %4476 = vmatmul.mubr.bf16.gmra.mrb[0].mxu0 %v4163
        %v4477 = vpop.f32.mrb[0].mxu0
        %v4478 = vadd.f32 %v4226, %v4477
        %v4479 = vpop.f32.mrb[0].mxu0
        %v4480 = vpop.f32.mrb[0].mxu0
        %v4481 = vadd.f32 %v4226, %v4480
        %v4482 = vpop.f32.mrb[0].mxu0
        %4483 = vmatprep.mubr.bf16.mxu0 0
        %4484 = vmatmul.mubr.bf16.gmra.mrb[0].mxu0 %v4164
        %v4485 = vpop.f32.mrb[0].mxu0
        %v4486 = vadd.f32 %v4226, %v4485
        %v4487 = vpop.f32.mrb[0].mxu0
        %v4488 = vpop.f32.mrb[0].mxu0
        %v4489 = vadd.f32 %v4226, %v4488
        %v4490 = vpop.f32.mrb[0].mxu0
        %4491 = vmatprep.mubr.bf16.mxu0 0
        %4492 = vmatmul.mubr.bf16.gmra.mrb[0].mxu0 %v4165
        %v4493 = vpop.f32.mrb[0].mxu0
        %v4494 = vadd.f32 %v4226, %v4493
        %v4495 = vpop.f32.mrb[0].mxu0
        %v4496 = vpop.f32.mrb[0].mxu0
        %v4497 = vadd.f32 %v4226, %v4496
        %v4498 = vpop.f32.mrb[0].mxu0
        %4499 = vmatprep.mubr.bf16.mxu0 0
        %4500 = vmatmul.mubr.bf16.gmra.mrb[0].mxu0 %v4166
        %v4501 = vpop.f32.mrb[0].mxu0
        %v4502 = vadd.f32 %v4226, %v4501
        %v4503 = vpop.f32.mrb[0].mxu0
        %v4504 = vpop.f32.mrb[0].mxu0
        %v4505 = vadd.f32 %v4226, %v4504
        %v4506 = vpop.f32.mrb[0].mxu0
        %4507 = vmatprep.mubr.bf16.mxu0 0
        %4508 = vmatmul.mubr.bf16.gmra.mrb[0].mxu0 %v4167
        %v4509 = vpop.f32.mrb[0].mxu0
        %v4510 = vadd.f32 %v4226, %v4509
        %v4511 = vpop.f32.mrb[0].mxu0
        %v4512 = vpop.f32.mrb[0].mxu0
        %v4513 = vadd.f32 %v4226, %v4512
        %v4514 = vpop.f32.mrb[0].mxu0
        %4515 = vmatprep.mubr.bf16.mxu0 0
        %4516 = vmatmul.mubr.bf16.gmra.mrb[0].mxu0 %v4168
        %v4517 = vpop.f32.mrb[0].mxu0
        %v4518 = vadd.f32 %v4226, %v4517
        %v4519 = vpop.f32.mrb[0].mxu0
        %v4520 = vpop.f32.mrb[0].mxu0
        %v4521 = vadd.f32 %v4226, %v4520
        %v4522 = vpop.f32.mrb[0].mxu0
        %4523 = vmatprep.mubr.bf16.mxu0 0
        %4524 = vmatmul.mubr.bf16.gmra.mrb[0].mxu0 %v4169
        %v4525 = vpop.f32.mrb[0].mxu0
        %v4526 = vadd.f32 %v4226, %v4525
        %v4527 = vpop.f32.mrb[0].mxu0
        %v4528 = vpop.f32.mrb[0].mxu0
        %v4529 = vadd.f32 %v4226, %v4528
        %v4530 = vpop.f32.mrb[0].mxu0
        %4531 = vmatprep.mubr.bf16.mxu0 0
        %4532 = vmatmul.mubr.bf16.gmra.mrb[0].mxu0 %v4170
        %v4533 = vpop.f32.mrb[0].mxu0
        %v4534 = vadd.f32 %v4226, %v4533
        %v4535 = vpop.f32.mrb[0].mxu0
        %v4536 = vpop.f32.mrb[0].mxu0
        %v4537 = vadd.f32 %v4226, %v4536
        %v4538 = vpop.f32.mrb[0].mxu0
        %4539 = vmatprep.mubr.bf16.mxu0 0
        %4540 = vmatmul.mubr.bf16.gmra.mrb[0].mxu0 %v4171
        %v4541 = vpop.f32.mrb[0].mxu0
        %v4542 = vadd.f32 %v4226, %v4541
        %v4543 = vpop.f32.mrb[0].mxu0
        %v4544 = vpop.f32.mrb[0].mxu0
        %v4545 = vadd.f32 %v4226, %v4544
        %v4546 = vpop.f32.mrb[0].mxu0
        %4547 = vmatprep.mubr.bf16.mxu0 0
        %4548 = vmatmul.mubr.bf16.gmra.mrb[0].mxu0 %v4172
        %v4549 = vpop.f32.mrb[0].mxu0
        %v4550 = vadd.f32 %v4226, %v4549
        %v4551 = vpop.f32.mrb[0].mxu0
        %v4552 = vpop.f32.mrb[0].mxu0
        %v4553 = vadd.f32 %v4226, %v4552
        %v4554 = vpop.f32.mrb[0].mxu0
        %4555 = vmatprep.mubr.bf16.mxu0 0
        %4556 = vmatmul.mubr.bf16.gmra.mrb[0].mxu0 %v4173
        %v4557 = vpop.f32.mrb[0].mxu0
        %v4558 = vadd.f32 %v4226, %v4557
        %v4559 = vpop.f32.mrb[0].mxu0
        %v4560 = vpop.f32.mrb[0].mxu0
        %v4561 = vadd.f32 %v4226, %v4560
        %v4562 = vpop.f32.mrb[0].mxu0
        %4563 = vmatprep.mubr.bf16.mxu0 0
        %4564 = vmatmul.mubr.bf16.gmra.mrb[0].mxu0 %v4174
        %v4565 = vpop.f32.mrb[0].mxu0
        %v4566 = vadd.f32 %v4226, %v4565
        %v4567 = vpop.f32.mrb[0].mxu0
        %v4568 = vpop.f32.mrb[0].mxu0
        %v4569 = vadd.f32 %v4226, %v4568
        %v4570 = vpop.f32.mrb[0].mxu0
        %4571 = vmatprep.mubr.bf16.mxu0 0
        %4572 = vmatmul.mubr.bf16.gmra.mrb[0].mxu0 %v4175
        %v4573 = vpop.f32.mrb[0].mxu0
        %v4574 = vadd.f32 %v4226, %v4573
        %v4575 = vpop.f32.mrb[0].mxu0
        %v4576 = vpop.f32.mrb[0].mxu0
        %v4577 = vadd.f32 %v4226, %v4576
        %v4578 = vpop.f32.mrb[0].mxu0
        %4579 = vmatprep.mubr.bf16.mxu0 0
        %4580 = vmatmul.mubr.bf16.gmra.mrb[0].mxu0 %v4176
        %v4581 = vpop.f32.mrb[0].mxu0
        %v4582 = vadd.f32 %v4226, %v4581
        %v4583 = vpop.f32.mrb[0].mxu0
        %v4584 = vpop.f32.mrb[0].mxu0
        %v4585 = vadd.f32 %v4226, %v4584
        %v4586 = vpop.f32.mrb[0].mxu0
        %4587 = vmatprep.mubr.bf16.mxu0 0
        %4588 = vmatmul.mubr.bf16.gmra.mrb[0].mxu0 %v4177
        %v4589 = vpop.f32.mrb[0].mxu0
        %v4590 = vadd.f32 %v4226, %v4589
        %v4591 = vpop.f32.mrb[0].mxu0
        %v4592 = vpop.f32.mrb[0].mxu0
        %v4593 = vadd.f32 %v4226, %v4592
        %v4594 = vpop.f32.mrb[0].mxu0
        %4595 = vmatprep.mubr.bf16.mxu0 0
        %4596 = vmatmul.mubr.bf16.gmra.mrb[0].mxu0 %v4178
        %v4597 = vpop.f32.mrb[0].mxu0
        %v4598 = vadd.f32 %v4226, %v4597
        %v4599 = vpop.f32.mrb[0].mxu0
        %v4600 = vpop.f32.mrb[0].mxu0
        %v4601 = vadd.f32 %v4226, %v4600
        %v4602 = vpop.f32.mrb[0].mxu0
        %4603 = vmatprep.mubr.bf16.mxu0 0
        %4604 = vmatmul.mubr.bf16.gmra.mrb[0].mxu0 %v4179
        %v4605 = vpop.f32.mrb[0].mxu0
        %v4606 = vadd.f32 %v4226, %v4605
        %v4607 = vpop.f32.mrb[0].mxu0
        %v4608 = vpop.f32.mrb[0].mxu0
        %v4609 = vadd.f32 %v4226, %v4608
        %v4610 = vpop.f32.mrb[0].mxu0
        %4611 = vmatprep.mubr.bf16.mxu0 0
        %4612 = vmatmul.mubr.bf16.gmra.mrb[0].mxu0 %v4180
        %v4613 = vpop.f32.mrb[0].mxu0
        %v4614 = vadd.f32 %v4226, %v4613
        %v4615 = vpop.f32.mrb[0].mxu0
        %v4616 = vpop.f32.mrb[0].mxu0
        %v4617 = vadd.f32 %v4226, %v4616
        %v4618 = vpop.f32.mrb[0].mxu0
        %4619 = vmatprep.mubr.bf16.mxu0 0
        %4620 = vmatmul.mubr.bf16.gmra.mrb[0].mxu0 %v4181
        %v4621 = vpop.f32.mrb[0].mxu0
        %v4622 = vadd.f32 %v4226, %v4621
        %v4623 = vpop.f32.mrb[0].mxu0
        %v4624 = vpop.f32.mrb[0].mxu0
        %v4625 = vadd.f32 %v4226, %v4624
        %v4626 = vpop.f32.mrb[0].mxu0
        %4627 = vmatprep.mubr.bf16.mxu0 0
        %4628 = vmatmul.mubr.bf16.gmra.mrb[0].mxu0 %v4182
        %v4629 = vpop.f32.mrb[0].mxu0
        %v4630 = vadd.f32 %v4226, %v4629
        %v4631 = vpop.f32.mrb[0].mxu0
        %v4632 = vpop.f32.mrb[0].mxu0
        %v4633 = vadd.f32 %v4226, %v4632
        %v4634 = vpop.f32.mrb[0].mxu0
        %4635 = vmatprep.mubr.bf16.mxu0 0
        %4636 = vmatmul.mubr.bf16.gmra.mrb[0].mxu0 %v4183
        %v4637 = vpop.f32.mrb[0].mxu0
        %v4638 = vadd.f32 %v4226, %v4637
        %v4639 = vpop.f32.mrb[0].mxu0
        %v4640 = vpop.f32.mrb[0].mxu0
        %v4641 = vadd.f32 %v4226, %v4640
        %v4642 = vpop.f32.mrb[0].mxu0
        %4643 = vmatprep.mubr.bf16.mxu0 0
        %4644 = vmatmul.mubr.bf16.gmra.mrb[0].mxu0 %v4184
        %v4645 = vpop.f32.mrb[0].mxu0
        %v4646 = vadd.f32 %v4226, %v4645
        %v4647 = vpop.f32.mrb[0].mxu0
        %v4648 = vpop.f32.mrb[0].mxu0
        %v4649 = vadd.f32 %v4226, %v4648
        %v4650 = vpop.f32.mrb[0].mxu0
        %4651 = vmatprep.mubr.bf16.mxu0 0
        %4652 = vmatmul.mubr.bf16.gmra.mrb[0].mxu0 %v4185
        %v4653 = vpop.f32.mrb[0].mxu0
        %v4654 = vadd.f32 %v4226, %v4653
        %v4655 = vpop.f32.mrb[0].mxu0
        %v4656 = vpop.f32.mrb[0].mxu0
        %v4657 = vadd.f32 %v4226, %v4656
        %v4658 = vpop.f32.mrb[0].mxu0
        %4659 = vmatprep.mubr.bf16.mxu0 0
        %4660 = vmatmul.mubr.bf16.gmra.mrb[0].mxu0 %v4186
        %v4661 = vpop.f32.mrb[0].mxu0
        %v4662 = vadd.f32 %v4226, %v4661
        %v4663 = vpop.f32.mrb[0].mxu0
        %v4664 = vpop.f32.mrb[0].mxu0
        %v4665 = vadd.f32 %v4226, %v4664
        %v4666 = vpop.f32.mrb[0].mxu0
        %4667 = vmatprep.mubr.bf16.mxu0 0
        %4668 = vmatmul.mubr.bf16.gmra.mrb[0].mxu0 %v4187
        %v4669 = vpop.f32.mrb[0].mxu0
        %v4670 = vadd.f32 %v4226, %v4669
        %v4671 = vpop.f32.mrb[0].mxu0
        %v4672 = vpop.f32.mrb[0].mxu0
        %v4673 = vadd.f32 %v4226, %v4672
        %v4674 = vpop.f32.mrb[0].mxu0
        %4675 = vmatprep.mubr.bf16.mxu0 0
        %4676 = vmatmul.mubr.bf16.gmra.mrb[0].mxu0 %v4188
        %v4677 = vpop.f32.mrb[0].mxu0
        %v4678 = vadd.f32 %v4226, %v4677
        %v4679 = vpop.f32.mrb[0].mxu0
        %v4680 = vpop.f32.mrb[0].mxu0
        %v4681 = vadd.f32 %v4226, %v4680
        %v4682 = vpop.f32.mrb[0].mxu0
        %4683 = vmatprep.mubr.bf16.mxu0 0
        %4684 = vmatmul.mubr.bf16.gmra.mrb[0].mxu0 %v4189
        %v4685 = vpop.f32.mrb[0].mxu0
        %v4686 = vadd.f32 %v4226, %v4685
        %v4687 = vpop.f32.mrb[0].mxu0
        %v4688 = vpop.f32.mrb[0].mxu0
        %v4689 = vadd.f32 %v4226, %v4688
        %v4690 = vpop.f32.mrb[0].mxu0
        %4691 = vmatprep.mubr.bf16.mxu0 0
        %4692 = vmatmul.mubr.bf16.gmra.mrb[0].mxu0 %v4190
        %v4693 = vpop.f32.mrb[0].mxu0
        %v4694 = vadd.f32 %v4226, %v4693
        %v4695 = vpop.f32.mrb[0].mxu0
        %v4696 = vpop.f32.mrb[0].mxu0
        %v4697 = vadd.f32 %v4226, %v4696
        %v4698 = vpop.f32.mrb[0].mxu0
        %4699 = vmatprep.mubr.bf16.mxu0 0
        %4700 = vmatmul.mubr.bf16.gmra.mrb[0].mxu0 %v4191
        %v4701 = vpop.f32.mrb[0].mxu0
        %v4702 = vadd.f32 %v4226, %v4701
        %v4703 = vpop.f32.mrb[0].mxu0
        %v4704 = vpop.f32.mrb[0].mxu0
        %v4705 = vadd.f32 %v4226, %v4704
        %v4706 = vpop.f32.mrb[0].mxu0
        %4707 = vmatprep.mubr.bf16.mxu0 0
        %4708 = vmatmul.mubr.bf16.gmra.mrb[0].mxu0 %v4192
        %v4709 = vpop.f32.mrb[0].mxu0
        %v4710 = vadd.f32 %v4226, %v4709
        %v4711 = vpop.f32.mrb[0].mxu0
        %v4712 = vpop.f32.mrb[0].mxu0
        %v4713 = vadd.f32 %v4226, %v4712
        %v4714 = vpop.f32.mrb[0].mxu0
        %4715 = vmatprep.mubr.bf16.mxu0 0
        %4716 = vmatmul.mubr.bf16.gmra.mrb[0].mxu0 %v4193
        %v4717 = vpop.f32.mrb[0].mxu0
        %v4718 = vadd.f32 %v4226, %v4717
        %v4719 = vpop.f32.mrb[0].mxu0
        %v4720 = vpop.f32.mrb[0].mxu0
        %v4721 = vadd.f32 %v4226, %v4720
        %v4722 = vpop.f32.mrb[0].mxu0
        %4723 = vmatprep.mubr.bf16.mxu0 0
        %4724 = vmatmul.mubr.bf16.gmra.mrb[0].mxu0 %v4194
        %v4725 = vpop.f32.mrb[0].mxu0
        %v4726 = vadd.f32 %v4226, %v4725
        %v4727 = vpop.f32.mrb[0].mxu0
        %v4728 = vpop.f32.mrb[0].mxu0
        %v4729 = vadd.f32 %v4226, %v4728
        %v4730 = vpop.f32.mrb[0].mxu0
        %4731 = vmatprep.mubr.bf16.mxu0 0
        %4732 = vmatmul.mubr.bf16.gmra.mrb[0].mxu0 %v4195
        %v4733 = vpop.f32.mrb[0].mxu0
        %v4734 = vadd.f32 %v4226, %v4733
        %v4735 = vpop.f32.mrb[0].mxu0
        %v4736 = vpop.f32.mrb[0].mxu0
        %v4737 = vadd.f32 %v4226, %v4736
        %v4738 = vpop.f32.mrb[0].mxu0
        %4739 = vmatprep.mubr.bf16.mxu0 0
        %4740 = vmatmul.mubr.bf16.gmra.mrb[0].mxu0 %v4196
        %v4741 = vpop.f32.mrb[0].mxu0
        %v4742 = vadd.f32 %v4226, %v4741
        %v4743 = vpop.f32.mrb[0].mxu0
        %v4744 = vpop.f32.mrb[0].mxu0
        %v4745 = vadd.f32 %v4226, %v4744
        %v4746 = vpop.f32.mrb[0].mxu0
        %4747 = vmatprep.mubr.bf16.mxu0 0
        %4748 = vmatmul.mubr.bf16.gmra.mrb[0].mxu0 %v4197
        %v4749 = vpop.f32.mrb[0].mxu0
        %v4750 = vadd.f32 %v4226, %v4749
        %v4751 = vpop.f32.mrb[0].mxu0
        %v4752 = vpop.f32.mrb[0].mxu0
        %v4753 = vadd.f32 %v4226, %v4752
        %v4754 = vpop.f32.mrb[0].mxu0
        %4755 = vmatprep.mubr.bf16.mxu0 0
        %4756 = vmatmul.mubr.bf16.gmra.mrb[0].mxu0 %v4198
        %v4757 = vpop.f32.mrb[0].mxu0
        %v4758 = vadd.f32 %v4226, %v4757
        %v4759 = vpop.f32.mrb[0].mxu0
        %v4760 = vpop.f32.mrb[0].mxu0
        %v4761 = vadd.f32 %v4226, %v4760
        %v4762 = vpop.f32.mrb[0].mxu0
        %4763 = vmatprep.mubr.bf16.mxu0 0
        %4764 = vmatmul.mubr.bf16.gmra.mrb[0].mxu0 %v4199
        %v4765 = vpop.f32.mrb[0].mxu0
        %v4766 = vadd.f32 %v4226, %v4765
        %v4767 = vpop.f32.mrb[0].mxu0
        %v4768 = vpop.f32.mrb[0].mxu0
        %v4769 = vadd.f32 %v4226, %v4768
        %v4770 = vpop.f32.mrb[0].mxu0
        %4771 = vmatprep.mubr.bf16.mxu0 0
        %4772 = vmatmul.mubr.bf16.gmra.mrb[0].mxu0 %v4200
        %v4773 = vpop.f32.mrb[0].mxu0
        %v4774 = vadd.f32 %v4226, %v4773
        %v4775 = vpop.f32.mrb[0].mxu0
        %v4776 = vpop.f32.mrb[0].mxu0
        %v4777 = vadd.f32 %v4226, %v4776
        %v4778 = vpop.f32.mrb[0].mxu0
        %4779 = vmatprep.mubr.bf16.mxu0 0
        %4780 = vmatmul.mubr.bf16.gmra.mrb[0].mxu0 %v4201
        %v4781 = vpop.f32.mrb[0].mxu0
        %v4782 = vadd.f32 %v4226, %v4781
        %v4783 = vpop.f32.mrb[0].mxu0
        %v4784 = vpop.f32.mrb[0].mxu0
        %v4785 = vadd.f32 %v4226, %v4784
        %v4786 = vpop.f32.mrb[0].mxu0
        %4787 = vmatprep.mubr.bf16.mxu0 0
        %4788 = vmatmul.mubr.bf16.gmra.mrb[0].mxu0 %v4202
        %v4789 = vpop.f32.mrb[0].mxu0
        %v4790 = vadd.f32 %v4226, %v4789
        %v4791 = vpop.f32.mrb[0].mxu0
        %v4792 = vpop.f32.mrb[0].mxu0
        %v4793 = vadd.f32 %v4226, %v4792
        %v4794 = vpop.f32.mrb[0].mxu0
        %4795 = vmatprep.mubr.bf16.mxu0 0
        %4796 = vmatmul.mubr.bf16.gmra.mrb[0].mxu0 %v4203
        %v4797 = vpop.f32.mrb[0].mxu0
        %v4798 = vadd.f32 %v4226, %v4797
        %v4799 = vpop.f32.mrb[0].mxu0
        %v4800 = vpop.f32.mrb[0].mxu0
        %v4801 = vadd.f32 %v4226, %v4800
        %v4802 = vpop.f32.mrb[0].mxu0
        %4803 = vmatprep.mubr.bf16.mxu0 0
        %4804 = vmatmul.mubr.bf16.gmra.mrb[0].mxu0 %v4204
        %v4805 = vpop.f32.mrb[0].mxu0
        %v4806 = vadd.f32 %v4226, %v4805
        %v4807 = vpop.f32.mrb[0].mxu0
        %v4808 = vpop.f32.mrb[0].mxu0
        %v4809 = vadd.f32 %v4226, %v4808
        %v4810 = vpop.f32.mrb[0].mxu0
        %4811 = vmatprep.mubr.bf16.mxu0 0
        %4812 = vmatmul.mubr.bf16.gmra.mrb[0].mxu0 %v4205
        %v4813 = vpop.f32.mrb[0].mxu0
        %v4814 = vadd.f32 %v4226, %v4813
        %v4815 = vpop.f32.mrb[0].mxu0
        %v4816 = vpop.f32.mrb[0].mxu0
        %v4817 = vadd.f32 %v4226, %v4816
        %v4818 = vpop.f32.mrb[0].mxu0
        %4819 = vdwg.mxu0
        %v4820 = vmul.f32 %v2438, 2.0
        %v4821 = vmul.f32 %v2439, 2.0
        %v4822 = vmul.f32 %v2440, 2.0
        %v4823 = vmul.f32 %v2441, 2.0
        %v4824 = vmul.f32 %v2442, 2.0
        %v4825 = vmul.f32 %v2443, 2.0
        %v4826 = vmul.f32 %v2444, 2.0
        %v4827 = vmul.f32 %v2445, 2.0
        %v4828 = vmul.f32 %v2446, 2.0
        %v4829 = vmul.f32 %v2447, 2.0
        %v4830 = vmul.f32 %v2448, 2.0
        %v4831 = vmul.f32 %v2449, 2.0
        %v4832 = vmul.f32 %v2450, 2.0
        %v4833 = vmul.f32 %v2451, 2.0
        %v4834 = vmul.f32 %v2452, 2.0
        %v4835 = vmul.f32 %v2453, 2.0
        %v4836 = vmul.f32 %v2454, 2.0
        %v4837 = vmul.f32 %v2455, 2.0
        %v4838 = vmul.f32 %v2456, 2.0
        %v4839 = vmul.f32 %v2457, 2.0
        %v4840 = vmul.f32 %v2458, 2.0
        %v4841 = vmul.f32 %v2459, 2.0
        %v4842 = vmul.f32 %v2460, 2.0
        %v4843 = vmul.f32 %v2461, 2.0
        %v4844 = vmul.f32 %v2462, 2.0
        %v4845 = vmul.f32 %v2463, 2.0
        %v4846 = vmul.f32 %v2464, 2.0
        %v4847 = vmul.f32 %v2465, 2.0
        %v4848 = vmul.f32 %v2466, 2.0
        %v4849 = vmul.f32 %v2467, 2.0
        %v4850 = vmul.f32 %v2468, 2.0
        %v4851 = vmul.f32 %v2469, 2.0
        %v4852 = vmul.f32 %v2470, 2.0
        %v4853 = vmul.f32 %v2471, 2.0
        %v4854 = vmul.f32 %v2472, 2.0
        %v4855 = vmul.f32 %v2473, 2.0
        %v4856 = vmul.f32 %v2474, 2.0
        %v4857 = vmul.f32 %v2475, 2.0
        %v4858 = vmul.f32 %v2476, 2.0
        %v4859 = vmul.f32 %v2477, 2.0
        %v4860 = vmul.f32 %v2478, 2.0
        %v4861 = vmul.f32 %v2479, 2.0
        %v4862 = vmul.f32 %v2480, 2.0
        %v4863 = vmul.f32 %v2481, 2.0
        %v4864 = vmul.f32 %v2482, 2.0
        %v4865 = vmul.f32 %v2483, 2.0
        %v4866 = vmul.f32 %v2484, 2.0
        %v4867 = vmul.f32 %v2485, 2.0
        %v4868 = vmul.f32 %v2486, 2.0
        %v4869 = vmul.f32 %v2487, 2.0
        %v4870 = vmul.f32 %v2488, 2.0
        %v4871 = vmul.f32 %v2489, 2.0
        %v4872 = vmul.f32 %v2490, 2.0
        %v4873 = vmul.f32 %v2491, 2.0
        %v4874 = vmul.f32 %v2492, 2.0
        %v4875 = vmul.f32 %v2493, 2.0
        %v4876 = vmul.f32 %v2494, 2.0
        %v4877 = vmul.f32 %v2495, 2.0
        %v4878 = vmul.f32 %v2496, 2.0
        %v4879 = vmul.f32 %v2497, 2.0
        %v4880 = vmul.f32 %v2498, 2.0
        %v4881 = vmul.f32 %v2499, 2.0
        %v4882 = vmul.f32 %v2500, 2.0
        %v4883 = vmul.f32 %v2501, 2.0
        %v4884 = vmul.f32 %v2502, 2.0
        %v4885 = vmul.f32 %v2503, 2.0
        %v4886 = vmul.f32 %v2504, 2.0
        %v4887 = vmul.f32 %v2505, 2.0
        %v4888 = vmul.f32 %v2506, 2.0
        %v4889 = vmul.f32 %v2507, 2.0
        %v4890 = vmul.f32 %v2508, 2.0
        %v4891 = vmul.f32 %v2509, 2.0
        %v4892 = vmul.f32 %v2510, 2.0
        %v4893 = vmul.f32 %v2511, 2.0
        %v4894 = vmul.f32 %v2512, 2.0
        %v4895 = vmul.f32 %v2513, 2.0
        %v4896 = vmul.f32 %v2514, 2.0
        %v4897 = vmul.f32 %v2515, 2.0
        %v4898 = vmul.f32 %v2516, 2.0
        %v4899 = vmul.f32 %v2517, 2.0
        %v4900 = vmul.f32 %v2518, 2.0
        %v4901 = vmul.f32 %v2519, 2.0
        %v4902 = vmul.f32 %v2520, 2.0
        %v4903 = vmul.f32 %v2521, 2.0
        %v4904 = vmul.f32 %v2522, 2.0
        %v4905 = vmul.f32 %v2523, 2.0
        %v4906 = vmul.f32 %v2524, 2.0
        %v4907 = vmul.f32 %v2525, 2.0
        %v4908 = vmul.f32 %v2526, 2.0
        %v4909 = vmul.f32 %v2527, 2.0
        %v4910 = vmul.f32 %v2528, 2.0
        %v4911 = vmul.f32 %v2529, 2.0
        %v4912 = vmul.f32 %v2530, 2.0
        %v4913 = vmul.f32 %v2531, 2.0
        %v4914 = vmul.f32 %v2532, 2.0
        %v4915 = vmul.f32 %v2533, 2.0
        %v4916 = vmul.f32 %v2534, 2.0
        %v4917 = vmul.f32 %v2535, 2.0
        %v4918 = vmul.f32 %v2536, 2.0
        %v4919 = vmul.f32 %v2537, 2.0
        %v4920 = vmul.f32 %v2538, 2.0
        %v4921 = vmul.f32 %v2539, 2.0
        %v4922 = vmul.f32 %v2540, 2.0
        %v4923 = vmul.f32 %v2541, 2.0
        %v4924 = vmul.f32 %v2542, 2.0
        %v4925 = vmul.f32 %v2543, 2.0
        %v4926 = vmul.f32 %v2544, 2.0
        %v4927 = vmul.f32 %v2545, 2.0
        %v4928 = vmul.f32 %v2546, 2.0
        %v4929 = vmul.f32 %v2547, 2.0
        %v4930 = vmul.f32 %v2548, 2.0
        %v4931 = vmul.f32 %v2549, 2.0
        %v4932 = vmul.f32 %v2550, 2.0
        %v4933 = vmul.f32 %v2551, 2.0
        %v4934 = vmul.f32 %v2552, 2.0
        %v4935 = vmul.f32 %v2553, 2.0
        %v4936 = vmul.f32 %v2554, 2.0
        %v4937 = vmul.f32 %v2555, 2.0
        %v4938 = vmul.f32 %v2556, 2.0
        %v4939 = vmul.f32 %v2557, 2.0
        %v4940 = vmul.f32 %v2558, 2.0
        %v4941 = vmul.f32 %v2559, 2.0
        %v4942 = vmul.f32 %v2560, 2.0
        %v4943 = vmul.f32 %v2561, 2.0
        %v4944 = vmul.f32 %v2562, 2.0
        %v4945 = vmul.f32 %v2563, 2.0
        %v4946 = vmul.f32 %v2564, 2.0
        %v4947 = vmul.f32 %v2565, 2.0
        %v4948 = vadd.f32 %v4820, %v4310
        %v4949 = vadd.f32 %v4821, %v4313
        %v4950 = vadd.f32 %v4822, %v4318
        %v4951 = vadd.f32 %v4823, %v4321
        %v4952 = vadd.f32 %v4824, %v4326
        %v4953 = vadd.f32 %v4825, %v4329
        %v4954 = vadd.f32 %v4826, %v4334
        %v4955 = vadd.f32 %v4827, %v4337
        %v4956 = vadd.f32 %v4828, %v4342
        %v4957 = vadd.f32 %v4829, %v4345
        %v4958 = vadd.f32 %v4830, %v4350
        %v4959 = vadd.f32 %v4831, %v4353
        %v4960 = vadd.f32 %v4832, %v4358
        %v4961 = vadd.f32 %v4833, %v4361
        %v4962 = vadd.f32 %v4834, %v4366
        %v4963 = vadd.f32 %v4835, %v4369
        %v4964 = vadd.f32 %v4836, %v4374
        %v4965 = vadd.f32 %v4837, %v4377
        %v4966 = vadd.f32 %v4838, %v4382
        %v4967 = vadd.f32 %v4839, %v4385
        %v4968 = vadd.f32 %v4840, %v4390
        %v4969 = vadd.f32 %v4841, %v4393
        %v4970 = vadd.f32 %v4842, %v4398
        %v4971 = vadd.f32 %v4843, %v4401
        %v4972 = vadd.f32 %v4844, %v4406
        %v4973 = vadd.f32 %v4845, %v4409
        %v4974 = vadd.f32 %v4846, %v4414
        %v4975 = vadd.f32 %v4847, %v4417
        %v4976 = vadd.f32 %v4848, %v4422
        %v4977 = vadd.f32 %v4849, %v4425
        %v4978 = vadd.f32 %v4850, %v4430
        %v4979 = vadd.f32 %v4851, %v4433
        %v4980 = vadd.f32 %v4852, %v4438
        %v4981 = vadd.f32 %v4853, %v4441
        %v4982 = vadd.f32 %v4854, %v4446
        %v4983 = vadd.f32 %v4855, %v4449
        %v4984 = vadd.f32 %v4856, %v4454
        %v4985 = vadd.f32 %v4857, %v4457
        %v4986 = vadd.f32 %v4858, %v4462
        %v4987 = vadd.f32 %v4859, %v4465
        %v4988 = vadd.f32 %v4860, %v4470
        %v4989 = vadd.f32 %v4861, %v4473
        %v4990 = vadd.f32 %v4862, %v4478
        %v4991 = vadd.f32 %v4863, %v4481
        %v4992 = vadd.f32 %v4864, %v4486
        %v4993 = vadd.f32 %v4865, %v4489
        %v4994 = vadd.f32 %v4866, %v4494
        %v4995 = vadd.f32 %v4867, %v4497
        %v4996 = vadd.f32 %v4868, %v4502
        %v4997 = vadd.f32 %v4869, %v4505
        %v4998 = vadd.f32 %v4870, %v4510
        %v4999 = vadd.f32 %v4871, %v4513
        %v5000 = vadd.f32 %v4872, %v4518
        %v5001 = vadd.f32 %v4873, %v4521
        %v5002 = vadd.f32 %v4874, %v4526
        %v5003 = vadd.f32 %v4875, %v4529
        %v5004 = vadd.f32 %v4876, %v4534
        %v5005 = vadd.f32 %v4877, %v4537
        %v5006 = vadd.f32 %v4878, %v4542
        %v5007 = vadd.f32 %v4879, %v4545
        %v5008 = vadd.f32 %v4880, %v4550
        %v5009 = vadd.f32 %v4881, %v4553
        %v5010 = vadd.f32 %v4882, %v4558
        %v5011 = vadd.f32 %v4883, %v4561
        %v5012 = vadd.f32 %v4884, %v4566
        %v5013 = vadd.f32 %v4885, %v4569
        %v5014 = vadd.f32 %v4886, %v4574
        %v5015 = vadd.f32 %v4887, %v4577
        %v5016 = vadd.f32 %v4888, %v4582
        %v5017 = vadd.f32 %v4889, %v4585
        %v5018 = vadd.f32 %v4890, %v4590
        %v5019 = vadd.f32 %v4891, %v4593
        %v5020 = vadd.f32 %v4892, %v4598
        %v5021 = vadd.f32 %v4893, %v4601
        %v5022 = vadd.f32 %v4894, %v4606
        %v5023 = vadd.f32 %v4895, %v4609
        %v5024 = vadd.f32 %v4896, %v4614
        %v5025 = vadd.f32 %v4897, %v4617
        %v5026 = vadd.f32 %v4898, %v4622
        %v5027 = vadd.f32 %v4899, %v4625
        %v5028 = vadd.f32 %v4900, %v4630
        %v5029 = vadd.f32 %v4901, %v4633
        %v5030 = vadd.f32 %v4902, %v4638
        %v5031 = vadd.f32 %v4903, %v4641
        %v5032 = vadd.f32 %v4904, %v4646
        %v5033 = vadd.f32 %v4905, %v4649
        %v5034 = vadd.f32 %v4906, %v4654
        %v5035 = vadd.f32 %v4907, %v4657
        %v5036 = vadd.f32 %v4908, %v4662
        %v5037 = vadd.f32 %v4909, %v4665
        %v5038 = vadd.f32 %v4910, %v4670
        %v5039 = vadd.f32 %v4911, %v4673
        %v5040 = vadd.f32 %v4912, %v4678
        %v5041 = vadd.f32 %v4913, %v4681
        %v5042 = vadd.f32 %v4914, %v4686
        %v5043 = vadd.f32 %v4915, %v4689
        %v5044 = vadd.f32 %v4916, %v4694
        %v5045 = vadd.f32 %v4917, %v4697
        %v5046 = vadd.f32 %v4918, %v4702
        %v5047 = vadd.f32 %v4919, %v4705
        %v5048 = vadd.f32 %v4920, %v4710
        %v5049 = vadd.f32 %v4921, %v4713
        %v5050 = vadd.f32 %v4922, %v4718
        %v5051 = vadd.f32 %v4923, %v4721
        %v5052 = vadd.f32 %v4924, %v4726
        %v5053 = vadd.f32 %v4925, %v4729
        %v5054 = vadd.f32 %v4926, %v4734
        %v5055 = vadd.f32 %v4927, %v4737
        %v5056 = vadd.f32 %v4928, %v4742
        %v5057 = vadd.f32 %v4929, %v4745
        %v5058 = vadd.f32 %v4930, %v4750
        %v5059 = vadd.f32 %v4931, %v4753
        %v5060 = vadd.f32 %v4932, %v4758
        %v5061 = vadd.f32 %v4933, %v4761
        %v5062 = vadd.f32 %v4934, %v4766
        %v5063 = vadd.f32 %v4935, %v4769
        %v5064 = vadd.f32 %v4936, %v4774
        %v5065 = vadd.f32 %v4937, %v4777
        %v5066 = vadd.f32 %v4938, %v4782
        %v5067 = vadd.f32 %v4939, %v4785
        %v5068 = vadd.f32 %v4940, %v4790
        %v5069 = vadd.f32 %v4941, %v4793
        %v5070 = vadd.f32 %v4942, %v4798
        %v5071 = vadd.f32 %v4943, %v4801
        %v5072 = vadd.f32 %v4944, %v4806
        %v5073 = vadd.f32 %v4945, %v4809
        %v5074 = vadd.f32 %v4946, %v4814
        %v5075 = vadd.f32 %v4947, %v4817
        %v5076 = vld [vmem:[%s1 + $0x4] sm:$0x1]
        %v5077 = vld [vmem:[%s1 + $0x5] sm:$0x1]
        %5078 = vadd.xlane.f32.xlu0 %v4948
        %v5079 = vpop.xlane.xlu0 %5078
        %5080 = vadd.xlane.f32.xlu0 %v4949
        %v5081 = vpop.xlane.xlu0 %5080
        %5082 = vadd.xlane.f32.xlu0 %v4950
        %v5083 = vpop.xlane.xlu0 %5082
        %5084 = vadd.xlane.f32.xlu0 %v4951
        %v5085 = vpop.xlane.xlu0 %5084
        %5086 = vadd.xlane.f32.xlu0 %v4952
        %v5087 = vpop.xlane.xlu0 %5086
        %5088 = vadd.xlane.f32.xlu0 %v4953
        %v5089 = vpop.xlane.xlu0 %5088
        %5090 = vadd.xlane.f32.xlu0 %v4954
        %v5091 = vpop.xlane.xlu0 %5090
        %5092 = vadd.xlane.f32.xlu0 %v4955
        %v5093 = vpop.xlane.xlu0 %5092
        %5094 = vadd.xlane.f32.xlu0 %v4956
        %v5095 = vpop.xlane.xlu0 %5094
        %5096 = vadd.xlane.f32.xlu0 %v4957
        %v5097 = vpop.xlane.xlu0 %5096
        %5098 = vadd.xlane.f32.xlu0 %v4958
        %v5099 = vpop.xlane.xlu0 %5098
        %5100 = vadd.xlane.f32.xlu0 %v4959
        %v5101 = vpop.xlane.xlu0 %5100
        %5102 = vadd.xlane.f32.xlu0 %v4960
        %v5103 = vpop.xlane.xlu0 %5102
        %5104 = vadd.xlane.f32.xlu0 %v4961
        %v5105 = vpop.xlane.xlu0 %5104
        %5106 = vadd.xlane.f32.xlu0 %v4962
        %v5107 = vpop.xlane.xlu0 %5106
        %5108 = vadd.xlane.f32.xlu0 %v4963
        %v5109 = vpop.xlane.xlu0 %5108
        %5110 = vadd.xlane.f32.xlu0 %v4964
        %v5111 = vpop.xlane.xlu0 %5110
        %5112 = vadd.xlane.f32.xlu0 %v4965
        %v5113 = vpop.xlane.xlu0 %5112
        %5114 = vadd.xlane.f32.xlu0 %v4966
        %v5115 = vpop.xlane.xlu0 %5114
        %5116 = vadd.xlane.f32.xlu0 %v4967
        %v5117 = vpop.xlane.xlu0 %5116
        %5118 = vadd.xlane.f32.xlu0 %v4968
        %v5119 = vpop.xlane.xlu0 %5118
        %5120 = vadd.xlane.f32.xlu0 %v4969
        %v5121 = vpop.xlane.xlu0 %5120
        %5122 = vadd.xlane.f32.xlu0 %v4970
        %v5123 = vpop.xlane.xlu0 %5122
        %5124 = vadd.xlane.f32.xlu0 %v4971
        %v5125 = vpop.xlane.xlu0 %5124
        %5126 = vadd.xlane.f32.xlu0 %v4972
        %v5127 = vpop.xlane.xlu0 %5126
        %5128 = vadd.xlane.f32.xlu0 %v4973
        %v5129 = vpop.xlane.xlu0 %5128
        %5130 = vadd.xlane.f32.xlu0 %v4974
        %v5131 = vpop.xlane.xlu0 %5130
        %5132 = vadd.xlane.f32.xlu0 %v4975
        %v5133 = vpop.xlane.xlu0 %5132
        %5134 = vadd.xlane.f32.xlu0 %v4976
        %v5135 = vpop.xlane.xlu0 %5134
        %5136 = vadd.xlane.f32.xlu0 %v4977
        %v5137 = vpop.xlane.xlu0 %5136
        %5138 = vadd.xlane.f32.xlu0 %v4978
        %v5139 = vpop.xlane.xlu0 %5138
        %5140 = vadd.xlane.f32.xlu0 %v4979
        %v5141 = vpop.xlane.xlu0 %5140
        %5142 = vadd.xlane.f32.xlu0 %v4980
        %v5143 = vpop.xlane.xlu0 %5142
        %5144 = vadd.xlane.f32.xlu0 %v4981
        %v5145 = vpop.xlane.xlu0 %5144
        %5146 = vadd.xlane.f32.xlu0 %v4982
        %v5147 = vpop.xlane.xlu0 %5146
        %5148 = vadd.xlane.f32.xlu0 %v4983
        %v5149 = vpop.xlane.xlu0 %5148
        %5150 = vadd.xlane.f32.xlu0 %v4984
        %v5151 = vpop.xlane.xlu0 %5150
        %5152 = vadd.xlane.f32.xlu0 %v4985
        %v5153 = vpop.xlane.xlu0 %5152
        %5154 = vadd.xlane.f32.xlu0 %v4986
        %v5155 = vpop.xlane.xlu0 %5154
        %5156 = vadd.xlane.f32.xlu0 %v4987
        %v5157 = vpop.xlane.xlu0 %5156
        %5158 = vadd.xlane.f32.xlu0 %v4988
        %v5159 = vpop.xlane.xlu0 %5158
        %5160 = vadd.xlane.f32.xlu0 %v4989
        %v5161 = vpop.xlane.xlu0 %5160
        %5162 = vadd.xlane.f32.xlu0 %v4990
        %v5163 = vpop.xlane.xlu0 %5162
        %5164 = vadd.xlane.f32.xlu0 %v4991
        %v5165 = vpop.xlane.xlu0 %5164
        %5166 = vadd.xlane.f32.xlu0 %v4992
        %v5167 = vpop.xlane.xlu0 %5166
        %5168 = vadd.xlane.f32.xlu0 %v4993
        %v5169 = vpop.xlane.xlu0 %5168
        %5170 = vadd.xlane.f32.xlu0 %v4994
        %v5171 = vpop.xlane.xlu0 %5170
        %5172 = vadd.xlane.f32.xlu0 %v4995
        %v5173 = vpop.xlane.xlu0 %5172
        %5174 = vadd.xlane.f32.xlu0 %v4996
        %v5175 = vpop.xlane.xlu0 %5174
        %5176 = vadd.xlane.f32.xlu0 %v4997
        %v5177 = vpop.xlane.xlu0 %5176
        %5178 = vadd.xlane.f32.xlu0 %v4998
        %v5179 = vpop.xlane.xlu0 %5178
        %5180 = vadd.xlane.f32.xlu0 %v4999
        %v5181 = vpop.xlane.xlu0 %5180
        %5182 = vadd.xlane.f32.xlu0 %v5000
        %v5183 = vpop.xlane.xlu0 %5182
        %5184 = vadd.xlane.f32.xlu0 %v5001
        %v5185 = vpop.xlane.xlu0 %5184
        %5186 = vadd.xlane.f32.xlu0 %v5002
        %v5187 = vpop.xlane.xlu0 %5186
        %5188 = vadd.xlane.f32.xlu0 %v5003
        %v5189 = vpop.xlane.xlu0 %5188
        %5190 = vadd.xlane.f32.xlu0 %v5004
        %v5191 = vpop.xlane.xlu0 %5190
        %5192 = vadd.xlane.f32.xlu0 %v5005
        %v5193 = vpop.xlane.xlu0 %5192
        %5194 = vadd.xlane.f32.xlu0 %v5006
        %v5195 = vpop.xlane.xlu0 %5194
        %5196 = vadd.xlane.f32.xlu0 %v5007
        %v5197 = vpop.xlane.xlu0 %5196
        %5198 = vadd.xlane.f32.xlu0 %v5008
        %v5199 = vpop.xlane.xlu0 %5198
        %5200 = vadd.xlane.f32.xlu0 %v5009
        %v5201 = vpop.xlane.xlu0 %5200
        %5202 = vadd.xlane.f32.xlu0 %v5010
        %v5203 = vpop.xlane.xlu0 %5202
        %5204 = vadd.xlane.f32.xlu0 %v5011
        %v5205 = vpop.xlane.xlu0 %5204
        %5206 = vadd.xlane.f32.xlu0 %v5012
        %v5207 = vpop.xlane.xlu0 %5206
        %5208 = vadd.xlane.f32.xlu0 %v5013
        %v5209 = vpop.xlane.xlu0 %5208
        %5210 = vadd.xlane.f32.xlu0 %v5014
        %v5211 = vpop.xlane.xlu0 %5210
        %5212 = vadd.xlane.f32.xlu0 %v5015
        %v5213 = vpop.xlane.xlu0 %5212
        %5214 = vadd.xlane.f32.xlu0 %v5016
        %v5215 = vpop.xlane.xlu0 %5214
        %5216 = vadd.xlane.f32.xlu0 %v5017
        %v5217 = vpop.xlane.xlu0 %5216
        %5218 = vadd.xlane.f32.xlu0 %v5018
        %v5219 = vpop.xlane.xlu0 %5218
        %5220 = vadd.xlane.f32.xlu0 %v5019
        %v5221 = vpop.xlane.xlu0 %5220
        %5222 = vadd.xlane.f32.xlu0 %v5020
        %v5223 = vpop.xlane.xlu0 %5222
        %5224 = vadd.xlane.f32.xlu0 %v5021
        %v5225 = vpop.xlane.xlu0 %5224
        %5226 = vadd.xlane.f32.xlu0 %v5022
        %v5227 = vpop.xlane.xlu0 %5226
        %5228 = vadd.xlane.f32.xlu0 %v5023
        %v5229 = vpop.xlane.xlu0 %5228
        %5230 = vadd.xlane.f32.xlu0 %v5024
        %v5231 = vpop.xlane.xlu0 %5230
        %5232 = vadd.xlane.f32.xlu0 %v5025
        %v5233 = vpop.xlane.xlu0 %5232
        %5234 = vadd.xlane.f32.xlu0 %v5026
        %v5235 = vpop.xlane.xlu0 %5234
        %5236 = vadd.xlane.f32.xlu0 %v5027
        %v5237 = vpop.xlane.xlu0 %5236
        %5238 = vadd.xlane.f32.xlu0 %v5028
        %v5239 = vpop.xlane.xlu0 %5238
        %5240 = vadd.xlane.f32.xlu0 %v5029
        %v5241 = vpop.xlane.xlu0 %5240
        %5242 = vadd.xlane.f32.xlu0 %v5030
        %v5243 = vpop.xlane.xlu0 %5242
        %5244 = vadd.xlane.f32.xlu0 %v5031
        %v5245 = vpop.xlane.xlu0 %5244
        %5246 = vadd.xlane.f32.xlu0 %v5032
        %v5247 = vpop.xlane.xlu0 %5246
        %5248 = vadd.xlane.f32.xlu0 %v5033
        %v5249 = vpop.xlane.xlu0 %5248
        %5250 = vadd.xlane.f32.xlu0 %v5034
        %v5251 = vpop.xlane.xlu0 %5250
        %5252 = vadd.xlane.f32.xlu0 %v5035
        %v5253 = vpop.xlane.xlu0 %5252
        %5254 = vadd.xlane.f32.xlu0 %v5036
        %v5255 = vpop.xlane.xlu0 %5254
        %5256 = vadd.xlane.f32.xlu0 %v5037
        %v5257 = vpop.xlane.xlu0 %5256
        %5258 = vadd.xlane.f32.xlu0 %v5038
        %v5259 = vpop.xlane.xlu0 %5258
        %5260 = vadd.xlane.f32.xlu0 %v5039
        %v5261 = vpop.xlane.xlu0 %5260
        %5262 = vadd.xlane.f32.xlu0 %v5040
        %v5263 = vpop.xlane.xlu0 %5262
        %5264 = vadd.xlane.f32.xlu0 %v5041
        %v5265 = vpop.xlane.xlu0 %5264
        %5266 = vadd.xlane.f32.xlu0 %v5042
        %v5267 = vpop.xlane.xlu0 %5266
        %5268 = vadd.xlane.f32.xlu0 %v5043
        %v5269 = vpop.xlane.xlu0 %5268
        %5270 = vadd.xlane.f32.xlu0 %v5044
        %v5271 = vpop.xlane.xlu0 %5270
        %5272 = vadd.xlane.f32.xlu0 %v5045
        %v5273 = vpop.xlane.xlu0 %5272
        %5274 = vadd.xlane.f32.xlu0 %v5046
        %v5275 = vpop.xlane.xlu0 %5274
        %5276 = vadd.xlane.f32.xlu0 %v5047
        %v5277 = vpop.xlane.xlu0 %5276
        %5278 = vadd.xlane.f32.xlu0 %v5048
        %v5279 = vpop.xlane.xlu0 %5278
        %5280 = vadd.xlane.f32.xlu0 %v5049
        %v5281 = vpop.xlane.xlu0 %5280
        %5282 = vadd.xlane.f32.xlu0 %v5050
        %v5283 = vpop.xlane.xlu0 %5282
        %5284 = vadd.xlane.f32.xlu0 %v5051
        %v5285 = vpop.xlane.xlu0 %5284
        %5286 = vadd.xlane.f32.xlu0 %v5052
        %v5287 = vpop.xlane.xlu0 %5286
        %5288 = vadd.xlane.f32.xlu0 %v5053
        %v5289 = vpop.xlane.xlu0 %5288
        %5290 = vadd.xlane.f32.xlu0 %v5054
        %v5291 = vpop.xlane.xlu0 %5290
        %5292 = vadd.xlane.f32.xlu0 %v5055
        %v5293 = vpop.xlane.xlu0 %5292
        %5294 = vadd.xlane.f32.xlu0 %v5056
        %v5295 = vpop.xlane.xlu0 %5294
        %5296 = vadd.xlane.f32.xlu0 %v5057
        %v5297 = vpop.xlane.xlu0 %5296
        %5298 = vadd.xlane.f32.xlu0 %v5058
        %v5299 = vpop.xlane.xlu0 %5298
        %5300 = vadd.xlane.f32.xlu0 %v5059
        %v5301 = vpop.xlane.xlu0 %5300
        %5302 = vadd.xlane.f32.xlu0 %v5060
        %v5303 = vpop.xlane.xlu0 %5302
        %5304 = vadd.xlane.f32.xlu0 %v5061
        %v5305 = vpop.xlane.xlu0 %5304
        %5306 = vadd.xlane.f32.xlu0 %v5062
        %v5307 = vpop.xlane.xlu0 %5306
        %5308 = vadd.xlane.f32.xlu0 %v5063
        %v5309 = vpop.xlane.xlu0 %5308
        %5310 = vadd.xlane.f32.xlu0 %v5064
        %v5311 = vpop.xlane.xlu0 %5310
        %5312 = vadd.xlane.f32.xlu0 %v5065
        %v5313 = vpop.xlane.xlu0 %5312
        %5314 = vadd.xlane.f32.xlu0 %v5066
        %v5315 = vpop.xlane.xlu0 %5314
        %5316 = vadd.xlane.f32.xlu0 %v5067
        %v5317 = vpop.xlane.xlu0 %5316
        %5318 = vadd.xlane.f32.xlu0 %v5068
        %v5319 = vpop.xlane.xlu0 %5318
        %5320 = vadd.xlane.f32.xlu0 %v5069
        %v5321 = vpop.xlane.xlu0 %5320
        %5322 = vadd.xlane.f32.xlu0 %v5070
        %v5323 = vpop.xlane.xlu0 %5322
        %5324 = vadd.xlane.f32.xlu0 %v5071
        %v5325 = vpop.xlane.xlu0 %5324
        %5326 = vadd.xlane.f32.xlu0 %v5072
        %v5327 = vpop.xlane.xlu0 %5326
        %5328 = vadd.xlane.f32.xlu0 %v5073
        %v5329 = vpop.xlane.xlu0 %5328
        %5330 = vadd.xlane.f32.xlu0 %v5074
        %v5331 = vpop.xlane.xlu0 %5330
        %5332 = vadd.xlane.f32.xlu0 %v5075
        %v5333 = vpop.xlane.xlu0 %5332
        %v5334 = vmul.f32 %v5079, %v765
        %v5335 = vmul.f32 %v5081, %v765
        %v5336 = vmul.f32 %v5083, %v765
        %v5337 = vmul.f32 %v5085, %v765
        %v5338 = vmul.f32 %v5087, %v765
        %v5339 = vmul.f32 %v5089, %v765
        %v5340 = vmul.f32 %v5091, %v765
        %v5341 = vmul.f32 %v5093, %v765
        %v5342 = vmul.f32 %v5095, %v765
        %v5343 = vmul.f32 %v5097, %v765
        %v5344 = vmul.f32 %v5099, %v765
        %v5345 = vmul.f32 %v5101, %v765
        %v5346 = vmul.f32 %v5103, %v765
        %v5347 = vmul.f32 %v5105, %v765
        %v5348 = vmul.f32 %v5107, %v765
        %v5349 = vmul.f32 %v5109, %v765
        %v5350 = vmul.f32 %v5111, %v765
        %v5351 = vmul.f32 %v5113, %v765
        %v5352 = vmul.f32 %v5115, %v765
        %v5353 = vmul.f32 %v5117, %v765
        %v5354 = vmul.f32 %v5119, %v765
        %v5355 = vmul.f32 %v5121, %v765
        %v5356 = vmul.f32 %v5123, %v765
        %v5357 = vmul.f32 %v5125, %v765
        %v5358 = vmul.f32 %v5127, %v765
        %v5359 = vmul.f32 %v5129, %v765
        %v5360 = vmul.f32 %v5131, %v765
        %v5361 = vmul.f32 %v5133, %v765
        %v5362 = vmul.f32 %v5135, %v765
        %v5363 = vmul.f32 %v5137, %v765
        %v5364 = vmul.f32 %v5139, %v765
        %v5365 = vmul.f32 %v5141, %v765
        %v5366 = vmul.f32 %v5143, %v765
        %v5367 = vmul.f32 %v5145, %v765
        %v5368 = vmul.f32 %v5147, %v765
        %v5369 = vmul.f32 %v5149, %v765
        %v5370 = vmul.f32 %v5151, %v765
        %v5371 = vmul.f32 %v5153, %v765
        %v5372 = vmul.f32 %v5155, %v765
        %v5373 = vmul.f32 %v5157, %v765
        %v5374 = vmul.f32 %v5159, %v765
        %v5375 = vmul.f32 %v5161, %v765
        %v5376 = vmul.f32 %v5163, %v765
        %v5377 = vmul.f32 %v5165, %v765
        %v5378 = vmul.f32 %v5167, %v765
        %v5379 = vmul.f32 %v5169, %v765
        %v5380 = vmul.f32 %v5171, %v765
        %v5381 = vmul.f32 %v5173, %v765
        %v5382 = vmul.f32 %v5175, %v765
        %v5383 = vmul.f32 %v5177, %v765
        %v5384 = vmul.f32 %v5179, %v765
        %v5385 = vmul.f32 %v5181, %v765
        %v5386 = vmul.f32 %v5183, %v765
        %v5387 = vmul.f32 %v5185, %v765
        %v5388 = vmul.f32 %v5187, %v765
        %v5389 = vmul.f32 %v5189, %v765
        %v5390 = vmul.f32 %v5191, %v765
        %v5391 = vmul.f32 %v5193, %v765
        %v5392 = vmul.f32 %v5195, %v765
        %v5393 = vmul.f32 %v5197, %v765
        %v5394 = vmul.f32 %v5199, %v765
        %v5395 = vmul.f32 %v5201, %v765
        %v5396 = vmul.f32 %v5203, %v765
        %v5397 = vmul.f32 %v5205, %v765
        %v5398 = vmul.f32 %v5207, %v765
        %v5399 = vmul.f32 %v5209, %v765
        %v5400 = vmul.f32 %v5211, %v765
        %v5401 = vmul.f32 %v5213, %v765
        %v5402 = vmul.f32 %v5215, %v765
        %v5403 = vmul.f32 %v5217, %v765
        %v5404 = vmul.f32 %v5219, %v765
        %v5405 = vmul.f32 %v5221, %v765
        %v5406 = vmul.f32 %v5223, %v765
        %v5407 = vmul.f32 %v5225, %v765
        %v5408 = vmul.f32 %v5227, %v765
        %v5409 = vmul.f32 %v5229, %v765
        %v5410 = vmul.f32 %v5231, %v765
        %v5411 = vmul.f32 %v5233, %v765
        %v5412 = vmul.f32 %v5235, %v765
        %v5413 = vmul.f32 %v5237, %v765
        %v5414 = vmul.f32 %v5239, %v765
        %v5415 = vmul.f32 %v5241, %v765
        %v5416 = vmul.f32 %v5243, %v765
        %v5417 = vmul.f32 %v5245, %v765
        %v5418 = vmul.f32 %v5247, %v765
        %v5419 = vmul.f32 %v5249, %v765
        %v5420 = vmul.f32 %v5251, %v765
        %v5421 = vmul.f32 %v5253, %v765
        %v5422 = vmul.f32 %v5255, %v765
        %v5423 = vmul.f32 %v5257, %v765
        %v5424 = vmul.f32 %v5259, %v765
        %v5425 = vmul.f32 %v5261, %v765
        %v5426 = vmul.f32 %v5263, %v765
        %v5427 = vmul.f32 %v5265, %v765
        %v5428 = vmul.f32 %v5267, %v765
        %v5429 = vmul.f32 %v5269, %v765
        %v5430 = vmul.f32 %v5271, %v765
        %v5431 = vmul.f32 %v5273, %v765
        %v5432 = vmul.f32 %v5275, %v765
        %v5433 = vmul.f32 %v5277, %v765
        %v5434 = vmul.f32 %v5279, %v765
        %v5435 = vmul.f32 %v5281, %v765
        %v5436 = vmul.f32 %v5283, %v765
        %v5437 = vmul.f32 %v5285, %v765
        %v5438 = vmul.f32 %v5287, %v765
        %v5439 = vmul.f32 %v5289, %v765
        %v5440 = vmul.f32 %v5291, %v765
        %v5441 = vmul.f32 %v5293, %v765
        %v5442 = vmul.f32 %v5295, %v765
        %v5443 = vmul.f32 %v5297, %v765
        %v5444 = vmul.f32 %v5299, %v765
        %v5445 = vmul.f32 %v5301, %v765
        %v5446 = vmul.f32 %v5303, %v765
        %v5447 = vmul.f32 %v5305, %v765
        %v5448 = vmul.f32 %v5307, %v765
        %v5449 = vmul.f32 %v5309, %v765
        %v5450 = vmul.f32 %v5311, %v765
        %v5451 = vmul.f32 %v5313, %v765
        %v5452 = vmul.f32 %v5315, %v765
        %v5453 = vmul.f32 %v5317, %v765
        %v5454 = vmul.f32 %v5319, %v765
        %v5455 = vmul.f32 %v5321, %v765
        %v5456 = vmul.f32 %v5323, %v765
        %v5457 = vmul.f32 %v5325, %v765
        %v5458 = vmul.f32 %v5327, %v765
        %v5459 = vmul.f32 %v5329, %v765
        %v5460 = vmul.f32 %v5331, %v765
        %v5461 = vmul.f32 %v5333, %v765
        %v5462 = vmul.f32 %v4948, %v4948
        %v5463 = vmul.f32 %v4949, %v4949
        %v5464 = vmul.f32 %v4950, %v4950
        %v5465 = vmul.f32 %v4951, %v4951
        %v5466 = vmul.f32 %v4952, %v4952
        %v5467 = vmul.f32 %v4953, %v4953
        %v5468 = vmul.f32 %v4954, %v4954
        %v5469 = vmul.f32 %v4955, %v4955
        %v5470 = vmul.f32 %v4956, %v4956
        %v5471 = vmul.f32 %v4957, %v4957
        %v5472 = vmul.f32 %v4958, %v4958
        %v5473 = vmul.f32 %v4959, %v4959
        %v5474 = vmul.f32 %v4960, %v4960
        %v5475 = vmul.f32 %v4961, %v4961
        %v5476 = vmul.f32 %v4962, %v4962
        %v5477 = vmul.f32 %v4963, %v4963
        %v5478 = vmul.f32 %v4964, %v4964
        %v5479 = vmul.f32 %v4965, %v4965
        %v5480 = vmul.f32 %v4966, %v4966
        %v5481 = vmul.f32 %v4967, %v4967
        %v5482 = vmul.f32 %v4968, %v4968
        %v5483 = vmul.f32 %v4969, %v4969
        %v5484 = vmul.f32 %v4970, %v4970
        %v5485 = vmul.f32 %v4971, %v4971
        %v5486 = vmul.f32 %v4972, %v4972
        %v5487 = vmul.f32 %v4973, %v4973
        %v5488 = vmul.f32 %v4974, %v4974
        %v5489 = vmul.f32 %v4975, %v4975
        %v5490 = vmul.f32 %v4976, %v4976
        %v5491 = vmul.f32 %v4977, %v4977
        %v5492 = vmul.f32 %v4978, %v4978
        %v5493 = vmul.f32 %v4979, %v4979
        %v5494 = vmul.f32 %v4980, %v4980
        %v5495 = vmul.f32 %v4981, %v4981
        %v5496 = vmul.f32 %v4982, %v4982
        %v5497 = vmul.f32 %v4983, %v4983
        %v5498 = vmul.f32 %v4984, %v4984
        %v5499 = vmul.f32 %v4985, %v4985
        %v5500 = vmul.f32 %v4986, %v4986
        %v5501 = vmul.f32 %v4987, %v4987
        %v5502 = vmul.f32 %v4988, %v4988
        %v5503 = vmul.f32 %v4989, %v4989
        %v5504 = vmul.f32 %v4990, %v4990
        %v5505 = vmul.f32 %v4991, %v4991
        %v5506 = vmul.f32 %v4992, %v4992
        %v5507 = vmul.f32 %v4993, %v4993
        %v5508 = vmul.f32 %v4994, %v4994
        %v5509 = vmul.f32 %v4995, %v4995
        %v5510 = vmul.f32 %v4996, %v4996
        %v5511 = vmul.f32 %v4997, %v4997
        %v5512 = vmul.f32 %v4998, %v4998
        %v5513 = vmul.f32 %v4999, %v4999
        %v5514 = vmul.f32 %v5000, %v5000
        %v5515 = vmul.f32 %v5001, %v5001
        %v5516 = vmul.f32 %v5002, %v5002
        %v5517 = vmul.f32 %v5003, %v5003
        %v5518 = vmul.f32 %v5004, %v5004
        %v5519 = vmul.f32 %v5005, %v5005
        %v5520 = vmul.f32 %v5006, %v5006
        %v5521 = vmul.f32 %v5007, %v5007
        %v5522 = vmul.f32 %v5008, %v5008
        %v5523 = vmul.f32 %v5009, %v5009
        %v5524 = vmul.f32 %v5010, %v5010
        %v5525 = vmul.f32 %v5011, %v5011
        %v5526 = vmul.f32 %v5012, %v5012
        %v5527 = vmul.f32 %v5013, %v5013
        %v5528 = vmul.f32 %v5014, %v5014
        %v5529 = vmul.f32 %v5015, %v5015
        %v5530 = vmul.f32 %v5016, %v5016
        %v5531 = vmul.f32 %v5017, %v5017
        %v5532 = vmul.f32 %v5018, %v5018
        %v5533 = vmul.f32 %v5019, %v5019
        %v5534 = vmul.f32 %v5020, %v5020
        %v5535 = vmul.f32 %v5021, %v5021
        %v5536 = vmul.f32 %v5022, %v5022
        %v5537 = vmul.f32 %v5023, %v5023
        %v5538 = vmul.f32 %v5024, %v5024
        %v5539 = vmul.f32 %v5025, %v5025
        %v5540 = vmul.f32 %v5026, %v5026
        %v5541 = vmul.f32 %v5027, %v5027
        %v5542 = vmul.f32 %v5028, %v5028
        %v5543 = vmul.f32 %v5029, %v5029
        %v5544 = vmul.f32 %v5030, %v5030
        %v5545 = vmul.f32 %v5031, %v5031
        %v5546 = vmul.f32 %v5032, %v5032
        %v5547 = vmul.f32 %v5033, %v5033
        %v5548 = vmul.f32 %v5034, %v5034
        %v5549 = vmul.f32 %v5035, %v5035
        %v5550 = vmul.f32 %v5036, %v5036
        %v5551 = vmul.f32 %v5037, %v5037
        %v5552 = vmul.f32 %v5038, %v5038
        %v5553 = vmul.f32 %v5039, %v5039
        %v5554 = vmul.f32 %v5040, %v5040
        %v5555 = vmul.f32 %v5041, %v5041
        %v5556 = vmul.f32 %v5042, %v5042
        %v5557 = vmul.f32 %v5043, %v5043
        %v5558 = vmul.f32 %v5044, %v5044
        %v5559 = vmul.f32 %v5045, %v5045
        %v5560 = vmul.f32 %v5046, %v5046
        %v5561 = vmul.f32 %v5047, %v5047
        %v5562 = vmul.f32 %v5048, %v5048
        %v5563 = vmul.f32 %v5049, %v5049
        %v5564 = vmul.f32 %v5050, %v5050
        %v5565 = vmul.f32 %v5051, %v5051
        %v5566 = vmul.f32 %v5052, %v5052
        %v5567 = vmul.f32 %v5053, %v5053
        %v5568 = vmul.f32 %v5054, %v5054
        %v5569 = vmul.f32 %v5055, %v5055
        %v5570 = vmul.f32 %v5056, %v5056
        %v5571 = vmul.f32 %v5057, %v5057
        %v5572 = vmul.f32 %v5058, %v5058
        %v5573 = vmul.f32 %v5059, %v5059
        %v5574 = vmul.f32 %v5060, %v5060
        %v5575 = vmul.f32 %v5061, %v5061
        %v5576 = vmul.f32 %v5062, %v5062
        %v5577 = vmul.f32 %v5063, %v5063
        %v5578 = vmul.f32 %v5064, %v5064
        %v5579 = vmul.f32 %v5065, %v5065
        %v5580 = vmul.f32 %v5066, %v5066
        %v5581 = vmul.f32 %v5067, %v5067
        %v5582 = vmul.f32 %v5068, %v5068
        %v5583 = vmul.f32 %v5069, %v5069
        %v5584 = vmul.f32 %v5070, %v5070
        %v5585 = vmul.f32 %v5071, %v5071
        %v5586 = vmul.f32 %v5072, %v5072
        %v5587 = vmul.f32 %v5073, %v5073
        %v5588 = vmul.f32 %v5074, %v5074
        %v5589 = vmul.f32 %v5075, %v5075
        %5590 = vadd.xlane.f32.xlu0 %v5462
        %v5591 = vpop.xlane.xlu0 %5590
        %5592 = vadd.xlane.f32.xlu0 %v5463
        %v5593 = vpop.xlane.xlu0 %5592
        %5594 = vadd.xlane.f32.xlu0 %v5464
        %v5595 = vpop.xlane.xlu0 %5594
        %5596 = vadd.xlane.f32.xlu0 %v5465
        %v5597 = vpop.xlane.xlu0 %5596
        %5598 = vadd.xlane.f32.xlu0 %v5466
        %v5599 = vpop.xlane.xlu0 %5598
        %5600 = vadd.xlane.f32.xlu0 %v5467
        %v5601 = vpop.xlane.xlu0 %5600
        %5602 = vadd.xlane.f32.xlu0 %v5468
        %v5603 = vpop.xlane.xlu0 %5602
        %5604 = vadd.xlane.f32.xlu0 %v5469
        %v5605 = vpop.xlane.xlu0 %5604
        %5606 = vadd.xlane.f32.xlu0 %v5470
        %v5607 = vpop.xlane.xlu0 %5606
        %5608 = vadd.xlane.f32.xlu0 %v5471
        %v5609 = vpop.xlane.xlu0 %5608
        %5610 = vadd.xlane.f32.xlu0 %v5472
        %v5611 = vpop.xlane.xlu0 %5610
        %5612 = vadd.xlane.f32.xlu0 %v5473
        %v5613 = vpop.xlane.xlu0 %5612
        %5614 = vadd.xlane.f32.xlu0 %v5474
        %v5615 = vpop.xlane.xlu0 %5614
        %5616 = vadd.xlane.f32.xlu0 %v5475
        %v5617 = vpop.xlane.xlu0 %5616
        %5618 = vadd.xlane.f32.xlu0 %v5476
        %v5619 = vpop.xlane.xlu0 %5618
        %5620 = vadd.xlane.f32.xlu0 %v5477
        %v5621 = vpop.xlane.xlu0 %5620
        %5622 = vadd.xlane.f32.xlu0 %v5478
        %v5623 = vpop.xlane.xlu0 %5622
        %5624 = vadd.xlane.f32.xlu0 %v5479
        %v5625 = vpop.xlane.xlu0 %5624
        %5626 = vadd.xlane.f32.xlu0 %v5480
        %v5627 = vpop.xlane.xlu0 %5626
        %5628 = vadd.xlane.f32.xlu0 %v5481
        %v5629 = vpop.xlane.xlu0 %5628
        %5630 = vadd.xlane.f32.xlu0 %v5482
        %v5631 = vpop.xlane.xlu0 %5630
        %5632 = vadd.xlane.f32.xlu0 %v5483
        %v5633 = vpop.xlane.xlu0 %5632
        %5634 = vadd.xlane.f32.xlu0 %v5484
        %v5635 = vpop.xlane.xlu0 %5634
        %5636 = vadd.xlane.f32.xlu0 %v5485
        %v5637 = vpop.xlane.xlu0 %5636
        %5638 = vadd.xlane.f32.xlu0 %v5486
        %v5639 = vpop.xlane.xlu0 %5638
        %5640 = vadd.xlane.f32.xlu0 %v5487
        %v5641 = vpop.xlane.xlu0 %5640
        %5642 = vadd.xlane.f32.xlu0 %v5488
        %v5643 = vpop.xlane.xlu0 %5642
        %5644 = vadd.xlane.f32.xlu0 %v5489
        %v5645 = vpop.xlane.xlu0 %5644
        %5646 = vadd.xlane.f32.xlu0 %v5490
        %v5647 = vpop.xlane.xlu0 %5646
        %5648 = vadd.xlane.f32.xlu0 %v5491
        %v5649 = vpop.xlane.xlu0 %5648
        %5650 = vadd.xlane.f32.xlu0 %v5492
        %v5651 = vpop.xlane.xlu0 %5650
        %5652 = vadd.xlane.f32.xlu0 %v5493
        %v5653 = vpop.xlane.xlu0 %5652
        %5654 = vadd.xlane.f32.xlu0 %v5494
        %v5655 = vpop.xlane.xlu0 %5654
        %5656 = vadd.xlane.f32.xlu0 %v5495
        %v5657 = vpop.xlane.xlu0 %5656
        %5658 = vadd.xlane.f32.xlu0 %v5496
        %v5659 = vpop.xlane.xlu0 %5658
        %5660 = vadd.xlane.f32.xlu0 %v5497
        %v5661 = vpop.xlane.xlu0 %5660
        %5662 = vadd.xlane.f32.xlu0 %v5498
        %v5663 = vpop.xlane.xlu0 %5662
        %5664 = vadd.xlane.f32.xlu0 %v5499
        %v5665 = vpop.xlane.xlu0 %5664
        %5666 = vadd.xlane.f32.xlu0 %v5500
        %v5667 = vpop.xlane.xlu0 %5666
        %5668 = vadd.xlane.f32.xlu0 %v5501
        %v5669 = vpop.xlane.xlu0 %5668
        %5670 = vadd.xlane.f32.xlu0 %v5502
        %v5671 = vpop.xlane.xlu0 %5670
        %5672 = vadd.xlane.f32.xlu0 %v5503
        %v5673 = vpop.xlane.xlu0 %5672
        %5674 = vadd.xlane.f32.xlu0 %v5504
        %v5675 = vpop.xlane.xlu0 %5674
        %5676 = vadd.xlane.f32.xlu0 %v5505
        %v5677 = vpop.xlane.xlu0 %5676
        %5678 = vadd.xlane.f32.xlu0 %v5506
        %v5679 = vpop.xlane.xlu0 %5678
        %5680 = vadd.xlane.f32.xlu0 %v5507
        %v5681 = vpop.xlane.xlu0 %5680
        %5682 = vadd.xlane.f32.xlu0 %v5508
        %v5683 = vpop.xlane.xlu0 %5682
        %5684 = vadd.xlane.f32.xlu0 %v5509
        %v5685 = vpop.xlane.xlu0 %5684
        %5686 = vadd.xlane.f32.xlu0 %v5510
        %v5687 = vpop.xlane.xlu0 %5686
        %5688 = vadd.xlane.f32.xlu0 %v5511
        %v5689 = vpop.xlane.xlu0 %5688
        %5690 = vadd.xlane.f32.xlu0 %v5512
        %v5691 = vpop.xlane.xlu0 %5690
        %5692 = vadd.xlane.f32.xlu0 %v5513
        %v5693 = vpop.xlane.xlu0 %5692
        %5694 = vadd.xlane.f32.xlu0 %v5514
        %v5695 = vpop.xlane.xlu0 %5694
        %5696 = vadd.xlane.f32.xlu0 %v5515
        %v5697 = vpop.xlane.xlu0 %5696
        %5698 = vadd.xlane.f32.xlu0 %v5516
        %v5699 = vpop.xlane.xlu0 %5698
        %5700 = vadd.xlane.f32.xlu0 %v5517
        %v5701 = vpop.xlane.xlu0 %5700
        %5702 = vadd.xlane.f32.xlu0 %v5518
        %v5703 = vpop.xlane.xlu0 %5702
        %5704 = vadd.xlane.f32.xlu0 %v5519
        %v5705 = vpop.xlane.xlu0 %5704
        %5706 = vadd.xlane.f32.xlu0 %v5520
        %v5707 = vpop.xlane.xlu0 %5706
        %5708 = vadd.xlane.f32.xlu0 %v5521
        %v5709 = vpop.xlane.xlu0 %5708
        %5710 = vadd.xlane.f32.xlu0 %v5522
        %v5711 = vpop.xlane.xlu0 %5710
        %5712 = vadd.xlane.f32.xlu0 %v5523
        %v5713 = vpop.xlane.xlu0 %5712
        %5714 = vadd.xlane.f32.xlu0 %v5524
        %v5715 = vpop.xlane.xlu0 %5714
        %5716 = vadd.xlane.f32.xlu0 %v5525
        %v5717 = vpop.xlane.xlu0 %5716
        %5718 = vadd.xlane.f32.xlu0 %v5526
        %v5719 = vpop.xlane.xlu0 %5718
        %5720 = vadd.xlane.f32.xlu0 %v5527
        %v5721 = vpop.xlane.xlu0 %5720
        %5722 = vadd.xlane.f32.xlu0 %v5528
        %v5723 = vpop.xlane.xlu0 %5722
        %5724 = vadd.xlane.f32.xlu0 %v5529
        %v5725 = vpop.xlane.xlu0 %5724
        %5726 = vadd.xlane.f32.xlu0 %v5530
        %v5727 = vpop.xlane.xlu0 %5726
        %5728 = vadd.xlane.f32.xlu0 %v5531
        %v5729 = vpop.xlane.xlu0 %5728
        %5730 = vadd.xlane.f32.xlu0 %v5532
        %v5731 = vpop.xlane.xlu0 %5730
        %5732 = vadd.xlane.f32.xlu0 %v5533
        %v5733 = vpop.xlane.xlu0 %5732
        %5734 = vadd.xlane.f32.xlu0 %v5534
        %v5735 = vpop.xlane.xlu0 %5734
        %5736 = vadd.xlane.f32.xlu0 %v5535
        %v5737 = vpop.xlane.xlu0 %5736
        %5738 = vadd.xlane.f32.xlu0 %v5536
        %v5739 = vpop.xlane.xlu0 %5738
        %5740 = vadd.xlane.f32.xlu0 %v5537
        %v5741 = vpop.xlane.xlu0 %5740
        %5742 = vadd.xlane.f32.xlu0 %v5538
        %v5743 = vpop.xlane.xlu0 %5742
        %5744 = vadd.xlane.f32.xlu0 %v5539
        %v5745 = vpop.xlane.xlu0 %5744
        %5746 = vadd.xlane.f32.xlu0 %v5540
        %v5747 = vpop.xlane.xlu0 %5746
        %5748 = vadd.xlane.f32.xlu0 %v5541
        %v5749 = vpop.xlane.xlu0 %5748
        %5750 = vadd.xlane.f32.xlu0 %v5542
        %v5751 = vpop.xlane.xlu0 %5750
        %5752 = vadd.xlane.f32.xlu0 %v5543
        %v5753 = vpop.xlane.xlu0 %5752
        %5754 = vadd.xlane.f32.xlu0 %v5544
        %v5755 = vpop.xlane.xlu0 %5754
        %5756 = vadd.xlane.f32.xlu0 %v5545
        %v5757 = vpop.xlane.xlu0 %5756
        %5758 = vadd.xlane.f32.xlu0 %v5546
        %v5759 = vpop.xlane.xlu0 %5758
        %5760 = vadd.xlane.f32.xlu0 %v5547
        %v5761 = vpop.xlane.xlu0 %5760
        %5762 = vadd.xlane.f32.xlu0 %v5548
        %v5763 = vpop.xlane.xlu0 %5762
        %5764 = vadd.xlane.f32.xlu0 %v5549
        %v5765 = vpop.xlane.xlu0 %5764
        %5766 = vadd.xlane.f32.xlu0 %v5550
        %v5767 = vpop.xlane.xlu0 %5766
        %5768 = vadd.xlane.f32.xlu0 %v5551
        %v5769 = vpop.xlane.xlu0 %5768
        %5770 = vadd.xlane.f32.xlu0 %v5552
        %v5771 = vpop.xlane.xlu0 %5770
        %5772 = vadd.xlane.f32.xlu0 %v5553
        %v5773 = vpop.xlane.xlu0 %5772
        %5774 = vadd.xlane.f32.xlu0 %v5554
        %v5775 = vpop.xlane.xlu0 %5774
        %5776 = vadd.xlane.f32.xlu0 %v5555
        %v5777 = vpop.xlane.xlu0 %5776
        %5778 = vadd.xlane.f32.xlu0 %v5556
        %v5779 = vpop.xlane.xlu0 %5778
        %5780 = vadd.xlane.f32.xlu0 %v5557
        %v5781 = vpop.xlane.xlu0 %5780
        %5782 = vadd.xlane.f32.xlu0 %v5558
        %v5783 = vpop.xlane.xlu0 %5782
        %5784 = vadd.xlane.f32.xlu0 %v5559
        %v5785 = vpop.xlane.xlu0 %5784
        %5786 = vadd.xlane.f32.xlu0 %v5560
        %v5787 = vpop.xlane.xlu0 %5786
        %5788 = vadd.xlane.f32.xlu0 %v5561
        %v5789 = vpop.xlane.xlu0 %5788
        %5790 = vadd.xlane.f32.xlu0 %v5562
        %v5791 = vpop.xlane.xlu0 %5790
        %5792 = vadd.xlane.f32.xlu0 %v5563
        %v5793 = vpop.xlane.xlu0 %5792
        %5794 = vadd.xlane.f32.xlu0 %v5564
        %v5795 = vpop.xlane.xlu0 %5794
        %5796 = vadd.xlane.f32.xlu0 %v5565
        %v5797 = vpop.xlane.xlu0 %5796
        %5798 = vadd.xlane.f32.xlu0 %v5566
        %v5799 = vpop.xlane.xlu0 %5798
        %5800 = vadd.xlane.f32.xlu0 %v5567
        %v5801 = vpop.xlane.xlu0 %5800
        %5802 = vadd.xlane.f32.xlu0 %v5568
        %v5803 = vpop.xlane.xlu0 %5802
        %5804 = vadd.xlane.f32.xlu0 %v5569
        %v5805 = vpop.xlane.xlu0 %5804
        %5806 = vadd.xlane.f32.xlu0 %v5570
        %v5807 = vpop.xlane.xlu0 %5806
        %5808 = vadd.xlane.f32.xlu0 %v5571
        %v5809 = vpop.xlane.xlu0 %5808
        %5810 = vadd.xlane.f32.xlu0 %v5572
        %v5811 = vpop.xlane.xlu0 %5810
        %5812 = vadd.xlane.f32.xlu0 %v5573
        %v5813 = vpop.xlane.xlu0 %5812
        %5814 = vadd.xlane.f32.xlu0 %v5574
        %v5815 = vpop.xlane.xlu0 %5814
        %5816 = vadd.xlane.f32.xlu0 %v5575
        %v5817 = vpop.xlane.xlu0 %5816
        %5818 = vadd.xlane.f32.xlu0 %v5576
        %v5819 = vpop.xlane.xlu0 %5818
        %5820 = vadd.xlane.f32.xlu0 %v5577
        %v5821 = vpop.xlane.xlu0 %5820
        %5822 = vadd.xlane.f32.xlu0 %v5578
        %v5823 = vpop.xlane.xlu0 %5822
        %5824 = vadd.xlane.f32.xlu0 %v5579
        %v5825 = vpop.xlane.xlu0 %5824
        %5826 = vadd.xlane.f32.xlu0 %v5580
        %v5827 = vpop.xlane.xlu0 %5826
        %5828 = vadd.xlane.f32.xlu0 %v5581
        %v5829 = vpop.xlane.xlu0 %5828
        %5830 = vadd.xlane.f32.xlu0 %v5582
        %v5831 = vpop.xlane.xlu0 %5830
        %5832 = vadd.xlane.f32.xlu0 %v5583
        %v5833 = vpop.xlane.xlu0 %5832
        %5834 = vadd.xlane.f32.xlu0 %v5584
        %v5835 = vpop.xlane.xlu0 %5834
        %5836 = vadd.xlane.f32.xlu0 %v5585
        %v5837 = vpop.xlane.xlu0 %5836
        %5838 = vadd.xlane.f32.xlu0 %v5586
        %v5839 = vpop.xlane.xlu0 %5838
        %5840 = vadd.xlane.f32.xlu0 %v5587
        %v5841 = vpop.xlane.xlu0 %5840
        %5842 = vadd.xlane.f32.xlu0 %v5588
        %v5843 = vpop.xlane.xlu0 %5842
        %5844 = vadd.xlane.f32.xlu0 %v5589
        %v5845 = vpop.xlane.xlu0 %5844
        %v5846 = vmul.f32 %v5591, %v765
        %v5847 = vmul.f32 %v5593, %v765
        %v5848 = vmul.f32 %v5595, %v765
        %v5849 = vmul.f32 %v5597, %v765
        %v5850 = vmul.f32 %v5599, %v765
        %v5851 = vmul.f32 %v5601, %v765
        %v5852 = vmul.f32 %v5603, %v765
        %v5853 = vmul.f32 %v5605, %v765
        %v5854 = vmul.f32 %v5607, %v765
        %v5855 = vmul.f32 %v5609, %v765
        %v5856 = vmul.f32 %v5611, %v765
        %v5857 = vmul.f32 %v5613, %v765
        %v5858 = vmul.f32 %v5615, %v765
        %v5859 = vmul.f32 %v5617, %v765
        %v5860 = vmul.f32 %v5619, %v765
        %v5861 = vmul.f32 %v5621, %v765
        %v5862 = vmul.f32 %v5623, %v765
        %v5863 = vmul.f32 %v5625, %v765
        %v5864 = vmul.f32 %v5627, %v765
        %v5865 = vmul.f32 %v5629, %v765
        %v5866 = vmul.f32 %v5631, %v765
        %v5867 = vmul.f32 %v5633, %v765
        %v5868 = vmul.f32 %v5635, %v765
        %v5869 = vmul.f32 %v5637, %v765
        %v5870 = vmul.f32 %v5639, %v765
        %v5871 = vmul.f32 %v5641, %v765
        %v5872 = vmul.f32 %v5643, %v765
        %v5873 = vmul.f32 %v5645, %v765
        %v5874 = vmul.f32 %v5647, %v765
        %v5875 = vmul.f32 %v5649, %v765
        %v5876 = vmul.f32 %v5651, %v765
        %v5877 = vmul.f32 %v5653, %v765
        %v5878 = vmul.f32 %v5655, %v765
        %v5879 = vmul.f32 %v5657, %v765
        %v5880 = vmul.f32 %v5659, %v765
        %v5881 = vmul.f32 %v5661, %v765
        %v5882 = vmul.f32 %v5663, %v765
        %v5883 = vmul.f32 %v5665, %v765
        %v5884 = vmul.f32 %v5667, %v765
        %v5885 = vmul.f32 %v5669, %v765
        %v5886 = vmul.f32 %v5671, %v765
        %v5887 = vmul.f32 %v5673, %v765
        %v5888 = vmul.f32 %v5675, %v765
        %v5889 = vmul.f32 %v5677, %v765
        %v5890 = vmul.f32 %v5679, %v765
        %v5891 = vmul.f32 %v5681, %v765
        %v5892 = vmul.f32 %v5683, %v765
        %v5893 = vmul.f32 %v5685, %v765
        %v5894 = vmul.f32 %v5687, %v765
        %v5895 = vmul.f32 %v5689, %v765
        %v5896 = vmul.f32 %v5691, %v765
        %v5897 = vmul.f32 %v5693, %v765
        %v5898 = vmul.f32 %v5695, %v765
        %v5899 = vmul.f32 %v5697, %v765
        %v5900 = vmul.f32 %v5699, %v765
        %v5901 = vmul.f32 %v5701, %v765
        %v5902 = vmul.f32 %v5703, %v765
        %v5903 = vmul.f32 %v5705, %v765
        %v5904 = vmul.f32 %v5707, %v765
        %v5905 = vmul.f32 %v5709, %v765
        %v5906 = vmul.f32 %v5711, %v765
        %v5907 = vmul.f32 %v5713, %v765
        %v5908 = vmul.f32 %v5715, %v765
        %v5909 = vmul.f32 %v5717, %v765
        %v5910 = vmul.f32 %v5719, %v765
        %v5911 = vmul.f32 %v5721, %v765
        %v5912 = vmul.f32 %v5723, %v765
        %v5913 = vmul.f32 %v5725, %v765
        %v5914 = vmul.f32 %v5727, %v765
        %v5915 = vmul.f32 %v5729, %v765
        %v5916 = vmul.f32 %v5731, %v765
        %v5917 = vmul.f32 %v5733, %v765
        %v5918 = vmul.f32 %v5735, %v765
        %v5919 = vmul.f32 %v5737, %v765
        %v5920 = vmul.f32 %v5739, %v765
        %v5921 = vmul.f32 %v5741, %v765
        %v5922 = vmul.f32 %v5743, %v765
        %v5923 = vmul.f32 %v5745, %v765
        %v5924 = vmul.f32 %v5747, %v765
        %v5925 = vmul.f32 %v5749, %v765
        %v5926 = vmul.f32 %v5751, %v765
        %v5927 = vmul.f32 %v5753, %v765
        %v5928 = vmul.f32 %v5755, %v765
        %v5929 = vmul.f32 %v5757, %v765
        %v5930 = vmul.f32 %v5759, %v765
        %v5931 = vmul.f32 %v5761, %v765
        %v5932 = vmul.f32 %v5763, %v765
        %v5933 = vmul.f32 %v5765, %v765
        %v5934 = vmul.f32 %v5767, %v765
        %v5935 = vmul.f32 %v5769, %v765
        %v5936 = vmul.f32 %v5771, %v765
        %v5937 = vmul.f32 %v5773, %v765
        %v5938 = vmul.f32 %v5775, %v765
        %v5939 = vmul.f32 %v5777, %v765
        %v5940 = vmul.f32 %v5779, %v765
        %v5941 = vmul.f32 %v5781, %v765
        %v5942 = vmul.f32 %v5783, %v765
        %v5943 = vmul.f32 %v5785, %v765
        %v5944 = vmul.f32 %v5787, %v765
        %v5945 = vmul.f32 %v5789, %v765
        %v5946 = vmul.f32 %v5791, %v765
        %v5947 = vmul.f32 %v5793, %v765
        %v5948 = vmul.f32 %v5795, %v765
        %v5949 = vmul.f32 %v5797, %v765
        %v5950 = vmul.f32 %v5799, %v765
        %v5951 = vmul.f32 %v5801, %v765
        %v5952 = vmul.f32 %v5803, %v765
        %v5953 = vmul.f32 %v5805, %v765
        %v5954 = vmul.f32 %v5807, %v765
        %v5955 = vmul.f32 %v5809, %v765
        %v5956 = vmul.f32 %v5811, %v765
        %v5957 = vmul.f32 %v5813, %v765
        %v5958 = vmul.f32 %v5815, %v765
        %v5959 = vmul.f32 %v5817, %v765
        %v5960 = vmul.f32 %v5819, %v765
        %v5961 = vmul.f32 %v5821, %v765
        %v5962 = vmul.f32 %v5823, %v765
        %v5963 = vmul.f32 %v5825, %v765
        %v5964 = vmul.f32 %v5827, %v765
        %v5965 = vmul.f32 %v5829, %v765
        %v5966 = vmul.f32 %v5831, %v765
        %v5967 = vmul.f32 %v5833, %v765
        %v5968 = vmul.f32 %v5835, %v765
        %v5969 = vmul.f32 %v5837, %v765
        %v5970 = vmul.f32 %v5839, %v765
        %v5971 = vmul.f32 %v5841, %v765
        %v5972 = vmul.f32 %v5843, %v765
        %v5973 = vmul.f32 %v5845, %v765
        %v5974 = vmul.f32 %v5334, %v5334
        %v5975 = vmul.f32 %v5335, %v5335
        %v5976 = vmul.f32 %v5336, %v5336
        %v5977 = vmul.f32 %v5337, %v5337
        %v5978 = vmul.f32 %v5338, %v5338
        %v5979 = vmul.f32 %v5339, %v5339
        %v5980 = vmul.f32 %v5340, %v5340
        %v5981 = vmul.f32 %v5341, %v5341
        %v5982 = vmul.f32 %v5342, %v5342
        %v5983 = vmul.f32 %v5343, %v5343
        %v5984 = vmul.f32 %v5344, %v5344
        %v5985 = vmul.f32 %v5345, %v5345
        %v5986 = vmul.f32 %v5346, %v5346
        %v5987 = vmul.f32 %v5347, %v5347
        %v5988 = vmul.f32 %v5348, %v5348
        %v5989 = vmul.f32 %v5349, %v5349
        %v5990 = vmul.f32 %v5350, %v5350
        %v5991 = vmul.f32 %v5351, %v5351
        %v5992 = vmul.f32 %v5352, %v5352
        %v5993 = vmul.f32 %v5353, %v5353
        %v5994 = vmul.f32 %v5354, %v5354
        %v5995 = vmul.f32 %v5355, %v5355
        %v5996 = vmul.f32 %v5356, %v5356
        %v5997 = vmul.f32 %v5357, %v5357
        %v5998 = vmul.f32 %v5358, %v5358
        %v5999 = vmul.f32 %v5359, %v5359
        %v6000 = vmul.f32 %v5360, %v5360
        %v6001 = vmul.f32 %v5361, %v5361
        %v6002 = vmul.f32 %v5362, %v5362
        %v6003 = vmul.f32 %v5363, %v5363
        %v6004 = vmul.f32 %v5364, %v5364
        %v6005 = vmul.f32 %v5365, %v5365
        %v6006 = vmul.f32 %v5366, %v5366
        %v6007 = vmul.f32 %v5367, %v5367
        %v6008 = vmul.f32 %v5368, %v5368
        %v6009 = vmul.f32 %v5369, %v5369
        %v6010 = vmul.f32 %v5370, %v5370
        %v6011 = vmul.f32 %v5371, %v5371
        %v6012 = vmul.f32 %v5372, %v5372
        %v6013 = vmul.f32 %v5373, %v5373
        %v6014 = vmul.f32 %v5374, %v5374
        %v6015 = vmul.f32 %v5375, %v5375
        %v6016 = vmul.f32 %v5376, %v5376
        %v6017 = vmul.f32 %v5377, %v5377
        %v6018 = vmul.f32 %v5378, %v5378
        %v6019 = vmul.f32 %v5379, %v5379
        %v6020 = vmul.f32 %v5380, %v5380
        %v6021 = vmul.f32 %v5381, %v5381
        %v6022 = vmul.f32 %v5382, %v5382
        %v6023 = vmul.f32 %v5383, %v5383
        %v6024 = vmul.f32 %v5384, %v5384
        %v6025 = vmul.f32 %v5385, %v5385
        %v6026 = vmul.f32 %v5386, %v5386
        %v6027 = vmul.f32 %v5387, %v5387
        %v6028 = vmul.f32 %v5388, %v5388
        %v6029 = vmul.f32 %v5389, %v5389
        %v6030 = vmul.f32 %v5390, %v5390
        %v6031 = vmul.f32 %v5391, %v5391
        %v6032 = vmul.f32 %v5392, %v5392
        %v6033 = vmul.f32 %v5393, %v5393
        %v6034 = vmul.f32 %v5394, %v5394
        %v6035 = vmul.f32 %v5395, %v5395
        %v6036 = vmul.f32 %v5396, %v5396
        %v6037 = vmul.f32 %v5397, %v5397
        %v6038 = vmul.f32 %v5398, %v5398
        %v6039 = vmul.f32 %v5399, %v5399
        %v6040 = vmul.f32 %v5400, %v5400
        %v6041 = vmul.f32 %v5401, %v5401
        %v6042 = vmul.f32 %v5402, %v5402
        %v6043 = vmul.f32 %v5403, %v5403
        %v6044 = vmul.f32 %v5404, %v5404
        %v6045 = vmul.f32 %v5405, %v5405
        %v6046 = vmul.f32 %v5406, %v5406
        %v6047 = vmul.f32 %v5407, %v5407
        %v6048 = vmul.f32 %v5408, %v5408
        %v6049 = vmul.f32 %v5409, %v5409
        %v6050 = vmul.f32 %v5410, %v5410
        %v6051 = vmul.f32 %v5411, %v5411
        %v6052 = vmul.f32 %v5412, %v5412
        %v6053 = vmul.f32 %v5413, %v5413
        %v6054 = vmul.f32 %v5414, %v5414
        %v6055 = vmul.f32 %v5415, %v5415
        %v6056 = vmul.f32 %v5416, %v5416
        %v6057 = vmul.f32 %v5417, %v5417
        %v6058 = vmul.f32 %v5418, %v5418
        %v6059 = vmul.f32 %v5419, %v5419
        %v6060 = vmul.f32 %v5420, %v5420
        %v6061 = vmul.f32 %v5421, %v5421
        %v6062 = vmul.f32 %v5422, %v5422
        %v6063 = vmul.f32 %v5423, %v5423
        %v6064 = vmul.f32 %v5424, %v5424
        %v6065 = vmul.f32 %v5425, %v5425
        %v6066 = vmul.f32 %v5426, %v5426
        %v6067 = vmul.f32 %v5427, %v5427
        %v6068 = vmul.f32 %v5428, %v5428
        %v6069 = vmul.f32 %v5429, %v5429
        %v6070 = vmul.f32 %v5430, %v5430
        %v6071 = vmul.f32 %v5431, %v5431
        %v6072 = vmul.f32 %v5432, %v5432
        %v6073 = vmul.f32 %v5433, %v5433
        %v6074 = vmul.f32 %v5434, %v5434
        %v6075 = vmul.f32 %v5435, %v5435
        %v6076 = vmul.f32 %v5436, %v5436
        %v6077 = vmul.f32 %v5437, %v5437
        %v6078 = vmul.f32 %v5438, %v5438
        %v6079 = vmul.f32 %v5439, %v5439
        %v6080 = vmul.f32 %v5440, %v5440
        %v6081 = vmul.f32 %v5441, %v5441
        %v6082 = vmul.f32 %v5442, %v5442
        %v6083 = vmul.f32 %v5443, %v5443
        %v6084 = vmul.f32 %v5444, %v5444
        %v6085 = vmul.f32 %v5445, %v5445
        %v6086 = vmul.f32 %v5446, %v5446
        %v6087 = vmul.f32 %v5447, %v5447
        %v6088 = vmul.f32 %v5448, %v5448
        %v6089 = vmul.f32 %v5449, %v5449
        %v6090 = vmul.f32 %v5450, %v5450
        %v6091 = vmul.f32 %v5451, %v5451
        %v6092 = vmul.f32 %v5452, %v5452
        %v6093 = vmul.f32 %v5453, %v5453
        %v6094 = vmul.f32 %v5454, %v5454
        %v6095 = vmul.f32 %v5455, %v5455
        %v6096 = vmul.f32 %v5456, %v5456
        %v6097 = vmul.f32 %v5457, %v5457
        %v6098 = vmul.f32 %v5458, %v5458
        %v6099 = vmul.f32 %v5459, %v5459
        %v6100 = vmul.f32 %v5460, %v5460
        %v6101 = vmul.f32 %v5461, %v5461
        %v6102 = vsub.f32 %v5846, %v5974
        %v6103 = vsub.f32 %v5847, %v5975
        %v6104 = vsub.f32 %v5848, %v5976
        %v6105 = vsub.f32 %v5849, %v5977
        %v6106 = vsub.f32 %v5850, %v5978
        %v6107 = vsub.f32 %v5851, %v5979
        %v6108 = vsub.f32 %v5852, %v5980
        %v6109 = vsub.f32 %v5853, %v5981
        %v6110 = vsub.f32 %v5854, %v5982
        %v6111 = vsub.f32 %v5855, %v5983
        %v6112 = vsub.f32 %v5856, %v5984
        %v6113 = vsub.f32 %v5857, %v5985
        %v6114 = vsub.f32 %v5858, %v5986
        %v6115 = vsub.f32 %v5859, %v5987
        %v6116 = vsub.f32 %v5860, %v5988
        %v6117 = vsub.f32 %v5861, %v5989
        %v6118 = vsub.f32 %v5862, %v5990
        %v6119 = vsub.f32 %v5863, %v5991
        %v6120 = vsub.f32 %v5864, %v5992
        %v6121 = vsub.f32 %v5865, %v5993
        %v6122 = vsub.f32 %v5866, %v5994
        %v6123 = vsub.f32 %v5867, %v5995
        %v6124 = vsub.f32 %v5868, %v5996
        %v6125 = vsub.f32 %v5869, %v5997
        %v6126 = vsub.f32 %v5870, %v5998
        %v6127 = vsub.f32 %v5871, %v5999
        %v6128 = vsub.f32 %v5872, %v6000
        %v6129 = vsub.f32 %v5873, %v6001
        %v6130 = vsub.f32 %v5874, %v6002
        %v6131 = vsub.f32 %v5875, %v6003
        %v6132 = vsub.f32 %v5876, %v6004
        %v6133 = vsub.f32 %v5877, %v6005
        %v6134 = vsub.f32 %v5878, %v6006
        %v6135 = vsub.f32 %v5879, %v6007
        %v6136 = vsub.f32 %v5880, %v6008
        %v6137 = vsub.f32 %v5881, %v6009
        %v6138 = vsub.f32 %v5882, %v6010
        %v6139 = vsub.f32 %v5883, %v6011
        %v6140 = vsub.f32 %v5884, %v6012
        %v6141 = vsub.f32 %v5885, %v6013
        %v6142 = vsub.f32 %v5886, %v6014
        %v6143 = vsub.f32 %v5887, %v6015
        %v6144 = vsub.f32 %v5888, %v6016
        %v6145 = vsub.f32 %v5889, %v6017
        %v6146 = vsub.f32 %v5890, %v6018
        %v6147 = vsub.f32 %v5891, %v6019
        %v6148 = vsub.f32 %v5892, %v6020
        %v6149 = vsub.f32 %v5893, %v6021
        %v6150 = vsub.f32 %v5894, %v6022
        %v6151 = vsub.f32 %v5895, %v6023
        %v6152 = vsub.f32 %v5896, %v6024
        %v6153 = vsub.f32 %v5897, %v6025
        %v6154 = vsub.f32 %v5898, %v6026
        %v6155 = vsub.f32 %v5899, %v6027
        %v6156 = vsub.f32 %v5900, %v6028
        %v6157 = vsub.f32 %v5901, %v6029
        %v6158 = vsub.f32 %v5902, %v6030
        %v6159 = vsub.f32 %v5903, %v6031
        %v6160 = vsub.f32 %v5904, %v6032
        %v6161 = vsub.f32 %v5905, %v6033
        %v6162 = vsub.f32 %v5906, %v6034
        %v6163 = vsub.f32 %v5907, %v6035
        %v6164 = vsub.f32 %v5908, %v6036
        %v6165 = vsub.f32 %v5909, %v6037
        %v6166 = vsub.f32 %v5910, %v6038
        %v6167 = vsub.f32 %v5911, %v6039
        %v6168 = vsub.f32 %v5912, %v6040
        %v6169 = vsub.f32 %v5913, %v6041
        %v6170 = vsub.f32 %v5914, %v6042
        %v6171 = vsub.f32 %v5915, %v6043
        %v6172 = vsub.f32 %v5916, %v6044
        %v6173 = vsub.f32 %v5917, %v6045
        %v6174 = vsub.f32 %v5918, %v6046
        %v6175 = vsub.f32 %v5919, %v6047
        %v6176 = vsub.f32 %v5920, %v6048
        %v6177 = vsub.f32 %v5921, %v6049
        %v6178 = vsub.f32 %v5922, %v6050
        %v6179 = vsub.f32 %v5923, %v6051
        %v6180 = vsub.f32 %v5924, %v6052
        %v6181 = vsub.f32 %v5925, %v6053
        %v6182 = vsub.f32 %v5926, %v6054
        %v6183 = vsub.f32 %v5927, %v6055
        %v6184 = vsub.f32 %v5928, %v6056
        %v6185 = vsub.f32 %v5929, %v6057
        %v6186 = vsub.f32 %v5930, %v6058
        %v6187 = vsub.f32 %v5931, %v6059
        %v6188 = vsub.f32 %v5932, %v6060
        %v6189 = vsub.f32 %v5933, %v6061
        %v6190 = vsub.f32 %v5934, %v6062
        %v6191 = vsub.f32 %v5935, %v6063
        %v6192 = vsub.f32 %v5936, %v6064
        %v6193 = vsub.f32 %v5937, %v6065
        %v6194 = vsub.f32 %v5938, %v6066
        %v6195 = vsub.f32 %v5939, %v6067
        %v6196 = vsub.f32 %v5940, %v6068
        %v6197 = vsub.f32 %v5941, %v6069
        %v6198 = vsub.f32 %v5942, %v6070
        %v6199 = vsub.f32 %v5943, %v6071
        %v6200 = vsub.f32 %v5944, %v6072
        %v6201 = vsub.f32 %v5945, %v6073
        %v6202 = vsub.f32 %v5946, %v6074
        %v6203 = vsub.f32 %v5947, %v6075
        %v6204 = vsub.f32 %v5948, %v6076
        %v6205 = vsub.f32 %v5949, %v6077
        %v6206 = vsub.f32 %v5950, %v6078
        %v6207 = vsub.f32 %v5951, %v6079
        %v6208 = vsub.f32 %v5952, %v6080
        %v6209 = vsub.f32 %v5953, %v6081
        %v6210 = vsub.f32 %v5954, %v6082
        %v6211 = vsub.f32 %v5955, %v6083
        %v6212 = vsub.f32 %v5956, %v6084
        %v6213 = vsub.f32 %v5957, %v6085
        %v6214 = vsub.f32 %v5958, %v6086
        %v6215 = vsub.f32 %v5959, %v6087
        %v6216 = vsub.f32 %v5960, %v6088
        %v6217 = vsub.f32 %v5961, %v6089
        %v6218 = vsub.f32 %v5962, %v6090
        %v6219 = vsub.f32 %v5963, %v6091
        %v6220 = vsub.f32 %v5964, %v6092
        %v6221 = vsub.f32 %v5965, %v6093
        %v6222 = vsub.f32 %v5966, %v6094
        %v6223 = vsub.f32 %v5967, %v6095
        %v6224 = vsub.f32 %v5968, %v6096
        %v6225 = vsub.f32 %v5969, %v6097
        %v6226 = vsub.f32 %v5970, %v6098
        %v6227 = vsub.f32 %v5971, %v6099
        %v6228 = vsub.f32 %v5972, %v6100
        %v6229 = vsub.f32 %v5973, %v6101
        %v6230 = vmax.f32 %v6102, 0.0
        %v6231 = vmax.f32 %v6103, 0.0
        %v6232 = vmax.f32 %v6104, 0.0
        %v6233 = vmax.f32 %v6105, 0.0
        %v6234 = vmax.f32 %v6106, 0.0
        %v6235 = vmax.f32 %v6107, 0.0
        %v6236 = vmax.f32 %v6108, 0.0
        %v6237 = vmax.f32 %v6109, 0.0
        %v6238 = vmax.f32 %v6110, 0.0
        %v6239 = vmax.f32 %v6111, 0.0
        %v6240 = vmax.f32 %v6112, 0.0
        %v6241 = vmax.f32 %v6113, 0.0
        %v6242 = vmax.f32 %v6114, 0.0
        %v6243 = vmax.f32 %v6115, 0.0
        %v6244 = vmax.f32 %v6116, 0.0
        %v6245 = vmax.f32 %v6117, 0.0
        %v6246 = vmax.f32 %v6118, 0.0
        %v6247 = vmax.f32 %v6119, 0.0
        %v6248 = vmax.f32 %v6120, 0.0
        %v6249 = vmax.f32 %v6121, 0.0
        %v6250 = vmax.f32 %v6122, 0.0
        %v6251 = vmax.f32 %v6123, 0.0
        %v6252 = vmax.f32 %v6124, 0.0
        %v6253 = vmax.f32 %v6125, 0.0
        %v6254 = vmax.f32 %v6126, 0.0
        %v6255 = vmax.f32 %v6127, 0.0
        %v6256 = vmax.f32 %v6128, 0.0
        %v6257 = vmax.f32 %v6129, 0.0
        %v6258 = vmax.f32 %v6130, 0.0
        %v6259 = vmax.f32 %v6131, 0.0
        %v6260 = vmax.f32 %v6132, 0.0
        %v6261 = vmax.f32 %v6133, 0.0
        %v6262 = vmax.f32 %v6134, 0.0
        %v6263 = vmax.f32 %v6135, 0.0
        %v6264 = vmax.f32 %v6136, 0.0
        %v6265 = vmax.f32 %v6137, 0.0
        %v6266 = vmax.f32 %v6138, 0.0
        %v6267 = vmax.f32 %v6139, 0.0
        %v6268 = vmax.f32 %v6140, 0.0
        %v6269 = vmax.f32 %v6141, 0.0
        %v6270 = vmax.f32 %v6142, 0.0
        %v6271 = vmax.f32 %v6143, 0.0
        %v6272 = vmax.f32 %v6144, 0.0
        %v6273 = vmax.f32 %v6145, 0.0
        %v6274 = vmax.f32 %v6146, 0.0
        %v6275 = vmax.f32 %v6147, 0.0
        %v6276 = vmax.f32 %v6148, 0.0
        %v6277 = vmax.f32 %v6149, 0.0
        %v6278 = vmax.f32 %v6150, 0.0
        %v6279 = vmax.f32 %v6151, 0.0
        %v6280 = vmax.f32 %v6152, 0.0
        %v6281 = vmax.f32 %v6153, 0.0
        %v6282 = vmax.f32 %v6154, 0.0
        %v6283 = vmax.f32 %v6155, 0.0
        %v6284 = vmax.f32 %v6156, 0.0
        %v6285 = vmax.f32 %v6157, 0.0
        %v6286 = vmax.f32 %v6158, 0.0
        %v6287 = vmax.f32 %v6159, 0.0
        %v6288 = vmax.f32 %v6160, 0.0
        %v6289 = vmax.f32 %v6161, 0.0
        %v6290 = vmax.f32 %v6162, 0.0
        %v6291 = vmax.f32 %v6163, 0.0
        %v6292 = vmax.f32 %v6164, 0.0
        %v6293 = vmax.f32 %v6165, 0.0
        %v6294 = vmax.f32 %v6166, 0.0
        %v6295 = vmax.f32 %v6167, 0.0
        %v6296 = vmax.f32 %v6168, 0.0
        %v6297 = vmax.f32 %v6169, 0.0
        %v6298 = vmax.f32 %v6170, 0.0
        %v6299 = vmax.f32 %v6171, 0.0
        %v6300 = vmax.f32 %v6172, 0.0
        %v6301 = vmax.f32 %v6173, 0.0
        %v6302 = vmax.f32 %v6174, 0.0
        %v6303 = vmax.f32 %v6175, 0.0
        %v6304 = vmax.f32 %v6176, 0.0
        %v6305 = vmax.f32 %v6177, 0.0
        %v6306 = vmax.f32 %v6178, 0.0
        %v6307 = vmax.f32 %v6179, 0.0
        %v6308 = vmax.f32 %v6180, 0.0
        %v6309 = vmax.f32 %v6181, 0.0
        %v6310 = vmax.f32 %v6182, 0.0
        %v6311 = vmax.f32 %v6183, 0.0
        %v6312 = vmax.f32 %v6184, 0.0
        %v6313 = vmax.f32 %v6185, 0.0
        %v6314 = vmax.f32 %v6186, 0.0
        %v6315 = vmax.f32 %v6187, 0.0
        %v6316 = vmax.f32 %v6188, 0.0
        %v6317 = vmax.f32 %v6189, 0.0
        %v6318 = vmax.f32 %v6190, 0.0
        %v6319 = vmax.f32 %v6191, 0.0
        %v6320 = vmax.f32 %v6192, 0.0
        %v6321 = vmax.f32 %v6193, 0.0
        %v6322 = vmax.f32 %v6194, 0.0
        %v6323 = vmax.f32 %v6195, 0.0
        %v6324 = vmax.f32 %v6196, 0.0
        %v6325 = vmax.f32 %v6197, 0.0
        %v6326 = vmax.f32 %v6198, 0.0
        %v6327 = vmax.f32 %v6199, 0.0
        %v6328 = vmax.f32 %v6200, 0.0
        %v6329 = vmax.f32 %v6201, 0.0
        %v6330 = vmax.f32 %v6202, 0.0
        %v6331 = vmax.f32 %v6203, 0.0
        %v6332 = vmax.f32 %v6204, 0.0
        %v6333 = vmax.f32 %v6205, 0.0
        %v6334 = vmax.f32 %v6206, 0.0
        %v6335 = vmax.f32 %v6207, 0.0
        %v6336 = vmax.f32 %v6208, 0.0
        %v6337 = vmax.f32 %v6209, 0.0
        %v6338 = vmax.f32 %v6210, 0.0
        %v6339 = vmax.f32 %v6211, 0.0
        %v6340 = vmax.f32 %v6212, 0.0
        %v6341 = vmax.f32 %v6213, 0.0
        %v6342 = vmax.f32 %v6214, 0.0
        %v6343 = vmax.f32 %v6215, 0.0
        %v6344 = vmax.f32 %v6216, 0.0
        %v6345 = vmax.f32 %v6217, 0.0
        %v6346 = vmax.f32 %v6218, 0.0
        %v6347 = vmax.f32 %v6219, 0.0
        %v6348 = vmax.f32 %v6220, 0.0
        %v6349 = vmax.f32 %v6221, 0.0
        %v6350 = vmax.f32 %v6222, 0.0
        %v6351 = vmax.f32 %v6223, 0.0
        %v6352 = vmax.f32 %v6224, 0.0
        %v6353 = vmax.f32 %v6225, 0.0
        %v6354 = vmax.f32 %v6226, 0.0
        %v6355 = vmax.f32 %v6227, 0.0
        %v6356 = vmax.f32 %v6228, 0.0
        %v6357 = vmax.f32 %v6229, 0.0
        %v6358 = vsub.f32 %v4948, %v5334
        %v6359 = vsub.f32 %v4949, %v5335
        %v6360 = vsub.f32 %v4950, %v5336
        %v6361 = vsub.f32 %v4951, %v5337
        %v6362 = vsub.f32 %v4952, %v5338
        %v6363 = vsub.f32 %v4953, %v5339
        %v6364 = vsub.f32 %v4954, %v5340
        %v6365 = vsub.f32 %v4955, %v5341
        %v6366 = vsub.f32 %v4956, %v5342
        %v6367 = vsub.f32 %v4957, %v5343
        %v6368 = vsub.f32 %v4958, %v5344
        %v6369 = vsub.f32 %v4959, %v5345
        %v6370 = vsub.f32 %v4960, %v5346
        %v6371 = vsub.f32 %v4961, %v5347
        %v6372 = vsub.f32 %v4962, %v5348
        %v6373 = vsub.f32 %v4963, %v5349
        %v6374 = vsub.f32 %v4964, %v5350
        %v6375 = vsub.f32 %v4965, %v5351
        %v6376 = vsub.f32 %v4966, %v5352
        %v6377 = vsub.f32 %v4967, %v5353
        %v6378 = vsub.f32 %v4968, %v5354
        %v6379 = vsub.f32 %v4969, %v5355
        %v6380 = vsub.f32 %v4970, %v5356
        %v6381 = vsub.f32 %v4971, %v5357
        %v6382 = vsub.f32 %v4972, %v5358
        %v6383 = vsub.f32 %v4973, %v5359
        %v6384 = vsub.f32 %v4974, %v5360
        %v6385 = vsub.f32 %v4975, %v5361
        %v6386 = vsub.f32 %v4976, %v5362
        %v6387 = vsub.f32 %v4977, %v5363
        %v6388 = vsub.f32 %v4978, %v5364
        %v6389 = vsub.f32 %v4979, %v5365
        %v6390 = vsub.f32 %v4980, %v5366
        %v6391 = vsub.f32 %v4981, %v5367
        %v6392 = vsub.f32 %v4982, %v5368
        %v6393 = vsub.f32 %v4983, %v5369
        %v6394 = vsub.f32 %v4984, %v5370
        %v6395 = vsub.f32 %v4985, %v5371
        %v6396 = vsub.f32 %v4986, %v5372
        %v6397 = vsub.f32 %v4987, %v5373
        %v6398 = vsub.f32 %v4988, %v5374
        %v6399 = vsub.f32 %v4989, %v5375
        %v6400 = vsub.f32 %v4990, %v5376
        %v6401 = vsub.f32 %v4991, %v5377
        %v6402 = vsub.f32 %v4992, %v5378
        %v6403 = vsub.f32 %v4993, %v5379
        %v6404 = vsub.f32 %v4994, %v5380
        %v6405 = vsub.f32 %v4995, %v5381
        %v6406 = vsub.f32 %v4996, %v5382
        %v6407 = vsub.f32 %v4997, %v5383
        %v6408 = vsub.f32 %v4998, %v5384
        %v6409 = vsub.f32 %v4999, %v5385
        %v6410 = vsub.f32 %v5000, %v5386
        %v6411 = vsub.f32 %v5001, %v5387
        %v6412 = vsub.f32 %v5002, %v5388
        %v6413 = vsub.f32 %v5003, %v5389
        %v6414 = vsub.f32 %v5004, %v5390
        %v6415 = vsub.f32 %v5005, %v5391
        %v6416 = vsub.f32 %v5006, %v5392
        %v6417 = vsub.f32 %v5007, %v5393
        %v6418 = vsub.f32 %v5008, %v5394
        %v6419 = vsub.f32 %v5009, %v5395
        %v6420 = vsub.f32 %v5010, %v5396
        %v6421 = vsub.f32 %v5011, %v5397
        %v6422 = vsub.f32 %v5012, %v5398
        %v6423 = vsub.f32 %v5013, %v5399
        %v6424 = vsub.f32 %v5014, %v5400
        %v6425 = vsub.f32 %v5015, %v5401
        %v6426 = vsub.f32 %v5016, %v5402
        %v6427 = vsub.f32 %v5017, %v5403
        %v6428 = vsub.f32 %v5018, %v5404
        %v6429 = vsub.f32 %v5019, %v5405
        %v6430 = vsub.f32 %v5020, %v5406
        %v6431 = vsub.f32 %v5021, %v5407
        %v6432 = vsub.f32 %v5022, %v5408
        %v6433 = vsub.f32 %v5023, %v5409
        %v6434 = vsub.f32 %v5024, %v5410
        %v6435 = vsub.f32 %v5025, %v5411
        %v6436 = vsub.f32 %v5026, %v5412
        %v6437 = vsub.f32 %v5027, %v5413
        %v6438 = vsub.f32 %v5028, %v5414
        %v6439 = vsub.f32 %v5029, %v5415
        %v6440 = vsub.f32 %v5030, %v5416
        %v6441 = vsub.f32 %v5031, %v5417
        %v6442 = vsub.f32 %v5032, %v5418
        %v6443 = vsub.f32 %v5033, %v5419
        %v6444 = vsub.f32 %v5034, %v5420
        %v6445 = vsub.f32 %v5035, %v5421
        %v6446 = vsub.f32 %v5036, %v5422
        %v6447 = vsub.f32 %v5037, %v5423
        %v6448 = vsub.f32 %v5038, %v5424
        %v6449 = vsub.f32 %v5039, %v5425
        %v6450 = vsub.f32 %v5040, %v5426
        %v6451 = vsub.f32 %v5041, %v5427
        %v6452 = vsub.f32 %v5042, %v5428
        %v6453 = vsub.f32 %v5043, %v5429
        %v6454 = vsub.f32 %v5044, %v5430
        %v6455 = vsub.f32 %v5045, %v5431
        %v6456 = vsub.f32 %v5046, %v5432
        %v6457 = vsub.f32 %v5047, %v5433
        %v6458 = vsub.f32 %v5048, %v5434
        %v6459 = vsub.f32 %v5049, %v5435
        %v6460 = vsub.f32 %v5050, %v5436
        %v6461 = vsub.f32 %v5051, %v5437
        %v6462 = vsub.f32 %v5052, %v5438
        %v6463 = vsub.f32 %v5053, %v5439
        %v6464 = vsub.f32 %v5054, %v5440
        %v6465 = vsub.f32 %v5055, %v5441
        %v6466 = vsub.f32 %v5056, %v5442
        %v6467 = vsub.f32 %v5057, %v5443
        %v6468 = vsub.f32 %v5058, %v5444
        %v6469 = vsub.f32 %v5059, %v5445
        %v6470 = vsub.f32 %v5060, %v5446
        %v6471 = vsub.f32 %v5061, %v5447
        %v6472 = vsub.f32 %v5062, %v5448
        %v6473 = vsub.f32 %v5063, %v5449
        %v6474 = vsub.f32 %v5064, %v5450
        %v6475 = vsub.f32 %v5065, %v5451
        %v6476 = vsub.f32 %v5066, %v5452
        %v6477 = vsub.f32 %v5067, %v5453
        %v6478 = vsub.f32 %v5068, %v5454
        %v6479 = vsub.f32 %v5069, %v5455
        %v6480 = vsub.f32 %v5070, %v5456
        %v6481 = vsub.f32 %v5071, %v5457
        %v6482 = vsub.f32 %v5072, %v5458
        %v6483 = vsub.f32 %v5073, %v5459
        %v6484 = vsub.f32 %v5074, %v5460
        %v6485 = vsub.f32 %v5075, %v5461
        %v6486 = vadd.f32 %v6230, 1e-05
        %v6487 = vadd.f32 %v6231, 1e-05
        %v6488 = vadd.f32 %v6232, 1e-05
        %v6489 = vadd.f32 %v6233, 1e-05
        %v6490 = vadd.f32 %v6234, 1e-05
        %v6491 = vadd.f32 %v6235, 1e-05
        %v6492 = vadd.f32 %v6236, 1e-05
        %v6493 = vadd.f32 %v6237, 1e-05
        %v6494 = vadd.f32 %v6238, 1e-05
        %v6495 = vadd.f32 %v6239, 1e-05
        %v6496 = vadd.f32 %v6240, 1e-05
        %v6497 = vadd.f32 %v6241, 1e-05
        %v6498 = vadd.f32 %v6242, 1e-05
        %v6499 = vadd.f32 %v6243, 1e-05
        %v6500 = vadd.f32 %v6244, 1e-05
        %v6501 = vadd.f32 %v6245, 1e-05
        %v6502 = vadd.f32 %v6246, 1e-05
        %v6503 = vadd.f32 %v6247, 1e-05
        %v6504 = vadd.f32 %v6248, 1e-05
        %v6505 = vadd.f32 %v6249, 1e-05
        %v6506 = vadd.f32 %v6250, 1e-05
        %v6507 = vadd.f32 %v6251, 1e-05
        %v6508 = vadd.f32 %v6252, 1e-05
        %v6509 = vadd.f32 %v6253, 1e-05
        %v6510 = vadd.f32 %v6254, 1e-05
        %v6511 = vadd.f32 %v6255, 1e-05
        %v6512 = vadd.f32 %v6256, 1e-05
        %v6513 = vadd.f32 %v6257, 1e-05
        %v6514 = vadd.f32 %v6258, 1e-05
        %v6515 = vadd.f32 %v6259, 1e-05
        %v6516 = vadd.f32 %v6260, 1e-05
        %v6517 = vadd.f32 %v6261, 1e-05
        %v6518 = vadd.f32 %v6262, 1e-05
        %v6519 = vadd.f32 %v6263, 1e-05
        %v6520 = vadd.f32 %v6264, 1e-05
        %v6521 = vadd.f32 %v6265, 1e-05
        %v6522 = vadd.f32 %v6266, 1e-05
        %v6523 = vadd.f32 %v6267, 1e-05
        %v6524 = vadd.f32 %v6268, 1e-05
        %v6525 = vadd.f32 %v6269, 1e-05
        %v6526 = vadd.f32 %v6270, 1e-05
        %v6527 = vadd.f32 %v6271, 1e-05
        %v6528 = vadd.f32 %v6272, 1e-05
        %v6529 = vadd.f32 %v6273, 1e-05
        %v6530 = vadd.f32 %v6274, 1e-05
        %v6531 = vadd.f32 %v6275, 1e-05
        %v6532 = vadd.f32 %v6276, 1e-05
        %v6533 = vadd.f32 %v6277, 1e-05
        %v6534 = vadd.f32 %v6278, 1e-05
        %v6535 = vadd.f32 %v6279, 1e-05
        %v6536 = vadd.f32 %v6280, 1e-05
        %v6537 = vadd.f32 %v6281, 1e-05
        %v6538 = vadd.f32 %v6282, 1e-05
        %v6539 = vadd.f32 %v6283, 1e-05
        %v6540 = vadd.f32 %v6284, 1e-05
        %v6541 = vadd.f32 %v6285, 1e-05
        %v6542 = vadd.f32 %v6286, 1e-05
        %v6543 = vadd.f32 %v6287, 1e-05
        %v6544 = vadd.f32 %v6288, 1e-05
        %v6545 = vadd.f32 %v6289, 1e-05
        %v6546 = vadd.f32 %v6290, 1e-05
        %v6547 = vadd.f32 %v6291, 1e-05
        %v6548 = vadd.f32 %v6292, 1e-05
        %v6549 = vadd.f32 %v6293, 1e-05
        %v6550 = vadd.f32 %v6294, 1e-05
        %v6551 = vadd.f32 %v6295, 1e-05
        %v6552 = vadd.f32 %v6296, 1e-05
        %v6553 = vadd.f32 %v6297, 1e-05
        %v6554 = vadd.f32 %v6298, 1e-05
        %v6555 = vadd.f32 %v6299, 1e-05
        %v6556 = vadd.f32 %v6300, 1e-05
        %v6557 = vadd.f32 %v6301, 1e-05
        %v6558 = vadd.f32 %v6302, 1e-05
        %v6559 = vadd.f32 %v6303, 1e-05
        %v6560 = vadd.f32 %v6304, 1e-05
        %v6561 = vadd.f32 %v6305, 1e-05
        %v6562 = vadd.f32 %v6306, 1e-05
        %v6563 = vadd.f32 %v6307, 1e-05
        %v6564 = vadd.f32 %v6308, 1e-05
        %v6565 = vadd.f32 %v6309, 1e-05
        %v6566 = vadd.f32 %v6310, 1e-05
        %v6567 = vadd.f32 %v6311, 1e-05
        %v6568 = vadd.f32 %v6312, 1e-05
        %v6569 = vadd.f32 %v6313, 1e-05
        %v6570 = vadd.f32 %v6314, 1e-05
        %v6571 = vadd.f32 %v6315, 1e-05
        %v6572 = vadd.f32 %v6316, 1e-05
        %v6573 = vadd.f32 %v6317, 1e-05
        %v6574 = vadd.f32 %v6318, 1e-05
        %v6575 = vadd.f32 %v6319, 1e-05
        %v6576 = vadd.f32 %v6320, 1e-05
        %v6577 = vadd.f32 %v6321, 1e-05
        %v6578 = vadd.f32 %v6322, 1e-05
        %v6579 = vadd.f32 %v6323, 1e-05
        %v6580 = vadd.f32 %v6324, 1e-05
        %v6581 = vadd.f32 %v6325, 1e-05
        %v6582 = vadd.f32 %v6326, 1e-05
        %v6583 = vadd.f32 %v6327, 1e-05
        %v6584 = vadd.f32 %v6328, 1e-05
        %v6585 = vadd.f32 %v6329, 1e-05
        %v6586 = vadd.f32 %v6330, 1e-05
        %v6587 = vadd.f32 %v6331, 1e-05
        %v6588 = vadd.f32 %v6332, 1e-05
        %v6589 = vadd.f32 %v6333, 1e-05
        %v6590 = vadd.f32 %v6334, 1e-05
        %v6591 = vadd.f32 %v6335, 1e-05
        %v6592 = vadd.f32 %v6336, 1e-05
        %v6593 = vadd.f32 %v6337, 1e-05
        %v6594 = vadd.f32 %v6338, 1e-05
        %v6595 = vadd.f32 %v6339, 1e-05
        %v6596 = vadd.f32 %v6340, 1e-05
        %v6597 = vadd.f32 %v6341, 1e-05
        %v6598 = vadd.f32 %v6342, 1e-05
        %v6599 = vadd.f32 %v6343, 1e-05
        %v6600 = vadd.f32 %v6344, 1e-05
        %v6601 = vadd.f32 %v6345, 1e-05
        %v6602 = vadd.f32 %v6346, 1e-05
        %v6603 = vadd.f32 %v6347, 1e-05
        %v6604 = vadd.f32 %v6348, 1e-05
        %v6605 = vadd.f32 %v6349, 1e-05
        %v6606 = vadd.f32 %v6350, 1e-05
        %v6607 = vadd.f32 %v6351, 1e-05
        %v6608 = vadd.f32 %v6352, 1e-05
        %v6609 = vadd.f32 %v6353, 1e-05
        %v6610 = vadd.f32 %v6354, 1e-05
        %v6611 = vadd.f32 %v6355, 1e-05
        %v6612 = vadd.f32 %v6356, 1e-05
        %v6613 = vadd.f32 %v6357, 1e-05
        %v6614 = vrsqrt.pop %v6486
        %v6615 = vrsqrt.pop %v6487
        %v6616 = vrsqrt.pop %v6488
        %v6617 = vrsqrt.pop %v6489
        %v6618 = vrsqrt.pop %v6490
        %v6619 = vrsqrt.pop %v6491
        %v6620 = vrsqrt.pop %v6492
        %v6621 = vrsqrt.pop %v6493
        %v6622 = vrsqrt.pop %v6494
        %v6623 = vrsqrt.pop %v6495
        %v6624 = vrsqrt.pop %v6496
        %v6625 = vrsqrt.pop %v6497
        %v6626 = vrsqrt.pop %v6498
        %v6627 = vrsqrt.pop %v6499
        %v6628 = vrsqrt.pop %v6500
        %v6629 = vrsqrt.pop %v6501
        %v6630 = vrsqrt.pop %v6502
        %v6631 = vrsqrt.pop %v6503
        %v6632 = vrsqrt.pop %v6504
        %v6633 = vrsqrt.pop %v6505
        %v6634 = vrsqrt.pop %v6506
        %v6635 = vrsqrt.pop %v6507
        %v6636 = vrsqrt.pop %v6508
        %v6637 = vrsqrt.pop %v6509
        %v6638 = vrsqrt.pop %v6510
        %v6639 = vrsqrt.pop %v6511
        %v6640 = vrsqrt.pop %v6512
        %v6641 = vrsqrt.pop %v6513
        %v6642 = vrsqrt.pop %v6514
        %v6643 = vrsqrt.pop %v6515
        %v6644 = vrsqrt.pop %v6516
        %v6645 = vrsqrt.pop %v6517
        %v6646 = vrsqrt.pop %v6518
        %v6647 = vrsqrt.pop %v6519
        %v6648 = vrsqrt.pop %v6520
        %v6649 = vrsqrt.pop %v6521
        %v6650 = vrsqrt.pop %v6522
        %v6651 = vrsqrt.pop %v6523
        %v6652 = vrsqrt.pop %v6524
        %v6653 = vrsqrt.pop %v6525
        %v6654 = vrsqrt.pop %v6526
        %v6655 = vrsqrt.pop %v6527
        %v6656 = vrsqrt.pop %v6528
        %v6657 = vrsqrt.pop %v6529
        %v6658 = vrsqrt.pop %v6530
        %v6659 = vrsqrt.pop %v6531
        %v6660 = vrsqrt.pop %v6532
        %v6661 = vrsqrt.pop %v6533
        %v6662 = vrsqrt.pop %v6534
        %v6663 = vrsqrt.pop %v6535
        %v6664 = vrsqrt.pop %v6536
        %v6665 = vrsqrt.pop %v6537
        %v6666 = vrsqrt.pop %v6538
        %v6667 = vrsqrt.pop %v6539
        %v6668 = vrsqrt.pop %v6540
        %v6669 = vrsqrt.pop %v6541
        %v6670 = vrsqrt.pop %v6542
        %v6671 = vrsqrt.pop %v6543
        %v6672 = vrsqrt.pop %v6544
        %v6673 = vrsqrt.pop %v6545
        %v6674 = vrsqrt.pop %v6546
        %v6675 = vrsqrt.pop %v6547
        %v6676 = vrsqrt.pop %v6548
        %v6677 = vrsqrt.pop %v6549
        %v6678 = vrsqrt.pop %v6550
        %v6679 = vrsqrt.pop %v6551
        %v6680 = vrsqrt.pop %v6552
        %v6681 = vrsqrt.pop %v6553
        %v6682 = vrsqrt.pop %v6554
        %v6683 = vrsqrt.pop %v6555
        %v6684 = vrsqrt.pop %v6556
        %v6685 = vrsqrt.pop %v6557
        %v6686 = vrsqrt.pop %v6558
        %v6687 = vrsqrt.pop %v6559
        %v6688 = vrsqrt.pop %v6560
        %v6689 = vrsqrt.pop %v6561
        %v6690 = vrsqrt.pop %v6562
        %v6691 = vrsqrt.pop %v6563
        %v6692 = vrsqrt.pop %v6564
        %v6693 = vrsqrt.pop %v6565
        %v6694 = vrsqrt.pop %v6566
        %v6695 = vrsqrt.pop %v6567
        %v6696 = vrsqrt.pop %v6568
        %v6697 = vrsqrt.pop %v6569
        %v6698 = vrsqrt.pop %v6570
        %v6699 = vrsqrt.pop %v6571
        %v6700 = vrsqrt.pop %v6572
        %v6701 = vrsqrt.pop %v6573
        %v6702 = vrsqrt.pop %v6574
        %v6703 = vrsqrt.pop %v6575
        %v6704 = vrsqrt.pop %v6576
        %v6705 = vrsqrt.pop %v6577
        %v6706 = vrsqrt.pop %v6578
        %v6707 = vrsqrt.pop %v6579
        %v6708 = vrsqrt.pop %v6580
        %v6709 = vrsqrt.pop %v6581
        %v6710 = vrsqrt.pop %v6582
        %v6711 = vrsqrt.pop %v6583
        %v6712 = vrsqrt.pop %v6584
        %v6713 = vrsqrt.pop %v6585
        %v6714 = vrsqrt.pop %v6586
        %v6715 = vrsqrt.pop %v6587
        %v6716 = vrsqrt.pop %v6588
        %v6717 = vrsqrt.pop %v6589
        %v6718 = vrsqrt.pop %v6590
        %v6719 = vrsqrt.pop %v6591
        %v6720 = vrsqrt.pop %v6592
        %v6721 = vrsqrt.pop %v6593
        %v6722 = vrsqrt.pop %v6594
        %v6723 = vrsqrt.pop %v6595
        %v6724 = vrsqrt.pop %v6596
        %v6725 = vrsqrt.pop %v6597
        %v6726 = vrsqrt.pop %v6598
        %v6727 = vrsqrt.pop %v6599
        %v6728 = vrsqrt.pop %v6600
        %v6729 = vrsqrt.pop %v6601
        %v6730 = vrsqrt.pop %v6602
        %v6731 = vrsqrt.pop %v6603
        %v6732 = vrsqrt.pop %v6604
        %v6733 = vrsqrt.pop %v6605
        %v6734 = vrsqrt.pop %v6606
        %v6735 = vrsqrt.pop %v6607
        %v6736 = vrsqrt.pop %v6608
        %v6737 = vrsqrt.pop %v6609
        %v6738 = vrsqrt.pop %v6610
        %v6739 = vrsqrt.pop %v6611
        %v6740 = vrsqrt.pop %v6612
        %v6741 = vrsqrt.pop %v6613
        %v6742 = vmul.f32 %v6358, %v6614
        %v6743 = vmul.f32 %v6359, %v6615
        %v6744 = vmul.f32 %v6360, %v6616
        %v6745 = vmul.f32 %v6361, %v6617
        %v6746 = vmul.f32 %v6362, %v6618
        %v6747 = vmul.f32 %v6363, %v6619
        %v6748 = vmul.f32 %v6364, %v6620
        %v6749 = vmul.f32 %v6365, %v6621
        %v6750 = vmul.f32 %v6366, %v6622
        %v6751 = vmul.f32 %v6367, %v6623
        %v6752 = vmul.f32 %v6368, %v6624
        %v6753 = vmul.f32 %v6369, %v6625
        %v6754 = vmul.f32 %v6370, %v6626
        %v6755 = vmul.f32 %v6371, %v6627
        %v6756 = vmul.f32 %v6372, %v6628
        %v6757 = vmul.f32 %v6373, %v6629
        %v6758 = vmul.f32 %v6374, %v6630
        %v6759 = vmul.f32 %v6375, %v6631
        %v6760 = vmul.f32 %v6376, %v6632
        %v6761 = vmul.f32 %v6377, %v6633
        %v6762 = vmul.f32 %v6378, %v6634
        %v6763 = vmul.f32 %v6379, %v6635
        %v6764 = vmul.f32 %v6380, %v6636
        %v6765 = vmul.f32 %v6381, %v6637
        %v6766 = vmul.f32 %v6382, %v6638
        %v6767 = vmul.f32 %v6383, %v6639
        %v6768 = vmul.f32 %v6384, %v6640
        %v6769 = vmul.f32 %v6385, %v6641
        %v6770 = vmul.f32 %v6386, %v6642
        %v6771 = vmul.f32 %v6387, %v6643
        %v6772 = vmul.f32 %v6388, %v6644
        %v6773 = vmul.f32 %v6389, %v6645
        %v6774 = vmul.f32 %v6390, %v6646
        %v6775 = vmul.f32 %v6391, %v6647
        %v6776 = vmul.f32 %v6392, %v6648
        %v6777 = vmul.f32 %v6393, %v6649
        %v6778 = vmul.f32 %v6394, %v6650
        %v6779 = vmul.f32 %v6395, %v6651
        %v6780 = vmul.f32 %v6396, %v6652
        %v6781 = vmul.f32 %v6397, %v6653
        %v6782 = vmul.f32 %v6398, %v6654
        %v6783 = vmul.f32 %v6399, %v6655
        %v6784 = vmul.f32 %v6400, %v6656
        %v6785 = vmul.f32 %v6401, %v6657
        %v6786 = vmul.f32 %v6402, %v6658
        %v6787 = vmul.f32 %v6403, %v6659
        %v6788 = vmul.f32 %v6404, %v6660
        %v6789 = vmul.f32 %v6405, %v6661
        %v6790 = vmul.f32 %v6406, %v6662
        %v6791 = vmul.f32 %v6407, %v6663
        %v6792 = vmul.f32 %v6408, %v6664
        %v6793 = vmul.f32 %v6409, %v6665
        %v6794 = vmul.f32 %v6410, %v6666
        %v6795 = vmul.f32 %v6411, %v6667
        %v6796 = vmul.f32 %v6412, %v6668
        %v6797 = vmul.f32 %v6413, %v6669
        %v6798 = vmul.f32 %v6414, %v6670
        %v6799 = vmul.f32 %v6415, %v6671
        %v6800 = vmul.f32 %v6416, %v6672
        %v6801 = vmul.f32 %v6417, %v6673
        %v6802 = vmul.f32 %v6418, %v6674
        %v6803 = vmul.f32 %v6419, %v6675
        %v6804 = vmul.f32 %v6420, %v6676
        %v6805 = vmul.f32 %v6421, %v6677
        %v6806 = vmul.f32 %v6422, %v6678
        %v6807 = vmul.f32 %v6423, %v6679
        %v6808 = vmul.f32 %v6424, %v6680
        %v6809 = vmul.f32 %v6425, %v6681
        %v6810 = vmul.f32 %v6426, %v6682
        %v6811 = vmul.f32 %v6427, %v6683
        %v6812 = vmul.f32 %v6428, %v6684
        %v6813 = vmul.f32 %v6429, %v6685
        %v6814 = vmul.f32 %v6430, %v6686
        %v6815 = vmul.f32 %v6431, %v6687
        %v6816 = vmul.f32 %v6432, %v6688
        %v6817 = vmul.f32 %v6433, %v6689
        %v6818 = vmul.f32 %v6434, %v6690
        %v6819 = vmul.f32 %v6435, %v6691
        %v6820 = vmul.f32 %v6436, %v6692
        %v6821 = vmul.f32 %v6437, %v6693
        %v6822 = vmul.f32 %v6438, %v6694
        %v6823 = vmul.f32 %v6439, %v6695
        %v6824 = vmul.f32 %v6440, %v6696
        %v6825 = vmul.f32 %v6441, %v6697
        %v6826 = vmul.f32 %v6442, %v6698
        %v6827 = vmul.f32 %v6443, %v6699
        %v6828 = vmul.f32 %v6444, %v6700
        %v6829 = vmul.f32 %v6445, %v6701
        %v6830 = vmul.f32 %v6446, %v6702
        %v6831 = vmul.f32 %v6447, %v6703
        %v6832 = vmul.f32 %v6448, %v6704
        %v6833 = vmul.f32 %v6449, %v6705
        %v6834 = vmul.f32 %v6450, %v6706
        %v6835 = vmul.f32 %v6451, %v6707
        %v6836 = vmul.f32 %v6452, %v6708
        %v6837 = vmul.f32 %v6453, %v6709
        %v6838 = vmul.f32 %v6454, %v6710
        %v6839 = vmul.f32 %v6455, %v6711
        %v6840 = vmul.f32 %v6456, %v6712
        %v6841 = vmul.f32 %v6457, %v6713
        %v6842 = vmul.f32 %v6458, %v6714
        %v6843 = vmul.f32 %v6459, %v6715
        %v6844 = vmul.f32 %v6460, %v6716
        %v6845 = vmul.f32 %v6461, %v6717
        %v6846 = vmul.f32 %v6462, %v6718
        %v6847 = vmul.f32 %v6463, %v6719
        %v6848 = vmul.f32 %v6464, %v6720
        %v6849 = vmul.f32 %v6465, %v6721
        %v6850 = vmul.f32 %v6466, %v6722
        %v6851 = vmul.f32 %v6467, %v6723
        %v6852 = vmul.f32 %v6468, %v6724
        %v6853 = vmul.f32 %v6469, %v6725
        %v6854 = vmul.f32 %v6470, %v6726
        %v6855 = vmul.f32 %v6471, %v6727
        %v6856 = vmul.f32 %v6472, %v6728
        %v6857 = vmul.f32 %v6473, %v6729
        %v6858 = vmul.f32 %v6474, %v6730
        %v6859 = vmul.f32 %v6475, %v6731
        %v6860 = vmul.f32 %v6476, %v6732
        %v6861 = vmul.f32 %v6477, %v6733
        %v6862 = vmul.f32 %v6478, %v6734
        %v6863 = vmul.f32 %v6479, %v6735
        %v6864 = vmul.f32 %v6480, %v6736
        %v6865 = vmul.f32 %v6481, %v6737
        %v6866 = vmul.f32 %v6482, %v6738
        %v6867 = vmul.f32 %v6483, %v6739
        %v6868 = vmul.f32 %v6484, %v6740
        %v6869 = vmul.f32 %v6485, %v6741
        %v6870 = vlaneseq
        %v6871 = vshrl.u32 %v6870, 7
        %v6872 = vsub.s32 0, %v6871
        %v6873 = vrot.slane %v5076, %v6872
        %v6874 = vmul.f32 %v6742, %v6873
        %v6875 = vmul.f32 %v6743, %v6873
        %v6876 = vmul.f32 %v6744, %v6873
        %v6877 = vmul.f32 %v6745, %v6873
        %v6878 = vmul.f32 %v6746, %v6873
        %v6879 = vmul.f32 %v6747, %v6873
        %v6880 = vmul.f32 %v6748, %v6873
        %v6881 = vmul.f32 %v6749, %v6873
        %v6882 = vmul.f32 %v6750, %v6873
        %v6883 = vmul.f32 %v6751, %v6873
        %v6884 = vmul.f32 %v6752, %v6873
        %v6885 = vmul.f32 %v6753, %v6873
        %v6886 = vmul.f32 %v6754, %v6873
        %v6887 = vmul.f32 %v6755, %v6873
        %v6888 = vmul.f32 %v6756, %v6873
        %v6889 = vmul.f32 %v6757, %v6873
        %v6890 = vmul.f32 %v6758, %v6873
        %v6891 = vmul.f32 %v6759, %v6873
        %v6892 = vmul.f32 %v6760, %v6873
        %v6893 = vmul.f32 %v6761, %v6873
        %v6894 = vmul.f32 %v6762, %v6873
        %v6895 = vmul.f32 %v6763, %v6873
        %v6896 = vmul.f32 %v6764, %v6873
        %v6897 = vmul.f32 %v6765, %v6873
        %v6898 = vmul.f32 %v6766, %v6873
        %v6899 = vmul.f32 %v6767, %v6873
        %v6900 = vmul.f32 %v6768, %v6873
        %v6901 = vmul.f32 %v6769, %v6873
        %v6902 = vmul.f32 %v6770, %v6873
        %v6903 = vmul.f32 %v6771, %v6873
        %v6904 = vmul.f32 %v6772, %v6873
        %v6905 = vmul.f32 %v6773, %v6873
        %v6906 = vmul.f32 %v6774, %v6873
        %v6907 = vmul.f32 %v6775, %v6873
        %v6908 = vmul.f32 %v6776, %v6873
        %v6909 = vmul.f32 %v6777, %v6873
        %v6910 = vmul.f32 %v6778, %v6873
        %v6911 = vmul.f32 %v6779, %v6873
        %v6912 = vmul.f32 %v6780, %v6873
        %v6913 = vmul.f32 %v6781, %v6873
        %v6914 = vmul.f32 %v6782, %v6873
        %v6915 = vmul.f32 %v6783, %v6873
        %v6916 = vmul.f32 %v6784, %v6873
        %v6917 = vmul.f32 %v6785, %v6873
        %v6918 = vmul.f32 %v6786, %v6873
        %v6919 = vmul.f32 %v6787, %v6873
        %v6920 = vmul.f32 %v6788, %v6873
        %v6921 = vmul.f32 %v6789, %v6873
        %v6922 = vmul.f32 %v6790, %v6873
        %v6923 = vmul.f32 %v6791, %v6873
        %v6924 = vmul.f32 %v6792, %v6873
        %v6925 = vmul.f32 %v6793, %v6873
        %v6926 = vmul.f32 %v6794, %v6873
        %v6927 = vmul.f32 %v6795, %v6873
        %v6928 = vmul.f32 %v6796, %v6873
        %v6929 = vmul.f32 %v6797, %v6873
        %v6930 = vmul.f32 %v6798, %v6873
        %v6931 = vmul.f32 %v6799, %v6873
        %v6932 = vmul.f32 %v6800, %v6873
        %v6933 = vmul.f32 %v6801, %v6873
        %v6934 = vmul.f32 %v6802, %v6873
        %v6935 = vmul.f32 %v6803, %v6873
        %v6936 = vmul.f32 %v6804, %v6873
        %v6937 = vmul.f32 %v6805, %v6873
        %v6938 = vmul.f32 %v6806, %v6873
        %v6939 = vmul.f32 %v6807, %v6873
        %v6940 = vmul.f32 %v6808, %v6873
        %v6941 = vmul.f32 %v6809, %v6873
        %v6942 = vmul.f32 %v6810, %v6873
        %v6943 = vmul.f32 %v6811, %v6873
        %v6944 = vmul.f32 %v6812, %v6873
        %v6945 = vmul.f32 %v6813, %v6873
        %v6946 = vmul.f32 %v6814, %v6873
        %v6947 = vmul.f32 %v6815, %v6873
        %v6948 = vmul.f32 %v6816, %v6873
        %v6949 = vmul.f32 %v6817, %v6873
        %v6950 = vmul.f32 %v6818, %v6873
        %v6951 = vmul.f32 %v6819, %v6873
        %v6952 = vmul.f32 %v6820, %v6873
        %v6953 = vmul.f32 %v6821, %v6873
        %v6954 = vmul.f32 %v6822, %v6873
        %v6955 = vmul.f32 %v6823, %v6873
        %v6956 = vmul.f32 %v6824, %v6873
        %v6957 = vmul.f32 %v6825, %v6873
        %v6958 = vmul.f32 %v6826, %v6873
        %v6959 = vmul.f32 %v6827, %v6873
        %v6960 = vmul.f32 %v6828, %v6873
        %v6961 = vmul.f32 %v6829, %v6873
        %v6962 = vmul.f32 %v6830, %v6873
        %v6963 = vmul.f32 %v6831, %v6873
        %v6964 = vmul.f32 %v6832, %v6873
        %v6965 = vmul.f32 %v6833, %v6873
        %v6966 = vmul.f32 %v6834, %v6873
        %v6967 = vmul.f32 %v6835, %v6873
        %v6968 = vmul.f32 %v6836, %v6873
        %v6969 = vmul.f32 %v6837, %v6873
        %v6970 = vmul.f32 %v6838, %v6873
        %v6971 = vmul.f32 %v6839, %v6873
        %v6972 = vmul.f32 %v6840, %v6873
        %v6973 = vmul.f32 %v6841, %v6873
        %v6974 = vmul.f32 %v6842, %v6873
        %v6975 = vmul.f32 %v6843, %v6873
        %v6976 = vmul.f32 %v6844, %v6873
        %v6977 = vmul.f32 %v6845, %v6873
        %v6978 = vmul.f32 %v6846, %v6873
        %v6979 = vmul.f32 %v6847, %v6873
        %v6980 = vmul.f32 %v6848, %v6873
        %v6981 = vmul.f32 %v6849, %v6873
        %v6982 = vmul.f32 %v6850, %v6873
        %v6983 = vmul.f32 %v6851, %v6873
        %v6984 = vmul.f32 %v6852, %v6873
        %v6985 = vmul.f32 %v6853, %v6873
        %v6986 = vmul.f32 %v6854, %v6873
        %v6987 = vmul.f32 %v6855, %v6873
        %v6988 = vmul.f32 %v6856, %v6873
        %v6989 = vmul.f32 %v6857, %v6873
        %v6990 = vmul.f32 %v6858, %v6873
        %v6991 = vmul.f32 %v6859, %v6873
        %v6992 = vmul.f32 %v6860, %v6873
        %v6993 = vmul.f32 %v6861, %v6873
        %v6994 = vmul.f32 %v6862, %v6873
        %v6995 = vmul.f32 %v6863, %v6873
        %v6996 = vmul.f32 %v6864, %v6873
        %v6997 = vmul.f32 %v6865, %v6873
        %v6998 = vmul.f32 %v6866, %v6873
        %v6999 = vmul.f32 %v6867, %v6873
        %v7000 = vmul.f32 %v6868, %v6873
        %v7001 = vmul.f32 %v6869, %v6873
        %v7002 = vlaneseq
        %v7003 = vshrl.u32 %v7002, 7
        %v7004 = vsub.s32 0, %v7003
        %v7005 = vrot.slane %v5077, %v7004
        %v7006 = vadd.f32 %v6874, %v7005
        %v7007 = vadd.f32 %v6875, %v7005
        %v7008 = vadd.f32 %v6876, %v7005
        %v7009 = vadd.f32 %v6877, %v7005
        %v7010 = vadd.f32 %v6878, %v7005
        %v7011 = vadd.f32 %v6879, %v7005
        %v7012 = vadd.f32 %v6880, %v7005
        %v7013 = vadd.f32 %v6881, %v7005
        %v7014 = vadd.f32 %v6882, %v7005
        %v7015 = vadd.f32 %v6883, %v7005
        %v7016 = vadd.f32 %v6884, %v7005
        %v7017 = vadd.f32 %v6885, %v7005
        %v7018 = vadd.f32 %v6886, %v7005
        %v7019 = vadd.f32 %v6887, %v7005
        %v7020 = vadd.f32 %v6888, %v7005
        %v7021 = vadd.f32 %v6889, %v7005
        %v7022 = vadd.f32 %v6890, %v7005
        %v7023 = vadd.f32 %v6891, %v7005
        %v7024 = vadd.f32 %v6892, %v7005
        %v7025 = vadd.f32 %v6893, %v7005
        %v7026 = vadd.f32 %v6894, %v7005
        %v7027 = vadd.f32 %v6895, %v7005
        %v7028 = vadd.f32 %v6896, %v7005
        %v7029 = vadd.f32 %v6897, %v7005
        %v7030 = vadd.f32 %v6898, %v7005
        %v7031 = vadd.f32 %v6899, %v7005
        %v7032 = vadd.f32 %v6900, %v7005
        %v7033 = vadd.f32 %v6901, %v7005
        %v7034 = vadd.f32 %v6902, %v7005
        %v7035 = vadd.f32 %v6903, %v7005
        %v7036 = vadd.f32 %v6904, %v7005
        %v7037 = vadd.f32 %v6905, %v7005
        %v7038 = vadd.f32 %v6906, %v7005
        %v7039 = vadd.f32 %v6907, %v7005
        %v7040 = vadd.f32 %v6908, %v7005
        %v7041 = vadd.f32 %v6909, %v7005
        %v7042 = vadd.f32 %v6910, %v7005
        %v7043 = vadd.f32 %v6911, %v7005
        %v7044 = vadd.f32 %v6912, %v7005
        %v7045 = vadd.f32 %v6913, %v7005
        %v7046 = vadd.f32 %v6914, %v7005
        %v7047 = vadd.f32 %v6915, %v7005
        %v7048 = vadd.f32 %v6916, %v7005
        %v7049 = vadd.f32 %v6917, %v7005
        %v7050 = vadd.f32 %v6918, %v7005
        %v7051 = vadd.f32 %v6919, %v7005
        %v7052 = vadd.f32 %v6920, %v7005
        %v7053 = vadd.f32 %v6921, %v7005
        %v7054 = vadd.f32 %v6922, %v7005
        %v7055 = vadd.f32 %v6923, %v7005
        %v7056 = vadd.f32 %v6924, %v7005
        %v7057 = vadd.f32 %v6925, %v7005
        %v7058 = vadd.f32 %v6926, %v7005
        %v7059 = vadd.f32 %v6927, %v7005
        %v7060 = vadd.f32 %v6928, %v7005
        %v7061 = vadd.f32 %v6929, %v7005
        %v7062 = vadd.f32 %v6930, %v7005
        %v7063 = vadd.f32 %v6931, %v7005
        %v7064 = vadd.f32 %v6932, %v7005
        %v7065 = vadd.f32 %v6933, %v7005
        %v7066 = vadd.f32 %v6934, %v7005
        %v7067 = vadd.f32 %v6935, %v7005
        %v7068 = vadd.f32 %v6936, %v7005
        %v7069 = vadd.f32 %v6937, %v7005
        %v7070 = vadd.f32 %v6938, %v7005
        %v7071 = vadd.f32 %v6939, %v7005
        %v7072 = vadd.f32 %v6940, %v7005
        %v7073 = vadd.f32 %v6941, %v7005
        %v7074 = vadd.f32 %v6942, %v7005
        %v7075 = vadd.f32 %v6943, %v7005
        %v7076 = vadd.f32 %v6944, %v7005
        %v7077 = vadd.f32 %v6945, %v7005
        %v7078 = vadd.f32 %v6946, %v7005
        %v7079 = vadd.f32 %v6947, %v7005
        %v7080 = vadd.f32 %v6948, %v7005
        %v7081 = vadd.f32 %v6949, %v7005
        %v7082 = vadd.f32 %v6950, %v7005
        %v7083 = vadd.f32 %v6951, %v7005
        %v7084 = vadd.f32 %v6952, %v7005
        %v7085 = vadd.f32 %v6953, %v7005
        %v7086 = vadd.f32 %v6954, %v7005
        %v7087 = vadd.f32 %v6955, %v7005
        %v7088 = vadd.f32 %v6956, %v7005
        %v7089 = vadd.f32 %v6957, %v7005
        %v7090 = vadd.f32 %v6958, %v7005
        %v7091 = vadd.f32 %v6959, %v7005
        %v7092 = vadd.f32 %v6960, %v7005
        %v7093 = vadd.f32 %v6961, %v7005
        %v7094 = vadd.f32 %v6962, %v7005
        %v7095 = vadd.f32 %v6963, %v7005
        %v7096 = vadd.f32 %v6964, %v7005
        %v7097 = vadd.f32 %v6965, %v7005
        %v7098 = vadd.f32 %v6966, %v7005
        %v7099 = vadd.f32 %v6967, %v7005
        %v7100 = vadd.f32 %v6968, %v7005
        %v7101 = vadd.f32 %v6969, %v7005
        %v7102 = vadd.f32 %v6970, %v7005
        %v7103 = vadd.f32 %v6971, %v7005
        %v7104 = vadd.f32 %v6972, %v7005
        %v7105 = vadd.f32 %v6973, %v7005
        %v7106 = vadd.f32 %v6974, %v7005
        %v7107 = vadd.f32 %v6975, %v7005
        %v7108 = vadd.f32 %v6976, %v7005
        %v7109 = vadd.f32 %v6977, %v7005
        %v7110 = vadd.f32 %v6978, %v7005
        %v7111 = vadd.f32 %v6979, %v7005
        %v7112 = vadd.f32 %v6980, %v7005
        %v7113 = vadd.f32 %v6981, %v7005
        %v7114 = vadd.f32 %v6982, %v7005
        %v7115 = vadd.f32 %v6983, %v7005
        %v7116 = vadd.f32 %v6984, %v7005
        %v7117 = vadd.f32 %v6985, %v7005
        %v7118 = vadd.f32 %v6986, %v7005
        %v7119 = vadd.f32 %v6987, %v7005
        %v7120 = vadd.f32 %v6988, %v7005
        %v7121 = vadd.f32 %v6989, %v7005
        %v7122 = vadd.f32 %v6990, %v7005
        %v7123 = vadd.f32 %v6991, %v7005
        %v7124 = vadd.f32 %v6992, %v7005
        %v7125 = vadd.f32 %v6993, %v7005
        %v7126 = vadd.f32 %v6994, %v7005
        %v7127 = vadd.f32 %v6995, %v7005
        %v7128 = vadd.f32 %v6996, %v7005
        %v7129 = vadd.f32 %v6997, %v7005
        %v7130 = vadd.f32 %v6998, %v7005
        %v7131 = vadd.f32 %v6999, %v7005
        %v7132 = vadd.f32 %v7000, %v7005
        %v7133 = vadd.f32 %v7001, %v7005
        %7134 = vst [vmem:[%s242] sm:$0xff] %v7006
        %7135 = vst [vmem:[%s242 + $0x8] sm:$0xff] %v7007
        %7136 = vst [vmem:[%s242 + $0x10] sm:$0xff] %v7008
        %7137 = vst [vmem:[%s242 + $0x18] sm:$0xff] %v7009
        %7138 = vst [vmem:[%s242 + $0x20] sm:$0xff] %v7010
        %7139 = vst [vmem:[%s242 + $0x28] sm:$0xff] %v7011
        %7140 = vst [vmem:[%s242 + $0x30] sm:$0xff] %v7012
        %7141 = vst [vmem:[%s242 + $0x38] sm:$0xff] %v7013
        %7142 = vst [vmem:[%s242 + $0x40] sm:$0xff] %v7014
        %7143 = vst [vmem:[%s242 + $0x48] sm:$0xff] %v7015
        %7144 = vst [vmem:[%s242 + $0x50] sm:$0xff] %v7016
        %7145 = vst [vmem:[%s242 + $0x58] sm:$0xff] %v7017
        %7146 = vst [vmem:[%s242 + $0x60] sm:$0xff] %v7018
        %7147 = vst [vmem:[%s242 + $0x68] sm:$0xff] %v7019
        %7148 = vst [vmem:[%s242 + $0x70] sm:$0xff] %v7020
        %7149 = vst [vmem:[%s242 + $0x78] sm:$0xff] %v7021
        %7150 = vst [vmem:[%s242 + $0x80] sm:$0xff] %v7022
        %7151 = vst [vmem:[%s242 + $0x88] sm:$0xff] %v7023
        %7152 = vst [vmem:[%s242 + $0x90] sm:$0xff] %v7024
        %7153 = vst [vmem:[%s242 + $0x98] sm:$0xff] %v7025
        %7154 = vst [vmem:[%s242 + $0xa0] sm:$0xff] %v7026
        %7155 = vst [vmem:[%s242 + $0xa8] sm:$0xff] %v7027
        %7156 = vst [vmem:[%s242 + $0xb0] sm:$0xff] %v7028
        %7157 = vst [vmem:[%s242 + $0xb8] sm:$0xff] %v7029
        %7158 = vst [vmem:[%s242 + $0xc0] sm:$0xff] %v7030
        %7159 = vst [vmem:[%s242 + $0xc8] sm:$0xff] %v7031
        %7160 = vst [vmem:[%s242 + $0xd0] sm:$0xff] %v7032
        %7161 = vst [vmem:[%s242 + $0xd8] sm:$0xff] %v7033
        %7162 = vst [vmem:[%s242 + $0xe0] sm:$0xff] %v7034
        %7163 = vst [vmem:[%s242 + $0xe8] sm:$0xff] %v7035
        %7164 = vst [vmem:[%s242 + $0xf0] sm:$0xff] %v7036
        %7165 = vst [vmem:[%s242 + $0xf8] sm:$0xff] %v7037
        %7166 = vst [vmem:[%s242 + $0x100] sm:$0xff] %v7038
        %7167 = vst [vmem:[%s242 + $0x108] sm:$0xff] %v7039
        %7168 = vst [vmem:[%s242 + $0x110] sm:$0xff] %v7040
        %7169 = vst [vmem:[%s242 + $0x118] sm:$0xff] %v7041
        %7170 = vst [vmem:[%s242 + $0x120] sm:$0xff] %v7042
        %7171 = vst [vmem:[%s242 + $0x128] sm:$0xff] %v7043
        %7172 = vst [vmem:[%s242 + $0x130] sm:$0xff] %v7044
        %7173 = vst [vmem:[%s242 + $0x138] sm:$0xff] %v7045
        %7174 = vst [vmem:[%s242 + $0x140] sm:$0xff] %v7046
        %7175 = vst [vmem:[%s242 + $0x148] sm:$0xff] %v7047
        %7176 = vst [vmem:[%s242 + $0x150] sm:$0xff] %v7048
        %7177 = vst [vmem:[%s242 + $0x158] sm:$0xff] %v7049
        %7178 = vst [vmem:[%s242 + $0x160] sm:$0xff] %v7050
        %7179 = vst [vmem:[%s242 + $0x168] sm:$0xff] %v7051
        %7180 = vst [vmem:[%s242 + $0x170] sm:$0xff] %v7052
        %7181 = vst [vmem:[%s242 + $0x178] sm:$0xff] %v7053
        %7182 = vst [vmem:[%s242 + $0x180] sm:$0xff] %v7054
        %7183 = vst [vmem:[%s242 + $0x188] sm:$0xff] %v7055
        %7184 = vst [vmem:[%s242 + $0x190] sm:$0xff] %v7056
        %7185 = vst [vmem:[%s242 + $0x198] sm:$0xff] %v7057
        %7186 = vst [vmem:[%s242 + $0x1a0] sm:$0xff] %v7058
        %7187 = vst [vmem:[%s242 + $0x1a8] sm:$0xff] %v7059
        %7188 = vst [vmem:[%s242 + $0x1b0] sm:$0xff] %v7060
        %7189 = vst [vmem:[%s242 + $0x1b8] sm:$0xff] %v7061
        %7190 = vst [vmem:[%s242 + $0x1c0] sm:$0xff] %v7062
        %7191 = vst [vmem:[%s242 + $0x1c8] sm:$0xff] %v7063
        %7192 = vst [vmem:[%s242 + $0x1d0] sm:$0xff] %v7064
        %7193 = vst [vmem:[%s242 + $0x1d8] sm:$0xff] %v7065
        %7194 = vst [vmem:[%s242 + $0x1e0] sm:$0xff] %v7066
        %7195 = vst [vmem:[%s242 + $0x1e8] sm:$0xff] %v7067
        %7196 = vst [vmem:[%s242 + $0x1f0] sm:$0xff] %v7068
        %7197 = vst [vmem:[%s242 + $0x1f8] sm:$0xff] %v7069
        %7198 = vst [vmem:[%s242 + $0x200] sm:$0xff] %v7070
        %7199 = vst [vmem:[%s242 + $0x208] sm:$0xff] %v7071
        %7200 = vst [vmem:[%s242 + $0x210] sm:$0xff] %v7072
        %7201 = vst [vmem:[%s242 + $0x218] sm:$0xff] %v7073
        %7202 = vst [vmem:[%s242 + $0x220] sm:$0xff] %v7074
        %7203 = vst [vmem:[%s242 + $0x228] sm:$0xff] %v7075
        %7204 = vst [vmem:[%s242 + $0x230] sm:$0xff] %v7076
        %7205 = vst [vmem:[%s242 + $0x238] sm:$0xff] %v7077
        %7206 = vst [vmem:[%s242 + $0x240] sm:$0xff] %v7078
        %7207 = vst [vmem:[%s242 + $0x248] sm:$0xff] %v7079
        %7208 = vst [vmem:[%s242 + $0x250] sm:$0xff] %v7080
        %7209 = vst [vmem:[%s242 + $0x258] sm:$0xff] %v7081
        %7210 = vst [vmem:[%s242 + $0x260] sm:$0xff] %v7082
        %7211 = vst [vmem:[%s242 + $0x268] sm:$0xff] %v7083
        %7212 = vst [vmem:[%s242 + $0x270] sm:$0xff] %v7084
        %7213 = vst [vmem:[%s242 + $0x278] sm:$0xff] %v7085
        %7214 = vst [vmem:[%s242 + $0x280] sm:$0xff] %v7086
        %7215 = vst [vmem:[%s242 + $0x288] sm:$0xff] %v7087
        %7216 = vst [vmem:[%s242 + $0x290] sm:$0xff] %v7088
        %7217 = vst [vmem:[%s242 + $0x298] sm:$0xff] %v7089
        %7218 = vst [vmem:[%s242 + $0x2a0] sm:$0xff] %v7090
        %7219 = vst [vmem:[%s242 + $0x2a8] sm:$0xff] %v7091
        %7220 = vst [vmem:[%s242 + $0x2b0] sm:$0xff] %v7092
        %7221 = vst [vmem:[%s242 + $0x2b8] sm:$0xff] %v7093
        %7222 = vst [vmem:[%s242 + $0x2c0] sm:$0xff] %v7094
        %7223 = vst [vmem:[%s242 + $0x2c8] sm:$0xff] %v7095
        %7224 = vst [vmem:[%s242 + $0x2d0] sm:$0xff] %v7096
        %7225 = vst [vmem:[%s242 + $0x2d8] sm:$0xff] %v7097
        %7226 = vst [vmem:[%s242 + $0x2e0] sm:$0xff] %v7098
        %7227 = vst [vmem:[%s242 + $0x2e8] sm:$0xff] %v7099
        %7228 = vst [vmem:[%s242 + $0x2f0] sm:$0xff] %v7100
        %7229 = vst [vmem:[%s242 + $0x2f8] sm:$0xff] %v7101
        %7230 = vst [vmem:[%s242 + $0x300] sm:$0xff] %v7102
        %7231 = vst [vmem:[%s242 + $0x308] sm:$0xff] %v7103
        %7232 = vst [vmem:[%s242 + $0x310] sm:$0xff] %v7104
        %7233 = vst [vmem:[%s242 + $0x318] sm:$0xff] %v7105
        %7234 = vst [vmem:[%s242 + $0x320] sm:$0xff] %v7106
        %7235 = vst [vmem:[%s242 + $0x328] sm:$0xff] %v7107
        %7236 = vst [vmem:[%s242 + $0x330] sm:$0xff] %v7108
        %7237 = vst [vmem:[%s242 + $0x338] sm:$0xff] %v7109
        %7238 = vst [vmem:[%s242 + $0x340] sm:$0xff] %v7110
        %7239 = vst [vmem:[%s242 + $0x348] sm:$0xff] %v7111
        %7240 = vst [vmem:[%s242 + $0x350] sm:$0xff] %v7112
        %7241 = vst [vmem:[%s242 + $0x358] sm:$0xff] %v7113
        %7242 = vst [vmem:[%s242 + $0x360] sm:$0xff] %v7114
        %7243 = vst [vmem:[%s242 + $0x368] sm:$0xff] %v7115
        %7244 = vst [vmem:[%s242 + $0x370] sm:$0xff] %v7116
        %7245 = vst [vmem:[%s242 + $0x378] sm:$0xff] %v7117
        %7246 = vst [vmem:[%s242 + $0x380] sm:$0xff] %v7118
        %7247 = vst [vmem:[%s242 + $0x388] sm:$0xff] %v7119
        %7248 = vst [vmem:[%s242 + $0x390] sm:$0xff] %v7120
        %7249 = vst [vmem:[%s242 + $0x398] sm:$0xff] %v7121
        %7250 = vst [vmem:[%s242 + $0x3a0] sm:$0xff] %v7122
        %7251 = vst [vmem:[%s242 + $0x3a8] sm:$0xff] %v7123
        %7252 = vst [vmem:[%s242 + $0x3b0] sm:$0xff] %v7124
        %7253 = vst [vmem:[%s242 + $0x3b8] sm:$0xff] %v7125
        %7254 = vst [vmem:[%s242 + $0x3c0] sm:$0xff] %v7126
        %7255 = vst [vmem:[%s242 + $0x3c8] sm:$0xff] %v7127
        %7256 = vst [vmem:[%s242 + $0x3d0] sm:$0xff] %v7128
        %7257 = vst [vmem:[%s242 + $0x3d8] sm:$0xff] %v7129
        %7258 = vst [vmem:[%s242 + $0x3e0] sm:$0xff] %v7130
        %7259 = vst [vmem:[%s242 + $0x3e8] sm:$0xff] %v7131
        %7260 = vst [vmem:[%s242 + $0x3f0] sm:$0xff] %v7132
        %7261 = vst [vmem:[%s242 + $0x3f8] sm:$0xff] %v7133
        %s7262 = sand.u32 %s140, 1
        %s7263 = scalar_lea.sflag [#allocation4], %s7262
        %s7264 = sand.u32 %s140, 1
        %s7265 = smul.addr %s7264, 1024
        %s7266 = scalar_lea.vmem [#allocation5], %s7265
        // Predicated region
        $region45: #{mlp_encoder_layer.1} parent=39 // pred_check
          %p7267 = pneg %p150
        $region46: #{mlp_encoder_layer.1} parent=39 // pred_check_branch
          %7269 = sbr.rel (%p7267) target = $region48
        $region47: #{mlp_encoder_layer.1} parent=39 // pred_region
          %s7270 = smul.u32 128, %s22
          %s7272 = ssub.s32 16384, 16384
          %7273 = vsyncadd %s7263, %s7272
          %s7274 = smul.addr %s7270, 128
          %s7275 = scalar_lea.hbm %s5, %s7274
          %s7276 = sshll.u32 %s7266, 4
          %s7277 = int_to_ptr.vmem [resolvable:$true] %s7276
          %7282 = dma.vmem_to_hbm [thread:$0]  %s7277, 16384, %s7275, %s7263, 128, 128, 8
        $region48: #{mlp_encoder_layer.1} parent=39 // pred_fallthru
          _
      $region40: #{mlp_encoder_layer.1} parent=5 // pred_fallthru
        _
      %p7283 = scmp.le.s32.totalorder 2, %s17
      // Predicated region
      $region49: #{mlp_encoder_layer.1} parent=5 // pred_check
        %p7284 = pneg %p7283
      $region50: #{mlp_encoder_layer.1} parent=5 // pred_check_branch
        %7286 = sbr.rel (%p7284) target = $region52
      $region51: #{mlp_encoder_layer.1} parent=5 // pred_region
        %s7287 = ssub.s32 %s17, 2
        // Predicated region
        $region53: #{mlp_encoder_layer.1} parent=51 // pred_check
          %p7288 = pneg %p156
        $region54: #{mlp_encoder_layer.1} parent=51 // pred_check_branch
          %7290 = sbr.rel (%p7288) target = $region56
        $region55: #{mlp_encoder_layer.1} parent=51 // pred_region
          %s7291 = sand.u32 %s141, 1
          %s7292 = scalar_lea.sflag [#allocation4], %s7291
          %s7293 = sand.u32 %s141, 1
          %s7294 = smul.addr %s7293, 1024
          %s7295 = scalar_lea.vmem [#allocation5], %s7294
          %7296 = dma.done %s7292, 16384
        $region56: #{mlp_encoder_layer.1} parent=51 // pred_fallthru
          _
      $region52: #{mlp_encoder_layer.1} parent=5 // pred_fallthru
        _
    $region6: #{mlp_encoder_layer.1} parent=1 // loop_footer
      %s21 = sadd.s32 1, %s17
    $region7: #{mlp_encoder_layer.1} parent=1 // loop_footer_branch
      %16 = sbr.rel target = $region3
    $region8: #{mlp_encoder_layer.1} parent=1 // loop_exit
      _
    %7297 = vsyncpa [#allocation3], 1
    %s7298 = scalar_lea.sflag [#allocation3], 1
    %7299 = vsyncpa %s7298, 1
    %7300 = vsyncpa [#allocation4], 1
    %s7301 = scalar_lea.sflag [#allocation4], 1
    %7302 = vsyncpa %s7301, 1

</llo_original>
